<compile_context>
chip_gen: v7x
topology: tpu7x:2x2x1
jax: 0.10.0
libtpu: 0.0.40
codegen_flags: <defaults>
</compile_context>

<pallas_src>
import functools
import math

import jax
import jax.numpy as jnp
from jax.experimental import pallas as pl
from jax.experimental.pallas import tpu as pltpu


ACT_DTYPE = jnp.bfloat16      # inter-kernel activation dtype
WEIGHT_DTYPE = jnp.bfloat16   # MXU operand weights


def _vmem_budget_bytes():
    """Generation-dependent VMEM budget (~75% of physical, capped, with headroom)."""
    cap = 64 * 1024 * 1024
    try:
        info = pltpu.get_tpu_info()
        cap = int(getattr(info, "vmem_capacity_bytes", cap) or cap)
    except Exception:
        pass
    return max(32 * 1024 * 1024, min(cap * 3 // 4, 112 * 1024 * 1024))


VMEM_LIMIT = _vmem_budget_bytes()
LARGE_VMEM = VMEM_LIMIT >= 80 * 1024 * 1024          # v5e / v6e (128 MiB physical)

ROW_TARGET_FFN = 512 if LARGE_VMEM else 128          # v7x: smaller FFN row tile
ROW_TARGET_LM = 1024 if LARGE_VMEM else 512          # bigger tm -> less vocab re-stream
COL_TARGET_LM = 512
ROW_TARGET_PROJ = 512 if LARGE_VMEM else 256
ATTN_TQ_TARGET = 256
ATTN_TKV_TARGET = 512 if LARGE_VMEM else 256


# ------------------------------ tiling helpers -------------------------------


def _divisor_tile(n, target, gran):
    """Largest multiple of `gran` dividing n and <= target; else n (full extent)."""
    if n % gran != 0:
        return n
    t = min(target, n)
    t -= t % gran
    if t <= 0:
        return n
    while n % t != 0:
        t -= gran
    return t


def _row_tile(m, target):
    return _divisor_tile(m, target, 8)


def _col_tile(n, target):
    # Prefer 256-granular tiles (v6e/v7x MXU is 2x256^2), fall back to 128.
    for gran in (256, 128):
        if n % gran == 0:
            return _divisor_tile(n, max(target, gran), gran)
    return n


# ------------------------------- Pallas kernels -------------------------------


def _proj_heads_kernel(x_ref, *refs, num_outs, num_heads, q_scale):
    """Fused head projections: y_i = x @ W_i, emitted as (H, rows, dk) bf16."""
    w_refs = refs[:num_outs]
    out_refs = refs[num_outs:]
    x = x_ref[0].astype(w_refs[0].dtype)                      # (tm, d)
    tm, d = x.shape
    dk = d // num_heads
    for idx in range(num_outs):
        y = jnp.dot(x, w_refs[idx][...], preferred_element_type=jnp.float32)
        if idx == 0 and q_scale != 1.0:
            y = y * q_scale                                    # fold 1/sqrt(dk) into q
        yh = jnp.transpose(y.reshape(tm, num_heads, dk), (1, 0, 2))
        out_refs[idx][0] = yh.astype(out_refs[idx].dtype)


def _flash_mha_ln_kernel(res_ref, q_ref, k_ref, v_ref, wo_ref, bo_ref, g_ref, b_ref,
                         o_ref, m_scr, l_scr, acc_scr, *, causal, tq, tkv):
    """Online-softmax attention over KV blocks, fused out-proj + residual + LayerNorm."""
    ki = pl.program_id(2)

    @pl.when(ki == 0)
    def _():
        m_scr[...] = jnp.full(m_scr.shape, -jnp.inf, m_scr.dtype)
        l_scr[...] = jnp.zeros(l_scr.shape, l_scr.dtype)
        acc_scr[...] = jnp.zeros(acc_scr.shape, acc_scr.dtype)

    q = q_ref[0]                                               # (H, tq, dk), pre-scaled
    k = k_ref[0]                                               # (H, tkv, dk)
    v = v_ref[0]                                               # (H, tkv, dk)

    s = jnp.einsum('hqd,hkd->hqk', q, k, preferred_element_type=jnp.float32)

    if causal:
        q0 = pl.program_id(1) * tq
        k0 = ki * tkv
        row = jax.lax.broadcasted_iota(jnp.int32, (tq, tkv), 0) + q0
        col = jax.lax.broadcasted_iota(jnp.int32, (tq, tkv), 1) + k0
        s = jnp.where((col > row)[None, :, :], -jnp.inf, s)

    m_prev = m_scr[...]
    m_new = jnp.maximum(m_prev, jnp.max(s, axis=-1, keepdims=True))
    alpha = jnp.exp(m_prev - m_new)
    p = jnp.exp(s - m_new)
    l_scr[...] = alpha * l_scr[...] + jnp.sum(p, axis=-1, keepdims=True)
    acc_scr[...] = alpha * acc_scr[...] + jnp.einsum(
        'hqk,hkd->hqd', p.astype(v.dtype), v, preferred_element_type=jnp.float32)
    m_scr[...] = m_new

    @pl.when(ki == pl.num_programs(2) - 1)
    def _():
        h, rows, dk = acc_scr.shape
        ctx = acc_scr[...] / l_scr[...]                        # exact normalization
        ctx2d = jnp.transpose(ctx, (1, 0, 2)).reshape(rows, h * dk)
        out = (jnp.dot(ctx2d.astype(wo_ref.dtype), wo_ref[...],
                       preferred_element_type=jnp.float32) + bo_ref[...])
        y = out + res_ref[0].astype(jnp.float32)               # residual (f32)
        mean = jnp.mean(y, axis=-1, keepdims=True)
        var = jnp.mean((y - mean) ** 2, axis=-1, keepdims=True)
        o_ref[0] = ((y - mean) * jax.lax.rsqrt(var + 1e-5) * g_ref[...]
                    + b_ref[...]).astype(o_ref.dtype)


def _ffn_ln_kernel(x_ref, w1_ref, b1_ref, w2_ref, b2_ref, g_ref, b_ref, o_ref):
    # Fused: linear -> ReLU -> linear -> residual add -> LayerNorm (stats in f32)
    x = x_ref[...]                                             # bf16 (tm, d)
    h = (jnp.dot(x, w1_ref[...], preferred_element_type=jnp.float32) + b1_ref[...])
    h = jnp.maximum(h, 0.0)
    y = (jnp.dot(h.astype(w2_ref.dtype), w2_ref[...],
                 preferred_element_type=jnp.float32) + b2_ref[...])
    y = y + x.astype(jnp.float32)                              # residual
    mean = jnp.mean(y, axis=-1, keepdims=True)
    var = jnp.mean((y - mean) ** 2, axis=-1, keepdims=True)
    o_ref[...] = ((y - mean) * jax.lax.rsqrt(var + 1e-5) * g_ref[...]
                  + b_ref[...]).astype(o_ref.dtype)


def _linear_kernel(x_ref, w_ref, b_ref, o_ref):
    # LM head tile: (tm, d) x (d, tn) + (1, tn), f32 logits out
    o_ref[...] = (jnp.dot(x_ref[...], w_ref[...], preferred_element_type=jnp.float32)
                  + b_ref[...])


# ----------------------------- kernel call wrappers ---------------------------


def project_heads(x, weights, *, num_heads, q_scale=1.0):
    """x: (B, S, d) bf16 -> tuple of (B, H, S, dk) bf16 head-projected tensors."""
    b, s, d = x.shape
    dk = d // num_heads
    n = len(weights)
    tm = _row_tile(s, ROW_TARGET_PROJ)
    kernel = functools.partial(_proj_heads_kernel, num_outs=n, num_heads=num_heads,
                               q_scale=q_scale)
    ce = pl.CostEstimate(
        flops=int(2 * n * b * s * d * d),
        transcendentals=0,
        bytes_accessed=int(2 * b * s * d * (1 + n) + 2 * n * d * d))
    outs = pl.pallas_call(
        kernel,
        out_shape=tuple(jax.ShapeDtypeStruct((b, num_heads, s, dk), ACT_DTYPE)
                        for _ in range(n)),
        grid=(b, s // tm),
        in_specs=[pl.BlockSpec((1, tm, d), lambda bi, i: (bi, i, 0))]
                + [pl.BlockSpec((d, d), lambda bi, i: (0, 0)) for _ in range(n)],
        out_specs=tuple(pl.BlockSpec((1, num_heads, tm, dk),
                                     lambda bi, i: (bi, 0, i, 0)) for _ in range(n)),
        compiler_params=pltpu.CompilerParams(
            dimension_semantics=("parallel", "parallel"),
            vmem_limit_bytes=VMEM_LIMIT),
        cost_estimate=ce,
    )(x, *weights)
    if not isinstance(outs, (list, tuple)):
        outs = (outs,)
    return tuple(outs)


def flash_mha_ln(res, q, k, v, wo, bo, gamma, beta, *, num_heads, causal):
    """res: (B, Sq, d); q: (B, H, Sq, dk); k, v: (B, H, Skv, dk). Returns (B, Sq, d)."""
    b, sq, d = res.shape
    skv = k.shape[2]
    dk = d // num_heads
    tq = _row_tile(sq, ATTN_TQ_TARGET)
    tkv = _row_tile(skv, ATTN_TKV_TARGET)
    kernel = functools.partial(_flash_mha_ln_kernel, causal=causal, tq=tq, tkv=tkv)
    ce = pl.CostEstimate(
        flops=int(4 * b * sq * skv * d + 2 * b * sq * d * d),
        transcendentals=int(b * num_heads * sq * skv),
        bytes_accessed=int(2 * b * (3 * sq * d + 2 * (sq // tq) * skv * d)
                           + 2 * d * d + 4 * 3 * d),
    )
    return pl.pallas_call(
        kernel,
        out_shape=jax.ShapeDtypeStruct((b, sq, d), ACT_DTYPE),
        grid=(b, sq // tq, skv // tkv),
        in_specs=[
            pl.BlockSpec((1, tq, d), lambda bi, qi, ki: (bi, qi, 0)),              # residual
            pl.BlockSpec((1, num_heads, tq, dk), lambda bi, qi, ki: (bi, 0, qi, 0)),
            pl.BlockSpec((1, num_heads, tkv, dk), lambda bi, qi, ki: (bi, 0, ki, 0)),
            pl.BlockSpec((1, num_heads, tkv, dk), lambda bi, qi, ki: (bi, 0, ki, 0)),
            pl.BlockSpec((d, d), lambda bi, qi, ki: (0, 0)),                       # wo
            pl.BlockSpec((1, d), lambda bi, qi, ki: (0, 0)),                       # bo
            pl.BlockSpec((1, d), lambda bi, qi, ki: (0, 0)),                       # gamma
            pl.BlockSpec((1, d), lambda bi, qi, ki: (0, 0)),                       # beta
        ],
        out_specs=pl.BlockSpec((1, tq, d), lambda bi, qi, ki: (bi, qi, 0)),
        scratch_shapes=[
            pltpu.VMEM((num_heads, tq, 1), jnp.float32),   # running max
            pltpu.VMEM((num_heads, tq, 1), jnp.float32),   # running denom
            pltpu.VMEM((num_heads, tq, dk), jnp.float32),  # context accumulator
        ],
        compiler_params=pltpu.CompilerParams(
            dimension_semantics=("parallel", "parallel", "arbitrary"),
            vmem_limit_bytes=VMEM_LIMIT),
        cost_estimate=ce,
    )(res, q, k, v, wo, bo.reshape(1, d), gamma.reshape(1, d), beta.reshape(1, d))


def ffn_ln(x, p, gamma, beta):
    b, s, d = x.shape
    e = p["w1"].shape[1]
    m = b * s
    tm = _row_tile(m, ROW_TARGET_FFN)
    x2d = x.reshape(m, d)
    ce = pl.CostEstimate(
        flops=int(4 * m * d * e),
        transcendentals=int(m),
        bytes_accessed=int(2 * m * d * 2 + 2 * 2 * d * e + 4 * (2 * d + e)),
    )
    out = pl.pallas_call(
        _ffn_ln_kernel,
        out_shape=jax.ShapeDtypeStruct((m, d), ACT_DTYPE),
        grid=(m // tm,),
        in_specs=[
            pl.BlockSpec((tm, d), lambda i: (i, 0)),
            pl.BlockSpec((d, e), lambda i: (0, 0)),
            pl.BlockSpec((1, e), lambda i: (0, 0)),
            pl.BlockSpec((e, d), lambda i: (0, 0)),
            pl.BlockSpec((1, d), lambda i: (0, 0)),
            pl.BlockSpec((1, d), lambda i: (0, 0)),
            pl.BlockSpec((1, d), lambda i: (0, 0)),
        ],
        out_specs=pl.BlockSpec((tm, d), lambda i: (i, 0)),
        compiler_params=pltpu.CompilerParams(
            dimension_semantics=("parallel",), vmem_limit_bytes=VMEM_LIMIT),
        cost_estimate=ce,
    )(x2d, p["w1"], p["b1"].reshape(1, e), p["w2"], p["b2"].reshape(1, d),
      gamma.reshape(1, d), beta.reshape(1, d))
    return out.reshape(b, s, d)


def lm_head_linear(x2d, w, b):
    m, d = x2d.shape
    n = w.shape[1]
    tm = _row_tile(m, ROW_TARGET_LM)
    tn = _col_tile(n, COL_TARGET_LM)
    ce = pl.CostEstimate(
        flops=int(2 * m * d * n),
        transcendentals=0,
        bytes_accessed=int(2 * m * d + (m // tm) * 2 * d * n + 4 * m * n),
    )
    return pl.pallas_call(
        _linear_kernel,
        out_shape=jax.ShapeDtypeStruct((m, n), jnp.float32),
        grid=(m // tm, n // tn),
        in_specs=[
            pl.BlockSpec((tm, d), lambda i, j: (i, 0)),
            pl.BlockSpec((d, tn), lambda i, j: (0, j)),
            pl.BlockSpec((1, tn), lambda i, j: (0, j)),
        ],
        out_specs=pl.BlockSpec((tm, tn), lambda i, j: (i, j)),
        compiler_params=pltpu.CompilerParams(
            dimension_semantics=("parallel", "parallel"),
            vmem_limit_bytes=VMEM_LIMIT),
        cost_estimate=ce,
    )(x2d, w, b.reshape(1, n))


# -------------------------------- model (glue) --------------------------------


def positional_encoding_table(max_seq_len, model_dim):
    positions = jnp.arange(max_seq_len, dtype=jnp.float32)[:, None]
    div_term = 1.0 / jnp.power(
        10000.0, jnp.arange(0, model_dim, 2, dtype=jnp.float32) / model_dim)
    freq = positions * div_term
    pe = jnp.zeros((max_seq_len, model_dim), jnp.float32)
    pe = pe.at[:, 0::2].set(jnp.sin(freq))
    pe = pe.at[:, 1::2].set(jnp.cos(freq)[:, : model_dim // 2])   # odd-dim safe
    return pe


def embed(tokens, table, scale, pe):
    # embedding gather + sqrt(model_dim) scale + positional encoding (JAX glue)
    x = jnp.take(table, tokens, axis=0) * scale
    x = x + pe[: tokens.shape[1]][None, :, :]
    return x.astype(ACT_DTYPE)


def attention_ln(q_act, kv_act, p, gamma, beta, *, num_heads, causal, shared_qkv):
    d = q_act.shape[-1]
    dk = d // num_heads
    scale = 1.0 / math.sqrt(dk)
    if shared_qkv:
        q, k, v = project_heads(q_act, (p["wq"], p["wk"], p["wv"]),
                                num_heads=num_heads, q_scale=scale)
    else:
        (q,) = project_heads(q_act, (p["wq"],), num_heads=num_heads, q_scale=scale)
        k, v = project_heads(kv_act, (p["wk"], p["wv"]), num_heads=num_heads)
    return flash_mha_ln(q_act, q, k, v, p["wo"], p["bo"], gamma, beta,
                        num_heads=num_heads, causal=causal)


def encoder_block(x, p, num_heads):
    x = attention_ln(x, x, p["mha"], p["ln1_g"], p["ln1_b"],
                     num_heads=num_heads, causal=False, shared_qkv=True)
    x = ffn_ln(x, p["ffn"], p["ln2_g"], p["ln2_b"])
    return x


def decoder_block(x, enc_out, p, num_heads):
    x = attention_ln(x, x, p["mha_self"], p["ln1_g"], p["ln1_b"],
                     num_heads=num_heads, causal=True, shared_qkv=True)
    x = attention_ln(x, enc_out, p["mha_cross"], p["ln2_g"], p["ln2_b"],
                     num_heads=num_heads, causal=False, shared_qkv=False)
    x = ffn_ln(x, p["ffn"], p["ln3_g"], p["ln3_b"])
    return x


def transformer_forward(params, encoder_tokens, decoder_tokens, cfg):
    d = cfg["model_dim"]
    h = cfg["num_heads"]
    scale = math.sqrt(d)
    pe = params["pos_enc"]

    enc_x = embed(encoder_tokens, params["src_emb"], scale, pe)
    dec_x = embed(decoder_tokens, params["tgt_emb"], scale, pe)

    for blk in params["encoder"]:
        enc_x = encoder_block(enc_x, blk, h)

    x = dec_x
    for blk in params["decoder"]:
        x = decoder_block(x, enc_x, blk, h)

    b, s, _ = x.shape
    logits = lm_head_linear(x.reshape(b * s, d), params["lm_w"], params["lm_b"])
    return logits.reshape(b, s, cfg["vocab_tgt_size"])


# ---------------------------- parameter initialization ------------------------


def init_params(key, cfg):
    d = cfg["model_dim"]
    e = cfg["expansion_dim"]
    keys = iter(jax.random.split(key, 4096))

    def nrm(shape, std=0.05, dtype=jnp.float32):
        return (jax.random.normal(next(keys), shape, jnp.float32) * std).astype(dtype)

    wdt = WEIGHT_DTYPE

    def mha_params():
        # per-head (d, dk) projections fused along the output dim -> (d, H*dk) = (d, d)
        return dict(
            wq=nrm((d, d), dtype=wdt), wk=nrm((d, d), dtype=wdt),
            wv=nrm((d, d), dtype=wdt), wo=nrm((d, d), dtype=wdt),
            bo=jnp.zeros((d,), jnp.float32),
        )

    def ffn_params():
        return dict(
            w1=nrm((d, e), dtype=wdt), b1=jnp.zeros((e,), jnp.float32),
            w2=nrm((e, d), dtype=wdt), b2=jnp.zeros((d,), jnp.float32),
        )

    def enc_block():
        return dict(
            mha=mha_params(), ffn=ffn_params(),
            ln1_g=jnp.ones((d,), jnp.float32), ln1_b=jnp.zeros((d,), jnp.float32),
            ln2_g=jnp.ones((d,), jnp.float32), ln2_b=jnp.zeros((d,), jnp.float32),
        )

    def dec_block():
        return dict(
            mha_self=mha_params(), mha_cross=mha_params(), ffn=ffn_params(),
            ln1_g=jnp.ones((d,), jnp.float32), ln1_b=jnp.zeros((d,), jnp.float32),
            ln2_g=jnp.ones((d,), jnp.float32), ln2_b=jnp.zeros((d,), jnp.float32),
            ln3_g=jnp.ones((d,), jnp.float32), ln3_b=jnp.zeros((d,), jnp.float32),
        )

    return dict(
        src_emb=nrm((cfg["vocab_src_size"], d), 1.0),
        tgt_emb=nrm((cfg["vocab_tgt_size"], d), 1.0),
        pos_enc=positional_encoding_table(cfg["max_seq_len"], d),
        encoder=[enc_block() for _ in range(cfg["num_blocks"])],
        decoder=[dec_block() for _ in range(cfg["num_blocks"])],
        lm_w=nrm((d, cfg["vocab_tgt_size"]), dtype=wdt),
        lm_b=jnp.zeros((cfg["vocab_tgt_size"],), jnp.float32),
    )


# ------------------------------------- main ------------------------------------


if __name__ == "__main__":
    # Small, lane-friendly demo config (feature / vocab dims are 128-multiples).
    cfg = dict(
        model_dim=128,
        expansion_dim=256,
        num_heads=4,
        num_blocks=2,
        dropout_rate=0.0,
        vocab_src_size=160,
        vocab_tgt_size=256,
        max_seq_len=32,
    )
    batch, enc_seq, dec_seq = 2, 16, 16

    root = jax.random.PRNGKey(0)
    k_params, k_enc, k_dec = jax.random.split(root, 3)
    params = init_params(k_params, cfg)

    encoder_tokens = jax.random.randint(
        k_enc, (batch, enc_seq), 0, cfg["vocab_src_size"], dtype=jnp.int32)
    decoder_tokens = jax.random.randint(
        k_dec, (batch, dec_seq), 0, cfg["vocab_tgt_size"], dtype=jnp.int32)

    fwd = jax.jit(functools.partial(transformer_forward, cfg=cfg))
    logits = fwd(params, encoder_tokens, decoder_tokens)
    logits = jax.block_until_ready(logits)

    assert logits.shape == (batch, dec_seq, cfg["vocab_tgt_size"])
    assert bool(jnp.all(jnp.isfinite(logits)))
    print("KERNEL_OK")
</pallas_src>

<mosaic_0001>
module attributes {stable_mosaic.version = 11 : i64} {
  func.func @_proj_heads_kernel(%arg0: i32, %arg1: i32, %arg2: memref<1x16x128xbf16, #tpu.memory_space<vmem>>, %arg3: memref<128x128xbf16, #tpu.memory_space<vmem>>, %arg4: memref<128x128xbf16, #tpu.memory_space<vmem>>, %arg5: memref<128x128xbf16, #tpu.memory_space<vmem>>, %arg6: memref<1x4x16x32xbf16, #tpu.memory_space<vmem>>, %arg7: memref<1x4x16x32xbf16, #tpu.memory_space<vmem>>, %arg8: memref<1x4x16x32xbf16, #tpu.memory_space<vmem>>) attributes {dimension_semantics = [#tpu.dimension_semantics<parallel>, #tpu.dimension_semantics<parallel>], iteration_bounds = array<i64: 2, 1>, scalar_prefetch = 0 : i64, scratch_operands = 0 : i64, tpu.core_type = #tpu.core_type<tc>, window_params = [{transform_indices = @transform_0, window_bounds = array<i64: 1, 16, 128>}, {pipeline_mode = #tpu.pipeline_mode<synchronous>, transform_indices = @transform_1, window_bounds = array<i64: 128, 128>}, {pipeline_mode = #tpu.pipeline_mode<synchronous>, transform_indices = @transform_2, window_bounds = array<i64: 128, 128>}, {pipeline_mode = #tpu.pipeline_mode<synchronous>, transform_indices = @transform_3, window_bounds = array<i64: 128, 128>}, {transform_indices = @transform_4, window_bounds = array<i64: 1, 4, 16, 32>}, {transform_indices = @transform_5, window_bounds = array<i64: 1, 4, 16, 32>}, {transform_indices = @transform_6, window_bounds = array<i64: 1, 4, 16, 32>}]} {
    %c0 = arith.constant 0 : index
    %c0_0 = arith.constant 0 : index
    %c0_1 = arith.constant 0 : index
    %0 = vector.load %arg2[%c0, %c0_0, %c0_1] : memref<1x16x128xbf16, #tpu.memory_space<vmem>>, vector<1x16x128xbf16>
    %1 = vector.shape_cast %0 : vector<1x16x128xbf16> to vector<16x128xbf16>
    %c0_2 = arith.constant 0 : index
    %c0_3 = arith.constant 0 : index
    %2 = vector.load %arg3[%c0_2, %c0_3] : memref<128x128xbf16, #tpu.memory_space<vmem>>, vector<128x128xbf16>
    %cst = arith.constant dense<0.000000e+00> : vector<16x128xf32>
    %3 = tpu.matmul %1, %2, %cst {dimension_numbers = #tpu.dot_dimension_numbers<[1], [0], [0], [1], [0, 0, 1, 1], [], []>} : vector<16x128xbf16>, vector<128x128xbf16>, vector<16x128xf32> -> vector<16x128xf32>
    %cst_4 = arith.constant 0.176776692 : f32
    %4 = vector.broadcast %cst_4 : f32 to vector<16x128xf32>
    %5 = arith.mulf %3, %4 : vector<16x128xf32>
    %6 = vector.shape_cast %5 : vector<16x128xf32> to vector<16x4x32xf32>
    %7 = tpu.transpose %6, [1, 0, 2] : vector<16x4x32xf32> -> vector<4x16x32xf32>
    %8 = arith.truncf %7 : vector<4x16x32xf32> to vector<4x16x32xbf16>
    %c0_5 = arith.constant 0 : index
    %c0_6 = arith.constant 0 : index
    %c0_7 = arith.constant 0 : index
    %c0_8 = arith.constant 0 : index
    %9 = vector.load %arg6[%c0_5, %c0_6, %c0_7, %c0_8] : memref<1x4x16x32xbf16, #tpu.memory_space<vmem>>, vector<1x4x16x32xbf16>
    %10 = vector.shape_cast %9 : vector<1x4x16x32xbf16> to vector<4x16x32xbf16>
    %11 = vector.shape_cast %8 : vector<4x16x32xbf16> to vector<1x4x16x32xbf16>
    tpu.vector_store %arg6[%c0_5, %c0_6, %c0_7, %c0_8], %11 {strides = array<i32>} : memref<1x4x16x32xbf16, #tpu.memory_space<vmem>>, vector<1x4x16x32xbf16>,
    %c0_9 = arith.constant 0 : index
    %c0_10 = arith.constant 0 : index
    %12 = vector.load %arg4[%c0_9, %c0_10] : memref<128x128xbf16, #tpu.memory_space<vmem>>, vector<128x128xbf16>
    %cst_11 = arith.constant dense<0.000000e+00> : vector<16x128xf32>
    %13 = tpu.matmul %1, %12, %cst_11 {dimension_numbers = #tpu.dot_dimension_numbers<[1], [0], [0], [1], [0, 0, 1, 1], [], []>} : vector<16x128xbf16>, vector<128x128xbf16>, vector<16x128xf32> -> vector<16x128xf32>
    %14 = vector.shape_cast %13 : vector<16x128xf32> to vector<16x4x32xf32>
    %15 = tpu.transpose %14, [1, 0, 2] : vector<16x4x32xf32> -> vector<4x16x32xf32>
    %16 = arith.truncf %15 : vector<4x16x32xf32> to vector<4x16x32xbf16>
    %c0_12 = arith.constant 0 : index
    %c0_13 = arith.constant 0 : index
    %c0_14 = arith.constant 0 : index
    %c0_15 = arith.constant 0 : index
    %17 = vector.load %arg7[%c0_12, %c0_13, %c0_14, %c0_15] : memref<1x4x16x32xbf16, #tpu.memory_space<vmem>>, vector<1x4x16x32xbf16>
    %18 = vector.shape_cast %17 : vector<1x4x16x32xbf16> to vector<4x16x32xbf16>
    %19 = vector.shape_cast %16 : vector<4x16x32xbf16> to vector<1x4x16x32xbf16>
    tpu.vector_store %arg7[%c0_12, %c0_13, %c0_14, %c0_15], %19 {strides = array<i32>} : memref<1x4x16x32xbf16, #tpu.memory_space<vmem>>, vector<1x4x16x32xbf16>,
    %c0_16 = arith.constant 0 : index
    %c0_17 = arith.constant 0 : index
    %20 = vector.load %arg5[%c0_16, %c0_17] : memref<128x128xbf16, #tpu.memory_space<vmem>>, vector<128x128xbf16>
    %cst_18 = arith.constant dense<0.000000e+00> : vector<16x128xf32>
    %21 = tpu.matmul %1, %20, %cst_18 {dimension_numbers = #tpu.dot_dimension_numbers<[1], [0], [0], [1], [0, 0, 1, 1], [], []>} : vector<16x128xbf16>, vector<128x128xbf16>, vector<16x128xf32> -> vector<16x128xf32>
    %22 = vector.shape_cast %21 : vector<16x128xf32> to vector<16x4x32xf32>
    %23 = tpu.transpose %22, [1, 0, 2] : vector<16x4x32xf32> -> vector<4x16x32xf32>
    %24 = arith.truncf %23 : vector<4x16x32xf32> to vector<4x16x32xbf16>
    %c0_19 = arith.constant 0 : index
    %c0_20 = arith.constant 0 : index
    %c0_21 = arith.constant 0 : index
    %c0_22 = arith.constant 0 : index
    %25 = vector.load %arg8[%c0_19, %c0_20, %c0_21, %c0_22] : memref<1x4x16x32xbf16, #tpu.memory_space<vmem>>, vector<1x4x16x32xbf16>
    %26 = vector.shape_cast %25 : vector<1x4x16x32xbf16> to vector<4x16x32xbf16>
    %27 = vector.shape_cast %24 : vector<4x16x32xbf16> to vector<1x4x16x32xbf16>
    tpu.vector_store %arg8[%c0_19, %c0_20, %c0_21, %c0_22], %27 {strides = array<i32>} : memref<1x4x16x32xbf16, #tpu.memory_space<vmem>>, vector<1x4x16x32xbf16>,
    return
  }
  func.func @transform_0(%arg0: i32, %arg1: i32) -> (i32, i32, i32) {
    %c0_i32 = arith.constant 0 : i32
    %c0_i32_0 = arith.constant 0 : i32
    return %arg0, %arg1, %c0_i32 : i32, i32, i32
  }
  func.func @transform_1(%arg0: i32, %arg1: i32) -> (i32, i32) {
    %c0_i32 = arith.constant 0 : i32
    %c0_i32_0 = arith.constant 0 : i32
    %c0_i32_1 = arith.constant 0 : i32
    return %c0_i32, %c0_i32_0 : i32, i32
  }
  func.func @transform_2(%arg0: i32, %arg1: i32) -> (i32, i32) {
    %c0_i32 = arith.constant 0 : i32
    %c0_i32_0 = arith.constant 0 : i32
    %c0_i32_1 = arith.constant 0 : i32
    return %c0_i32, %c0_i32_0 : i32, i32
  }
  func.func @transform_3(%arg0: i32, %arg1: i32) -> (i32, i32) {
    %c0_i32 = arith.constant 0 : i32
    %c0_i32_0 = arith.constant 0 : i32
    %c0_i32_1 = arith.constant 0 : i32
    return %c0_i32, %c0_i32_0 : i32, i32
  }
  func.func @transform_4(%arg0: i32, %arg1: i32) -> (i32, i32, i32, i32) {
    %c0_i32 = arith.constant 0 : i32
    %c0_i32_0 = arith.constant 0 : i32
    %c0_i32_1 = arith.constant 0 : i32
    return %arg0, %c0_i32, %arg1, %c0_i32_0 : i32, i32, i32, i32
  }
  func.func @transform_5(%arg0: i32, %arg1: i32) -> (i32, i32, i32, i32) {
    %c0_i32 = arith.constant 0 : i32
    %c0_i32_0 = arith.constant 0 : i32
    %c0_i32_1 = arith.constant 0 : i32
    return %arg0, %c0_i32, %arg1, %c0_i32_0 : i32, i32, i32, i32
  }
  func.func @transform_6(%arg0: i32, %arg1: i32) -> (i32, i32, i32, i32) {
    %c0_i32 = arith.constant 0 : i32
    %c0_i32_0 = arith.constant 0 : i32
    %c0_i32_1 = arith.constant 0 : i32
    return %arg0, %c0_i32, %arg1, %c0_i32_0 : i32, i32, i32, i32
  }
}

module attributes {stable_mosaic.version = 11 : i64} {
  func.func @_proj_heads_kernel(%arg0: i32, %arg1: i32, %arg2: memref<1x16x128xbf16, #tpu.memory_space<vmem>>, %arg3: memref<128x128xbf16, #tpu.memory_space<vmem>>, %arg4: memref<1x4x16x32xbf16, #tpu.memory_space<vmem>>) attributes {dimension_semantics = [#tpu.dimension_semantics<parallel>, #tpu.dimension_semantics<parallel>], iteration_bounds = array<i64: 2, 1>, scalar_prefetch = 0 : i64, scratch_operands = 0 : i64, tpu.core_type = #tpu.core_type<tc>, window_params = [{transform_indices = @transform_0, window_bounds = array<i64: 1, 16, 128>}, {pipeline_mode = #tpu.pipeline_mode<synchronous>, transform_indices = @transform_1, window_bounds = array<i64: 128, 128>}, {transform_indices = @transform_2, window_bounds = array<i64: 1, 4, 16, 32>}]} {
    %c0 = arith.constant 0 : index
    %c0_0 = arith.constant 0 : index
    %c0_1 = arith.constant 0 : index
    %0 = vector.load %arg2[%c0, %c0_0, %c0_1] : memref<1x16x128xbf16, #tpu.memory_space<vmem>>, vector<1x16x128xbf16>
    %1 = vector.shape_cast %0 : vector<1x16x128xbf16> to vector<16x128xbf16>
    %c0_2 = arith.constant 0 : index
    %c0_3 = arith.constant 0 : index
    %2 = vector.load %arg3[%c0_2, %c0_3] : memref<128x128xbf16, #tpu.memory_space<vmem>>, vector<128x128xbf16>
    %cst = arith.constant dense<0.000000e+00> : vector<16x128xf32>
    %3 = tpu.matmul %1, %2, %cst {dimension_numbers = #tpu.dot_dimension_numbers<[1], [0], [0], [1], [0, 0, 1, 1], [], []>} : vector<16x128xbf16>, vector<128x128xbf16>, vector<16x128xf32> -> vector<16x128xf32>
    %cst_4 = arith.constant 0.176776692 : f32
    %4 = vector.broadcast %cst_4 : f32 to vector<16x128xf32>
    %5 = arith.mulf %3, %4 : vector<16x128xf32>
    %6 = vector.shape_cast %5 : vector<16x128xf32> to vector<16x4x32xf32>
    %7 = tpu.transpose %6, [1, 0, 2] : vector<16x4x32xf32> -> vector<4x16x32xf32>
    %8 = arith.truncf %7 : vector<4x16x32xf32> to vector<4x16x32xbf16>
    %c0_5 = arith.constant 0 : index
    %c0_6 = arith.constant 0 : index
    %c0_7 = arith.constant 0 : index
    %c0_8 = arith.constant 0 : index
    %9 = vector.load %arg4[%c0_5, %c0_6, %c0_7, %c0_8] : memref<1x4x16x32xbf16, #tpu.memory_space<vmem>>, vector<1x4x16x32xbf16>
    %10 = vector.shape_cast %9 : vector<1x4x16x32xbf16> to vector<4x16x32xbf16>
    %11 = vector.shape_cast %8 : vector<4x16x32xbf16> to vector<1x4x16x32xbf16>
    tpu.vector_store %arg4[%c0_5, %c0_6, %c0_7, %c0_8], %11 {strides = array<i32>} : memref<1x4x16x32xbf16, #tpu.memory_space<vmem>>, vector<1x4x16x32xbf16>,
    return
  }
  func.func @transform_0(%arg0: i32, %arg1: i32) -> (i32, i32, i32) {
    %c0_i32 = arith.constant 0 : i32
    %c0_i32_0 = arith.constant 0 : i32
    return %arg0, %arg1, %c0_i32 : i32, i32, i32
  }
  func.func @transform_1(%arg0: i32, %arg1: i32) -> (i32, i32) {
    %c0_i32 = arith.constant 0 : i32
    %c0_i32_0 = arith.constant 0 : i32
    %c0_i32_1 = arith.constant 0 : i32
    return %c0_i32, %c0_i32_0 : i32, i32
  }
  func.func @transform_2(%arg0: i32, %arg1: i32) -> (i32, i32, i32, i32) {
    %c0_i32 = arith.constant 0 : i32
    %c0_i32_0 = arith.constant 0 : i32
    %c0_i32_1 = arith.constant 0 : i32
    return %arg0, %c0_i32, %arg1, %c0_i32_0 : i32, i32, i32, i32
  }
}

module attributes {stable_mosaic.version = 11 : i64} {
  func.func @_flash_mha_ln_kernel(%arg0: i32, %arg1: i32, %arg2: i32, %arg3: memref<1x16x128xbf16, #tpu.memory_space<vmem>>, %arg4: memref<1x4x16x32xbf16, #tpu.memory_space<vmem>>, %arg5: memref<1x4x16x32xbf16, #tpu.memory_space<vmem>>, %arg6: memref<1x4x16x32xbf16, #tpu.memory_space<vmem>>, %arg7: memref<128x128xbf16, #tpu.memory_space<vmem>>, %arg8: memref<1x128xf32, #tpu.memory_space<vmem>>, %arg9: memref<1x128xf32, #tpu.memory_space<vmem>>, %arg10: memref<1x128xf32, #tpu.memory_space<vmem>>, %arg11: memref<1x16x128xbf16, #tpu.memory_space<vmem>>, %arg12: memref<4x16x1xf32, #tpu.memory_space<vmem>>, %arg13: memref<4x16x1xf32, #tpu.memory_space<vmem>>, %arg14: memref<4x16x32xf32, #tpu.memory_space<vmem>>) attributes {dimension_semantics = [#tpu.dimension_semantics<parallel>, #tpu.dimension_semantics<parallel>, #tpu.dimension_semantics<arbitrary>], iteration_bounds = array<i64: 2, 1, 1>, scalar_prefetch = 0 : i64, scratch_operands = 3 : i64, tpu.core_type = #tpu.core_type<tc>, window_params = [{transform_indices = @transform_0, window_bounds = array<i64: 1, 16, 128>}, {transform_indices = @transform_1, window_bounds = array<i64: 1, 4, 16, 32>}, {transform_indices = @transform_2, window_bounds = array<i64: 1, 4, 16, 32>}, {transform_indices = @transform_3, window_bounds = array<i64: 1, 4, 16, 32>}, {pipeline_mode = #tpu.pipeline_mode<synchronous>, transform_indices = @transform_4, window_bounds = array<i64: 128, 128>}, {pipeline_mode = #tpu.pipeline_mode<synchronous>, transform_indices = @transform_5, window_bounds = array<i64: 1, 128>}, {pipeline_mode = #tpu.pipeline_mode<synchronous>, transform_indices = @transform_6, window_bounds = array<i64: 1, 128>}, {pipeline_mode = #tpu.pipeline_mode<synchronous>, transform_indices = @transform_7, window_bounds = array<i64: 1, 128>}, {transform_indices = @transform_8, window_bounds = array<i64: 1, 16, 128>}]} {
    %c0_i32 = arith.constant 0 : i32
    %0 = arith.cmpi eq, %arg2, %c0_i32 : i32
    %1 = arith.extui %0 : i1 to i32
    %c0_i32_0 = arith.constant 0 : i32
    %2 = arith.cmpi ne, %1, %c0_i32_0 : i32
    scf.if %2 {
      %cst_37 = arith.constant 0xFF800000 : f32
      %50 = vector.broadcast %cst_37 : f32 to vector<4x16x1xf32>
      %c0_38 = arith.constant 0 : index
      %c0_39 = arith.constant 0 : index
      %c0_40 = arith.constant 0 : index
      %51 = vector.load %arg12[%c0_38, %c0_39, %c0_40] : memref<4x16x1xf32, #tpu.memory_space<vmem>>, vector<4x16x1xf32>
      tpu.vector_store %arg12[%c0_38, %c0_39, %c0_40], %50 {strides = array<i32>} : memref<4x16x1xf32, #tpu.memory_space<vmem>>, vector<4x16x1xf32>,
      %cst_41 = arith.constant 0.000000e+00 : f32
      %52 = vector.broadcast %cst_41 : f32 to vector<4x16x1xf32>
      %c0_42 = arith.constant 0 : index
      %c0_43 = arith.constant 0 : index
      %c0_44 = arith.constant 0 : index
      %53 = vector.load %arg13[%c0_42, %c0_43, %c0_44] : memref<4x16x1xf32, #tpu.memory_space<vmem>>, vector<4x16x1xf32>
      tpu.vector_store %arg13[%c0_42, %c0_43, %c0_44], %52 {strides = array<i32>} : memref<4x16x1xf32, #tpu.memory_space<vmem>>, vector<4x16x1xf32>,
      %cst_45 = arith.constant 0.000000e+00 : f32
      %54 = vector.broadcast %cst_45 : f32 to vector<4x16x32xf32>
      %c0_46 = arith.constant 0 : index
      %c0_47 = arith.constant 0 : index
      %c0_48 = arith.constant 0 : index
      %55 = vector.load %arg14[%c0_46, %c0_47, %c0_48] : memref<4x16x32xf32, #tpu.memory_space<vmem>>, vector<4x16x32xf32>
      tpu.vector_store %arg14[%c0_46, %c0_47, %c0_48], %54 {strides = array<i32>} : memref<4x16x32xf32, #tpu.memory_space<vmem>>, vector<4x16x32xf32>,
    } else {
    }
    %c0 = arith.constant 0 : index
    %c0_1 = arith.constant 0 : index
    %c0_2 = arith.constant 0 : index
    %c0_3 = arith.constant 0 : index
    %3 = vector.load %arg4[%c0, %c0_1, %c0_2, %c0_3] : memref<1x4x16x32xbf16, #tpu.memory_space<vmem>>, vector<1x4x16x32xbf16>
    %4 = vector.shape_cast %3 : vector<1x4x16x32xbf16> to vector<4x16x32xbf16>
    %c0_4 = arith.constant 0 : index
    %c0_5 = arith.constant 0 : index
    %c0_6 = arith.constant 0 : index
    %c0_7 = arith.constant 0 : index
    %5 = vector.load %arg5[%c0_4, %c0_5, %c0_6, %c0_7] : memref<1x4x16x32xbf16, #tpu.memory_space<vmem>>, vector<1x4x16x32xbf16>
    %6 = vector.shape_cast %5 : vector<1x4x16x32xbf16> to vector<4x16x32xbf16>
    %c0_8 = arith.constant 0 : index
    %c0_9 = arith.constant 0 : index
    %c0_10 = arith.constant 0 : index
    %c0_11 = arith.constant 0 : index
    %7 = vector.load %arg6[%c0_8, %c0_9, %c0_10, %c0_11] : memref<1x4x16x32xbf16, #tpu.memory_space<vmem>>, vector<1x4x16x32xbf16>
    %8 = vector.shape_cast %7 : vector<1x4x16x32xbf16> to vector<4x16x32xbf16>
    "tpu.trace_start"() <{level = 10 : i32, message = "hqd,hkd->hqk"}> : () -> ()
    %cst = arith.constant dense<0.000000e+00> : vector<4x16x16xf32>
    %9 = tpu.matmul %4, %6, %cst {dimension_numbers = #tpu.dot_dimension_numbers<[2], [2], [1], [1], [0, 0, 0, 1, 1, 1], [0], [0]>} : vector<4x16x32xbf16>, vector<4x16x32xbf16>, vector<4x16x16xf32> -> vector<4x16x16xf32>
    "tpu.trace_stop"() : () -> ()
    %c16_i32 = arith.constant 16 : i32
    %10 = arith.muli %arg1, %c16_i32 : i32
    %c16_i32_12 = arith.constant 16 : i32
    %11 = arith.muli %arg2, %c16_i32_12 : i32
    %12 = tpu.iota {dimensions = array<i32: 0>} : vector<16x16xi32>
    %13 = vector.broadcast %10 : i32 to vector<16x16xi32>
    %14 = arith.addi %12, %13 : vector<16x16xi32>
    %15 = tpu.iota {dimensions = array<i32: 1>} : vector<16x16xi32>
    %16 = vector.broadcast %11 : i32 to vector<16x16xi32>
    %17 = arith.addi %15, %16 : vector<16x16xi32>
    %18 = arith.cmpi sgt, %17, %14 : vector<16x16xi32>
    %19 = vector.shape_cast %18 : vector<16x16xi1> to vector<1x16x16xi1>
    %cst_13 = arith.constant 0xFF800000 : f32
    %20 = vector.shape_cast %19 : vector<1x16x16xi1> to vector<1x16x16xi1>
    %21 = vector.broadcast %20 : vector<1x16x16xi1> to vector<4x16x16xi1>
    %22 = vector.broadcast %cst_13 : f32 to vector<4x16x16xf32>
    %23 = arith.select %21, %22, %9 : vector<4x16x16xi1>, vector<4x16x16xf32>
    %c0_14 = arith.constant 0 : index
    %c0_15 = arith.constant 0 : index
    %c0_16 = arith.constant 0 : index
    %24 = vector.load %arg12[%c0_14, %c0_15, %c0_16] : memref<4x16x1xf32, #tpu.memory_space<vmem>>, vector<4x16x1xf32>
    %cst_17 = arith.constant dense<0xFF800000> : vector<4x16xf32>
    %25 = vector.multi_reduction <maximumf>, %23, %cst_17 [2] : vector<4x16x16xf32> to vector<4x16xf32>
    %26 = vector.shape_cast %25 : vector<4x16xf32> to vector<4x16x1xf32>
    %27 = arith.maximumf %24, %26 : vector<4x16x1xf32>
    %28 = arith.subf %24, %27 : vector<4x16x1xf32>
    %29 = math.exp %28 : vector<4x16x1xf32>
    %30 = vector.broadcast %27 : vector<4x16x1xf32> to vector<4x16x16xf32>
    %31 = arith.subf %23, %30 : vector<4x16x16xf32>
    %32 = math.exp %31 : vector<4x16x16xf32>
    %c0_18 = arith.constant 0 : index
    %c0_19 = arith.constant 0 : index
    %c0_20 = arith.constant 0 : index
    %33 = vector.load %arg13[%c0_18, %c0_19, %c0_20] : memref<4x16x1xf32, #tpu.memory_space<vmem>>, vector<4x16x1xf32>
    %34 = arith.mulf %29, %33 : vector<4x16x1xf32>
    %cst_21 = arith.constant dense<0.000000e+00> : vector<4x16xf32>
    %35 = vector.multi_reduction <add>, %32, %cst_21 [2] : vector<4x16x16xf32> to vector<4x16xf32>
    %36 = vector.shape_cast %35 : vector<4x16xf32> to vector<4x16x1xf32>
    %37 = arith.addf %34, %36 : vector<4x16x1xf32>
    %c0_22 = arith.constant 0 : index
    %c0_23 = arith.constant 0 : index
    %c0_24 = arith.constant 0 : index
    %38 = vector.load %arg13[%c0_22, %c0_23, %c0_24] : memref<4x16x1xf32, #tpu.memory_space<vmem>>, vector<4x16x1xf32>
    tpu.vector_store %arg13[%c0_22, %c0_23, %c0_24], %37 {strides = array<i32>} : memref<4x16x1xf32, #tpu.memory_space<vmem>>, vector<4x16x1xf32>,
    %c0_25 = arith.constant 0 : index
    %c0_26 = arith.constant 0 : index
    %c0_27 = arith.constant 0 : index
    %39 = vector.load %arg14[%c0_25, %c0_26, %c0_27] : memref<4x16x32xf32, #tpu.memory_space<vmem>>, vector<4x16x32xf32>
    %40 = vector.broadcast %29 : vector<4x16x1xf32> to vector<4x16x32xf32>
    %41 = arith.mulf %40, %39 : vector<4x16x32xf32>
    %42 = arith.truncf %32 : vector<4x16x16xf32> to vector<4x16x16xbf16>
    "tpu.trace_start"() <{level = 10 : i32, message = "hqk,hkd->hqd"}> : () -> ()
    %cst_28 = arith.constant dense<0.000000e+00> : vector<4x16x32xf32>
    %43 = tpu.matmul %42, %8, %cst_28 {dimension_numbers = #tpu.dot_dimension_numbers<[2], [1], [1], [2], [0, 0, 0, 1, 1, 2], [0], [0]>} : vector<4x16x16xbf16>, vector<4x16x32xbf16>, vector<4x16x32xf32> -> vector<4x16x32xf32>
    "tpu.trace_stop"() : () -> ()
    %44 = arith.addf %41, %43 : vector<4x16x32xf32>
    %c0_29 = arith.constant 0 : index
    %c0_30 = arith.constant 0 : index
    %c0_31 = arith.constant 0 : index
    %45 = vector.load %arg14[%c0_29, %c0_30, %c0_31] : memref<4x16x32xf32, #tpu.memory_space<vmem>>, vector<4x16x32xf32>
    tpu.vector_store %arg14[%c0_29, %c0_30, %c0_31], %44 {strides = array<i32>} : memref<4x16x32xf32, #tpu.memory_space<vmem>>, vector<4x16x32xf32>,
    %c0_32 = arith.constant 0 : index
    %c0_33 = arith.constant 0 : index
    %c0_34 = arith.constant 0 : index
    %46 = vector.load %arg12[%c0_32, %c0_33, %c0_34] : memref<4x16x1xf32, #tpu.memory_space<vmem>>, vector<4x16x1xf32>
    tpu.vector_store %arg12[%c0_32, %c0_33, %c0_34], %27 {strides = array<i32>} : memref<4x16x1xf32, #tpu.memory_space<vmem>>, vector<4x16x1xf32>,
    %c0_i32_35 = arith.constant 0 : i32
    %47 = arith.cmpi eq, %arg2, %c0_i32_35 : i32
    %48 = arith.extui %47 : i1 to i32
    %c0_i32_36 = arith.constant 0 : i32
    %49 = arith.cmpi ne, %48, %c0_i32_36 : i32
    scf.if %49 {
      %c0_37 = arith.constant 0 : index
      %c0_38 = arith.constant 0 : index
      %c0_39 = arith.constant 0 : index
      %50 = vector.load %arg14[%c0_37, %c0_38, %c0_39] : memref<4x16x32xf32, #tpu.memory_space<vmem>>, vector<4x16x32xf32>
      %c0_40 = arith.constant 0 : index
      %c0_41 = arith.constant 0 : index
      %c0_42 = arith.constant 0 : index
      %51 = vector.load %arg13[%c0_40, %c0_41, %c0_42] : memref<4x16x1xf32, #tpu.memory_space<vmem>>, vector<4x16x1xf32>
      %52 = vector.broadcast %51 : vector<4x16x1xf32> to vector<4x16x32xf32>
      %53 = arith.divf %50, %52 : vector<4x16x32xf32>
      %54 = tpu.transpose %53, [1, 0, 2] : vector<4x16x32xf32> -> vector<16x4x32xf32>
      %55 = vector.shape_cast %54 : vector<16x4x32xf32> to vector<16x128xf32>
      %56 = arith.truncf %55 : vector<16x128xf32> to vector<16x128xbf16>
      %c0_43 = arith.constant 0 : index
      %c0_44 = arith.constant 0 : index
      %57 = vector.load %arg7[%c0_43, %c0_44] : memref<128x128xbf16, #tpu.memory_space<vmem>>, vector<128x128xbf16>
      %cst_45 = arith.constant dense<0.000000e+00> : vector<16x128xf32>
      %58 = tpu.matmul %56, %57, %cst_45 {dimension_numbers = #tpu.dot_dimension_numbers<[1], [0], [0], [1], [0, 0, 1, 1], [], []>} : vector<16x128xbf16>, vector<128x128xbf16>, vector<16x128xf32> -> vector<16x128xf32>
      %c0_46 = arith.constant 0 : index
      %c0_47 = arith.constant 0 : index
      %59 = vector.load %arg8[%c0_46, %c0_47] : memref<1x128xf32, #tpu.memory_space<vmem>>, vector<1x128xf32>
      %60 = vector.broadcast %59 : vector<1x128xf32> to vector<16x128xf32>
      %61 = arith.addf %58, %60 : vector<16x128xf32>
      %c0_48 = arith.constant 0 : index
      %c0_49 = arith.constant 0 : index
      %c0_50 = arith.constant 0 : index
      %62 = vector.load %arg3[%c0_48, %c0_49, %c0_50] : memref<1x16x128xbf16, #tpu.memory_space<vmem>>, vector<1x16x128xbf16>
      %63 = vector.shape_cast %62 : vector<1x16x128xbf16> to vector<16x128xbf16>
      %64 = arith.extf %63 : vector<16x128xbf16> to vector<16x128xf32>
      %65 = arith.addf %61, %64 : vector<16x128xf32>
      %cst_51 = arith.constant dense<0.000000e+00> : vector<16xf32>
      %66 = vector.multi_reduction <add>, %65, %cst_51 [1] : vector<16x128xf32> to vector<16xf32>
      %67 = vector.shape_cast %66 : vector<16xf32> to vector<16x1xf32>
      %cst_52 = arith.constant 1.280000e+02 : f32
      %68 = vector.broadcast %cst_52 : f32 to vector<16x1xf32>
      %69 = arith.divf %67, %68 : vector<16x1xf32>
      %70 = vector.broadcast %69 : vector<16x1xf32> to vector<16x128xf32>
      %71 = arith.subf %65, %70 : vector<16x128xf32>
      %72 = arith.mulf %71, %71 : vector<16x128xf32>
      %cst_53 = arith.constant dense<0.000000e+00> : vector<16xf32>
      %73 = vector.multi_reduction <add>, %72, %cst_53 [1] : vector<16x128xf32> to vector<16xf32>
      %74 = vector.shape_cast %73 : vector<16xf32> to vector<16x1xf32>
      %cst_54 = arith.constant 1.280000e+02 : f32
      %75 = vector.broadcast %cst_54 : f32 to vector<16x1xf32>
      %76 = arith.divf %74, %75 : vector<16x1xf32>
      %77 = vector.broadcast %69 : vector<16x1xf32> to vector<16x128xf32>
      %78 = arith.subf %65, %77 : vector<16x128xf32>
      %cst_55 = arith.constant 9.99999974E-6 : f32
      %79 = vector.broadcast %cst_55 : f32 to vector<16x1xf32>
      %80 = arith.addf %76, %79 : vector<16x1xf32>
      %81 = math.rsqrt %80 : vector<16x1xf32>
      %82 = vector.broadcast %81 : vector<16x1xf32> to vector<16x128xf32>
      %83 = arith.mulf %78, %82 : vector<16x128xf32>
      %c0_56 = arith.constant 0 : index
      %c0_57 = arith.constant 0 : index
      %84 = vector.load %arg9[%c0_56, %c0_57] : memref<1x128xf32, #tpu.memory_space<vmem>>, vector<1x128xf32>
      %85 = vector.broadcast %84 : vector<1x128xf32> to vector<16x128xf32>
      %86 = arith.mulf %83, %85 : vector<16x128xf32>
      %c0_58 = arith.constant 0 : index
      %c0_59 = arith.constant 0 : index
      %87 = vector.load %arg10[%c0_58, %c0_59] : memref<1x128xf32, #tpu.memory_space<vmem>>, vector<1x128xf32>
      %88 = vector.broadcast %87 : vector<1x128xf32> to vector<16x128xf32>
      %89 = arith.addf %86, %88 : vector<16x128xf32>
      %90 = arith.truncf %89 : vector<16x128xf32> to vector<16x128xbf16>
      %c0_60 = arith.constant 0 : index
      %c0_61 = arith.constant 0 : index
      %c0_62 = arith.constant 0 : index
      %91 = vector.load %arg11[%c0_60, %c0_61, %c0_62] : memref<1x16x128xbf16, #tpu.memory_space<vmem>>, vector<1x16x128xbf16>
      %92 = vector.shape_cast %91 : vector<1x16x128xbf16> to vector<16x128xbf16>
      %93 = vector.shape_cast %90 : vector<16x128xbf16> to vector<1x16x128xbf16>
      tpu.vector_store %arg11[%c0_60, %c0_61, %c0_62], %93 {strides = array<i32>} : memref<1x16x128xbf16, #tpu.memory_space<vmem>>, vector<1x16x128xbf16>,
    } else {
    }
    return
  }
  func.func @transform_0(%arg0: i32, %arg1: i32, %arg2: i32) -> (i32, i32, i32) {
    %c0_i32 = arith.constant 0 : i32
    %c0_i32_0 = arith.constant 0 : i32
    return %arg0, %arg1, %c0_i32 : i32, i32, i32
  }
  func.func @transform_1(%arg0: i32, %arg1: i32, %arg2: i32) -> (i32, i32, i32, i32) {
    %c0_i32 = arith.constant 0 : i32
    %c0_i32_0 = arith.constant 0 : i32
    %c0_i32_1 = arith.constant 0 : i32
    return %arg0, %c0_i32, %arg1, %c0_i32_0 : i32, i32, i32, i32
  }
  func.func @transform_2(%arg0: i32, %arg1: i32, %arg2: i32) -> (i32, i32, i32, i32) {
    %c0_i32 = arith.constant 0 : i32
    %c0_i32_0 = arith.constant 0 : i32
    %c0_i32_1 = arith.constant 0 : i32
    return %arg0, %c0_i32, %arg2, %c0_i32_0 : i32, i32, i32, i32
  }
  func.func @transform_3(%arg0: i32, %arg1: i32, %arg2: i32) -> (i32, i32, i32, i32) {
    %c0_i32 = arith.constant 0 : i32
    %c0_i32_0 = arith.constant 0 : i32
    %c0_i32_1 = arith.constant 0 : i32
    return %arg0, %c0_i32, %arg2, %c0_i32_0 : i32, i32, i32, i32
  }
  func.func @transform_4(%arg0: i32, %arg1: i32, %arg2: i32) -> (i32, i32) {
    %c0_i32 = arith.constant 0 : i32
    %c0_i32_0 = arith.constant 0 : i32
    %c0_i32_1 = arith.constant 0 : i32
    return %c0_i32, %c0_i32_0 : i32, i32
  }
  func.func @transform_5(%arg0: i32, %arg1: i32, %arg2: i32) -> (i32, i32) {
    %c0_i32 = arith.constant 0 : i32
    %c0_i32_0 = arith.constant 0 : i32
    %c0_i32_1 = arith.constant 0 : i32
    return %c0_i32, %c0_i32_0 : i32, i32
  }
  func.func @transform_6(%arg0: i32, %arg1: i32, %arg2: i32) -> (i32, i32) {
    %c0_i32 = arith.constant 0 : i32
    %c0_i32_0 = arith.constant 0 : i32
    %c0_i32_1 = arith.constant 0 : i32
    return %c0_i32, %c0_i32_0 : i32, i32
  }
  func.func @transform_7(%arg0: i32, %arg1: i32, %arg2: i32) -> (i32, i32) {
    %c0_i32 = arith.constant 0 : i32
    %c0_i32_0 = arith.constant 0 : i32
    %c0_i32_1 = arith.constant 0 : i32
    return %c0_i32, %c0_i32_0 : i32, i32
  }
  func.func @transform_8(%arg0: i32, %arg1: i32, %arg2: i32) -> (i32, i32, i32) {
    %c0_i32 = arith.constant 0 : i32
    %c0_i32_0 = arith.constant 0 : i32
    return %arg0, %arg1, %c0_i32 : i32, i32, i32
  }
}

module attributes {stable_mosaic.version = 11 : i64} {
  func.func @_flash_mha_ln_kernel(%arg0: i32, %arg1: i32, %arg2: i32, %arg3: memref<1x16x128xbf16, #tpu.memory_space<vmem>>, %arg4: memref<1x4x16x32xbf16, #tpu.memory_space<vmem>>, %arg5: memref<1x4x16x32xbf16, #tpu.memory_space<vmem>>, %arg6: memref<1x4x16x32xbf16, #tpu.memory_space<vmem>>, %arg7: memref<128x128xbf16, #tpu.memory_space<vmem>>, %arg8: memref<1x128xf32, #tpu.memory_space<vmem>>, %arg9: memref<1x128xf32, #tpu.memory_space<vmem>>, %arg10: memref<1x128xf32, #tpu.memory_space<vmem>>, %arg11: memref<1x16x128xbf16, #tpu.memory_space<vmem>>, %arg12: memref<4x16x1xf32, #tpu.memory_space<vmem>>, %arg13: memref<4x16x1xf32, #tpu.memory_space<vmem>>, %arg14: memref<4x16x32xf32, #tpu.memory_space<vmem>>) attributes {dimension_semantics = [#tpu.dimension_semantics<parallel>, #tpu.dimension_semantics<parallel>, #tpu.dimension_semantics<arbitrary>], iteration_bounds = array<i64: 2, 1, 1>, scalar_prefetch = 0 : i64, scratch_operands = 3 : i64, tpu.core_type = #tpu.core_type<tc>, window_params = [{transform_indices = @transform_0, window_bounds = array<i64: 1, 16, 128>}, {transform_indices = @transform_1, window_bounds = array<i64: 1, 4, 16, 32>}, {transform_indices = @transform_2, window_bounds = array<i64: 1, 4, 16, 32>}, {transform_indices = @transform_3, window_bounds = array<i64: 1, 4, 16, 32>}, {pipeline_mode = #tpu.pipeline_mode<synchronous>, transform_indices = @transform_4, window_bounds = array<i64: 128, 128>}, {pipeline_mode = #tpu.pipeline_mode<synchronous>, transform_indices = @transform_5, window_bounds = array<i64: 1, 128>}, {pipeline_mode = #tpu.pipeline_mode<synchronous>, transform_indices = @transform_6, window_bounds = array<i64: 1, 128>}, {pipeline_mode = #tpu.pipeline_mode<synchronous>, transform_indices = @transform_7, window_bounds = array<i64: 1, 128>}, {transform_indices = @transform_8, window_bounds = array<i64: 1, 16, 128>}]} {
    %c0_i32 = arith.constant 0 : i32
    %0 = arith.cmpi eq, %arg2, %c0_i32 : i32
    %1 = arith.extui %0 : i1 to i32
    %c0_i32_0 = arith.constant 0 : i32
    %2 = arith.cmpi ne, %1, %c0_i32_0 : i32
    scf.if %2 {
      %cst_35 = arith.constant 0xFF800000 : f32
      %36 = vector.broadcast %cst_35 : f32 to vector<4x16x1xf32>
      %c0_36 = arith.constant 0 : index
      %c0_37 = arith.constant 0 : index
      %c0_38 = arith.constant 0 : index
      %37 = vector.load %arg12[%c0_36, %c0_37, %c0_38] : memref<4x16x1xf32, #tpu.memory_space<vmem>>, vector<4x16x1xf32>
      tpu.vector_store %arg12[%c0_36, %c0_37, %c0_38], %36 {strides = array<i32>} : memref<4x16x1xf32, #tpu.memory_space<vmem>>, vector<4x16x1xf32>,
      %cst_39 = arith.constant 0.000000e+00 : f32
      %38 = vector.broadcast %cst_39 : f32 to vector<4x16x1xf32>
      %c0_40 = arith.constant 0 : index
      %c0_41 = arith.constant 0 : index
      %c0_42 = arith.constant 0 : index
      %39 = vector.load %arg13[%c0_40, %c0_41, %c0_42] : memref<4x16x1xf32, #tpu.memory_space<vmem>>, vector<4x16x1xf32>
      tpu.vector_store %arg13[%c0_40, %c0_41, %c0_42], %38 {strides = array<i32>} : memref<4x16x1xf32, #tpu.memory_space<vmem>>, vector<4x16x1xf32>,
      %cst_43 = arith.constant 0.000000e+00 : f32
      %40 = vector.broadcast %cst_43 : f32 to vector<4x16x32xf32>
      %c0_44 = arith.constant 0 : index
      %c0_45 = arith.constant 0 : index
      %c0_46 = arith.constant 0 : index
      %41 = vector.load %arg14[%c0_44, %c0_45, %c0_46] : memref<4x16x32xf32, #tpu.memory_space<vmem>>, vector<4x16x32xf32>
      tpu.vector_store %arg14[%c0_44, %c0_45, %c0_46], %40 {strides = array<i32>} : memref<4x16x32xf32, #tpu.memory_space<vmem>>, vector<4x16x32xf32>,
    } else {
    }
    %c0 = arith.constant 0 : index
    %c0_1 = arith.constant 0 : index
    %c0_2 = arith.constant 0 : index
    %c0_3 = arith.constant 0 : index
    %3 = vector.load %arg4[%c0, %c0_1, %c0_2, %c0_3] : memref<1x4x16x32xbf16, #tpu.memory_space<vmem>>, vector<1x4x16x32xbf16>
    %4 = vector.shape_cast %3 : vector<1x4x16x32xbf16> to vector<4x16x32xbf16>
    %c0_4 = arith.constant 0 : index
    %c0_5 = arith.constant 0 : index
    %c0_6 = arith.constant 0 : index
    %c0_7 = arith.constant 0 : index
    %5 = vector.load %arg5[%c0_4, %c0_5, %c0_6, %c0_7] : memref<1x4x16x32xbf16, #tpu.memory_space<vmem>>, vector<1x4x16x32xbf16>
    %6 = vector.shape_cast %5 : vector<1x4x16x32xbf16> to vector<4x16x32xbf16>
    %c0_8 = arith.constant 0 : index
    %c0_9 = arith.constant 0 : index
    %c0_10 = arith.constant 0 : index
    %c0_11 = arith.constant 0 : index
    %7 = vector.load %arg6[%c0_8, %c0_9, %c0_10, %c0_11] : memref<1x4x16x32xbf16, #tpu.memory_space<vmem>>, vector<1x4x16x32xbf16>
    %8 = vector.shape_cast %7 : vector<1x4x16x32xbf16> to vector<4x16x32xbf16>
    "tpu.trace_start"() <{level = 10 : i32, message = "hqd,hkd->hqk"}> : () -> ()
    %cst = arith.constant dense<0.000000e+00> : vector<4x16x16xf32>
    %9 = tpu.matmul %4, %6, %cst {dimension_numbers = #tpu.dot_dimension_numbers<[2], [2], [1], [1], [0, 0, 0, 1, 1, 1], [0], [0]>} : vector<4x16x32xbf16>, vector<4x16x32xbf16>, vector<4x16x16xf32> -> vector<4x16x16xf32>
    "tpu.trace_stop"() : () -> ()
    %c0_12 = arith.constant 0 : index
    %c0_13 = arith.constant 0 : index
    %c0_14 = arith.constant 0 : index
    %10 = vector.load %arg12[%c0_12, %c0_13, %c0_14] : memref<4x16x1xf32, #tpu.memory_space<vmem>>, vector<4x16x1xf32>
    %cst_15 = arith.constant dense<0xFF800000> : vector<4x16xf32>
    %11 = vector.multi_reduction <maximumf>, %9, %cst_15 [2] : vector<4x16x16xf32> to vector<4x16xf32>
    %12 = vector.shape_cast %11 : vector<4x16xf32> to vector<4x16x1xf32>
    %13 = arith.maximumf %10, %12 : vector<4x16x1xf32>
    %14 = arith.subf %10, %13 : vector<4x16x1xf32>
    %15 = math.exp %14 : vector<4x16x1xf32>
    %16 = vector.broadcast %13 : vector<4x16x1xf32> to vector<4x16x16xf32>
    %17 = arith.subf %9, %16 : vector<4x16x16xf32>
    %18 = math.exp %17 : vector<4x16x16xf32>
    %c0_16 = arith.constant 0 : index
    %c0_17 = arith.constant 0 : index
    %c0_18 = arith.constant 0 : index
    %19 = vector.load %arg13[%c0_16, %c0_17, %c0_18] : memref<4x16x1xf32, #tpu.memory_space<vmem>>, vector<4x16x1xf32>
    %20 = arith.mulf %15, %19 : vector<4x16x1xf32>
    %cst_19 = arith.constant dense<0.000000e+00> : vector<4x16xf32>
    %21 = vector.multi_reduction <add>, %18, %cst_19 [2] : vector<4x16x16xf32> to vector<4x16xf32>
    %22 = vector.shape_cast %21 : vector<4x16xf32> to vector<4x16x1xf32>
    %23 = arith.addf %20, %22 : vector<4x16x1xf32>
    %c0_20 = arith.constant 0 : index
    %c0_21 = arith.constant 0 : index
    %c0_22 = arith.constant 0 : index
    %24 = vector.load %arg13[%c0_20, %c0_21, %c0_22] : memref<4x16x1xf32, #tpu.memory_space<vmem>>, vector<4x16x1xf32>
    tpu.vector_store %arg13[%c0_20, %c0_21, %c0_22], %23 {strides = array<i32>} : memref<4x16x1xf32, #tpu.memory_space<vmem>>, vector<4x16x1xf32>,
    %c0_23 = arith.constant 0 : index
    %c0_24 = arith.constant 0 : index
    %c0_25 = arith.constant 0 : index
    %25 = vector.load %arg14[%c0_23, %c0_24, %c0_25] : memref<4x16x32xf32, #tpu.memory_space<vmem>>, vector<4x16x32xf32>
    %26 = vector.broadcast %15 : vector<4x16x1xf32> to vector<4x16x32xf32>
    %27 = arith.mulf %26, %25 : vector<4x16x32xf32>
    %28 = arith.truncf %18 : vector<4x16x16xf32> to vector<4x16x16xbf16>
    "tpu.trace_start"() <{level = 10 : i32, message = "hqk,hkd->hqd"}> : () -> ()
    %cst_26 = arith.constant dense<0.000000e+00> : vector<4x16x32xf32>
    %29 = tpu.matmul %28, %8, %cst_26 {dimension_numbers = #tpu.dot_dimension_numbers<[2], [1], [1], [2], [0, 0, 0, 1, 1, 2], [0], [0]>} : vector<4x16x16xbf16>, vector<4x16x32xbf16>, vector<4x16x32xf32> -> vector<4x16x32xf32>
    "tpu.trace_stop"() : () -> ()
    %30 = arith.addf %27, %29 : vector<4x16x32xf32>
    %c0_27 = arith.constant 0 : index
    %c0_28 = arith.constant 0 : index
    %c0_29 = arith.constant 0 : index
    %31 = vector.load %arg14[%c0_27, %c0_28, %c0_29] : memref<4x16x32xf32, #tpu.memory_space<vmem>>, vector<4x16x32xf32>
    tpu.vector_store %arg14[%c0_27, %c0_28, %c0_29], %30 {strides = array<i32>} : memref<4x16x32xf32, #tpu.memory_space<vmem>>, vector<4x16x32xf32>,
    %c0_30 = arith.constant 0 : index
    %c0_31 = arith.constant 0 : index
    %c0_32 = arith.constant 0 : index
    %32 = vector.load %arg12[%c0_30, %c0_31, %c0_32] : memref<4x16x1xf32, #tpu.memory_space<vmem>>, vector<4x16x1xf32>
    tpu.vector_store %arg12[%c0_30, %c0_31, %c0_32], %13 {strides = array<i32>} : memref<4x16x1xf32, #tpu.memory_space<vmem>>, vector<4x16x1xf32>,
    %c0_i32_33 = arith.constant 0 : i32
    %33 = arith.cmpi eq, %arg2, %c0_i32_33 : i32
    %34 = arith.extui %33 : i1 to i32
    %c0_i32_34 = arith.constant 0 : i32
    %35 = arith.cmpi ne, %34, %c0_i32_34 : i32
    scf.if %35 {
      %c0_35 = arith.constant 0 : index
      %c0_36 = arith.constant 0 : index
      %c0_37 = arith.constant 0 : index
      %36 = vector.load %arg14[%c0_35, %c0_36, %c0_37] : memref<4x16x32xf32, #tpu.memory_space<vmem>>, vector<4x16x32xf32>
      %c0_38 = arith.constant 0 : index
      %c0_39 = arith.constant 0 : index
      %c0_40 = arith.constant 0 : index
      %37 = vector.load %arg13[%c0_38, %c0_39, %c0_40] : memref<4x16x1xf32, #tpu.memory_space<vmem>>, vector<4x16x1xf32>
      %38 = vector.broadcast %37 : vector<4x16x1xf32> to vector<4x16x32xf32>
      %39 = arith.divf %36, %38 : vector<4x16x32xf32>
      %40 = tpu.transpose %39, [1, 0, 2] : vector<4x16x32xf32> -> vector<16x4x32xf32>
      %41 = vector.shape_cast %40 : vector<16x4x32xf32> to vector<16x128xf32>
      %42 = arith.truncf %41 : vector<16x128xf32> to vector<16x128xbf16>
      %c0_41 = arith.constant 0 : index
      %c0_42 = arith.constant 0 : index
      %43 = vector.load %arg7[%c0_41, %c0_42] : memref<128x128xbf16, #tpu.memory_space<vmem>>, vector<128x128xbf16>
      %cst_43 = arith.constant dense<0.000000e+00> : vector<16x128xf32>
      %44 = tpu.matmul %42, %43, %cst_43 {dimension_numbers = #tpu.dot_dimension_numbers<[1], [0], [0], [1], [0, 0, 1, 1], [], []>} : vector<16x128xbf16>, vector<128x128xbf16>, vector<16x128xf32> -> vector<16x128xf32>
      %c0_44 = arith.constant 0 : index
      %c0_45 = arith.constant 0 : index
      %45 = vector.load %arg8[%c0_44, %c0_45] : memref<1x128xf32, #tpu.memory_space<vmem>>, vector<1x128xf32>
      %46 = vector.broadcast %45 : vector<1x128xf32> to vector<16x128xf32>
      %47 = arith.addf %44, %46 : vector<16x128xf32>
      %c0_46 = arith.constant 0 : index
      %c0_47 = arith.constant 0 : index
      %c0_48 = arith.constant 0 : index
      %48 = vector.load %arg3[%c0_46, %c0_47, %c0_48] : memref<1x16x128xbf16, #tpu.memory_space<vmem>>, vector<1x16x128xbf16>
      %49 = vector.shape_cast %48 : vector<1x16x128xbf16> to vector<16x128xbf16>
      %50 = arith.extf %49 : vector<16x128xbf16> to vector<16x128xf32>
      %51 = arith.addf %47, %50 : vector<16x128xf32>
      %cst_49 = arith.constant dense<0.000000e+00> : vector<16xf32>
      %52 = vector.multi_reduction <add>, %51, %cst_49 [1] : vector<16x128xf32> to vector<16xf32>
      %53 = vector.shape_cast %52 : vector<16xf32> to vector<16x1xf32>
      %cst_50 = arith.constant 1.280000e+02 : f32
      %54 = vector.broadcast %cst_50 : f32 to vector<16x1xf32>
      %55 = arith.divf %53, %54 : vector<16x1xf32>
      %56 = vector.broadcast %55 : vector<16x1xf32> to vector<16x128xf32>
      %57 = arith.subf %51, %56 : vector<16x128xf32>
      %58 = arith.mulf %57, %57 : vector<16x128xf32>
      %cst_51 = arith.constant dense<0.000000e+00> : vector<16xf32>
      %59 = vector.multi_reduction <add>, %58, %cst_51 [1] : vector<16x128xf32> to vector<16xf32>
      %60 = vector.shape_cast %59 : vector<16xf32> to vector<16x1xf32>
      %cst_52 = arith.constant 1.280000e+02 : f32
      %61 = vector.broadcast %cst_52 : f32 to vector<16x1xf32>
      %62 = arith.divf %60, %61 : vector<16x1xf32>
      %63 = vector.broadcast %55 : vector<16x1xf32> to vector<16x128xf32>
      %64 = arith.subf %51, %63 : vector<16x128xf32>
      %cst_53 = arith.constant 9.99999974E-6 : f32
      %65 = vector.broadcast %cst_53 : f32 to vector<16x1xf32>
      %66 = arith.addf %62, %65 : vector<16x1xf32>
      %67 = math.rsqrt %66 : vector<16x1xf32>
      %68 = vector.broadcast %67 : vector<16x1xf32> to vector<16x128xf32>
      %69 = arith.mulf %64, %68 : vector<16x128xf32>
      %c0_54 = arith.constant 0 : index
      %c0_55 = arith.constant 0 : index
      %70 = vector.load %arg9[%c0_54, %c0_55] : memref<1x128xf32, #tpu.memory_space<vmem>>, vector<1x128xf32>
      %71 = vector.broadcast %70 : vector<1x128xf32> to vector<16x128xf32>
      %72 = arith.mulf %69, %71 : vector<16x128xf32>
      %c0_56 = arith.constant 0 : index
      %c0_57 = arith.constant 0 : index
      %73 = vector.load %arg10[%c0_56, %c0_57] : memref<1x128xf32, #tpu.memory_space<vmem>>, vector<1x128xf32>
      %74 = vector.broadcast %73 : vector<1x128xf32> to vector<16x128xf32>
      %75 = arith.addf %72, %74 : vector<16x128xf32>
      %76 = arith.truncf %75 : vector<16x128xf32> to vector<16x128xbf16>
      %c0_58 = arith.constant 0 : index
      %c0_59 = arith.constant 0 : index
      %c0_60 = arith.constant 0 : index
      %77 = vector.load %arg11[%c0_58, %c0_59, %c0_60] : memref<1x16x128xbf16, #tpu.memory_space<vmem>>, vector<1x16x128xbf16>
      %78 = vector.shape_cast %77 : vector<1x16x128xbf16> to vector<16x128xbf16>
      %79 = vector.shape_cast %76 : vector<16x128xbf16> to vector<1x16x128xbf16>
      tpu.vector_store %arg11[%c0_58, %c0_59, %c0_60], %79 {strides = array<i32>} : memref<1x16x128xbf16, #tpu.memory_space<vmem>>, vector<1x16x128xbf16>,
    } else {
    }
    return
  }
  func.func @transform_0(%arg0: i32, %arg1: i32, %arg2: i32) -> (i32, i32, i32) {
    %c0_i32 = arith.constant 0 : i32
    %c0_i32_0 = arith.constant 0 : i32
    return %arg0, %arg1, %c0_i32 : i32, i32, i32
  }
  func.func @transform_1(%arg0: i32, %arg1: i32, %arg2: i32) -> (i32, i32, i32, i32) {
    %c0_i32 = arith.constant 0 : i32
    %c0_i32_0 = arith.constant 0 : i32
    %c0_i32_1 = arith.constant 0 : i32
    return %arg0, %c0_i32, %arg1, %c0_i32_0 : i32, i32, i32, i32
  }
  func.func @transform_2(%arg0: i32, %arg1: i32, %arg2: i32) -> (i32, i32, i32, i32) {
    %c0_i32 = arith.constant 0 : i32
    %c0_i32_0 = arith.constant 0 : i32
    %c0_i32_1 = arith.constant 0 : i32
    return %arg0, %c0_i32, %arg2, %c0_i32_0 : i32, i32, i32, i32
  }
  func.func @transform_3(%arg0: i32, %arg1: i32, %arg2: i32) -> (i32, i32, i32, i32) {
    %c0_i32 = arith.constant 0 : i32
    %c0_i32_0 = arith.constant 0 : i32
    %c0_i32_1 = arith.constant 0 : i32
    return %arg0, %c0_i32, %arg2, %c0_i32_0 : i32, i32, i32, i32
  }
  func.func @transform_4(%arg0: i32, %arg1: i32, %arg2: i32) -> (i32, i32) {
    %c0_i32 = arith.constant 0 : i32
    %c0_i32_0 = arith.constant 0 : i32
    %c0_i32_1 = arith.constant 0 : i32
    return %c0_i32, %c0_i32_0 : i32, i32
  }
  func.func @transform_5(%arg0: i32, %arg1: i32, %arg2: i32) -> (i32, i32) {
    %c0_i32 = arith.constant 0 : i32
    %c0_i32_0 = arith.constant 0 : i32
    %c0_i32_1 = arith.constant 0 : i32
    return %c0_i32, %c0_i32_0 : i32, i32
  }
  func.func @transform_6(%arg0: i32, %arg1: i32, %arg2: i32) -> (i32, i32) {
    %c0_i32 = arith.constant 0 : i32
    %c0_i32_0 = arith.constant 0 : i32
    %c0_i32_1 = arith.constant 0 : i32
    return %c0_i32, %c0_i32_0 : i32, i32
  }
  func.func @transform_7(%arg0: i32, %arg1: i32, %arg2: i32) -> (i32, i32) {
    %c0_i32 = arith.constant 0 : i32
    %c0_i32_0 = arith.constant 0 : i32
    %c0_i32_1 = arith.constant 0 : i32
    return %c0_i32, %c0_i32_0 : i32, i32
  }
  func.func @transform_8(%arg0: i32, %arg1: i32, %arg2: i32) -> (i32, i32, i32) {
    %c0_i32 = arith.constant 0 : i32
    %c0_i32_0 = arith.constant 0 : i32
    return %arg0, %arg1, %c0_i32 : i32, i32, i32
  }
}

module attributes {stable_mosaic.version = 11 : i64} {
  func.func @_ffn_ln_kernel(%arg0: i32, %arg1: memref<32x128xbf16, #tpu.memory_space<vmem>>, %arg2: memref<128x256xbf16, #tpu.memory_space<vmem>>, %arg3: memref<1x256xf32, #tpu.memory_space<vmem>>, %arg4: memref<256x128xbf16, #tpu.memory_space<vmem>>, %arg5: memref<1x128xf32, #tpu.memory_space<vmem>>, %arg6: memref<1x128xf32, #tpu.memory_space<vmem>>, %arg7: memref<1x128xf32, #tpu.memory_space<vmem>>, %arg8: memref<32x128xbf16, #tpu.memory_space<vmem>>) attributes {dimension_semantics = [#tpu.dimension_semantics<parallel>], iteration_bounds = array<i64: 1>, scalar_prefetch = 0 : i64, scratch_operands = 0 : i64, tpu.core_type = #tpu.core_type<tc>, window_params = [{transform_indices = @transform_0, window_bounds = array<i64: 32, 128>}, {pipeline_mode = #tpu.pipeline_mode<synchronous>, transform_indices = @transform_1, window_bounds = array<i64: 128, 256>}, {pipeline_mode = #tpu.pipeline_mode<synchronous>, transform_indices = @transform_2, window_bounds = array<i64: 1, 256>}, {pipeline_mode = #tpu.pipeline_mode<synchronous>, transform_indices = @transform_3, window_bounds = array<i64: 256, 128>}, {pipeline_mode = #tpu.pipeline_mode<synchronous>, transform_indices = @transform_4, window_bounds = array<i64: 1, 128>}, {pipeline_mode = #tpu.pipeline_mode<synchronous>, transform_indices = @transform_5, window_bounds = array<i64: 1, 128>}, {pipeline_mode = #tpu.pipeline_mode<synchronous>, transform_indices = @transform_6, window_bounds = array<i64: 1, 128>}, {transform_indices = @transform_7, window_bounds = array<i64: 32, 128>}]} {
    %c0 = arith.constant 0 : index
    %c0_0 = arith.constant 0 : index
    %0 = vector.load %arg1[%c0, %c0_0] : memref<32x128xbf16, #tpu.memory_space<vmem>>, vector<32x128xbf16>
    %c0_1 = arith.constant 0 : index
    %c0_2 = arith.constant 0 : index
    %1 = vector.load %arg2[%c0_1, %c0_2] : memref<128x256xbf16, #tpu.memory_space<vmem>>, vector<128x256xbf16>
    %cst = arith.constant dense<0.000000e+00> : vector<32x256xf32>
    %2 = tpu.matmul %0, %1, %cst {dimension_numbers = #tpu.dot_dimension_numbers<[1], [0], [0], [1], [0, 0, 1, 1], [], []>} : vector<32x128xbf16>, vector<128x256xbf16>, vector<32x256xf32> -> vector<32x256xf32>
    %c0_3 = arith.constant 0 : index
    %c0_4 = arith.constant 0 : index
    %3 = vector.load %arg3[%c0_3, %c0_4] : memref<1x256xf32, #tpu.memory_space<vmem>>, vector<1x256xf32>
    %4 = vector.broadcast %3 : vector<1x256xf32> to vector<32x256xf32>
    %5 = arith.addf %2, %4 : vector<32x256xf32>
    %cst_5 = arith.constant 0.000000e+00 : f32
    %6 = vector.broadcast %cst_5 : f32 to vector<32x256xf32>
    %7 = arith.maximumf %5, %6 : vector<32x256xf32>
    %8 = arith.truncf %7 : vector<32x256xf32> to vector<32x256xbf16>
    %c0_6 = arith.constant 0 : index
    %c0_7 = arith.constant 0 : index
    %9 = vector.load %arg4[%c0_6, %c0_7] : memref<256x128xbf16, #tpu.memory_space<vmem>>, vector<256x128xbf16>
    %cst_8 = arith.constant dense<0.000000e+00> : vector<32x128xf32>
    %10 = tpu.matmul %8, %9, %cst_8 {dimension_numbers = #tpu.dot_dimension_numbers<[1], [0], [0], [1], [0, 0, 1, 1], [], []>} : vector<32x256xbf16>, vector<256x128xbf16>, vector<32x128xf32> -> vector<32x128xf32>
    %c0_9 = arith.constant 0 : index
    %c0_10 = arith.constant 0 : index
    %11 = vector.load %arg5[%c0_9, %c0_10] : memref<1x128xf32, #tpu.memory_space<vmem>>, vector<1x128xf32>
    %12 = vector.broadcast %11 : vector<1x128xf32> to vector<32x128xf32>
    %13 = arith.addf %10, %12 : vector<32x128xf32>
    %14 = arith.extf %0 : vector<32x128xbf16> to vector<32x128xf32>
    %15 = arith.addf %13, %14 : vector<32x128xf32>
    %cst_11 = arith.constant dense<0.000000e+00> : vector<32xf32>
    %16 = vector.multi_reduction <add>, %15, %cst_11 [1] : vector<32x128xf32> to vector<32xf32>
    %17 = vector.shape_cast %16 : vector<32xf32> to vector<32x1xf32>
    %cst_12 = arith.constant 1.280000e+02 : f32
    %18 = vector.broadcast %cst_12 : f32 to vector<32x1xf32>
    %19 = arith.divf %17, %18 : vector<32x1xf32>
    %20 = vector.broadcast %19 : vector<32x1xf32> to vector<32x128xf32>
    %21 = arith.subf %15, %20 : vector<32x128xf32>
    %22 = arith.mulf %21, %21 : vector<32x128xf32>
    %cst_13 = arith.constant dense<0.000000e+00> : vector<32xf32>
    %23 = vector.multi_reduction <add>, %22, %cst_13 [1] : vector<32x128xf32> to vector<32xf32>
    %24 = vector.shape_cast %23 : vector<32xf32> to vector<32x1xf32>
    %cst_14 = arith.constant 1.280000e+02 : f32
    %25 = vector.broadcast %cst_14 : f32 to vector<32x1xf32>
    %26 = arith.divf %24, %25 : vector<32x1xf32>
    %27 = vector.broadcast %19 : vector<32x1xf32> to vector<32x128xf32>
    %28 = arith.subf %15, %27 : vector<32x128xf32>
    %cst_15 = arith.constant 9.99999974E-6 : f32
    %29 = vector.broadcast %cst_15 : f32 to vector<32x1xf32>
    %30 = arith.addf %26, %29 : vector<32x1xf32>
    %31 = math.rsqrt %30 : vector<32x1xf32>
    %32 = vector.broadcast %31 : vector<32x1xf32> to vector<32x128xf32>
    %33 = arith.mulf %28, %32 : vector<32x128xf32>
    %c0_16 = arith.constant 0 : index
    %c0_17 = arith.constant 0 : index
    %34 = vector.load %arg6[%c0_16, %c0_17] : memref<1x128xf32, #tpu.memory_space<vmem>>, vector<1x128xf32>
    %35 = vector.broadcast %34 : vector<1x128xf32> to vector<32x128xf32>
    %36 = arith.mulf %33, %35 : vector<32x128xf32>
    %c0_18 = arith.constant 0 : index
    %c0_19 = arith.constant 0 : index
    %37 = vector.load %arg7[%c0_18, %c0_19] : memref<1x128xf32, #tpu.memory_space<vmem>>, vector<1x128xf32>
    %38 = vector.broadcast %37 : vector<1x128xf32> to vector<32x128xf32>
    %39 = arith.addf %36, %38 : vector<32x128xf32>
    %40 = arith.truncf %39 : vector<32x128xf32> to vector<32x128xbf16>
    %c0_20 = arith.constant 0 : index
    %c0_21 = arith.constant 0 : index
    %41 = vector.load %arg8[%c0_20, %c0_21] : memref<32x128xbf16, #tpu.memory_space<vmem>>, vector<32x128xbf16>
    tpu.vector_store %arg8[%c0_20, %c0_21], %40 {strides = array<i32>} : memref<32x128xbf16, #tpu.memory_space<vmem>>, vector<32x128xbf16>,
    return
  }
  func.func @transform_0(%arg0: i32) -> (i32, i32) {
    %c0_i32 = arith.constant 0 : i32
    %c0_i32_0 = arith.constant 0 : i32
    return %arg0, %c0_i32 : i32, i32
  }
  func.func @transform_1(%arg0: i32) -> (i32, i32) {
    %c0_i32 = arith.constant 0 : i32
    %c0_i32_0 = arith.constant 0 : i32
    %c0_i32_1 = arith.constant 0 : i32
    return %c0_i32, %c0_i32_0 : i32, i32
  }
  func.func @transform_2(%arg0: i32) -> (i32, i32) {
    %c0_i32 = arith.constant 0 : i32
    %c0_i32_0 = arith.constant 0 : i32
    %c0_i32_1 = arith.constant 0 : i32
    return %c0_i32, %c0_i32_0 : i32, i32
  }
  func.func @transform_3(%arg0: i32) -> (i32, i32) {
    %c0_i32 = arith.constant 0 : i32
    %c0_i32_0 = arith.constant 0 : i32
    %c0_i32_1 = arith.constant 0 : i32
    return %c0_i32, %c0_i32_0 : i32, i32
  }
  func.func @transform_4(%arg0: i32) -> (i32, i32) {
    %c0_i32 = arith.constant 0 : i32
    %c0_i32_0 = arith.constant 0 : i32
    %c0_i32_1 = arith.constant 0 : i32
    return %c0_i32, %c0_i32_0 : i32, i32
  }
  func.func @transform_5(%arg0: i32) -> (i32, i32) {
    %c0_i32 = arith.constant 0 : i32
    %c0_i32_0 = arith.constant 0 : i32
    %c0_i32_1 = arith.constant 0 : i32
    return %c0_i32, %c0_i32_0 : i32, i32
  }
  func.func @transform_6(%arg0: i32) -> (i32, i32) {
    %c0_i32 = arith.constant 0 : i32
    %c0_i32_0 = arith.constant 0 : i32
    %c0_i32_1 = arith.constant 0 : i32
    return %c0_i32, %c0_i32_0 : i32, i32
  }
  func.func @transform_7(%arg0: i32) -> (i32, i32) {
    %c0_i32 = arith.constant 0 : i32
    %c0_i32_0 = arith.constant 0 : i32
    return %arg0, %c0_i32 : i32, i32
  }
}

module attributes {stable_mosaic.version = 11 : i64} {
  func.func @_proj_heads_kernel(%arg0: i32, %arg1: i32, %arg2: memref<1x16x128xbf16, #tpu.memory_space<vmem>>, %arg3: memref<128x128xbf16, #tpu.memory_space<vmem>>, %arg4: memref<128x128xbf16, #tpu.memory_space<vmem>>, %arg5: memref<1x4x16x32xbf16, #tpu.memory_space<vmem>>, %arg6: memref<1x4x16x32xbf16, #tpu.memory_space<vmem>>) attributes {dimension_semantics = [#tpu.dimension_semantics<parallel>, #tpu.dimension_semantics<parallel>], iteration_bounds = array<i64: 2, 1>, scalar_prefetch = 0 : i64, scratch_operands = 0 : i64, tpu.core_type = #tpu.core_type<tc>, window_params = [{transform_indices = @transform_0, window_bounds = array<i64: 1, 16, 128>}, {pipeline_mode = #tpu.pipeline_mode<synchronous>, transform_indices = @transform_1, window_bounds = array<i64: 128, 128>}, {pipeline_mode = #tpu.pipeline_mode<synchronous>, transform_indices = @transform_2, window_bounds = array<i64: 128, 128>}, {transform_indices = @transform_3, window_bounds = array<i64: 1, 4, 16, 32>}, {transform_indices = @transform_4, window_bounds = array<i64: 1, 4, 16, 32>}]} {
    %c0 = arith.constant 0 : index
    %c0_0 = arith.constant 0 : index
    %c0_1 = arith.constant 0 : index
    %0 = vector.load %arg2[%c0, %c0_0, %c0_1] : memref<1x16x128xbf16, #tpu.memory_space<vmem>>, vector<1x16x128xbf16>
    %1 = vector.shape_cast %0 : vector<1x16x128xbf16> to vector<16x128xbf16>
    %c0_2 = arith.constant 0 : index
    %c0_3 = arith.constant 0 : index
    %2 = vector.load %arg3[%c0_2, %c0_3] : memref<128x128xbf16, #tpu.memory_space<vmem>>, vector<128x128xbf16>
    %cst = arith.constant dense<0.000000e+00> : vector<16x128xf32>
    %3 = tpu.matmul %1, %2, %cst {dimension_numbers = #tpu.dot_dimension_numbers<[1], [0], [0], [1], [0, 0, 1, 1], [], []>} : vector<16x128xbf16>, vector<128x128xbf16>, vector<16x128xf32> -> vector<16x128xf32>
    %4 = vector.shape_cast %3 : vector<16x128xf32> to vector<16x4x32xf32>
    %5 = tpu.transpose %4, [1, 0, 2] : vector<16x4x32xf32> -> vector<4x16x32xf32>
    %6 = arith.truncf %5 : vector<4x16x32xf32> to vector<4x16x32xbf16>
    %c0_4 = arith.constant 0 : index
    %c0_5 = arith.constant 0 : index
    %c0_6 = arith.constant 0 : index
    %c0_7 = arith.constant 0 : index
    %7 = vector.load %arg5[%c0_4, %c0_5, %c0_6, %c0_7] : memref<1x4x16x32xbf16, #tpu.memory_space<vmem>>, vector<1x4x16x32xbf16>
    %8 = vector.shape_cast %7 : vector<1x4x16x32xbf16> to vector<4x16x32xbf16>
    %9 = vector.shape_cast %6 : vector<4x16x32xbf16> to vector<1x4x16x32xbf16>
    tpu.vector_store %arg5[%c0_4, %c0_5, %c0_6, %c0_7], %9 {strides = array<i32>} : memref<1x4x16x32xbf16, #tpu.memory_space<vmem>>, vector<1x4x16x32xbf16>,
    %c0_8 = arith.constant 0 : index
    %c0_9 = arith.constant 0 : index
    %10 = vector.load %arg4[%c0_8, %c0_9] : memref<128x128xbf16, #tpu.memory_space<vmem>>, vector<128x128xbf16>
    %cst_10 = arith.constant dense<0.000000e+00> : vector<16x128xf32>
    %11 = tpu.matmul %1, %10, %cst_10 {dimension_numbers = #tpu.dot_dimension_numbers<[1], [0], [0], [1], [0, 0, 1, 1], [], []>} : vector<16x128xbf16>, vector<128x128xbf16>, vector<16x128xf32> -> vector<16x128xf32>
    %12 = vector.shape_cast %11 : vector<16x128xf32> to vector<16x4x32xf32>
    %13 = tpu.transpose %12, [1, 0, 2] : vector<16x4x32xf32> -> vector<4x16x32xf32>
    %14 = arith.truncf %13 : vector<4x16x32xf32> to vector<4x16x32xbf16>
    %c0_11 = arith.constant 0 : index
    %c0_12 = arith.constant 0 : index
    %c0_13 = arith.constant 0 : index
    %c0_14 = arith.constant 0 : index
    %15 = vector.load %arg6[%c0_11, %c0_12, %c0_13, %c0_14] : memref<1x4x16x32xbf16, #tpu.memory_space<vmem>>, vector<1x4x16x32xbf16>
    %16 = vector.shape_cast %15 : vector<1x4x16x32xbf16> to vector<4x16x32xbf16>
    %17 = vector.shape_cast %14 : vector<4x16x32xbf16> to vector<1x4x16x32xbf16>
    tpu.vector_store %arg6[%c0_11, %c0_12, %c0_13, %c0_14], %17 {strides = array<i32>} : memref<1x4x16x32xbf16, #tpu.memory_space<vmem>>, vector<1x4x16x32xbf16>,
    return
  }
  func.func @transform_0(%arg0: i32, %arg1: i32) -> (i32, i32, i32) {
    %c0_i32 = arith.constant 0 : i32
    %c0_i32_0 = arith.constant 0 : i32
    return %arg0, %arg1, %c0_i32 : i32, i32, i32
  }
  func.func @transform_1(%arg0: i32, %arg1: i32) -> (i32, i32) {
    %c0_i32 = arith.constant 0 : i32
    %c0_i32_0 = arith.constant 0 : i32
    %c0_i32_1 = arith.constant 0 : i32
    return %c0_i32, %c0_i32_0 : i32, i32
  }
  func.func @transform_2(%arg0: i32, %arg1: i32) -> (i32, i32) {
    %c0_i32 = arith.constant 0 : i32
    %c0_i32_0 = arith.constant 0 : i32
    %c0_i32_1 = arith.constant 0 : i32
    return %c0_i32, %c0_i32_0 : i32, i32
  }
  func.func @transform_3(%arg0: i32, %arg1: i32) -> (i32, i32, i32, i32) {
    %c0_i32 = arith.constant 0 : i32
    %c0_i32_0 = arith.constant 0 : i32
    %c0_i32_1 = arith.constant 0 : i32
    return %arg0, %c0_i32, %arg1, %c0_i32_0 : i32, i32, i32, i32
  }
  func.func @transform_4(%arg0: i32, %arg1: i32) -> (i32, i32, i32, i32) {
    %c0_i32 = arith.constant 0 : i32
    %c0_i32_0 = arith.constant 0 : i32
    %c0_i32_1 = arith.constant 0 : i32
    return %arg0, %c0_i32, %arg1, %c0_i32_0 : i32, i32, i32, i32
  }
}

module attributes {stable_mosaic.version = 11 : i64} {
  func.func @_linear_kernel(%arg0: i32, %arg1: i32, %arg2: memref<32x128xbf16, #tpu.memory_space<vmem>>, %arg3: memref<128x256xbf16, #tpu.memory_space<vmem>>, %arg4: memref<1x256xf32, #tpu.memory_space<vmem>>, %arg5: memref<32x256xf32, #tpu.memory_space<vmem>>) attributes {dimension_semantics = [#tpu.dimension_semantics<parallel>, #tpu.dimension_semantics<parallel>], iteration_bounds = array<i64: 1, 1>, scalar_prefetch = 0 : i64, scratch_operands = 0 : i64, tpu.core_type = #tpu.core_type<tc>, window_params = [{transform_indices = @transform_0, window_bounds = array<i64: 32, 128>}, {transform_indices = @transform_1, window_bounds = array<i64: 128, 256>}, {transform_indices = @transform_2, window_bounds = array<i64: 1, 256>}, {transform_indices = @transform_3, window_bounds = array<i64: 32, 256>}]} {
    %c0 = arith.constant 0 : index
    %c0_0 = arith.constant 0 : index
    %0 = vector.load %arg2[%c0, %c0_0] : memref<32x128xbf16, #tpu.memory_space<vmem>>, vector<32x128xbf16>
    %c0_1 = arith.constant 0 : index
    %c0_2 = arith.constant 0 : index
    %1 = vector.load %arg3[%c0_1, %c0_2] : memref<128x256xbf16, #tpu.memory_space<vmem>>, vector<128x256xbf16>
    %cst = arith.constant dense<0.000000e+00> : vector<32x256xf32>
    %2 = tpu.matmul %0, %1, %cst {dimension_numbers = #tpu.dot_dimension_numbers<[1], [0], [0], [1], [0, 0, 1, 1], [], []>} : vector<32x128xbf16>, vector<128x256xbf16>, vector<32x256xf32> -> vector<32x256xf32>
    %c0_3 = arith.constant 0 : index
    %c0_4 = arith.constant 0 : index
    %3 = vector.load %arg4[%c0_3, %c0_4] : memref<1x256xf32, #tpu.memory_space<vmem>>, vector<1x256xf32>
    %4 = vector.broadcast %3 : vector<1x256xf32> to vector<32x256xf32>
    %5 = arith.addf %2, %4 : vector<32x256xf32>
    %c0_5 = arith.constant 0 : index
    %c0_6 = arith.constant 0 : index
    %6 = vector.load %arg5[%c0_5, %c0_6] : memref<32x256xf32, #tpu.memory_space<vmem>>, vector<32x256xf32>
    tpu.vector_store %arg5[%c0_5, %c0_6], %5 {strides = array<i32>} : memref<32x256xf32, #tpu.memory_space<vmem>>, vector<32x256xf32>,
    return
  }
  func.func @transform_0(%arg0: i32, %arg1: i32) -> (i32, i32) {
    %c0_i32 = arith.constant 0 : i32
    %c0_i32_0 = arith.constant 0 : i32
    return %arg0, %c0_i32 : i32, i32
  }
  func.func @transform_1(%arg0: i32, %arg1: i32) -> (i32, i32) {
    %c0_i32 = arith.constant 0 : i32
    %c0_i32_0 = arith.constant 0 : i32
    return %c0_i32, %arg1 : i32, i32
  }
  func.func @transform_2(%arg0: i32, %arg1: i32) -> (i32, i32) {
    %c0_i32 = arith.constant 0 : i32
    %c0_i32_0 = arith.constant 0 : i32
    return %c0_i32, %arg1 : i32, i32
  }
  func.func @transform_3(%arg0: i32, %arg1: i32) -> (i32, i32) {
    %c0_i32 = arith.constant 0 : i32
    return %arg0, %arg1 : i32, i32
  }
}

</mosaic_0001>

<llo_original>
// kernel: transformer_forward.27
$region0: #{transformer_forward.27}
  #allocation0 [shape = 'u32[]', space=smem, size = 0x4, offset = 0x4, fixed_abs, tag = 'smem constant byte address 0x4 - core index']
  #allocation1 [shape = 'u32[144,128]{1,0:T(1,128)}', space=vmem, size = 0x12000, scoped, tag = 'internal scratch']
  %s0 = inlined_call_operand.vmem [shape: bf16[2,16,128], index: 0, kind: input, shape index: {}]
  %s1 = inlined_call_operand.vmem [shape: bf16[128,128], index: 1, kind: input, shape index: {}]
  %s2 = inlined_call_operand.vmem [shape: bf16[2,4,16,32], index: 2, kind: output, shape index: {}]
  %s3 = sld [smem:[#allocation0]]
  $region41: #{transformer_forward.27} parent=0
    _
  %s5 = ssub.s32 1, %s3
  %s6 = scalar_select 0, %s5, %s3
  loop: start=0, step=1, limit=4
  $region2: #{transformer_forward.27} parent=0 // loop_pre_header
    _
  $region3: #{transformer_forward.27} parent=0 // loop_header
    %s8 = sphi 0, %s12
    %p9 = scmp.ge.s32.totalorder %s8, 4
    %s15 = sphi 0, %s27
    %s16 = sphi 0, %s23
    %s17 = sphi 0, %s15
    %s18 = sphi 0, %s16
    %s19 = sphi 0, %s17
    %s20 = sphi 0, %s18
    %s32 = sphi 0, %s34
    %s35 = sphi 0, %s32
    %s36 = sphi 0, %s35
    %s52 = sphi 0, %s36
    %s56 = sphi 0, %s56
    %s58 = sphi 0, %s56
    %s59 = sphi 0, %s58
    %s73 = sphi 0, %s59
    %s81 = sphi 0, %s83
    %s84 = sphi 0, %s81
    %s85 = sphi 0, %s84
    %s101 = sphi 0, %s85
  $region4: #{transformer_forward.27} parent=0 // loop_header_branch
    %11 = sbr.rel (%p9) target = $region8
  $region5: #{transformer_forward.27} parent=0 // loop_body
    %s13 = ssub.s32 %s8, 1
    %s14 = ssub.s32 %s8, 2
    %s21 = sadd.s32 1, %s16
    %p22 = scmp.ge.s32.totalorder %s21, 1
    %s23 = scalar_select %p22, 0, %s21
    %s24 = sadd.s32 1, %s15
    %s25 = scalar_select %p22, %s24, %s15
    %p26 = scmp.ge.s32.totalorder %s25, 2
    %s27 = scalar_select %p26, 0, %s25
    %s28 = ssub.s32 %s15, %s27
    %s29 = ssub.s32 %s16, %s23
    %s30 = sor.u32 %s28, %s29
    %p31 = scmp.eq.s32.totalorder %s30, 0
    %s33 = sadd.s32 %s32, 1
    %s34 = scalar_select %p31, %s32, %s33
    %p37 = pneg %p31
    %p38 = scmp.eq.s32.totalorder %s8, 1
    %p39 = por %p37, %p38
    %p40 = scmp.ne.s32.totalorder %s32, %s35
    %p41 = scmp.eq.s32.totalorder %s8, 0
    %p42 = por %p40, %p41
    %p43 = scmp.ne.s32.totalorder %s32, %s35
    %p44 = scmp.eq.s32.totalorder %s13, 1
    %p45 = por %p43, %p44
    %p46 = scmp.ne.s32.totalorder %s35, %s36
    %p47 = scmp.eq.s32.totalorder %s13, 0
    %p48 = por %p46, %p47
    %p49 = scmp.ne.s32.totalorder %s35, %s36
    %p50 = scmp.eq.s32.totalorder %s14, 1
    %p51 = por %p49, %p50
    %p53 = scmp.ne.s32.totalorder %s36, %s52
    %p54 = scmp.eq.s32.totalorder %s14, 0
    %p55 = por %p53, %p54
    %s57 = sadd.s32 %s56, 1
    %p60 = scmp.eq.s32.totalorder %s8, 1
    %p61 = scmp.ne.s32.totalorder %s56, %s58
    %p62 = scmp.eq.s32.totalorder %s8, 0
    %p63 = por %p61, %p62
    %p64 = scmp.ne.s32.totalorder %s56, %s58
    %p65 = scmp.eq.s32.totalorder %s13, 1
    %p66 = por %p64, %p65
    %p67 = scmp.ne.s32.totalorder %s58, %s59
    %p68 = scmp.eq.s32.totalorder %s13, 0
    %p69 = por %p67, %p68
    %p70 = scmp.ne.s32.totalorder %s58, %s59
    %p71 = scmp.eq.s32.totalorder %s14, 1
    %p72 = por %p70, %p71
    %p74 = scmp.ne.s32.totalorder %s59, %s73
    %p75 = scmp.eq.s32.totalorder %s14, 0
    %p76 = por %p74, %p75
    %s77 = ssub.s32 %s15, %s27
    %s78 = ssub.s32 %s16, %s23
    %s79 = sor.u32 %s77, %s78
    %p80 = scmp.eq.s32.totalorder %s79, 0
    %s82 = sadd.s32 %s81, 1
    %s83 = scalar_select %p80, %s81, %s82
    %p86 = pneg %p80
    %p87 = scmp.eq.s32.totalorder %s8, 1
    %p88 = por %p86, %p87
    %p89 = scmp.ne.s32.totalorder %s81, %s84
    %p90 = scmp.eq.s32.totalorder %s8, 0
    %p91 = por %p89, %p90
    %p92 = scmp.ne.s32.totalorder %s81, %s84
    %p93 = scmp.eq.s32.totalorder %s13, 1
    %p94 = por %p92, %p93
    %p95 = scmp.ne.s32.totalorder %s84, %s85
    %p96 = scmp.eq.s32.totalorder %s13, 0
    %p97 = por %p95, %p96
    %p98 = scmp.ne.s32.totalorder %s84, %s85
    %p99 = scmp.eq.s32.totalorder %s14, 1
    %p100 = por %p98, %p99
    %p102 = scmp.ne.s32.totalorder %s85, %s101
    %p103 = scmp.eq.s32.totalorder %s14, 0
    %p104 = por %p102, %p103
    %p105 = scmp.le.s32.totalorder 1, %s8
    %p106 = scmp.lt.s32.totalorder %s8, 3
    %p107 = pnand %p105, %p106
    %p108 = pneg %p107
    // Predicated region
    $region9: #{transformer_forward.27} parent=5 // pred_check
      _
    $region10: #{transformer_forward.27} parent=5 // pred_check_branch
      %110 = sbr.rel (%p107) target = $region12
    $region11: #{transformer_forward.27} parent=5 // pred_region
      %s111 = ssub.s32 %s8, 1
      // Predicated region
      $region13: #{transformer_forward.27} parent=11 // pred_check
        %p112 = pneg %p69
      $region14: #{transformer_forward.27} parent=11 // pred_check_branch
        %114 = sbr.rel (%p112) target = $region16
      $region15: #{transformer_forward.27} parent=11 // pred_region
        _
      $region16: #{transformer_forward.27} parent=11 // pred_fallthru
        _
    $region12: #{transformer_forward.27} parent=5 // pred_fallthru
      _
    %p115 = scmp.lt.s32.totalorder %s8, 2
    // Predicated region
    $region17: #{transformer_forward.27} parent=5 // pred_check
      %p116 = pneg %p115
    $region18: #{transformer_forward.27} parent=5 // pred_check_branch
      %118 = sbr.rel (%p116) target = $region20
    $region19: #{transformer_forward.27} parent=5 // pred_region
      // Predicated region
      $region21: #{transformer_forward.27} parent=19 // pred_check
        %p119 = pneg %p42
      $region22: #{transformer_forward.27} parent=19 // pred_check_branch
        %121 = sbr.rel (%p119) target = $region24
      $region23: #{transformer_forward.27} parent=19 // pred_region
        %s122 = smul.u32 2, %s16
        %p123 = scmp.lt.s32.totalorder %s15, 1
        %s124 = scalar_select %p123, %s15, 1
        %p125 = scmp.lt.s32.totalorder %s122, 1
        %s126 = scalar_select %p125, %s122, 1
        %s127 = smul.addr %s124, 2
        %s128 = sadd.s32 %s126, %s127
        %s129 = smul.addr %s128, 4
        %s130 = scalar_lea.vmem %s0, %s129
        %s131 = smul.u32 2, %s16
      $region24: #{transformer_forward.27} parent=19 // pred_fallthru
        _
    $region20: #{transformer_forward.27} parent=5 // pred_fallthru
      _
    %p132 = scmp.le.s32.totalorder 1, %s8
    %p133 = scmp.lt.s32.totalorder %s8, 3
    %p134 = pnand %p132, %p133
    %p135 = pneg %p134
    // Predicated region
    $region25: #{transformer_forward.27} parent=5 // pred_check
      _
    $region26: #{transformer_forward.27} parent=5 // pred_check_branch
      %137 = sbr.rel (%p134) target = $region28
    $region27: #{transformer_forward.27} parent=5 // pred_region
      %s138 = ssub.s32 %s8, 1
      %s139 = smul.u32 2, %s18
      %p140 = scmp.lt.s32.totalorder %s17, 1
      %s141 = scalar_select %p140, %s17, 1
      %p142 = scmp.lt.s32.totalorder %s139, 1
      %s143 = scalar_select %p142, %s139, 1
      %s144 = smul.addr %s141, 2
      %s145 = sadd.s32 %s143, %s144
      %s146 = smul.addr %s145, 4
      %s147 = scalar_lea.vmem %s0, %s146
      %p148 = pneg %p48
      %p149 = pneg %p45
      %p150 = pneg %p69
      %p151 = pneg %p66
      %p152 = pneg %p97
      %p153 = pneg %p94
      %s154 = smul.u32 2, %s18
      %p155 = scmp.lt.s32.totalorder %s17, 1
      %s156 = scalar_select %p155, %s17, 1
      %p157 = scmp.lt.s32.totalorder %s154, 1
      %s158 = scalar_select %p157, %s154, 1
      %s159 = smul.addr %s156, 8
      %s160 = sadd.s32 %s158, %s159
      %s161 = smul.addr %s160, 4
      %s162 = scalar_lea.vmem %s2, %s161
      %s163 = smul.u32 2, %s18
      %p164 = scmp.lt.s32.totalorder %s17, 1
      %s165 = scalar_select %p164, %s17, 1
      %p166 = scmp.lt.s32.totalorder %s163, 1
      %s167 = scalar_select %p166, %s163, 1
      %s168 = smul.addr %s165, 2
      %s169 = sadd.s32 %s167, %s168
      %s170 = smul.addr %s169, 4
      %s171 = scalar_lea.vmem %s0, %s170
      %s172 = smul.u32 2, %s18
      %s173 = smul.u32 2, %s18
      %p174 = scmp.lt.s32.totalorder %s17, 1
      %s175 = scalar_select %p174, %s17, 1
      %p176 = scmp.lt.s32.totalorder %s173, 1
      %s177 = scalar_select %p176, %s173, 1
      %s178 = smul.addr %s175, 8
      %s179 = sadd.s32 %s177, %s178
      %s180 = smul.addr %s179, 4
      %s181 = scalar_lea.vmem %s2, %s180
      %s182 = smul.u32 2, %s18
      %v184 = vld [vmem:[%s171] sm:$0xf]
      %v185 = vld [vmem:[%s171 + $0x4] sm:$0xf]
      %v186 = vld [vmem:[%s1] sm:$0xf]
      %v187 = vld [vmem:[%s1 + $0x4] sm:$0xf]
      %v188 = vld [vmem:[%s1 + $0x8] sm:$0xf]
      %v189 = vld [vmem:[%s1 + $0xc] sm:$0xf]
      %v190 = vld [vmem:[%s1 + $0x10] sm:$0xf]
      %v191 = vld [vmem:[%s1 + $0x14] sm:$0xf]
      %v192 = vld [vmem:[%s1 + $0x18] sm:$0xf]
      %v193 = vld [vmem:[%s1 + $0x1c] sm:$0xf]
      %v194 = vld [vmem:[%s1 + $0x20] sm:$0xf]
      %v195 = vld [vmem:[%s1 + $0x24] sm:$0xf]
      %v196 = vld [vmem:[%s1 + $0x28] sm:$0xf]
      %v197 = vld [vmem:[%s1 + $0x2c] sm:$0xf]
      %v198 = vld [vmem:[%s1 + $0x30] sm:$0xf]
      %v199 = vld [vmem:[%s1 + $0x34] sm:$0xf]
      %v200 = vld [vmem:[%s1 + $0x38] sm:$0xf]
      %v201 = vld [vmem:[%s1 + $0x3c] sm:$0xf]
      %v204 = vunpack.c.l.b16 %v184
      %v205 = vunpack.c.l.b16 %v185
      %v206 = vpack.c.b16 %v205, %v204
      %v224 = vunpack.c.l.b16 %v186
      %v225 = vunpack.c.l.b16 %v187
      %v226 = vunpack.c.l.b16 %v188
      %v227 = vunpack.c.l.b16 %v189
      %v228 = vunpack.c.l.b16 %v190
      %v229 = vunpack.c.l.b16 %v191
      %v230 = vunpack.c.l.b16 %v192
      %v231 = vunpack.c.l.b16 %v193
      %v232 = vunpack.c.l.b16 %v194
      %v233 = vunpack.c.l.b16 %v195
      %v234 = vunpack.c.l.b16 %v196
      %v235 = vunpack.c.l.b16 %v197
      %v236 = vunpack.c.l.b16 %v198
      %v237 = vunpack.c.l.b16 %v199
      %v238 = vunpack.c.l.b16 %v200
      %v239 = vunpack.c.l.b16 %v201
      %v240 = vpack.c.b16 %v225, %v224
      %v241 = vpack.c.b16 %v227, %v226
      %v242 = vpack.c.b16 %v229, %v228
      %v243 = vpack.c.b16 %v231, %v230
      %v244 = vpack.c.b16 %v233, %v232
      %v245 = vpack.c.b16 %v235, %v234
      %v246 = vpack.c.b16 %v237, %v236
      %v247 = vpack.c.b16 %v239, %v238
      %256 = vmatprep.subr.bf16.mxu0 0
      %257 = vmatpush1.bf16.msra.mxu0 %v240
      %258 = vmatprep.subr.bf16.mxu0 0
      %259 = vmatpush1.bf16.msra.mxu0 %v241
      %260 = vmatprep.subr.bf16.mxu0 0
      %261 = vmatpush1.bf16.msra.mxu0 %v242
      %262 = vmatprep.subr.bf16.mxu0 0
      %263 = vmatpush1.bf16.msra.mxu0 %v243
      %264 = vmatprep.subr.bf16.mxu0 0
      %265 = vmatpush1.bf16.msra.mxu0 %v244
      %266 = vmatprep.subr.bf16.mxu0 0
      %267 = vmatpush1.bf16.msra.mxu0 %v245
      %268 = vmatprep.subr.bf16.mxu0 0
      %269 = vmatpush1.bf16.msra.mxu0 %v246
      %270 = vmatprep.subr.bf16.mxu0 0
      %271 = vmatpush1.bf16.msra.mxu0 %v247
      %272 = vmatprep.subr.bf16.mxu0 0
      %273 = vmatpush1.bf16.msra.mxu0 0
      %274 = vmatprep.subr.bf16.mxu0 0
      %275 = vmatpush1.bf16.msra.mxu0 0
      %276 = vmatprep.subr.bf16.mxu0 0
      %277 = vmatpush1.bf16.msra.mxu0 0
      %278 = vmatprep.subr.bf16.mxu0 0
      %279 = vmatpush1.bf16.msra.mxu0 0
      %280 = vmatprep.subr.bf16.mxu0 0
      %281 = vmatpush1.bf16.msra.mxu0 0
      %282 = vmatprep.subr.bf16.mxu0 0
      %283 = vmatpush1.bf16.msra.mxu0 0
      %284 = vmatprep.subr.bf16.mxu0 0
      %285 = vmatpush1.bf16.msra.mxu0 0
      %286 = vmatprep.subr.bf16.mxu0 0
      %287 = vmatpush1.bf16.msra.mxu0 0
      %288 = vmatprep.mubr.bf16.mxu0 0
      %289 = vmatmul.mubr.bf16.gmra.mrb[0].mxu0 %v206
      %v290 = vpop.f32.mrb[0].mxu0
      %v291 = vadd.f32 0.0, %v290
      %v292 = vpop.f32.mrb[0].mxu0
      %v293 = vpop.f32.mrb[0].mxu0
      %v294 = vadd.f32 0.0, %v293
      %v295 = vpop.f32.mrb[0].mxu0
      %296 = vdwg.mxu0
      %v297 = vmul.f32 %v291, 0.17677669
      %v298 = vmul.f32 %v294, 0.17677669
      %301 = vrot.lane.b32.xlu0 %v297, 96
      %v302 = vpop.permute.xlu0 %301
      %303 = vrot.lane.b32.xlu0 %v298, 96
      %v304 = vpop.permute.xlu0 %303
      %307 = vrot.lane.b32.xlu0 %v297, 64
      %v308 = vpop.permute.xlu0 %307
      %309 = vrot.lane.b32.xlu0 %v298, 64
      %v310 = vpop.permute.xlu0 %309
      %313 = vrot.lane.b32.xlu0 %v297, 32
      %v314 = vpop.permute.xlu0 %313
      %315 = vrot.lane.b32.xlu0 %v298, 32
      %v316 = vpop.permute.xlu0 %315
      %v319 = vcombine.low %v297, %v308
      %v320 = vcombine.high %v297, %v308
      %v322 = vunpack.c.l.s4 1983009808
      %v323 = vunpack.c.0.s8 %v322
      %v324 = vlaneseq
      %v325 = vshrl.u32 %v324, 7
      %v326 = vsub.s32 %v323, %v325
      %v327 = vrot.slane %v319, %v326
      %v329 = vunpack.c.l.s4 1983009808
      %v330 = vunpack.c.0.s8 %v329
      %v331 = vlaneseq
      %v332 = vshrl.u32 %v331, 7
      %v333 = vsub.s32 %v330, %v332
      %v334 = vrot.slane %v320, %v333
      %v335 = vcombine.low %v302, %v314
      %v336 = vcombine.high %v302, %v314
      %v338 = vunpack.c.l.s4 1983009808
      %v339 = vunpack.c.0.s8 %v338
      %v340 = vlaneseq
      %v341 = vshrl.u32 %v340, 7
      %v342 = vsub.s32 %v339, %v341
      %v343 = vrot.slane %v335, %v342
      %v345 = vunpack.c.l.s4 1983009808
      %v346 = vunpack.c.0.s8 %v345
      %v347 = vlaneseq
      %v348 = vshrl.u32 %v347, 7
      %v349 = vsub.s32 %v346, %v348
      %v350 = vrot.slane %v336, %v349
      %v351 = vcombine.low %v327, %v343
      %v352 = vcombine.high %v327, %v343
      %v354 = vunpack.c.l.s4 1934713408
      %v355 = vunpack.c.0.s8 %v354
      %v356 = vlaneseq
      %v357 = vshrl.u32 %v356, 7
      %v358 = vsub.s32 %v355, %v357
      %v359 = vrot.slane %v351, %v358
      %v361 = vunpack.c.l.s4 1934713408
      %v362 = vunpack.c.0.s8 %v361
      %v363 = vlaneseq
      %v364 = vshrl.u32 %v363, 7
      %v365 = vsub.s32 %v362, %v364
      %v366 = vrot.slane %v352, %v365
      %v367 = vcombine.low %v334, %v350
      %v368 = vcombine.high %v334, %v350
      %v370 = vunpack.c.l.s4 1934713408
      %v371 = vunpack.c.0.s8 %v370
      %v372 = vlaneseq
      %v373 = vshrl.u32 %v372, 7
      %v374 = vsub.s32 %v371, %v373
      %v375 = vrot.slane %v367, %v374
      %v377 = vunpack.c.l.s4 1934713408
      %v378 = vunpack.c.0.s8 %v377
      %v379 = vlaneseq
      %v380 = vshrl.u32 %v379, 7
      %v381 = vsub.s32 %v378, %v380
      %v382 = vrot.slane %v368, %v381
      %v383 = vcombine.high %v359, 0.0
      %v384 = vcombine.high %v366, 0.0
      %v385 = vcombine.high %v375, 0.0
      %v386 = vcombine.high %v382, 0.0
      %v387 = vcombine.low %v298, %v310
      %v388 = vcombine.high %v298, %v310
      %v390 = vunpack.c.l.s4 1983009808
      %v391 = vunpack.c.0.s8 %v390
      %v392 = vlaneseq
      %v393 = vshrl.u32 %v392, 7
      %v394 = vsub.s32 %v391, %v393
      %v395 = vrot.slane %v387, %v394
      %v397 = vunpack.c.l.s4 1983009808
      %v398 = vunpack.c.0.s8 %v397
      %v399 = vlaneseq
      %v400 = vshrl.u32 %v399, 7
      %v401 = vsub.s32 %v398, %v400
      %v402 = vrot.slane %v388, %v401
      %v403 = vcombine.low %v304, %v316
      %v404 = vcombine.high %v304, %v316
      %v406 = vunpack.c.l.s4 1983009808
      %v407 = vunpack.c.0.s8 %v406
      %v408 = vlaneseq
      %v409 = vshrl.u32 %v408, 7
      %v410 = vsub.s32 %v407, %v409
      %v411 = vrot.slane %v403, %v410
      %v413 = vunpack.c.l.s4 1983009808
      %v414 = vunpack.c.0.s8 %v413
      %v415 = vlaneseq
      %v416 = vshrl.u32 %v415, 7
      %v417 = vsub.s32 %v414, %v416
      %v418 = vrot.slane %v404, %v417
      %v419 = vcombine.low %v395, %v411
      %v420 = vcombine.high %v395, %v411
      %v422 = vunpack.c.l.s4 1934713408
      %v423 = vunpack.c.0.s8 %v422
      %v424 = vlaneseq
      %v425 = vshrl.u32 %v424, 7
      %v426 = vsub.s32 %v423, %v425
      %v427 = vrot.slane %v419, %v426
      %v429 = vunpack.c.l.s4 1934713408
      %v430 = vunpack.c.0.s8 %v429
      %v431 = vlaneseq
      %v432 = vshrl.u32 %v431, 7
      %v433 = vsub.s32 %v430, %v432
      %v434 = vrot.slane %v420, %v433
      %v435 = vcombine.low %v402, %v418
      %v436 = vcombine.high %v402, %v418
      %v438 = vunpack.c.l.s4 1934713408
      %v439 = vunpack.c.0.s8 %v438
      %v440 = vlaneseq
      %v441 = vshrl.u32 %v440, 7
      %v442 = vsub.s32 %v439, %v441
      %v443 = vrot.slane %v435, %v442
      %v445 = vunpack.c.l.s4 1934713408
      %v446 = vunpack.c.0.s8 %v445
      %v447 = vlaneseq
      %v448 = vshrl.u32 %v447, 7
      %v449 = vsub.s32 %v446, %v448
      %v450 = vrot.slane %v436, %v449
      %v451 = vcombine.high %v427, 0.0
      %v452 = vcombine.high %v434, 0.0
      %v453 = vcombine.high %v443, 0.0
      %v454 = vcombine.high %v450, 0.0
      %v455 = vcombine.low %v359, %v366
      %v457 = vunpack.c.l.s4 1983009808
      %v458 = vunpack.c.0.s8 %v457
      %v459 = vlaneseq
      %v460 = vshrl.u32 %v459, 7
      %v461 = vsub.s32 %v458, %v460
      %v462 = vrot.slane %v455, %v461
      %v463 = vcombine.low %v383, %v384
      %v465 = vunpack.c.l.s4 1983009808
      %v466 = vunpack.c.0.s8 %v465
      %v467 = vlaneseq
      %v468 = vshrl.u32 %v467, 7
      %v469 = vsub.s32 %v466, %v468
      %v470 = vrot.slane %v463, %v469
      %v471 = vcombine.low %v375, %v382
      %v473 = vunpack.c.l.s4 1983009808
      %v474 = vunpack.c.0.s8 %v473
      %v475 = vlaneseq
      %v476 = vshrl.u32 %v475, 7
      %v477 = vsub.s32 %v474, %v476
      %v478 = vrot.slane %v471, %v477
      %v479 = vcombine.low %v385, %v386
      %v481 = vunpack.c.l.s4 1983009808
      %v482 = vunpack.c.0.s8 %v481
      %v483 = vlaneseq
      %v484 = vshrl.u32 %v483, 7
      %v485 = vsub.s32 %v482, %v484
      %v486 = vrot.slane %v479, %v485
      %v487 = vcombine.low %v462, %v470
      %v488 = vcombine.high %v462, %v470
      %v490 = vunpack.c.l.s4 1934713408
      %v491 = vunpack.c.0.s8 %v490
      %v492 = vlaneseq
      %v493 = vshrl.u32 %v492, 7
      %v494 = vsub.s32 %v491, %v493
      %v495 = vrot.slane %v487, %v494
      %v497 = vunpack.c.l.s4 1934713408
      %v498 = vunpack.c.0.s8 %v497
      %v499 = vlaneseq
      %v500 = vshrl.u32 %v499, 7
      %v501 = vsub.s32 %v498, %v500
      %v502 = vrot.slane %v488, %v501
      %v503 = vcombine.low %v478, %v486
      %v504 = vcombine.high %v478, %v486
      %v506 = vunpack.c.l.s4 1934713408
      %v507 = vunpack.c.0.s8 %v506
      %v508 = vlaneseq
      %v509 = vshrl.u32 %v508, 7
      %v510 = vsub.s32 %v507, %v509
      %v511 = vrot.slane %v503, %v510
      %v513 = vunpack.c.l.s4 1934713408
      %v514 = vunpack.c.0.s8 %v513
      %v515 = vlaneseq
      %v516 = vshrl.u32 %v515, 7
      %v517 = vsub.s32 %v514, %v516
      %v518 = vrot.slane %v504, %v517
      %v519 = vcombine.low %v495, %v511
      %v520 = vcombine.high %v495, %v511
      %v521 = vcombine.low %v502, %v518
      %v522 = vcombine.high %v502, %v518
      %v523 = vcombine.low %v427, %v434
      %v525 = vunpack.c.l.s4 1983009808
      %v526 = vunpack.c.0.s8 %v525
      %v527 = vlaneseq
      %v528 = vshrl.u32 %v527, 7
      %v529 = vsub.s32 %v526, %v528
      %v530 = vrot.slane %v523, %v529
      %v531 = vcombine.low %v451, %v452
      %v533 = vunpack.c.l.s4 1983009808
      %v534 = vunpack.c.0.s8 %v533
      %v535 = vlaneseq
      %v536 = vshrl.u32 %v535, 7
      %v537 = vsub.s32 %v534, %v536
      %v538 = vrot.slane %v531, %v537
      %v539 = vcombine.low %v443, %v450
      %v541 = vunpack.c.l.s4 1983009808
      %v542 = vunpack.c.0.s8 %v541
      %v543 = vlaneseq
      %v544 = vshrl.u32 %v543, 7
      %v545 = vsub.s32 %v542, %v544
      %v546 = vrot.slane %v539, %v545
      %v547 = vcombine.low %v453, %v454
      %v549 = vunpack.c.l.s4 1983009808
      %v550 = vunpack.c.0.s8 %v549
      %v551 = vlaneseq
      %v552 = vshrl.u32 %v551, 7
      %v553 = vsub.s32 %v550, %v552
      %v554 = vrot.slane %v547, %v553
      %v555 = vcombine.low %v530, %v538
      %v556 = vcombine.high %v530, %v538
      %v558 = vunpack.c.l.s4 1934713408
      %v559 = vunpack.c.0.s8 %v558
      %v560 = vlaneseq
      %v561 = vshrl.u32 %v560, 7
      %v562 = vsub.s32 %v559, %v561
      %v563 = vrot.slane %v555, %v562
      %v565 = vunpack.c.l.s4 1934713408
      %v566 = vunpack.c.0.s8 %v565
      %v567 = vlaneseq
      %v568 = vshrl.u32 %v567, 7
      %v569 = vsub.s32 %v566, %v568
      %v570 = vrot.slane %v556, %v569
      %v571 = vcombine.low %v546, %v554
      %v572 = vcombine.high %v546, %v554
      %v574 = vunpack.c.l.s4 1934713408
      %v575 = vunpack.c.0.s8 %v574
      %v576 = vlaneseq
      %v577 = vshrl.u32 %v576, 7
      %v578 = vsub.s32 %v575, %v577
      %v579 = vrot.slane %v571, %v578
      %v581 = vunpack.c.l.s4 1934713408
      %v582 = vunpack.c.0.s8 %v581
      %v583 = vlaneseq
      %v584 = vshrl.u32 %v583, 7
      %v585 = vsub.s32 %v582, %v584
      %v586 = vrot.slane %v572, %v585
      %v587 = vcombine.low %v563, %v579
      %v588 = vcombine.high %v563, %v579
      %v589 = vcombine.low %v570, %v586
      %v590 = vcombine.high %v570, %v586
      %v591 = vpack.c.bf16 %v587, %v519
      %v592 = vpack.c.bf16 %v588, %v520
      %v593 = vpack.c.bf16 %v589, %v521
      %v594 = vpack.c.bf16 %v590, %v522
      %v599 = vunpack.c.l.b16 %v591
      %v600 = vunpack.c.h.b16 %v591
      %v601 = vunpack.c.l.b16 %v592
      %v602 = vunpack.c.h.b16 %v592
      %v603 = vunpack.c.l.b16 %v593
      %v604 = vunpack.c.h.b16 %v593
      %v605 = vunpack.c.l.b16 %v594
      %v606 = vunpack.c.h.b16 %v594
      %v607 = vpack.c.b16 %v599, %v599
      %v608 = vpack.c.b16 %v600, %v600
      %v609 = vpack.c.b16 %v601, %v601
      %v610 = vpack.c.b16 %v602, %v602
      %v611 = vpack.c.b16 %v603, %v603
      %v612 = vpack.c.b16 %v604, %v604
      %v613 = vpack.c.b16 %v605, %v605
      %v614 = vpack.c.b16 %v606, %v606
      %vm623 = vcmask 257024
      %624 = vst.msk [vmem:[%s181] sm:$0xf] %vm623, %v607
      %625 = vst.msk [vmem:[%s181 + $0x4] sm:$0xf] %vm623, %v608
      %626 = vst.msk [vmem:[%s181 + $0x8] sm:$0xf] %vm623, %v609
      %627 = vst.msk [vmem:[%s181 + $0xc] sm:$0xf] %vm623, %v610
      %628 = vst.msk [vmem:[%s181 + $0x10] sm:$0xf] %vm623, %v611
      %629 = vst.msk [vmem:[%s181 + $0x14] sm:$0xf] %vm623, %v612
      %630 = vst.msk [vmem:[%s181 + $0x18] sm:$0xf] %vm623, %v613
      %631 = vst.msk [vmem:[%s181 + $0x1c] sm:$0xf] %vm623, %v614
      %s632 = smul.u32 2, %s18
      %p633 = scmp.lt.s32.totalorder %s17, 1
      %s634 = scalar_select %p633, %s17, 1
      %p635 = scmp.lt.s32.totalorder %s632, 1
      %s636 = scalar_select %p635, %s632, 1
      %s637 = smul.addr %s634, 8
      %s638 = sadd.s32 %s636, %s637
      %s639 = smul.addr %s638, 4
      %s640 = scalar_lea.vmem %s2, %s639
      // Predicated region
      $region29: #{transformer_forward.27} parent=27 // pred_check
        %p641 = pneg %p94
      $region30: #{transformer_forward.27} parent=27 // pred_check_branch
        %643 = sbr.rel (%p641) target = $region32
      $region31: #{transformer_forward.27} parent=27 // pred_region
        %s644 = smul.u32 2, %s18
      $region32: #{transformer_forward.27} parent=27 // pred_fallthru
        _
    $region28: #{transformer_forward.27} parent=5 // pred_fallthru
      _
    %p645 = scmp.le.s32.totalorder 2, %s8
    // Predicated region
    $region33: #{transformer_forward.27} parent=5 // pred_check
      %p646 = pneg %p645
    $region34: #{transformer_forward.27} parent=5 // pred_check_branch
      %648 = sbr.rel (%p646) target = $region36
    $region35: #{transformer_forward.27} parent=5 // pred_region
      %s649 = ssub.s32 %s8, 2
      // Predicated region
      $region37: #{transformer_forward.27} parent=35 // pred_check
        %p650 = pneg %p100
      $region38: #{transformer_forward.27} parent=35 // pred_check_branch
        %652 = sbr.rel (%p650) target = $region40
      $region39: #{transformer_forward.27} parent=35 // pred_region
        %s653 = smul.u32 2, %s20
        %p654 = scmp.lt.s32.totalorder %s19, 1
        %s655 = scalar_select %p654, %s19, 1
        %p656 = scmp.lt.s32.totalorder %s653, 1
        %s657 = scalar_select %p656, %s653, 1
        %s658 = smul.addr %s655, 8
        %s659 = sadd.s32 %s657, %s658
        %s660 = smul.addr %s659, 4
        %s661 = scalar_lea.vmem %s2, %s660
      $region40: #{transformer_forward.27} parent=35 // pred_fallthru
        _
    $region36: #{transformer_forward.27} parent=5 // pred_fallthru
      _
  $region6: #{transformer_forward.27} parent=0 // loop_footer
    %s12 = sadd.s32 1, %s8
  $region7: #{transformer_forward.27} parent=0 // loop_footer_branch
    %7 = sbr.rel target = $region3
  $region8: #{transformer_forward.27} parent=0 // loop_exit
    _

// kernel: transformer_forward.25
$region0: #{transformer_forward.25}
  #allocation0 [shape = 'u32[]', space=smem, size = 0x4, offset = 0x4, fixed_abs, tag = 'smem constant byte address 0x4 - core index']
  #allocation1 [shape = 'u32[144,128]{1,0:T(1,128)}', space=vmem, size = 0x12000, scoped, tag = 'internal scratch']
  %s0 = inlined_call_operand.vmem [shape: bf16[2,16,128], index: 0, kind: input, shape index: {}]
  %s1 = inlined_call_operand.vmem [shape: bf16[128,128], index: 1, kind: input, shape index: {}]
  %s2 = inlined_call_operand.vmem [shape: bf16[128,128], index: 2, kind: input, shape index: {}]
  %s3 = inlined_call_operand.vmem [shape: bf16[128,128], index: 3, kind: input, shape index: {}]
  %s4 = inlined_call_operand.vmem [shape: bf16[2,4,16,32], index: 4, kind: output, shape index: {0}]
  %s5 = inlined_call_operand.vmem [shape: bf16[2,4,16,32], index: 5, kind: output, shape index: {1}]
  %s6 = inlined_call_operand.vmem [shape: bf16[2,4,16,32], index: 6, kind: output, shape index: {2}]
  %7 = xla_tuple %s4, %s5, %s6
  %s8 = sld [smem:[#allocation0]]
  $region65: #{transformer_forward.25} parent=0
    _
  %s10 = ssub.s32 1, %s8
  %s11 = scalar_select 0, %s10, %s8
  loop: start=0, step=1, limit=4
  $region2: #{transformer_forward.25} parent=0 // loop_pre_header
    _
  $region3: #{transformer_forward.25} parent=0 // loop_header
    %s13 = sphi 0, %s17
    %p14 = scmp.ge.s32.totalorder %s13, 4
    %s20 = sphi 0, %s32
    %s21 = sphi 0, %s28
    %s22 = sphi 0, %s20
    %s23 = sphi 0, %s21
    %s24 = sphi 0, %s22
    %s25 = sphi 0, %s23
    %s37 = sphi 0, %s39
    %s40 = sphi 0, %s37
    %s41 = sphi 0, %s40
    %s57 = sphi 0, %s41
    %s61 = sphi 0, %s61
    %s63 = sphi 0, %s61
    %s64 = sphi 0, %s63
    %s78 = sphi 0, %s64
    %s82 = sphi 0, %s82
    %s84 = sphi 0, %s82
    %s85 = sphi 0, %s84
    %s99 = sphi 0, %s85
    %s103 = sphi 0, %s103
    %s105 = sphi 0, %s103
    %s106 = sphi 0, %s105
    %s120 = sphi 0, %s106
    %s128 = sphi 0, %s130
    %s131 = sphi 0, %s128
    %s132 = sphi 0, %s131
    %s148 = sphi 0, %s132
    %s156 = sphi 0, %s158
    %s159 = sphi 0, %s156
    %s160 = sphi 0, %s159
    %s176 = sphi 0, %s160
    %s184 = sphi 0, %s186
    %s187 = sphi 0, %s184
    %s188 = sphi 0, %s187
    %s204 = sphi 0, %s188
  $region4: #{transformer_forward.25} parent=0 // loop_header_branch
    %16 = sbr.rel (%p14) target = $region8
  $region5: #{transformer_forward.25} parent=0 // loop_body
    %s18 = ssub.s32 %s13, 1
    %s19 = ssub.s32 %s13, 2
    %s26 = sadd.s32 1, %s21
    %p27 = scmp.ge.s32.totalorder %s26, 1
    %s28 = scalar_select %p27, 0, %s26
    %s29 = sadd.s32 1, %s20
    %s30 = scalar_select %p27, %s29, %s20
    %p31 = scmp.ge.s32.totalorder %s30, 2
    %s32 = scalar_select %p31, 0, %s30
    %s33 = ssub.s32 %s20, %s32
    %s34 = ssub.s32 %s21, %s28
    %s35 = sor.u32 %s33, %s34
    %p36 = scmp.eq.s32.totalorder %s35, 0
    %s38 = sadd.s32 %s37, 1
    %s39 = scalar_select %p36, %s37, %s38
    %p42 = pneg %p36
    %p43 = scmp.eq.s32.totalorder %s13, 1
    %p44 = por %p42, %p43
    %p45 = scmp.ne.s32.totalorder %s37, %s40
    %p46 = scmp.eq.s32.totalorder %s13, 0
    %p47 = por %p45, %p46
    %p48 = scmp.ne.s32.totalorder %s37, %s40
    %p49 = scmp.eq.s32.totalorder %s18, 1
    %p50 = por %p48, %p49
    %p51 = scmp.ne.s32.totalorder %s40, %s41
    %p52 = scmp.eq.s32.totalorder %s18, 0
    %p53 = por %p51, %p52
    %p54 = scmp.ne.s32.totalorder %s40, %s41
    %p55 = scmp.eq.s32.totalorder %s19, 1
    %p56 = por %p54, %p55
    %p58 = scmp.ne.s32.totalorder %s41, %s57
    %p59 = scmp.eq.s32.totalorder %s19, 0
    %p60 = por %p58, %p59
    %s62 = sadd.s32 %s61, 1
    %p65 = scmp.eq.s32.totalorder %s13, 1
    %p66 = scmp.ne.s32.totalorder %s61, %s63
    %p67 = scmp.eq.s32.totalorder %s13, 0
    %p68 = por %p66, %p67
    %p69 = scmp.ne.s32.totalorder %s61, %s63
    %p70 = scmp.eq.s32.totalorder %s18, 1
    %p71 = por %p69, %p70
    %p72 = scmp.ne.s32.totalorder %s63, %s64
    %p73 = scmp.eq.s32.totalorder %s18, 0
    %p74 = por %p72, %p73
    %p75 = scmp.ne.s32.totalorder %s63, %s64
    %p76 = scmp.eq.s32.totalorder %s19, 1
    %p77 = por %p75, %p76
    %p79 = scmp.ne.s32.totalorder %s64, %s78
    %p80 = scmp.eq.s32.totalorder %s19, 0
    %p81 = por %p79, %p80
    %s83 = sadd.s32 %s82, 1
    %p86 = scmp.eq.s32.totalorder %s13, 1
    %p87 = scmp.ne.s32.totalorder %s82, %s84
    %p88 = scmp.eq.s32.totalorder %s13, 0
    %p89 = por %p87, %p88
    %p90 = scmp.ne.s32.totalorder %s82, %s84
    %p91 = scmp.eq.s32.totalorder %s18, 1
    %p92 = por %p90, %p91
    %p93 = scmp.ne.s32.totalorder %s84, %s85
    %p94 = scmp.eq.s32.totalorder %s18, 0
    %p95 = por %p93, %p94
    %p96 = scmp.ne.s32.totalorder %s84, %s85
    %p97 = scmp.eq.s32.totalorder %s19, 1
    %p98 = por %p96, %p97
    %p100 = scmp.ne.s32.totalorder %s85, %s99
    %p101 = scmp.eq.s32.totalorder %s19, 0
    %p102 = por %p100, %p101
    %s104 = sadd.s32 %s103, 1
    %p107 = scmp.eq.s32.totalorder %s13, 1
    %p108 = scmp.ne.s32.totalorder %s103, %s105
    %p109 = scmp.eq.s32.totalorder %s13, 0
    %p110 = por %p108, %p109
    %p111 = scmp.ne.s32.totalorder %s103, %s105
    %p112 = scmp.eq.s32.totalorder %s18, 1
    %p113 = por %p111, %p112
    %p114 = scmp.ne.s32.totalorder %s105, %s106
    %p115 = scmp.eq.s32.totalorder %s18, 0
    %p116 = por %p114, %p115
    %p117 = scmp.ne.s32.totalorder %s105, %s106
    %p118 = scmp.eq.s32.totalorder %s19, 1
    %p119 = por %p117, %p118
    %p121 = scmp.ne.s32.totalorder %s106, %s120
    %p122 = scmp.eq.s32.totalorder %s19, 0
    %p123 = por %p121, %p122
    %s124 = ssub.s32 %s20, %s32
    %s125 = ssub.s32 %s21, %s28
    %s126 = sor.u32 %s124, %s125
    %p127 = scmp.eq.s32.totalorder %s126, 0
    %s129 = sadd.s32 %s128, 1
    %s130 = scalar_select %p127, %s128, %s129
    %p133 = pneg %p127
    %p134 = scmp.eq.s32.totalorder %s13, 1
    %p135 = por %p133, %p134
    %p136 = scmp.ne.s32.totalorder %s128, %s131
    %p137 = scmp.eq.s32.totalorder %s13, 0
    %p138 = por %p136, %p137
    %p139 = scmp.ne.s32.totalorder %s128, %s131
    %p140 = scmp.eq.s32.totalorder %s18, 1
    %p141 = por %p139, %p140
    %p142 = scmp.ne.s32.totalorder %s131, %s132
    %p143 = scmp.eq.s32.totalorder %s18, 0
    %p144 = por %p142, %p143
    %p145 = scmp.ne.s32.totalorder %s131, %s132
    %p146 = scmp.eq.s32.totalorder %s19, 1
    %p147 = por %p145, %p146
    %p149 = scmp.ne.s32.totalorder %s132, %s148
    %p150 = scmp.eq.s32.totalorder %s19, 0
    %p151 = por %p149, %p150
    %s152 = ssub.s32 %s20, %s32
    %s153 = ssub.s32 %s21, %s28
    %s154 = sor.u32 %s152, %s153
    %p155 = scmp.eq.s32.totalorder %s154, 0
    %s157 = sadd.s32 %s156, 1
    %s158 = scalar_select %p155, %s156, %s157
    %p161 = pneg %p155
    %p162 = scmp.eq.s32.totalorder %s13, 1
    %p163 = por %p161, %p162
    %p164 = scmp.ne.s32.totalorder %s156, %s159
    %p165 = scmp.eq.s32.totalorder %s13, 0
    %p166 = por %p164, %p165
    %p167 = scmp.ne.s32.totalorder %s156, %s159
    %p168 = scmp.eq.s32.totalorder %s18, 1
    %p169 = por %p167, %p168
    %p170 = scmp.ne.s32.totalorder %s159, %s160
    %p171 = scmp.eq.s32.totalorder %s18, 0
    %p172 = por %p170, %p171
    %p173 = scmp.ne.s32.totalorder %s159, %s160
    %p174 = scmp.eq.s32.totalorder %s19, 1
    %p175 = por %p173, %p174
    %p177 = scmp.ne.s32.totalorder %s160, %s176
    %p178 = scmp.eq.s32.totalorder %s19, 0
    %p179 = por %p177, %p178
    %s180 = ssub.s32 %s20, %s32
    %s181 = ssub.s32 %s21, %s28
    %s182 = sor.u32 %s180, %s181
    %p183 = scmp.eq.s32.totalorder %s182, 0
    %s185 = sadd.s32 %s184, 1
    %s186 = scalar_select %p183, %s184, %s185
    %p189 = pneg %p183
    %p190 = scmp.eq.s32.totalorder %s13, 1
    %p191 = por %p189, %p190
    %p192 = scmp.ne.s32.totalorder %s184, %s187
    %p193 = scmp.eq.s32.totalorder %s13, 0
    %p194 = por %p192, %p193
    %p195 = scmp.ne.s32.totalorder %s184, %s187
    %p196 = scmp.eq.s32.totalorder %s18, 1
    %p197 = por %p195, %p196
    %p198 = scmp.ne.s32.totalorder %s187, %s188
    %p199 = scmp.eq.s32.totalorder %s18, 0
    %p200 = por %p198, %p199
    %p201 = scmp.ne.s32.totalorder %s187, %s188
    %p202 = scmp.eq.s32.totalorder %s19, 1
    %p203 = por %p201, %p202
    %p205 = scmp.ne.s32.totalorder %s188, %s204
    %p206 = scmp.eq.s32.totalorder %s19, 0
    %p207 = por %p205, %p206
    %p208 = scmp.le.s32.totalorder 1, %s13
    %p209 = scmp.lt.s32.totalorder %s13, 3
    %p210 = pnand %p208, %p209
    %p211 = pneg %p210
    // Predicated region
    $region9: #{transformer_forward.25} parent=5 // pred_check
      _
    $region10: #{transformer_forward.25} parent=5 // pred_check_branch
      %213 = sbr.rel (%p210) target = $region12
    $region11: #{transformer_forward.25} parent=5 // pred_region
      %s214 = ssub.s32 %s13, 1
      // Predicated region
      $region13: #{transformer_forward.25} parent=11 // pred_check
        %p215 = pneg %p74
      $region14: #{transformer_forward.25} parent=11 // pred_check_branch
        %217 = sbr.rel (%p215) target = $region16
      $region15: #{transformer_forward.25} parent=11 // pred_region
        _
      $region16: #{transformer_forward.25} parent=11 // pred_fallthru
        _
      // Predicated region
      $region17: #{transformer_forward.25} parent=11 // pred_check
        %p218 = pneg %p95
      $region18: #{transformer_forward.25} parent=11 // pred_check_branch
        %220 = sbr.rel (%p218) target = $region20
      $region19: #{transformer_forward.25} parent=11 // pred_region
        _
      $region20: #{transformer_forward.25} parent=11 // pred_fallthru
        _
      // Predicated region
      $region21: #{transformer_forward.25} parent=11 // pred_check
        %p221 = pneg %p116
      $region22: #{transformer_forward.25} parent=11 // pred_check_branch
        %223 = sbr.rel (%p221) target = $region24
      $region23: #{transformer_forward.25} parent=11 // pred_region
        _
      $region24: #{transformer_forward.25} parent=11 // pred_fallthru
        _
    $region12: #{transformer_forward.25} parent=5 // pred_fallthru
      _
    %p224 = scmp.lt.s32.totalorder %s13, 2
    // Predicated region
    $region25: #{transformer_forward.25} parent=5 // pred_check
      %p225 = pneg %p224
    $region26: #{transformer_forward.25} parent=5 // pred_check_branch
      %227 = sbr.rel (%p225) target = $region28
    $region27: #{transformer_forward.25} parent=5 // pred_region
      // Predicated region
      $region29: #{transformer_forward.25} parent=27 // pred_check
        %p228 = pneg %p47
      $region30: #{transformer_forward.25} parent=27 // pred_check_branch
        %230 = sbr.rel (%p228) target = $region32
      $region31: #{transformer_forward.25} parent=27 // pred_region
        %s231 = smul.u32 2, %s21
        %p232 = scmp.lt.s32.totalorder %s20, 1
        %s233 = scalar_select %p232, %s20, 1
        %p234 = scmp.lt.s32.totalorder %s231, 1
        %s235 = scalar_select %p234, %s231, 1
        %s236 = smul.addr %s233, 2
        %s237 = sadd.s32 %s235, %s236
        %s238 = smul.addr %s237, 4
        %s239 = scalar_lea.vmem %s0, %s238
        %s240 = smul.u32 2, %s21
      $region32: #{transformer_forward.25} parent=27 // pred_fallthru
        _
    $region28: #{transformer_forward.25} parent=5 // pred_fallthru
      _
    %p241 = scmp.le.s32.totalorder 1, %s13
    %p242 = scmp.lt.s32.totalorder %s13, 3
    %p243 = pnand %p241, %p242
    %p244 = pneg %p243
    // Predicated region
    $region33: #{transformer_forward.25} parent=5 // pred_check
      _
    $region34: #{transformer_forward.25} parent=5 // pred_check_branch
      %246 = sbr.rel (%p243) target = $region36
    $region35: #{transformer_forward.25} parent=5 // pred_region
      %s247 = ssub.s32 %s13, 1
      %s248 = smul.u32 2, %s23
      %p249 = scmp.lt.s32.totalorder %s22, 1
      %s250 = scalar_select %p249, %s22, 1
      %p251 = scmp.lt.s32.totalorder %s248, 1
      %s252 = scalar_select %p251, %s248, 1
      %s253 = smul.addr %s250, 2
      %s254 = sadd.s32 %s252, %s253
      %s255 = smul.addr %s254, 4
      %s256 = scalar_lea.vmem %s0, %s255
      %p257 = pneg %p53
      %p258 = pneg %p50
      %p259 = pneg %p74
      %p260 = pneg %p71
      %p261 = pneg %p95
      %p262 = pneg %p92
      %p263 = pneg %p116
      %p264 = pneg %p113
      %p265 = pneg %p144
      %p266 = pneg %p141
      %s267 = smul.u32 2, %s23
      %p268 = scmp.lt.s32.totalorder %s22, 1
      %s269 = scalar_select %p268, %s22, 1
      %p270 = scmp.lt.s32.totalorder %s267, 1
      %s271 = scalar_select %p270, %s267, 1
      %s272 = smul.addr %s269, 8
      %s273 = sadd.s32 %s271, %s272
      %s274 = smul.addr %s273, 4
      %s275 = scalar_lea.vmem %s4, %s274
      %p276 = pneg %p172
      %p277 = pneg %p169
      %s278 = smul.u32 2, %s23
      %p279 = scmp.lt.s32.totalorder %s22, 1
      %s280 = scalar_select %p279, %s22, 1
      %p281 = scmp.lt.s32.totalorder %s278, 1
      %s282 = scalar_select %p281, %s278, 1
      %s283 = smul.addr %s280, 8
      %s284 = sadd.s32 %s282, %s283
      %s285 = smul.addr %s284, 4
      %s286 = scalar_lea.vmem %s5, %s285
      %p287 = pneg %p200
      %p288 = pneg %p197
      %s289 = smul.u32 2, %s23
      %p290 = scmp.lt.s32.totalorder %s22, 1
      %s291 = scalar_select %p290, %s22, 1
      %p292 = scmp.lt.s32.totalorder %s289, 1
      %s293 = scalar_select %p292, %s289, 1
      %s294 = smul.addr %s291, 8
      %s295 = sadd.s32 %s293, %s294
      %s296 = smul.addr %s295, 4
      %s297 = scalar_lea.vmem %s6, %s296
      %s298 = smul.u32 2, %s23
      %p299 = scmp.lt.s32.totalorder %s22, 1
      %s300 = scalar_select %p299, %s22, 1
      %p301 = scmp.lt.s32.totalorder %s298, 1
      %s302 = scalar_select %p301, %s298, 1
      %s303 = smul.addr %s300, 2
      %s304 = sadd.s32 %s302, %s303
      %s305 = smul.addr %s304, 4
      %s306 = scalar_lea.vmem %s0, %s305
      %s307 = smul.u32 2, %s23
      %s308 = smul.u32 2, %s23
      %p309 = scmp.lt.s32.totalorder %s22, 1
      %s310 = scalar_select %p309, %s22, 1
      %p311 = scmp.lt.s32.totalorder %s308, 1
      %s312 = scalar_select %p311, %s308, 1
      %s313 = smul.addr %s310, 8
      %s314 = sadd.s32 %s312, %s313
      %s315 = smul.addr %s314, 4
      %s316 = scalar_lea.vmem %s4, %s315
      %s317 = smul.u32 2, %s23
      %s318 = smul.u32 2, %s23
      %p319 = scmp.lt.s32.totalorder %s22, 1
      %s320 = scalar_select %p319, %s22, 1
      %p321 = scmp.lt.s32.totalorder %s318, 1
      %s322 = scalar_select %p321, %s318, 1
      %s323 = smul.addr %s320, 8
      %s324 = sadd.s32 %s322, %s323
      %s325 = smul.addr %s324, 4
      %s326 = scalar_lea.vmem %s5, %s325
      %s327 = smul.u32 2, %s23
      %s328 = smul.u32 2, %s23
      %p329 = scmp.lt.s32.totalorder %s22, 1
      %s330 = scalar_select %p329, %s22, 1
      %p331 = scmp.lt.s32.totalorder %s328, 1
      %s332 = scalar_select %p331, %s328, 1
      %s333 = smul.addr %s330, 8
      %s334 = sadd.s32 %s332, %s333
      %s335 = smul.addr %s334, 4
      %s336 = scalar_lea.vmem %s6, %s335
      %s337 = smul.u32 2, %s23
      %v339 = vld [vmem:[%s306] sm:$0xf]
      %v340 = vld [vmem:[%s306 + $0x4] sm:$0xf]
      %v341 = vld [vmem:[%s1] sm:$0xf]
      %v342 = vld [vmem:[%s1 + $0x4] sm:$0xf]
      %v343 = vld [vmem:[%s1 + $0x8] sm:$0xf]
      %v344 = vld [vmem:[%s1 + $0xc] sm:$0xf]
      %v345 = vld [vmem:[%s1 + $0x10] sm:$0xf]
      %v346 = vld [vmem:[%s1 + $0x14] sm:$0xf]
      %v347 = vld [vmem:[%s1 + $0x18] sm:$0xf]
      %v348 = vld [vmem:[%s1 + $0x1c] sm:$0xf]
      %v349 = vld [vmem:[%s1 + $0x20] sm:$0xf]
      %v350 = vld [vmem:[%s1 + $0x24] sm:$0xf]
      %v351 = vld [vmem:[%s1 + $0x28] sm:$0xf]
      %v352 = vld [vmem:[%s1 + $0x2c] sm:$0xf]
      %v353 = vld [vmem:[%s1 + $0x30] sm:$0xf]
      %v354 = vld [vmem:[%s1 + $0x34] sm:$0xf]
      %v355 = vld [vmem:[%s1 + $0x38] sm:$0xf]
      %v356 = vld [vmem:[%s1 + $0x3c] sm:$0xf]
      %v359 = vunpack.c.l.b16 %v339
      %v360 = vunpack.c.l.b16 %v340
      %v361 = vpack.c.b16 %v360, %v359
      %v379 = vunpack.c.l.b16 %v341
      %v380 = vunpack.c.l.b16 %v342
      %v381 = vunpack.c.l.b16 %v343
      %v382 = vunpack.c.l.b16 %v344
      %v383 = vunpack.c.l.b16 %v345
      %v384 = vunpack.c.l.b16 %v346
      %v385 = vunpack.c.l.b16 %v347
      %v386 = vunpack.c.l.b16 %v348
      %v387 = vunpack.c.l.b16 %v349
      %v388 = vunpack.c.l.b16 %v350
      %v389 = vunpack.c.l.b16 %v351
      %v390 = vunpack.c.l.b16 %v352
      %v391 = vunpack.c.l.b16 %v353
      %v392 = vunpack.c.l.b16 %v354
      %v393 = vunpack.c.l.b16 %v355
      %v394 = vunpack.c.l.b16 %v356
      %v395 = vpack.c.b16 %v380, %v379
      %v396 = vpack.c.b16 %v382, %v381
      %v397 = vpack.c.b16 %v384, %v383
      %v398 = vpack.c.b16 %v386, %v385
      %v399 = vpack.c.b16 %v388, %v387
      %v400 = vpack.c.b16 %v390, %v389
      %v401 = vpack.c.b16 %v392, %v391
      %v402 = vpack.c.b16 %v394, %v393
      %411 = vmatprep.subr.bf16.mxu0 0
      %412 = vmatpush1.bf16.msra.mxu0 %v395
      %413 = vmatprep.subr.bf16.mxu0 0
      %414 = vmatpush1.bf16.msra.mxu0 %v396
      %415 = vmatprep.subr.bf16.mxu0 0
      %416 = vmatpush1.bf16.msra.mxu0 %v397
      %417 = vmatprep.subr.bf16.mxu0 0
      %418 = vmatpush1.bf16.msra.mxu0 %v398
      %419 = vmatprep.subr.bf16.mxu0 0
      %420 = vmatpush1.bf16.msra.mxu0 %v399
      %421 = vmatprep.subr.bf16.mxu0 0
      %422 = vmatpush1.bf16.msra.mxu0 %v400
      %423 = vmatprep.subr.bf16.mxu0 0
      %424 = vmatpush1.bf16.msra.mxu0 %v401
      %425 = vmatprep.subr.bf16.mxu0 0
      %426 = vmatpush1.bf16.msra.mxu0 %v402
      %427 = vmatprep.subr.bf16.mxu0 0
      %428 = vmatpush1.bf16.msra.mxu0 0
      %429 = vmatprep.subr.bf16.mxu0 0
      %430 = vmatpush1.bf16.msra.mxu0 0
      %431 = vmatprep.subr.bf16.mxu0 0
      %432 = vmatpush1.bf16.msra.mxu0 0
      %433 = vmatprep.subr.bf16.mxu0 0
      %434 = vmatpush1.bf16.msra.mxu0 0
      %435 = vmatprep.subr.bf16.mxu0 0
      %436 = vmatpush1.bf16.msra.mxu0 0
      %437 = vmatprep.subr.bf16.mxu0 0
      %438 = vmatpush1.bf16.msra.mxu0 0
      %439 = vmatprep.subr.bf16.mxu0 0
      %440 = vmatpush1.bf16.msra.mxu0 0
      %441 = vmatprep.subr.bf16.mxu0 0
      %442 = vmatpush1.bf16.msra.mxu0 0
      %443 = vmatprep.mubr.bf16.mxu0 0
      %444 = vmatmul.mubr.bf16.gmra.mrb[0].mxu0 %v361
      %v445 = vpop.f32.mrb[0].mxu0
      %v446 = vadd.f32 0.0, %v445
      %v447 = vpop.f32.mrb[0].mxu0
      %v448 = vpop.f32.mrb[0].mxu0
      %v449 = vadd.f32 0.0, %v448
      %v450 = vpop.f32.mrb[0].mxu0
      %451 = vdwg.mxu0
      %v452 = vmul.f32 %v446, 0.17677669
      %v453 = vmul.f32 %v449, 0.17677669
      %456 = vrot.lane.b32.xlu0 %v452, 96
      %v457 = vpop.permute.xlu0 %456
      %458 = vrot.lane.b32.xlu0 %v453, 96
      %v459 = vpop.permute.xlu0 %458
      %462 = vrot.lane.b32.xlu0 %v452, 64
      %v463 = vpop.permute.xlu0 %462
      %464 = vrot.lane.b32.xlu0 %v453, 64
      %v465 = vpop.permute.xlu0 %464
      %468 = vrot.lane.b32.xlu0 %v452, 32
      %v469 = vpop.permute.xlu0 %468
      %470 = vrot.lane.b32.xlu0 %v453, 32
      %v471 = vpop.permute.xlu0 %470
      %v474 = vcombine.low %v452, %v463
      %v475 = vcombine.high %v452, %v463
      %v477 = vunpack.c.l.s4 1983009808
      %v478 = vunpack.c.0.s8 %v477
      %v479 = vlaneseq
      %v480 = vshrl.u32 %v479, 7
      %v481 = vsub.s32 %v478, %v480
      %v482 = vrot.slane %v474, %v481
      %v484 = vunpack.c.l.s4 1983009808
      %v485 = vunpack.c.0.s8 %v484
      %v486 = vlaneseq
      %v487 = vshrl.u32 %v486, 7
      %v488 = vsub.s32 %v485, %v487
      %v489 = vrot.slane %v475, %v488
      %v490 = vcombine.low %v457, %v469
      %v491 = vcombine.high %v457, %v469
      %v493 = vunpack.c.l.s4 1983009808
      %v494 = vunpack.c.0.s8 %v493
      %v495 = vlaneseq
      %v496 = vshrl.u32 %v495, 7
      %v497 = vsub.s32 %v494, %v496
      %v498 = vrot.slane %v490, %v497
      %v500 = vunpack.c.l.s4 1983009808
      %v501 = vunpack.c.0.s8 %v500
      %v502 = vlaneseq
      %v503 = vshrl.u32 %v502, 7
      %v504 = vsub.s32 %v501, %v503
      %v505 = vrot.slane %v491, %v504
      %v506 = vcombine.low %v482, %v498
      %v507 = vcombine.high %v482, %v498
      %v509 = vunpack.c.l.s4 1934713408
      %v510 = vunpack.c.0.s8 %v509
      %v511 = vlaneseq
      %v512 = vshrl.u32 %v511, 7
      %v513 = vsub.s32 %v510, %v512
      %v514 = vrot.slane %v506, %v513
      %v516 = vunpack.c.l.s4 1934713408
      %v517 = vunpack.c.0.s8 %v516
      %v518 = vlaneseq
      %v519 = vshrl.u32 %v518, 7
      %v520 = vsub.s32 %v517, %v519
      %v521 = vrot.slane %v507, %v520
      %v522 = vcombine.low %v489, %v505
      %v523 = vcombine.high %v489, %v505
      %v525 = vunpack.c.l.s4 1934713408
      %v526 = vunpack.c.0.s8 %v525
      %v527 = vlaneseq
      %v528 = vshrl.u32 %v527, 7
      %v529 = vsub.s32 %v526, %v528
      %v530 = vrot.slane %v522, %v529
      %v532 = vunpack.c.l.s4 1934713408
      %v533 = vunpack.c.0.s8 %v532
      %v534 = vlaneseq
      %v535 = vshrl.u32 %v534, 7
      %v536 = vsub.s32 %v533, %v535
      %v537 = vrot.slane %v523, %v536
      %v538 = vcombine.high %v514, 0.0
      %v539 = vcombine.high %v521, 0.0
      %v540 = vcombine.high %v530, 0.0
      %v541 = vcombine.high %v537, 0.0
      %v542 = vcombine.low %v453, %v465
      %v543 = vcombine.high %v453, %v465
      %v545 = vunpack.c.l.s4 1983009808
      %v546 = vunpack.c.0.s8 %v545
      %v547 = vlaneseq
      %v548 = vshrl.u32 %v547, 7
      %v549 = vsub.s32 %v546, %v548
      %v550 = vrot.slane %v542, %v549
      %v552 = vunpack.c.l.s4 1983009808
      %v553 = vunpack.c.0.s8 %v552
      %v554 = vlaneseq
      %v555 = vshrl.u32 %v554, 7
      %v556 = vsub.s32 %v553, %v555
      %v557 = vrot.slane %v543, %v556
      %v558 = vcombine.low %v459, %v471
      %v559 = vcombine.high %v459, %v471
      %v561 = vunpack.c.l.s4 1983009808
      %v562 = vunpack.c.0.s8 %v561
      %v563 = vlaneseq
      %v564 = vshrl.u32 %v563, 7
      %v565 = vsub.s32 %v562, %v564
      %v566 = vrot.slane %v558, %v565
      %v568 = vunpack.c.l.s4 1983009808
      %v569 = vunpack.c.0.s8 %v568
      %v570 = vlaneseq
      %v571 = vshrl.u32 %v570, 7
      %v572 = vsub.s32 %v569, %v571
      %v573 = vrot.slane %v559, %v572
      %v574 = vcombine.low %v550, %v566
      %v575 = vcombine.high %v550, %v566
      %v577 = vunpack.c.l.s4 1934713408
      %v578 = vunpack.c.0.s8 %v577
      %v579 = vlaneseq
      %v580 = vshrl.u32 %v579, 7
      %v581 = vsub.s32 %v578, %v580
      %v582 = vrot.slane %v574, %v581
      %v584 = vunpack.c.l.s4 1934713408
      %v585 = vunpack.c.0.s8 %v584
      %v586 = vlaneseq
      %v587 = vshrl.u32 %v586, 7
      %v588 = vsub.s32 %v585, %v587
      %v589 = vrot.slane %v575, %v588
      %v590 = vcombine.low %v557, %v573
      %v591 = vcombine.high %v557, %v573
      %v593 = vunpack.c.l.s4 1934713408
      %v594 = vunpack.c.0.s8 %v593
      %v595 = vlaneseq
      %v596 = vshrl.u32 %v595, 7
      %v597 = vsub.s32 %v594, %v596
      %v598 = vrot.slane %v590, %v597
      %v600 = vunpack.c.l.s4 1934713408
      %v601 = vunpack.c.0.s8 %v600
      %v602 = vlaneseq
      %v603 = vshrl.u32 %v602, 7
      %v604 = vsub.s32 %v601, %v603
      %v605 = vrot.slane %v591, %v604
      %v606 = vcombine.high %v582, 0.0
      %v607 = vcombine.high %v589, 0.0
      %v608 = vcombine.high %v598, 0.0
      %v609 = vcombine.high %v605, 0.0
      %v610 = vcombine.low %v514, %v521
      %v612 = vunpack.c.l.s4 1983009808
      %v613 = vunpack.c.0.s8 %v612
      %v614 = vlaneseq
      %v615 = vshrl.u32 %v614, 7
      %v616 = vsub.s32 %v613, %v615
      %v617 = vrot.slane %v610, %v616
      %v618 = vcombine.low %v538, %v539
      %v620 = vunpack.c.l.s4 1983009808
      %v621 = vunpack.c.0.s8 %v620
      %v622 = vlaneseq
      %v623 = vshrl.u32 %v622, 7
      %v624 = vsub.s32 %v621, %v623
      %v625 = vrot.slane %v618, %v624
      %v626 = vcombine.low %v530, %v537
      %v628 = vunpack.c.l.s4 1983009808
      %v629 = vunpack.c.0.s8 %v628
      %v630 = vlaneseq
      %v631 = vshrl.u32 %v630, 7
      %v632 = vsub.s32 %v629, %v631
      %v633 = vrot.slane %v626, %v632
      %v634 = vcombine.low %v540, %v541
      %v636 = vunpack.c.l.s4 1983009808
      %v637 = vunpack.c.0.s8 %v636
      %v638 = vlaneseq
      %v639 = vshrl.u32 %v638, 7
      %v640 = vsub.s32 %v637, %v639
      %v641 = vrot.slane %v634, %v640
      %v642 = vcombine.low %v617, %v625
      %v643 = vcombine.high %v617, %v625
      %v645 = vunpack.c.l.s4 1934713408
      %v646 = vunpack.c.0.s8 %v645
      %v647 = vlaneseq
      %v648 = vshrl.u32 %v647, 7
      %v649 = vsub.s32 %v646, %v648
      %v650 = vrot.slane %v642, %v649
      %v652 = vunpack.c.l.s4 1934713408
      %v653 = vunpack.c.0.s8 %v652
      %v654 = vlaneseq
      %v655 = vshrl.u32 %v654, 7
      %v656 = vsub.s32 %v653, %v655
      %v657 = vrot.slane %v643, %v656
      %v658 = vcombine.low %v633, %v641
      %v659 = vcombine.high %v633, %v641
      %v661 = vunpack.c.l.s4 1934713408
      %v662 = vunpack.c.0.s8 %v661
      %v663 = vlaneseq
      %v664 = vshrl.u32 %v663, 7
      %v665 = vsub.s32 %v662, %v664
      %v666 = vrot.slane %v658, %v665
      %v668 = vunpack.c.l.s4 1934713408
      %v669 = vunpack.c.0.s8 %v668
      %v670 = vlaneseq
      %v671 = vshrl.u32 %v670, 7
      %v672 = vsub.s32 %v669, %v671
      %v673 = vrot.slane %v659, %v672
      %v674 = vcombine.low %v650, %v666
      %v675 = vcombine.high %v650, %v666
      %v676 = vcombine.low %v657, %v673
      %v677 = vcombine.high %v657, %v673
      %v678 = vcombine.low %v582, %v589
      %v680 = vunpack.c.l.s4 1983009808
      %v681 = vunpack.c.0.s8 %v680
      %v682 = vlaneseq
      %v683 = vshrl.u32 %v682, 7
      %v684 = vsub.s32 %v681, %v683
      %v685 = vrot.slane %v678, %v684
      %v686 = vcombine.low %v606, %v607
      %v688 = vunpack.c.l.s4 1983009808
      %v689 = vunpack.c.0.s8 %v688
      %v690 = vlaneseq
      %v691 = vshrl.u32 %v690, 7
      %v692 = vsub.s32 %v689, %v691
      %v693 = vrot.slane %v686, %v692
      %v694 = vcombine.low %v598, %v605
      %v696 = vunpack.c.l.s4 1983009808
      %v697 = vunpack.c.0.s8 %v696
      %v698 = vlaneseq
      %v699 = vshrl.u32 %v698, 7
      %v700 = vsub.s32 %v697, %v699
      %v701 = vrot.slane %v694, %v700
      %v702 = vcombine.low %v608, %v609
      %v704 = vunpack.c.l.s4 1983009808
      %v705 = vunpack.c.0.s8 %v704
      %v706 = vlaneseq
      %v707 = vshrl.u32 %v706, 7
      %v708 = vsub.s32 %v705, %v707
      %v709 = vrot.slane %v702, %v708
      %v710 = vcombine.low %v685, %v693
      %v711 = vcombine.high %v685, %v693
      %v713 = vunpack.c.l.s4 1934713408
      %v714 = vunpack.c.0.s8 %v713
      %v715 = vlaneseq
      %v716 = vshrl.u32 %v715, 7
      %v717 = vsub.s32 %v714, %v716
      %v718 = vrot.slane %v710, %v717
      %v720 = vunpack.c.l.s4 1934713408
      %v721 = vunpack.c.0.s8 %v720
      %v722 = vlaneseq
      %v723 = vshrl.u32 %v722, 7
      %v724 = vsub.s32 %v721, %v723
      %v725 = vrot.slane %v711, %v724
      %v726 = vcombine.low %v701, %v709
      %v727 = vcombine.high %v701, %v709
      %v729 = vunpack.c.l.s4 1934713408
      %v730 = vunpack.c.0.s8 %v729
      %v731 = vlaneseq
      %v732 = vshrl.u32 %v731, 7
      %v733 = vsub.s32 %v730, %v732
      %v734 = vrot.slane %v726, %v733
      %v736 = vunpack.c.l.s4 1934713408
      %v737 = vunpack.c.0.s8 %v736
      %v738 = vlaneseq
      %v739 = vshrl.u32 %v738, 7
      %v740 = vsub.s32 %v737, %v739
      %v741 = vrot.slane %v727, %v740
      %v742 = vcombine.low %v718, %v734
      %v743 = vcombine.high %v718, %v734
      %v744 = vcombine.low %v725, %v741
      %v745 = vcombine.high %v725, %v741
      %v746 = vpack.c.bf16 %v742, %v674
      %v747 = vpack.c.bf16 %v743, %v675
      %v748 = vpack.c.bf16 %v744, %v676
      %v749 = vpack.c.bf16 %v745, %v677
      %v754 = vunpack.c.l.b16 %v746
      %v755 = vunpack.c.h.b16 %v746
      %v756 = vunpack.c.l.b16 %v747
      %v757 = vunpack.c.h.b16 %v747
      %v758 = vunpack.c.l.b16 %v748
      %v759 = vunpack.c.h.b16 %v748
      %v760 = vunpack.c.l.b16 %v749
      %v761 = vunpack.c.h.b16 %v749
      %v762 = vpack.c.b16 %v754, %v754
      %v763 = vpack.c.b16 %v755, %v755
      %v764 = vpack.c.b16 %v756, %v756
      %v765 = vpack.c.b16 %v757, %v757
      %v766 = vpack.c.b16 %v758, %v758
      %v767 = vpack.c.b16 %v759, %v759
      %v768 = vpack.c.b16 %v760, %v760
      %v769 = vpack.c.b16 %v761, %v761
      %vm778 = vcmask 257024
      %779 = vst.msk [vmem:[%s316] sm:$0xf] %vm778, %v762
      %780 = vst.msk [vmem:[%s316 + $0x4] sm:$0xf] %vm778, %v763
      %781 = vst.msk [vmem:[%s316 + $0x8] sm:$0xf] %vm778, %v764
      %782 = vst.msk [vmem:[%s316 + $0xc] sm:$0xf] %vm778, %v765
      %783 = vst.msk [vmem:[%s316 + $0x10] sm:$0xf] %vm778, %v766
      %784 = vst.msk [vmem:[%s316 + $0x14] sm:$0xf] %vm778, %v767
      %785 = vst.msk [vmem:[%s316 + $0x18] sm:$0xf] %vm778, %v768
      %786 = vst.msk [vmem:[%s316 + $0x1c] sm:$0xf] %vm778, %v769
      %v787 = vld [vmem:[%s2] sm:$0xf]
      %v788 = vld [vmem:[%s2 + $0x4] sm:$0xf]
      %v789 = vld [vmem:[%s2 + $0x8] sm:$0xf]
      %v790 = vld [vmem:[%s2 + $0xc] sm:$0xf]
      %v791 = vld [vmem:[%s2 + $0x10] sm:$0xf]
      %v792 = vld [vmem:[%s2 + $0x14] sm:$0xf]
      %v793 = vld [vmem:[%s2 + $0x18] sm:$0xf]
      %v794 = vld [vmem:[%s2 + $0x1c] sm:$0xf]
      %v795 = vld [vmem:[%s2 + $0x20] sm:$0xf]
      %v796 = vld [vmem:[%s2 + $0x24] sm:$0xf]
      %v797 = vld [vmem:[%s2 + $0x28] sm:$0xf]
      %v798 = vld [vmem:[%s2 + $0x2c] sm:$0xf]
      %v799 = vld [vmem:[%s2 + $0x30] sm:$0xf]
      %v800 = vld [vmem:[%s2 + $0x34] sm:$0xf]
      %v801 = vld [vmem:[%s2 + $0x38] sm:$0xf]
      %v802 = vld [vmem:[%s2 + $0x3c] sm:$0xf]
      %v819 = vunpack.c.l.b16 %v787
      %v820 = vunpack.c.l.b16 %v788
      %v821 = vunpack.c.l.b16 %v789
      %v822 = vunpack.c.l.b16 %v790
      %v823 = vunpack.c.l.b16 %v791
      %v824 = vunpack.c.l.b16 %v792
      %v825 = vunpack.c.l.b16 %v793
      %v826 = vunpack.c.l.b16 %v794
      %v827 = vunpack.c.l.b16 %v795
      %v828 = vunpack.c.l.b16 %v796
      %v829 = vunpack.c.l.b16 %v797
      %v830 = vunpack.c.l.b16 %v798
      %v831 = vunpack.c.l.b16 %v799
      %v832 = vunpack.c.l.b16 %v800
      %v833 = vunpack.c.l.b16 %v801
      %v834 = vunpack.c.l.b16 %v802
      %v835 = vpack.c.b16 %v820, %v819
      %v836 = vpack.c.b16 %v822, %v821
      %v837 = vpack.c.b16 %v824, %v823
      %v838 = vpack.c.b16 %v826, %v825
      %v839 = vpack.c.b16 %v828, %v827
      %v840 = vpack.c.b16 %v830, %v829
      %v841 = vpack.c.b16 %v832, %v831
      %v842 = vpack.c.b16 %v834, %v833
      %851 = vmatprep.subr.bf16.mxu0 0
      %852 = vmatpush1.bf16.msra.mxu0 %v835
      %853 = vmatprep.subr.bf16.mxu0 0
      %854 = vmatpush1.bf16.msra.mxu0 %v836
      %855 = vmatprep.subr.bf16.mxu0 0
      %856 = vmatpush1.bf16.msra.mxu0 %v837
      %857 = vmatprep.subr.bf16.mxu0 0
      %858 = vmatpush1.bf16.msra.mxu0 %v838
      %859 = vmatprep.subr.bf16.mxu0 0
      %860 = vmatpush1.bf16.msra.mxu0 %v839
      %861 = vmatprep.subr.bf16.mxu0 0
      %862 = vmatpush1.bf16.msra.mxu0 %v840
      %863 = vmatprep.subr.bf16.mxu0 0
      %864 = vmatpush1.bf16.msra.mxu0 %v841
      %865 = vmatprep.subr.bf16.mxu0 0
      %866 = vmatpush1.bf16.msra.mxu0 %v842
      %867 = vmatprep.subr.bf16.mxu0 0
      %868 = vmatpush1.bf16.msra.mxu0 0
      %869 = vmatprep.subr.bf16.mxu0 0
      %870 = vmatpush1.bf16.msra.mxu0 0
      %871 = vmatprep.subr.bf16.mxu0 0
      %872 = vmatpush1.bf16.msra.mxu0 0
      %873 = vmatprep.subr.bf16.mxu0 0
      %874 = vmatpush1.bf16.msra.mxu0 0
      %875 = vmatprep.subr.bf16.mxu0 0
      %876 = vmatpush1.bf16.msra.mxu0 0
      %877 = vmatprep.subr.bf16.mxu0 0
      %878 = vmatpush1.bf16.msra.mxu0 0
      %879 = vmatprep.subr.bf16.mxu0 0
      %880 = vmatpush1.bf16.msra.mxu0 0
      %881 = vmatprep.subr.bf16.mxu0 0
      %882 = vmatpush1.bf16.msra.mxu0 0
      %883 = vmatprep.mubr.bf16.mxu0 0
      %884 = vmatmul.mubr.bf16.gmra.mrb[0].mxu0 %v361
      %v885 = vpop.f32.mrb[0].mxu0
      %v886 = vadd.f32 0.0, %v885
      %v887 = vpop.f32.mrb[0].mxu0
      %v888 = vpop.f32.mrb[0].mxu0
      %v889 = vadd.f32 0.0, %v888
      %v890 = vpop.f32.mrb[0].mxu0
      %891 = vdwg.mxu0
      %894 = vrot.lane.b32.xlu0 %v886, 96
      %v895 = vpop.permute.xlu0 %894
      %896 = vrot.lane.b32.xlu0 %v889, 96
      %v897 = vpop.permute.xlu0 %896
      %900 = vrot.lane.b32.xlu0 %v886, 64
      %v901 = vpop.permute.xlu0 %900
      %902 = vrot.lane.b32.xlu0 %v889, 64
      %v903 = vpop.permute.xlu0 %902
      %906 = vrot.lane.b32.xlu0 %v886, 32
      %v907 = vpop.permute.xlu0 %906
      %908 = vrot.lane.b32.xlu0 %v889, 32
      %v909 = vpop.permute.xlu0 %908
      %v912 = vcombine.low %v886, %v901
      %v913 = vcombine.high %v886, %v901
      %v915 = vunpack.c.l.s4 1983009808
      %v916 = vunpack.c.0.s8 %v915
      %v917 = vlaneseq
      %v918 = vshrl.u32 %v917, 7
      %v919 = vsub.s32 %v916, %v918
      %v920 = vrot.slane %v912, %v919
      %v922 = vunpack.c.l.s4 1983009808
      %v923 = vunpack.c.0.s8 %v922
      %v924 = vlaneseq
      %v925 = vshrl.u32 %v924, 7
      %v926 = vsub.s32 %v923, %v925
      %v927 = vrot.slane %v913, %v926
      %v928 = vcombine.low %v895, %v907
      %v929 = vcombine.high %v895, %v907
      %v931 = vunpack.c.l.s4 1983009808
      %v932 = vunpack.c.0.s8 %v931
      %v933 = vlaneseq
      %v934 = vshrl.u32 %v933, 7
      %v935 = vsub.s32 %v932, %v934
      %v936 = vrot.slane %v928, %v935
      %v938 = vunpack.c.l.s4 1983009808
      %v939 = vunpack.c.0.s8 %v938
      %v940 = vlaneseq
      %v941 = vshrl.u32 %v940, 7
      %v942 = vsub.s32 %v939, %v941
      %v943 = vrot.slane %v929, %v942
      %v944 = vcombine.low %v920, %v936
      %v945 = vcombine.high %v920, %v936
      %v947 = vunpack.c.l.s4 1934713408
      %v948 = vunpack.c.0.s8 %v947
      %v949 = vlaneseq
      %v950 = vshrl.u32 %v949, 7
      %v951 = vsub.s32 %v948, %v950
      %v952 = vrot.slane %v944, %v951
      %v954 = vunpack.c.l.s4 1934713408
      %v955 = vunpack.c.0.s8 %v954
      %v956 = vlaneseq
      %v957 = vshrl.u32 %v956, 7
      %v958 = vsub.s32 %v955, %v957
      %v959 = vrot.slane %v945, %v958
      %v960 = vcombine.low %v927, %v943
      %v961 = vcombine.high %v927, %v943
      %v963 = vunpack.c.l.s4 1934713408
      %v964 = vunpack.c.0.s8 %v963
      %v965 = vlaneseq
      %v966 = vshrl.u32 %v965, 7
      %v967 = vsub.s32 %v964, %v966
      %v968 = vrot.slane %v960, %v967
      %v970 = vunpack.c.l.s4 1934713408
      %v971 = vunpack.c.0.s8 %v970
      %v972 = vlaneseq
      %v973 = vshrl.u32 %v972, 7
      %v974 = vsub.s32 %v971, %v973
      %v975 = vrot.slane %v961, %v974
      %v976 = vcombine.high %v952, 0.0
      %v977 = vcombine.high %v959, 0.0
      %v978 = vcombine.high %v968, 0.0
      %v979 = vcombine.high %v975, 0.0
      %v980 = vcombine.low %v889, %v903
      %v981 = vcombine.high %v889, %v903
      %v983 = vunpack.c.l.s4 1983009808
      %v984 = vunpack.c.0.s8 %v983
      %v985 = vlaneseq
      %v986 = vshrl.u32 %v985, 7
      %v987 = vsub.s32 %v984, %v986
      %v988 = vrot.slane %v980, %v987
      %v990 = vunpack.c.l.s4 1983009808
      %v991 = vunpack.c.0.s8 %v990
      %v992 = vlaneseq
      %v993 = vshrl.u32 %v992, 7
      %v994 = vsub.s32 %v991, %v993
      %v995 = vrot.slane %v981, %v994
      %v996 = vcombine.low %v897, %v909
      %v997 = vcombine.high %v897, %v909
      %v999 = vunpack.c.l.s4 1983009808
      %v1000 = vunpack.c.0.s8 %v999
      %v1001 = vlaneseq
      %v1002 = vshrl.u32 %v1001, 7
      %v1003 = vsub.s32 %v1000, %v1002
      %v1004 = vrot.slane %v996, %v1003
      %v1006 = vunpack.c.l.s4 1983009808
      %v1007 = vunpack.c.0.s8 %v1006
      %v1008 = vlaneseq
      %v1009 = vshrl.u32 %v1008, 7
      %v1010 = vsub.s32 %v1007, %v1009
      %v1011 = vrot.slane %v997, %v1010
      %v1012 = vcombine.low %v988, %v1004
      %v1013 = vcombine.high %v988, %v1004
      %v1015 = vunpack.c.l.s4 1934713408
      %v1016 = vunpack.c.0.s8 %v1015
      %v1017 = vlaneseq
      %v1018 = vshrl.u32 %v1017, 7
      %v1019 = vsub.s32 %v1016, %v1018
      %v1020 = vrot.slane %v1012, %v1019
      %v1022 = vunpack.c.l.s4 1934713408
      %v1023 = vunpack.c.0.s8 %v1022
      %v1024 = vlaneseq
      %v1025 = vshrl.u32 %v1024, 7
      %v1026 = vsub.s32 %v1023, %v1025
      %v1027 = vrot.slane %v1013, %v1026
      %v1028 = vcombine.low %v995, %v1011
      %v1029 = vcombine.high %v995, %v1011
      %v1031 = vunpack.c.l.s4 1934713408
      %v1032 = vunpack.c.0.s8 %v1031
      %v1033 = vlaneseq
      %v1034 = vshrl.u32 %v1033, 7
      %v1035 = vsub.s32 %v1032, %v1034
      %v1036 = vrot.slane %v1028, %v1035
      %v1038 = vunpack.c.l.s4 1934713408
      %v1039 = vunpack.c.0.s8 %v1038
      %v1040 = vlaneseq
      %v1041 = vshrl.u32 %v1040, 7
      %v1042 = vsub.s32 %v1039, %v1041
      %v1043 = vrot.slane %v1029, %v1042
      %v1044 = vcombine.high %v1020, 0.0
      %v1045 = vcombine.high %v1027, 0.0
      %v1046 = vcombine.high %v1036, 0.0
      %v1047 = vcombine.high %v1043, 0.0
      %v1048 = vcombine.low %v952, %v959
      %v1050 = vunpack.c.l.s4 1983009808
      %v1051 = vunpack.c.0.s8 %v1050
      %v1052 = vlaneseq
      %v1053 = vshrl.u32 %v1052, 7
      %v1054 = vsub.s32 %v1051, %v1053
      %v1055 = vrot.slane %v1048, %v1054
      %v1056 = vcombine.low %v976, %v977
      %v1058 = vunpack.c.l.s4 1983009808
      %v1059 = vunpack.c.0.s8 %v1058
      %v1060 = vlaneseq
      %v1061 = vshrl.u32 %v1060, 7
      %v1062 = vsub.s32 %v1059, %v1061
      %v1063 = vrot.slane %v1056, %v1062
      %v1064 = vcombine.low %v968, %v975
      %v1066 = vunpack.c.l.s4 1983009808
      %v1067 = vunpack.c.0.s8 %v1066
      %v1068 = vlaneseq
      %v1069 = vshrl.u32 %v1068, 7
      %v1070 = vsub.s32 %v1067, %v1069
      %v1071 = vrot.slane %v1064, %v1070
      %v1072 = vcombine.low %v978, %v979
      %v1074 = vunpack.c.l.s4 1983009808
      %v1075 = vunpack.c.0.s8 %v1074
      %v1076 = vlaneseq
      %v1077 = vshrl.u32 %v1076, 7
      %v1078 = vsub.s32 %v1075, %v1077
      %v1079 = vrot.slane %v1072, %v1078
      %v1080 = vcombine.low %v1055, %v1063
      %v1081 = vcombine.high %v1055, %v1063
      %v1083 = vunpack.c.l.s4 1934713408
      %v1084 = vunpack.c.0.s8 %v1083
      %v1085 = vlaneseq
      %v1086 = vshrl.u32 %v1085, 7
      %v1087 = vsub.s32 %v1084, %v1086
      %v1088 = vrot.slane %v1080, %v1087
      %v1090 = vunpack.c.l.s4 1934713408
      %v1091 = vunpack.c.0.s8 %v1090
      %v1092 = vlaneseq
      %v1093 = vshrl.u32 %v1092, 7
      %v1094 = vsub.s32 %v1091, %v1093
      %v1095 = vrot.slane %v1081, %v1094
      %v1096 = vcombine.low %v1071, %v1079
      %v1097 = vcombine.high %v1071, %v1079
      %v1099 = vunpack.c.l.s4 1934713408
      %v1100 = vunpack.c.0.s8 %v1099
      %v1101 = vlaneseq
      %v1102 = vshrl.u32 %v1101, 7
      %v1103 = vsub.s32 %v1100, %v1102
      %v1104 = vrot.slane %v1096, %v1103
      %v1106 = vunpack.c.l.s4 1934713408
      %v1107 = vunpack.c.0.s8 %v1106
      %v1108 = vlaneseq
      %v1109 = vshrl.u32 %v1108, 7
      %v1110 = vsub.s32 %v1107, %v1109
      %v1111 = vrot.slane %v1097, %v1110
      %v1112 = vcombine.low %v1088, %v1104
      %v1113 = vcombine.high %v1088, %v1104
      %v1114 = vcombine.low %v1095, %v1111
      %v1115 = vcombine.high %v1095, %v1111
      %v1116 = vcombine.low %v1020, %v1027
      %v1118 = vunpack.c.l.s4 1983009808
      %v1119 = vunpack.c.0.s8 %v1118
      %v1120 = vlaneseq
      %v1121 = vshrl.u32 %v1120, 7
      %v1122 = vsub.s32 %v1119, %v1121
      %v1123 = vrot.slane %v1116, %v1122
      %v1124 = vcombine.low %v1044, %v1045
      %v1126 = vunpack.c.l.s4 1983009808
      %v1127 = vunpack.c.0.s8 %v1126
      %v1128 = vlaneseq
      %v1129 = vshrl.u32 %v1128, 7
      %v1130 = vsub.s32 %v1127, %v1129
      %v1131 = vrot.slane %v1124, %v1130
      %v1132 = vcombine.low %v1036, %v1043
      %v1134 = vunpack.c.l.s4 1983009808
      %v1135 = vunpack.c.0.s8 %v1134
      %v1136 = vlaneseq
      %v1137 = vshrl.u32 %v1136, 7
      %v1138 = vsub.s32 %v1135, %v1137
      %v1139 = vrot.slane %v1132, %v1138
      %v1140 = vcombine.low %v1046, %v1047
      %v1142 = vunpack.c.l.s4 1983009808
      %v1143 = vunpack.c.0.s8 %v1142
      %v1144 = vlaneseq
      %v1145 = vshrl.u32 %v1144, 7
      %v1146 = vsub.s32 %v1143, %v1145
      %v1147 = vrot.slane %v1140, %v1146
      %v1148 = vcombine.low %v1123, %v1131
      %v1149 = vcombine.high %v1123, %v1131
      %v1151 = vunpack.c.l.s4 1934713408
      %v1152 = vunpack.c.0.s8 %v1151
      %v1153 = vlaneseq
      %v1154 = vshrl.u32 %v1153, 7
      %v1155 = vsub.s32 %v1152, %v1154
      %v1156 = vrot.slane %v1148, %v1155
      %v1158 = vunpack.c.l.s4 1934713408
      %v1159 = vunpack.c.0.s8 %v1158
      %v1160 = vlaneseq
      %v1161 = vshrl.u32 %v1160, 7
      %v1162 = vsub.s32 %v1159, %v1161
      %v1163 = vrot.slane %v1149, %v1162
      %v1164 = vcombine.low %v1139, %v1147
      %v1165 = vcombine.high %v1139, %v1147
      %v1167 = vunpack.c.l.s4 1934713408
      %v1168 = vunpack.c.0.s8 %v1167
      %v1169 = vlaneseq
      %v1170 = vshrl.u32 %v1169, 7
      %v1171 = vsub.s32 %v1168, %v1170
      %v1172 = vrot.slane %v1164, %v1171
      %v1174 = vunpack.c.l.s4 1934713408
      %v1175 = vunpack.c.0.s8 %v1174
      %v1176 = vlaneseq
      %v1177 = vshrl.u32 %v1176, 7
      %v1178 = vsub.s32 %v1175, %v1177
      %v1179 = vrot.slane %v1165, %v1178
      %v1180 = vcombine.low %v1156, %v1172
      %v1181 = vcombine.high %v1156, %v1172
      %v1182 = vcombine.low %v1163, %v1179
      %v1183 = vcombine.high %v1163, %v1179
      %v1184 = vpack.c.bf16 %v1180, %v1112
      %v1185 = vpack.c.bf16 %v1181, %v1113
      %v1186 = vpack.c.bf16 %v1182, %v1114
      %v1187 = vpack.c.bf16 %v1183, %v1115
      %v1192 = vunpack.c.l.b16 %v1184
      %v1193 = vunpack.c.h.b16 %v1184
      %v1194 = vunpack.c.l.b16 %v1185
      %v1195 = vunpack.c.h.b16 %v1185
      %v1196 = vunpack.c.l.b16 %v1186
      %v1197 = vunpack.c.h.b16 %v1186
      %v1198 = vunpack.c.l.b16 %v1187
      %v1199 = vunpack.c.h.b16 %v1187
      %v1200 = vpack.c.b16 %v1192, %v1192
      %v1201 = vpack.c.b16 %v1193, %v1193
      %v1202 = vpack.c.b16 %v1194, %v1194
      %v1203 = vpack.c.b16 %v1195, %v1195
      %v1204 = vpack.c.b16 %v1196, %v1196
      %v1205 = vpack.c.b16 %v1197, %v1197
      %v1206 = vpack.c.b16 %v1198, %v1198
      %v1207 = vpack.c.b16 %v1199, %v1199
      %1216 = vst.msk [vmem:[%s326] sm:$0xf] %vm778, %v1200
      %1217 = vst.msk [vmem:[%s326 + $0x4] sm:$0xf] %vm778, %v1201
      %1218 = vst.msk [vmem:[%s326 + $0x8] sm:$0xf] %vm778, %v1202
      %1219 = vst.msk [vmem:[%s326 + $0xc] sm:$0xf] %vm778, %v1203
      %1220 = vst.msk [vmem:[%s326 + $0x10] sm:$0xf] %vm778, %v1204
      %1221 = vst.msk [vmem:[%s326 + $0x14] sm:$0xf] %vm778, %v1205
      %1222 = vst.msk [vmem:[%s326 + $0x18] sm:$0xf] %vm778, %v1206
      %1223 = vst.msk [vmem:[%s326 + $0x1c] sm:$0xf] %vm778, %v1207
      %v1224 = vld [vmem:[%s3] sm:$0xf]
      %v1225 = vld [vmem:[%s3 + $0x4] sm:$0xf]
      %v1226 = vld [vmem:[%s3 + $0x8] sm:$0xf]
      %v1227 = vld [vmem:[%s3 + $0xc] sm:$0xf]
      %v1228 = vld [vmem:[%s3 + $0x10] sm:$0xf]
      %v1229 = vld [vmem:[%s3 + $0x14] sm:$0xf]
      %v1230 = vld [vmem:[%s3 + $0x18] sm:$0xf]
      %v1231 = vld [vmem:[%s3 + $0x1c] sm:$0xf]
      %v1232 = vld [vmem:[%s3 + $0x20] sm:$0xf]
      %v1233 = vld [vmem:[%s3 + $0x24] sm:$0xf]
      %v1234 = vld [vmem:[%s3 + $0x28] sm:$0xf]
      %v1235 = vld [vmem:[%s3 + $0x2c] sm:$0xf]
      %v1236 = vld [vmem:[%s3 + $0x30] sm:$0xf]
      %v1237 = vld [vmem:[%s3 + $0x34] sm:$0xf]
      %v1238 = vld [vmem:[%s3 + $0x38] sm:$0xf]
      %v1239 = vld [vmem:[%s3 + $0x3c] sm:$0xf]
      %v1256 = vunpack.c.l.b16 %v1224
      %v1257 = vunpack.c.l.b16 %v1225
      %v1258 = vunpack.c.l.b16 %v1226
      %v1259 = vunpack.c.l.b16 %v1227
      %v1260 = vunpack.c.l.b16 %v1228
      %v1261 = vunpack.c.l.b16 %v1229
      %v1262 = vunpack.c.l.b16 %v1230
      %v1263 = vunpack.c.l.b16 %v1231
      %v1264 = vunpack.c.l.b16 %v1232
      %v1265 = vunpack.c.l.b16 %v1233
      %v1266 = vunpack.c.l.b16 %v1234
      %v1267 = vunpack.c.l.b16 %v1235
      %v1268 = vunpack.c.l.b16 %v1236
      %v1269 = vunpack.c.l.b16 %v1237
      %v1270 = vunpack.c.l.b16 %v1238
      %v1271 = vunpack.c.l.b16 %v1239
      %v1272 = vpack.c.b16 %v1257, %v1256
      %v1273 = vpack.c.b16 %v1259, %v1258
      %v1274 = vpack.c.b16 %v1261, %v1260
      %v1275 = vpack.c.b16 %v1263, %v1262
      %v1276 = vpack.c.b16 %v1265, %v1264
      %v1277 = vpack.c.b16 %v1267, %v1266
      %v1278 = vpack.c.b16 %v1269, %v1268
      %v1279 = vpack.c.b16 %v1271, %v1270
      %1288 = vmatprep.subr.bf16.mxu0 0
      %1289 = vmatpush1.bf16.msra.mxu0 %v1272
      %1290 = vmatprep.subr.bf16.mxu0 0
      %1291 = vmatpush1.bf16.msra.mxu0 %v1273
      %1292 = vmatprep.subr.bf16.mxu0 0
      %1293 = vmatpush1.bf16.msra.mxu0 %v1274
      %1294 = vmatprep.subr.bf16.mxu0 0
      %1295 = vmatpush1.bf16.msra.mxu0 %v1275
      %1296 = vmatprep.subr.bf16.mxu0 0
      %1297 = vmatpush1.bf16.msra.mxu0 %v1276
      %1298 = vmatprep.subr.bf16.mxu0 0
      %1299 = vmatpush1.bf16.msra.mxu0 %v1277
      %1300 = vmatprep.subr.bf16.mxu0 0
      %1301 = vmatpush1.bf16.msra.mxu0 %v1278
      %1302 = vmatprep.subr.bf16.mxu0 0
      %1303 = vmatpush1.bf16.msra.mxu0 %v1279
      %1304 = vmatprep.subr.bf16.mxu0 0
      %1305 = vmatpush1.bf16.msra.mxu0 0
      %1306 = vmatprep.subr.bf16.mxu0 0
      %1307 = vmatpush1.bf16.msra.mxu0 0
      %1308 = vmatprep.subr.bf16.mxu0 0
      %1309 = vmatpush1.bf16.msra.mxu0 0
      %1310 = vmatprep.subr.bf16.mxu0 0
      %1311 = vmatpush1.bf16.msra.mxu0 0
      %1312 = vmatprep.subr.bf16.mxu0 0
      %1313 = vmatpush1.bf16.msra.mxu0 0
      %1314 = vmatprep.subr.bf16.mxu0 0
      %1315 = vmatpush1.bf16.msra.mxu0 0
      %1316 = vmatprep.subr.bf16.mxu0 0
      %1317 = vmatpush1.bf16.msra.mxu0 0
      %1318 = vmatprep.subr.bf16.mxu0 0
      %1319 = vmatpush1.bf16.msra.mxu0 0
      %1320 = vmatprep.mubr.bf16.mxu0 0
      %1321 = vmatmul.mubr.bf16.gmra.mrb[0].mxu0 %v361
      %v1322 = vpop.f32.mrb[0].mxu0
      %v1323 = vadd.f32 0.0, %v1322
      %v1324 = vpop.f32.mrb[0].mxu0
      %v1325 = vpop.f32.mrb[0].mxu0
      %v1326 = vadd.f32 0.0, %v1325
      %v1327 = vpop.f32.mrb[0].mxu0
      %1328 = vdwg.mxu0
      %1331 = vrot.lane.b32.xlu0 %v1323, 96
      %v1332 = vpop.permute.xlu0 %1331
      %1333 = vrot.lane.b32.xlu0 %v1326, 96
      %v1334 = vpop.permute.xlu0 %1333
      %1337 = vrot.lane.b32.xlu0 %v1323, 64
      %v1338 = vpop.permute.xlu0 %1337
      %1339 = vrot.lane.b32.xlu0 %v1326, 64
      %v1340 = vpop.permute.xlu0 %1339
      %1343 = vrot.lane.b32.xlu0 %v1323, 32
      %v1344 = vpop.permute.xlu0 %1343
      %1345 = vrot.lane.b32.xlu0 %v1326, 32
      %v1346 = vpop.permute.xlu0 %1345
      %v1349 = vcombine.low %v1323, %v1338
      %v1350 = vcombine.high %v1323, %v1338
      %v1352 = vunpack.c.l.s4 1983009808
      %v1353 = vunpack.c.0.s8 %v1352
      %v1354 = vlaneseq
      %v1355 = vshrl.u32 %v1354, 7
      %v1356 = vsub.s32 %v1353, %v1355
      %v1357 = vrot.slane %v1349, %v1356
      %v1359 = vunpack.c.l.s4 1983009808
      %v1360 = vunpack.c.0.s8 %v1359
      %v1361 = vlaneseq
      %v1362 = vshrl.u32 %v1361, 7
      %v1363 = vsub.s32 %v1360, %v1362
      %v1364 = vrot.slane %v1350, %v1363
      %v1365 = vcombine.low %v1332, %v1344
      %v1366 = vcombine.high %v1332, %v1344
      %v1368 = vunpack.c.l.s4 1983009808
      %v1369 = vunpack.c.0.s8 %v1368
      %v1370 = vlaneseq
      %v1371 = vshrl.u32 %v1370, 7
      %v1372 = vsub.s32 %v1369, %v1371
      %v1373 = vrot.slane %v1365, %v1372
      %v1375 = vunpack.c.l.s4 1983009808
      %v1376 = vunpack.c.0.s8 %v1375
      %v1377 = vlaneseq
      %v1378 = vshrl.u32 %v1377, 7
      %v1379 = vsub.s32 %v1376, %v1378
      %v1380 = vrot.slane %v1366, %v1379
      %v1381 = vcombine.low %v1357, %v1373
      %v1382 = vcombine.high %v1357, %v1373
      %v1384 = vunpack.c.l.s4 1934713408
      %v1385 = vunpack.c.0.s8 %v1384
      %v1386 = vlaneseq
      %v1387 = vshrl.u32 %v1386, 7
      %v1388 = vsub.s32 %v1385, %v1387
      %v1389 = vrot.slane %v1381, %v1388
      %v1391 = vunpack.c.l.s4 1934713408
      %v1392 = vunpack.c.0.s8 %v1391
      %v1393 = vlaneseq
      %v1394 = vshrl.u32 %v1393, 7
      %v1395 = vsub.s32 %v1392, %v1394
      %v1396 = vrot.slane %v1382, %v1395
      %v1397 = vcombine.low %v1364, %v1380
      %v1398 = vcombine.high %v1364, %v1380
      %v1400 = vunpack.c.l.s4 1934713408
      %v1401 = vunpack.c.0.s8 %v1400
      %v1402 = vlaneseq
      %v1403 = vshrl.u32 %v1402, 7
      %v1404 = vsub.s32 %v1401, %v1403
      %v1405 = vrot.slane %v1397, %v1404
      %v1407 = vunpack.c.l.s4 1934713408
      %v1408 = vunpack.c.0.s8 %v1407
      %v1409 = vlaneseq
      %v1410 = vshrl.u32 %v1409, 7
      %v1411 = vsub.s32 %v1408, %v1410
      %v1412 = vrot.slane %v1398, %v1411
      %v1413 = vcombine.high %v1389, 0.0
      %v1414 = vcombine.high %v1396, 0.0
      %v1415 = vcombine.high %v1405, 0.0
      %v1416 = vcombine.high %v1412, 0.0
      %v1417 = vcombine.low %v1326, %v1340
      %v1418 = vcombine.high %v1326, %v1340
      %v1420 = vunpack.c.l.s4 1983009808
      %v1421 = vunpack.c.0.s8 %v1420
      %v1422 = vlaneseq
      %v1423 = vshrl.u32 %v1422, 7
      %v1424 = vsub.s32 %v1421, %v1423
      %v1425 = vrot.slane %v1417, %v1424
      %v1427 = vunpack.c.l.s4 1983009808
      %v1428 = vunpack.c.0.s8 %v1427
      %v1429 = vlaneseq
      %v1430 = vshrl.u32 %v1429, 7
      %v1431 = vsub.s32 %v1428, %v1430
      %v1432 = vrot.slane %v1418, %v1431
      %v1433 = vcombine.low %v1334, %v1346
      %v1434 = vcombine.high %v1334, %v1346
      %v1436 = vunpack.c.l.s4 1983009808
      %v1437 = vunpack.c.0.s8 %v1436
      %v1438 = vlaneseq
      %v1439 = vshrl.u32 %v1438, 7
      %v1440 = vsub.s32 %v1437, %v1439
      %v1441 = vrot.slane %v1433, %v1440
      %v1443 = vunpack.c.l.s4 1983009808
      %v1444 = vunpack.c.0.s8 %v1443
      %v1445 = vlaneseq
      %v1446 = vshrl.u32 %v1445, 7
      %v1447 = vsub.s32 %v1444, %v1446
      %v1448 = vrot.slane %v1434, %v1447
      %v1449 = vcombine.low %v1425, %v1441
      %v1450 = vcombine.high %v1425, %v1441
      %v1452 = vunpack.c.l.s4 1934713408
      %v1453 = vunpack.c.0.s8 %v1452
      %v1454 = vlaneseq
      %v1455 = vshrl.u32 %v1454, 7
      %v1456 = vsub.s32 %v1453, %v1455
      %v1457 = vrot.slane %v1449, %v1456
      %v1459 = vunpack.c.l.s4 1934713408
      %v1460 = vunpack.c.0.s8 %v1459
      %v1461 = vlaneseq
      %v1462 = vshrl.u32 %v1461, 7
      %v1463 = vsub.s32 %v1460, %v1462
      %v1464 = vrot.slane %v1450, %v1463
      %v1465 = vcombine.low %v1432, %v1448
      %v1466 = vcombine.high %v1432, %v1448
      %v1468 = vunpack.c.l.s4 1934713408
      %v1469 = vunpack.c.0.s8 %v1468
      %v1470 = vlaneseq
      %v1471 = vshrl.u32 %v1470, 7
      %v1472 = vsub.s32 %v1469, %v1471
      %v1473 = vrot.slane %v1465, %v1472
      %v1475 = vunpack.c.l.s4 1934713408
      %v1476 = vunpack.c.0.s8 %v1475
      %v1477 = vlaneseq
      %v1478 = vshrl.u32 %v1477, 7
      %v1479 = vsub.s32 %v1476, %v1478
      %v1480 = vrot.slane %v1466, %v1479
      %v1481 = vcombine.high %v1457, 0.0
      %v1482 = vcombine.high %v1464, 0.0
      %v1483 = vcombine.high %v1473, 0.0
      %v1484 = vcombine.high %v1480, 0.0
      %v1485 = vcombine.low %v1389, %v1396
      %v1487 = vunpack.c.l.s4 1983009808
      %v1488 = vunpack.c.0.s8 %v1487
      %v1489 = vlaneseq
      %v1490 = vshrl.u32 %v1489, 7
      %v1491 = vsub.s32 %v1488, %v1490
      %v1492 = vrot.slane %v1485, %v1491
      %v1493 = vcombine.low %v1413, %v1414
      %v1495 = vunpack.c.l.s4 1983009808
      %v1496 = vunpack.c.0.s8 %v1495
      %v1497 = vlaneseq
      %v1498 = vshrl.u32 %v1497, 7
      %v1499 = vsub.s32 %v1496, %v1498
      %v1500 = vrot.slane %v1493, %v1499
      %v1501 = vcombine.low %v1405, %v1412
      %v1503 = vunpack.c.l.s4 1983009808
      %v1504 = vunpack.c.0.s8 %v1503
      %v1505 = vlaneseq
      %v1506 = vshrl.u32 %v1505, 7
      %v1507 = vsub.s32 %v1504, %v1506
      %v1508 = vrot.slane %v1501, %v1507
      %v1509 = vcombine.low %v1415, %v1416
      %v1511 = vunpack.c.l.s4 1983009808
      %v1512 = vunpack.c.0.s8 %v1511
      %v1513 = vlaneseq
      %v1514 = vshrl.u32 %v1513, 7
      %v1515 = vsub.s32 %v1512, %v1514
      %v1516 = vrot.slane %v1509, %v1515
      %v1517 = vcombine.low %v1492, %v1500
      %v1518 = vcombine.high %v1492, %v1500
      %v1520 = vunpack.c.l.s4 1934713408
      %v1521 = vunpack.c.0.s8 %v1520
      %v1522 = vlaneseq
      %v1523 = vshrl.u32 %v1522, 7
      %v1524 = vsub.s32 %v1521, %v1523
      %v1525 = vrot.slane %v1517, %v1524
      %v1527 = vunpack.c.l.s4 1934713408
      %v1528 = vunpack.c.0.s8 %v1527
      %v1529 = vlaneseq
      %v1530 = vshrl.u32 %v1529, 7
      %v1531 = vsub.s32 %v1528, %v1530
      %v1532 = vrot.slane %v1518, %v1531
      %v1533 = vcombine.low %v1508, %v1516
      %v1534 = vcombine.high %v1508, %v1516
      %v1536 = vunpack.c.l.s4 1934713408
      %v1537 = vunpack.c.0.s8 %v1536
      %v1538 = vlaneseq
      %v1539 = vshrl.u32 %v1538, 7
      %v1540 = vsub.s32 %v1537, %v1539
      %v1541 = vrot.slane %v1533, %v1540
      %v1543 = vunpack.c.l.s4 1934713408
      %v1544 = vunpack.c.0.s8 %v1543
      %v1545 = vlaneseq
      %v1546 = vshrl.u32 %v1545, 7
      %v1547 = vsub.s32 %v1544, %v1546
      %v1548 = vrot.slane %v1534, %v1547
      %v1549 = vcombine.low %v1525, %v1541
      %v1550 = vcombine.high %v1525, %v1541
      %v1551 = vcombine.low %v1532, %v1548
      %v1552 = vcombine.high %v1532, %v1548
      %v1553 = vcombine.low %v1457, %v1464
      %v1555 = vunpack.c.l.s4 1983009808
      %v1556 = vunpack.c.0.s8 %v1555
      %v1557 = vlaneseq
      %v1558 = vshrl.u32 %v1557, 7
      %v1559 = vsub.s32 %v1556, %v1558
      %v1560 = vrot.slane %v1553, %v1559
      %v1561 = vcombine.low %v1481, %v1482
      %v1563 = vunpack.c.l.s4 1983009808
      %v1564 = vunpack.c.0.s8 %v1563
      %v1565 = vlaneseq
      %v1566 = vshrl.u32 %v1565, 7
      %v1567 = vsub.s32 %v1564, %v1566
      %v1568 = vrot.slane %v1561, %v1567
      %v1569 = vcombine.low %v1473, %v1480
      %v1571 = vunpack.c.l.s4 1983009808
      %v1572 = vunpack.c.0.s8 %v1571
      %v1573 = vlaneseq
      %v1574 = vshrl.u32 %v1573, 7
      %v1575 = vsub.s32 %v1572, %v1574
      %v1576 = vrot.slane %v1569, %v1575
      %v1577 = vcombine.low %v1483, %v1484
      %v1579 = vunpack.c.l.s4 1983009808
      %v1580 = vunpack.c.0.s8 %v1579
      %v1581 = vlaneseq
      %v1582 = vshrl.u32 %v1581, 7
      %v1583 = vsub.s32 %v1580, %v1582
      %v1584 = vrot.slane %v1577, %v1583
      %v1585 = vcombine.low %v1560, %v1568
      %v1586 = vcombine.high %v1560, %v1568
      %v1588 = vunpack.c.l.s4 1934713408
      %v1589 = vunpack.c.0.s8 %v1588
      %v1590 = vlaneseq
      %v1591 = vshrl.u32 %v1590, 7
      %v1592 = vsub.s32 %v1589, %v1591
      %v1593 = vrot.slane %v1585, %v1592
      %v1595 = vunpack.c.l.s4 1934713408
      %v1596 = vunpack.c.0.s8 %v1595
      %v1597 = vlaneseq
      %v1598 = vshrl.u32 %v1597, 7
      %v1599 = vsub.s32 %v1596, %v1598
      %v1600 = vrot.slane %v1586, %v1599
      %v1601 = vcombine.low %v1576, %v1584
      %v1602 = vcombine.high %v1576, %v1584
      %v1604 = vunpack.c.l.s4 1934713408
      %v1605 = vunpack.c.0.s8 %v1604
      %v1606 = vlaneseq
      %v1607 = vshrl.u32 %v1606, 7
      %v1608 = vsub.s32 %v1605, %v1607
      %v1609 = vrot.slane %v1601, %v1608
      %v1611 = vunpack.c.l.s4 1934713408
      %v1612 = vunpack.c.0.s8 %v1611
      %v1613 = vlaneseq
      %v1614 = vshrl.u32 %v1613, 7
      %v1615 = vsub.s32 %v1612, %v1614
      %v1616 = vrot.slane %v1602, %v1615
      %v1617 = vcombine.low %v1593, %v1609
      %v1618 = vcombine.high %v1593, %v1609
      %v1619 = vcombine.low %v1600, %v1616
      %v1620 = vcombine.high %v1600, %v1616
      %v1621 = vpack.c.bf16 %v1617, %v1549
      %v1622 = vpack.c.bf16 %v1618, %v1550
      %v1623 = vpack.c.bf16 %v1619, %v1551
      %v1624 = vpack.c.bf16 %v1620, %v1552
      %v1629 = vunpack.c.l.b16 %v1621
      %v1630 = vunpack.c.h.b16 %v1621
      %v1631 = vunpack.c.l.b16 %v1622
      %v1632 = vunpack.c.h.b16 %v1622
      %v1633 = vunpack.c.l.b16 %v1623
      %v1634 = vunpack.c.h.b16 %v1623
      %v1635 = vunpack.c.l.b16 %v1624
      %v1636 = vunpack.c.h.b16 %v1624
      %v1637 = vpack.c.b16 %v1629, %v1629
      %v1638 = vpack.c.b16 %v1630, %v1630
      %v1639 = vpack.c.b16 %v1631, %v1631
      %v1640 = vpack.c.b16 %v1632, %v1632
      %v1641 = vpack.c.b16 %v1633, %v1633
      %v1642 = vpack.c.b16 %v1634, %v1634
      %v1643 = vpack.c.b16 %v1635, %v1635
      %v1644 = vpack.c.b16 %v1636, %v1636
      %1653 = vst.msk [vmem:[%s336] sm:$0xf] %vm778, %v1637
      %1654 = vst.msk [vmem:[%s336 + $0x4] sm:$0xf] %vm778, %v1638
      %1655 = vst.msk [vmem:[%s336 + $0x8] sm:$0xf] %vm778, %v1639
      %1656 = vst.msk [vmem:[%s336 + $0xc] sm:$0xf] %vm778, %v1640
      %1657 = vst.msk [vmem:[%s336 + $0x10] sm:$0xf] %vm778, %v1641
      %1658 = vst.msk [vmem:[%s336 + $0x14] sm:$0xf] %vm778, %v1642
      %1659 = vst.msk [vmem:[%s336 + $0x18] sm:$0xf] %vm778, %v1643
      %1660 = vst.msk [vmem:[%s336 + $0x1c] sm:$0xf] %vm778, %v1644
      %s1661 = smul.u32 2, %s23
      %p1662 = scmp.lt.s32.totalorder %s22, 1
      %s1663 = scalar_select %p1662, %s22, 1
      %p1664 = scmp.lt.s32.totalorder %s1661, 1
      %s1665 = scalar_select %p1664, %s1661, 1
      %s1666 = smul.addr %s1663, 8
      %s1667 = sadd.s32 %s1665, %s1666
      %s1668 = smul.addr %s1667, 4
      %s1669 = scalar_lea.vmem %s4, %s1668
      %s1670 = smul.u32 2, %s23
      %p1671 = scmp.lt.s32.totalorder %s22, 1
      %s1672 = scalar_select %p1671, %s22, 1
      %p1673 = scmp.lt.s32.totalorder %s1670, 1
      %s1674 = scalar_select %p1673, %s1670, 1
      %s1675 = smul.addr %s1672, 8
      %s1676 = sadd.s32 %s1674, %s1675
      %s1677 = smul.addr %s1676, 4
      %s1678 = scalar_lea.vmem %s5, %s1677
      %s1679 = smul.u32 2, %s23
      %p1680 = scmp.lt.s32.totalorder %s22, 1
      %s1681 = scalar_select %p1680, %s22, 1
      %p1682 = scmp.lt.s32.totalorder %s1679, 1
      %s1683 = scalar_select %p1682, %s1679, 1
      %s1684 = smul.addr %s1681, 8
      %s1685 = sadd.s32 %s1683, %s1684
      %s1686 = smul.addr %s1685, 4
      %s1687 = scalar_lea.vmem %s6, %s1686
      // Predicated region
      $region37: #{transformer_forward.25} parent=35 // pred_check
        %p1688 = pneg %p141
      $region38: #{transformer_forward.25} parent=35 // pred_check_branch
        %1690 = sbr.rel (%p1688) target = $region40
      $region39: #{transformer_forward.25} parent=35 // pred_region
        %s1691 = smul.u32 2, %s23
      $region40: #{transformer_forward.25} parent=35 // pred_fallthru
        _
      // Predicated region
      $region41: #{transformer_forward.25} parent=35 // pred_check
        %p1692 = pneg %p169
      $region42: #{transformer_forward.25} parent=35 // pred_check_branch
        %1694 = sbr.rel (%p1692) target = $region44
      $region43: #{transformer_forward.25} parent=35 // pred_region
        %s1695 = smul.u32 2, %s23
      $region44: #{transformer_forward.25} parent=35 // pred_fallthru
        _
      // Predicated region
      $region45: #{transformer_forward.25} parent=35 // pred_check
        %p1696 = pneg %p197
      $region46: #{transformer_forward.25} parent=35 // pred_check_branch
        %1698 = sbr.rel (%p1696) target = $region48
      $region47: #{transformer_forward.25} parent=35 // pred_region
        %s1699 = smul.u32 2, %s23
      $region48: #{transformer_forward.25} parent=35 // pred_fallthru
        _
    $region36: #{transformer_forward.25} parent=5 // pred_fallthru
      _
    %p1700 = scmp.le.s32.totalorder 2, %s13
    // Predicated region
    $region49: #{transformer_forward.25} parent=5 // pred_check
      %p1701 = pneg %p1700
    $region50: #{transformer_forward.25} parent=5 // pred_check_branch
      %1703 = sbr.rel (%p1701) target = $region52
    $region51: #{transformer_forward.25} parent=5 // pred_region
      %s1704 = ssub.s32 %s13, 2
      // Predicated region
      $region53: #{transformer_forward.25} parent=51 // pred_check
        %p1705 = pneg %p147
      $region54: #{transformer_forward.25} parent=51 // pred_check_branch
        %1707 = sbr.rel (%p1705) target = $region56
      $region55: #{transformer_forward.25} parent=51 // pred_region
        %s1708 = smul.u32 2, %s25
        %p1709 = scmp.lt.s32.totalorder %s24, 1
        %s1710 = scalar_select %p1709, %s24, 1
        %p1711 = scmp.lt.s32.totalorder %s1708, 1
        %s1712 = scalar_select %p1711, %s1708, 1
        %s1713 = smul.addr %s1710, 8
        %s1714 = sadd.s32 %s1712, %s1713
        %s1715 = smul.addr %s1714, 4
        %s1716 = scalar_lea.vmem %s4, %s1715
      $region56: #{transformer_forward.25} parent=51 // pred_fallthru
        _
      // Predicated region
      $region57: #{transformer_forward.25} parent=51 // pred_check
        %p1717 = pneg %p175
      $region58: #{transformer_forward.25} parent=51 // pred_check_branch
        %1719 = sbr.rel (%p1717) target = $region60
      $region59: #{transformer_forward.25} parent=51 // pred_region
        %s1720 = smul.u32 2, %s25
        %p1721 = scmp.lt.s32.totalorder %s24, 1
        %s1722 = scalar_select %p1721, %s24, 1
        %p1723 = scmp.lt.s32.totalorder %s1720, 1
        %s1724 = scalar_select %p1723, %s1720, 1
        %s1725 = smul.addr %s1722, 8
        %s1726 = sadd.s32 %s1724, %s1725
        %s1727 = smul.addr %s1726, 4
        %s1728 = scalar_lea.vmem %s5, %s1727
      $region60: #{transformer_forward.25} parent=51 // pred_fallthru
        _
      // Predicated region
      $region61: #{transformer_forward.25} parent=51 // pred_check
        %p1729 = pneg %p203
      $region62: #{transformer_forward.25} parent=51 // pred_check_branch
        %1731 = sbr.rel (%p1729) target = $region64
      $region63: #{transformer_forward.25} parent=51 // pred_region
        %s1732 = smul.u32 2, %s25
        %p1733 = scmp.lt.s32.totalorder %s24, 1
        %s1734 = scalar_select %p1733, %s24, 1
        %p1735 = scmp.lt.s32.totalorder %s1732, 1
        %s1736 = scalar_select %p1735, %s1732, 1
        %s1737 = smul.addr %s1734, 8
        %s1738 = sadd.s32 %s1736, %s1737
        %s1739 = smul.addr %s1738, 4
        %s1740 = scalar_lea.vmem %s6, %s1739
      $region64: #{transformer_forward.25} parent=51 // pred_fallthru
        _
    $region52: #{transformer_forward.25} parent=5 // pred_fallthru
      _
  $region6: #{transformer_forward.25} parent=0 // loop_footer
    %s17 = sadd.s32 1, %s13
  $region7: #{transformer_forward.25} parent=0 // loop_footer_branch
    %12 = sbr.rel target = $region3
  $region8: #{transformer_forward.25} parent=0 // loop_exit
    _

// kernel: transformer_forward.20
$region0: #{transformer_forward.20}
  #allocation0 [shape = 'u32[]', space=smem, size = 0x4, offset = 0x4, fixed_abs, tag = 'smem constant byte address 0x4 - core index']
  #allocation1 [shape = 'u32[144,128]{1,0:T(1,128)}', space=vmem, size = 0x12000, scoped, tag = 'internal scratch']
  #allocation2 [shape = 'f32[4,16,1]{2,1,0:T(8,128)}', space=vmem, size = 0x8000, scoped, tag = 'scratch operand']
  #allocation3 [shape = 'f32[4,16,1]{2,1,0:T(8,128)}', space=vmem, size = 0x8000, scoped, tag = 'scratch operand']
  #allocation4 [shape = 'f32[4,16,32]{2,1,0:T(8,128)}', space=vmem, size = 0x8000, scoped, tag = 'scratch operand']
  %s0 = inlined_call_operand.vmem [shape: bf16[2,16,128], index: 0, kind: input, shape index: {}]
  %s1 = inlined_call_operand.vmem [shape: bf16[2,4,16,32], index: 1, kind: input, shape index: {}]
  %s2 = inlined_call_operand.vmem [shape: bf16[2,4,16,32], index: 2, kind: input, shape index: {}]
  %s3 = inlined_call_operand.vmem [shape: bf16[2,4,16,32], index: 3, kind: input, shape index: {}]
  %s4 = inlined_call_operand.vmem [shape: bf16[128,128], index: 4, kind: input, shape index: {}]
  %s5 = inlined_call_operand.vmem [shape: f32[1,128], index: 5, kind: input, shape index: {}]
  %s6 = inlined_call_operand.vmem [shape: f32[1,128], index: 6, kind: input, shape index: {}]
  %s7 = inlined_call_operand.vmem [shape: f32[1,128], index: 7, kind: input, shape index: {}]
  %s8 = inlined_call_operand.vmem [shape: bf16[2,16,128], index: 8, kind: output, shape index: {}]
  %s9 = sld [smem:[#allocation0]]
  $region73: #{transformer_forward.20} parent=0
    _
  %s11 = ssub.s32 1, %s9
  %s12 = scalar_select 0, %s11, %s9
  loop: start=0, step=1, limit=4
  $region2: #{transformer_forward.20} parent=0 // loop_pre_header
    _
  $region3: #{transformer_forward.20} parent=0 // loop_header
    %s14 = sphi 0, %s18
    %p15 = scmp.ge.s32.totalorder %s14, 4
    %s21 = sphi 0, %s40
    %s22 = sphi 0, %s36
    %s23 = sphi 0, %s32
    %s24 = sphi 0, %s21
    %s25 = sphi 0, %s22
    %s26 = sphi 0, %s23
    %s27 = sphi 0, %s24
    %s28 = sphi 0, %s25
    %s29 = sphi 0, %s26
    %s45 = sphi 0, %s47
    %s48 = sphi 0, %s45
    %s49 = sphi 0, %s48
    %s65 = sphi 0, %s49
    %s73 = sphi 0, %s75
    %s76 = sphi 0, %s73
    %s77 = sphi 0, %s76
    %s93 = sphi 0, %s77
    %s101 = sphi 0, %s103
    %s104 = sphi 0, %s101
    %s105 = sphi 0, %s104
    %s121 = sphi 0, %s105
    %s129 = sphi 0, %s131
    %s132 = sphi 0, %s129
    %s133 = sphi 0, %s132
    %s149 = sphi 0, %s133
    %s153 = sphi 0, %s153
    %s155 = sphi 0, %s153
    %s156 = sphi 0, %s155
    %s170 = sphi 0, %s156
    %s174 = sphi 0, %s174
    %s176 = sphi 0, %s174
    %s177 = sphi 0, %s176
    %s191 = sphi 0, %s177
    %s195 = sphi 0, %s195
    %s197 = sphi 0, %s195
    %s198 = sphi 0, %s197
    %s212 = sphi 0, %s198
    %s216 = sphi 0, %s216
    %s218 = sphi 0, %s216
    %s219 = sphi 0, %s218
    %s233 = sphi 0, %s219
    %s241 = sphi 0, %s243
    %s244 = sphi 0, %s241
    %s245 = sphi 0, %s244
    %s261 = sphi 0, %s245
  $region4: #{transformer_forward.20} parent=0 // loop_header_branch
    %17 = sbr.rel (%p15) target = $region8
  $region5: #{transformer_forward.20} parent=0 // loop_body
    %s19 = ssub.s32 %s14, 1
    %s20 = ssub.s32 %s14, 2
    %s30 = sadd.s32 1, %s23
    %p31 = scmp.ge.s32.totalorder %s30, 1
    %s32 = scalar_select %p31, 0, %s30
    %s33 = sadd.s32 1, %s22
    %s34 = scalar_select %p31, %s33, %s22
    %p35 = scmp.ge.s32.totalorder %s34, 1
    %s36 = scalar_select %p35, 0, %s34
    %s37 = sadd.s32 1, %s21
    %s38 = scalar_select %p35, %s37, %s21
    %p39 = scmp.ge.s32.totalorder %s38, 2
    %s40 = scalar_select %p39, 0, %s38
    %s41 = ssub.s32 %s21, %s40
    %s42 = ssub.s32 %s22, %s36
    %s43 = sor.u32 %s41, %s42
    %p44 = scmp.eq.s32.totalorder %s43, 0
    %s46 = sadd.s32 %s45, 1
    %s47 = scalar_select %p44, %s45, %s46
    %p50 = pneg %p44
    %p51 = scmp.eq.s32.totalorder %s14, 1
    %p52 = por %p50, %p51
    %p53 = scmp.ne.s32.totalorder %s45, %s48
    %p54 = scmp.eq.s32.totalorder %s14, 0
    %p55 = por %p53, %p54
    %p56 = scmp.ne.s32.totalorder %s45, %s48
    %p57 = scmp.eq.s32.totalorder %s19, 1
    %p58 = por %p56, %p57
    %p59 = scmp.ne.s32.totalorder %s48, %s49
    %p60 = scmp.eq.s32.totalorder %s19, 0
    %p61 = por %p59, %p60
    %p62 = scmp.ne.s32.totalorder %s48, %s49
    %p63 = scmp.eq.s32.totalorder %s20, 1
    %p64 = por %p62, %p63
    %p66 = scmp.ne.s32.totalorder %s49, %s65
    %p67 = scmp.eq.s32.totalorder %s20, 0
    %p68 = por %p66, %p67
    %s69 = ssub.s32 %s21, %s40
    %s70 = ssub.s32 %s22, %s36
    %s71 = sor.u32 %s69, %s70
    %p72 = scmp.eq.s32.totalorder %s71, 0
    %s74 = sadd.s32 %s73, 1
    %s75 = scalar_select %p72, %s73, %s74
    %p78 = pneg %p72
    %p79 = scmp.eq.s32.totalorder %s14, 1
    %p80 = por %p78, %p79
    %p81 = scmp.ne.s32.totalorder %s73, %s76
    %p82 = scmp.eq.s32.totalorder %s14, 0
    %p83 = por %p81, %p82
    %p84 = scmp.ne.s32.totalorder %s73, %s76
    %p85 = scmp.eq.s32.totalorder %s19, 1
    %p86 = por %p84, %p85
    %p87 = scmp.ne.s32.totalorder %s76, %s77
    %p88 = scmp.eq.s32.totalorder %s19, 0
    %p89 = por %p87, %p88
    %p90 = scmp.ne.s32.totalorder %s76, %s77
    %p91 = scmp.eq.s32.totalorder %s20, 1
    %p92 = por %p90, %p91
    %p94 = scmp.ne.s32.totalorder %s77, %s93
    %p95 = scmp.eq.s32.totalorder %s20, 0
    %p96 = por %p94, %p95
    %s97 = ssub.s32 %s21, %s40
    %s98 = ssub.s32 %s23, %s32
    %s99 = sor.u32 %s97, %s98
    %p100 = scmp.eq.s32.totalorder %s99, 0
    %s102 = sadd.s32 %s101, 1
    %s103 = scalar_select %p100, %s101, %s102
    %p106 = pneg %p100
    %p107 = scmp.eq.s32.totalorder %s14, 1
    %p108 = por %p106, %p107
    %p109 = scmp.ne.s32.totalorder %s101, %s104
    %p110 = scmp.eq.s32.totalorder %s14, 0
    %p111 = por %p109, %p110
    %p112 = scmp.ne.s32.totalorder %s101, %s104
    %p113 = scmp.eq.s32.totalorder %s19, 1
    %p114 = por %p112, %p113
    %p115 = scmp.ne.s32.totalorder %s104, %s105
    %p116 = scmp.eq.s32.totalorder %s19, 0
    %p117 = por %p115, %p116
    %p118 = scmp.ne.s32.totalorder %s104, %s105
    %p119 = scmp.eq.s32.totalorder %s20, 1
    %p120 = por %p118, %p119
    %p122 = scmp.ne.s32.totalorder %s105, %s121
    %p123 = scmp.eq.s32.totalorder %s20, 0
    %p124 = por %p122, %p123
    %s125 = ssub.s32 %s21, %s40
    %s126 = ssub.s32 %s23, %s32
    %s127 = sor.u32 %s125, %s126
    %p128 = scmp.eq.s32.totalorder %s127, 0
    %s130 = sadd.s32 %s129, 1
    %s131 = scalar_select %p128, %s129, %s130
    %p134 = pneg %p128
    %p135 = scmp.eq.s32.totalorder %s14, 1
    %p136 = por %p134, %p135
    %p137 = scmp.ne.s32.totalorder %s129, %s132
    %p138 = scmp.eq.s32.totalorder %s14, 0
    %p139 = por %p137, %p138
    %p140 = scmp.ne.s32.totalorder %s129, %s132
    %p141 = scmp.eq.s32.totalorder %s19, 1
    %p142 = por %p140, %p141
    %p143 = scmp.ne.s32.totalorder %s132, %s133
    %p144 = scmp.eq.s32.totalorder %s19, 0
    %p145 = por %p143, %p144
    %p146 = scmp.ne.s32.totalorder %s132, %s133
    %p147 = scmp.eq.s32.totalorder %s20, 1
    %p148 = por %p146, %p147
    %p150 = scmp.ne.s32.totalorder %s133, %s149
    %p151 = scmp.eq.s32.totalorder %s20, 0
    %p152 = por %p150, %p151
    %s154 = sadd.s32 %s153, 1
    %p157 = scmp.eq.s32.totalorder %s14, 1
    %p158 = scmp.ne.s32.totalorder %s153, %s155
    %p159 = scmp.eq.s32.totalorder %s14, 0
    %p160 = por %p158, %p159
    %p161 = scmp.ne.s32.totalorder %s153, %s155
    %p162 = scmp.eq.s32.totalorder %s19, 1
    %p163 = por %p161, %p162
    %p164 = scmp.ne.s32.totalorder %s155, %s156
    %p165 = scmp.eq.s32.totalorder %s19, 0
    %p166 = por %p164, %p165
    %p167 = scmp.ne.s32.totalorder %s155, %s156
    %p168 = scmp.eq.s32.totalorder %s20, 1
    %p169 = por %p167, %p168
    %p171 = scmp.ne.s32.totalorder %s156, %s170
    %p172 = scmp.eq.s32.totalorder %s20, 0
    %p173 = por %p171, %p172
    %s175 = sadd.s32 %s174, 1
    %p178 = scmp.eq.s32.totalorder %s14, 1
    %p179 = scmp.ne.s32.totalorder %s174, %s176
    %p180 = scmp.eq.s32.totalorder %s14, 0
    %p181 = por %p179, %p180
    %p182 = scmp.ne.s32.totalorder %s174, %s176
    %p183 = scmp.eq.s32.totalorder %s19, 1
    %p184 = por %p182, %p183
    %p185 = scmp.ne.s32.totalorder %s176, %s177
    %p186 = scmp.eq.s32.totalorder %s19, 0
    %p187 = por %p185, %p186
    %p188 = scmp.ne.s32.totalorder %s176, %s177
    %p189 = scmp.eq.s32.totalorder %s20, 1
    %p190 = por %p188, %p189
    %p192 = scmp.ne.s32.totalorder %s177, %s191
    %p193 = scmp.eq.s32.totalorder %s20, 0
    %p194 = por %p192, %p193
    %s196 = sadd.s32 %s195, 1
    %p199 = scmp.eq.s32.totalorder %s14, 1
    %p200 = scmp.ne.s32.totalorder %s195, %s197
    %p201 = scmp.eq.s32.totalorder %s14, 0
    %p202 = por %p200, %p201
    %p203 = scmp.ne.s32.totalorder %s195, %s197
    %p204 = scmp.eq.s32.totalorder %s19, 1
    %p205 = por %p203, %p204
    %p206 = scmp.ne.s32.totalorder %s197, %s198
    %p207 = scmp.eq.s32.totalorder %s19, 0
    %p208 = por %p206, %p207
    %p209 = scmp.ne.s32.totalorder %s197, %s198
    %p210 = scmp.eq.s32.totalorder %s20, 1
    %p211 = por %p209, %p210
    %p213 = scmp.ne.s32.totalorder %s198, %s212
    %p214 = scmp.eq.s32.totalorder %s20, 0
    %p215 = por %p213, %p214
    %s217 = sadd.s32 %s216, 1
    %p220 = scmp.eq.s32.totalorder %s14, 1
    %p221 = scmp.ne.s32.totalorder %s216, %s218
    %p222 = scmp.eq.s32.totalorder %s14, 0
    %p223 = por %p221, %p222
    %p224 = scmp.ne.s32.totalorder %s216, %s218
    %p225 = scmp.eq.s32.totalorder %s19, 1
    %p226 = por %p224, %p225
    %p227 = scmp.ne.s32.totalorder %s218, %s219
    %p228 = scmp.eq.s32.totalorder %s19, 0
    %p229 = por %p227, %p228
    %p230 = scmp.ne.s32.totalorder %s218, %s219
    %p231 = scmp.eq.s32.totalorder %s20, 1
    %p232 = por %p230, %p231
    %p234 = scmp.ne.s32.totalorder %s219, %s233
    %p235 = scmp.eq.s32.totalorder %s20, 0
    %p236 = por %p234, %p235
    %s237 = ssub.s32 %s21, %s40
    %s238 = ssub.s32 %s22, %s36
    %s239 = sor.u32 %s237, %s238
    %p240 = scmp.eq.s32.totalorder %s239, 0
    %s242 = sadd.s32 %s241, 1
    %s243 = scalar_select %p240, %s241, %s242
    %p246 = pneg %p240
    %p247 = scmp.eq.s32.totalorder %s14, 1
    %p248 = por %p246, %p247
    %p249 = scmp.ne.s32.totalorder %s241, %s244
    %p250 = scmp.eq.s32.totalorder %s14, 0
    %p251 = por %p249, %p250
    %p252 = scmp.ne.s32.totalorder %s241, %s244
    %p253 = scmp.eq.s32.totalorder %s19, 1
    %p254 = por %p252, %p253
    %p255 = scmp.ne.s32.totalorder %s244, %s245
    %p256 = scmp.eq.s32.totalorder %s19, 0
    %p257 = por %p255, %p256
    %p258 = scmp.ne.s32.totalorder %s244, %s245
    %p259 = scmp.eq.s32.totalorder %s20, 1
    %p260 = por %p258, %p259
    %p262 = scmp.ne.s32.totalorder %s245, %s261
    %p263 = scmp.eq.s32.totalorder %s20, 0
    %p264 = por %p262, %p263
    %p265 = scmp.le.s32.totalorder 1, %s14
    %p266 = scmp.lt.s32.totalorder %s14, 3
    %p267 = pnand %p265, %p266
    %p268 = pneg %p267
    // Predicated region
    $region9: #{transformer_forward.20} parent=5 // pred_check
      _
    $region10: #{transformer_forward.20} parent=5 // pred_check_branch
      %270 = sbr.rel (%p267) target = $region12
    $region11: #{transformer_forward.20} parent=5 // pred_region
      %s271 = ssub.s32 %s14, 1
      // Predicated region
      $region13: #{transformer_forward.20} parent=11 // pred_check
        %p272 = pneg %p166
      $region14: #{transformer_forward.20} parent=11 // pred_check_branch
        %274 = sbr.rel (%p272) target = $region16
      $region15: #{transformer_forward.20} parent=11 // pred_region
        _
      $region16: #{transformer_forward.20} parent=11 // pred_fallthru
        _
      // Predicated region
      $region17: #{transformer_forward.20} parent=11 // pred_check
        %p275 = pneg %p187
      $region18: #{transformer_forward.20} parent=11 // pred_check_branch
        %277 = sbr.rel (%p275) target = $region20
      $region19: #{transformer_forward.20} parent=11 // pred_region
        _
      $region20: #{transformer_forward.20} parent=11 // pred_fallthru
        _
      // Predicated region
      $region21: #{transformer_forward.20} parent=11 // pred_check
        %p278 = pneg %p208
      $region22: #{transformer_forward.20} parent=11 // pred_check_branch
        %280 = sbr.rel (%p278) target = $region24
      $region23: #{transformer_forward.20} parent=11 // pred_region
        _
      $region24: #{transformer_forward.20} parent=11 // pred_fallthru
        _
      // Predicated region
      $region25: #{transformer_forward.20} parent=11 // pred_check
        %p281 = pneg %p229
      $region26: #{transformer_forward.20} parent=11 // pred_check_branch
        %283 = sbr.rel (%p281) target = $region28
      $region27: #{transformer_forward.20} parent=11 // pred_region
        _
      $region28: #{transformer_forward.20} parent=11 // pred_fallthru
        _
    $region12: #{transformer_forward.20} parent=5 // pred_fallthru
      _
    %p284 = scmp.lt.s32.totalorder %s14, 2
    // Predicated region
    $region29: #{transformer_forward.20} parent=5 // pred_check
      %p285 = pneg %p284
    $region30: #{transformer_forward.20} parent=5 // pred_check_branch
      %287 = sbr.rel (%p285) target = $region32
    $region31: #{transformer_forward.20} parent=5 // pred_region
      // Predicated region
      $region33: #{transformer_forward.20} parent=31 // pred_check
        %p288 = pneg %p55
      $region34: #{transformer_forward.20} parent=31 // pred_check_branch
        %290 = sbr.rel (%p288) target = $region36
      $region35: #{transformer_forward.20} parent=31 // pred_region
        %s291 = smul.u32 2, %s22
        %p292 = scmp.lt.s32.totalorder %s21, 1
        %s293 = scalar_select %p292, %s21, 1
        %p294 = scmp.lt.s32.totalorder %s291, 1
        %s295 = scalar_select %p294, %s291, 1
        %s296 = smul.addr %s293, 2
        %s297 = sadd.s32 %s295, %s296
        %s298 = smul.addr %s297, 4
        %s299 = scalar_lea.vmem %s0, %s298
        %s300 = smul.u32 2, %s22
      $region36: #{transformer_forward.20} parent=31 // pred_fallthru
        _
      // Predicated region
      $region37: #{transformer_forward.20} parent=31 // pred_check
        %p301 = pneg %p83
      $region38: #{transformer_forward.20} parent=31 // pred_check_branch
        %303 = sbr.rel (%p301) target = $region40
      $region39: #{transformer_forward.20} parent=31 // pred_region
        %s304 = smul.u32 2, %s22
        %p305 = scmp.lt.s32.totalorder %s21, 1
        %s306 = scalar_select %p305, %s21, 1
        %p307 = scmp.lt.s32.totalorder %s304, 1
        %s308 = scalar_select %p307, %s304, 1
        %s309 = smul.addr %s306, 8
        %s310 = sadd.s32 %s308, %s309
        %s311 = smul.addr %s310, 4
        %s312 = scalar_lea.vmem %s1, %s311
        %s313 = smul.u32 2, %s22
      $region40: #{transformer_forward.20} parent=31 // pred_fallthru
        _
      // Predicated region
      $region41: #{transformer_forward.20} parent=31 // pred_check
        %p314 = pneg %p111
      $region42: #{transformer_forward.20} parent=31 // pred_check_branch
        %316 = sbr.rel (%p314) target = $region44
      $region43: #{transformer_forward.20} parent=31 // pred_region
        %s317 = smul.u32 2, %s23
        %p318 = scmp.lt.s32.totalorder %s21, 1
        %s319 = scalar_select %p318, %s21, 1
        %p320 = scmp.lt.s32.totalorder %s317, 1
        %s321 = scalar_select %p320, %s317, 1
        %s322 = smul.addr %s319, 8
        %s323 = sadd.s32 %s321, %s322
        %s324 = smul.addr %s323, 4
        %s325 = scalar_lea.vmem %s2, %s324
        %s326 = smul.u32 2, %s23
      $region44: #{transformer_forward.20} parent=31 // pred_fallthru
        _
      // Predicated region
      $region45: #{transformer_forward.20} parent=31 // pred_check
        %p327 = pneg %p139
      $region46: #{transformer_forward.20} parent=31 // pred_check_branch
        %329 = sbr.rel (%p327) target = $region48
      $region47: #{transformer_forward.20} parent=31 // pred_region
        %s330 = smul.u32 2, %s23
        %p331 = scmp.lt.s32.totalorder %s21, 1
        %s332 = scalar_select %p331, %s21, 1
        %p333 = scmp.lt.s32.totalorder %s330, 1
        %s334 = scalar_select %p333, %s330, 1
        %s335 = smul.addr %s332, 8
        %s336 = sadd.s32 %s334, %s335
        %s337 = smul.addr %s336, 4
        %s338 = scalar_lea.vmem %s3, %s337
        %s339 = smul.u32 2, %s23
      $region48: #{transformer_forward.20} parent=31 // pred_fallthru
        _
    $region32: #{transformer_forward.20} parent=5 // pred_fallthru
      _
    %p340 = scmp.le.s32.totalorder 1, %s14
    %p341 = scmp.lt.s32.totalorder %s14, 3
    %p342 = pnand %p340, %p341
    %p343 = pneg %p342
    // Predicated region
    $region49: #{transformer_forward.20} parent=5 // pred_check
      _
    $region50: #{transformer_forward.20} parent=5 // pred_check_branch
      %345 = sbr.rel (%p342) target = $region52
    $region51: #{transformer_forward.20} parent=5 // pred_region
      %s346 = ssub.s32 %s14, 1
      %s347 = smul.u32 2, %s25
      %p348 = scmp.lt.s32.totalorder %s24, 1
      %s349 = scalar_select %p348, %s24, 1
      %p350 = scmp.lt.s32.totalorder %s347, 1
      %s351 = scalar_select %p350, %s347, 1
      %s352 = smul.addr %s349, 2
      %s353 = sadd.s32 %s351, %s352
      %s354 = smul.addr %s353, 4
      %s355 = scalar_lea.vmem %s0, %s354
      %p356 = pneg %p61
      %p357 = pneg %p58
      %s358 = smul.u32 2, %s25
      %p359 = scmp.lt.s32.totalorder %s24, 1
      %s360 = scalar_select %p359, %s24, 1
      %p361 = scmp.lt.s32.totalorder %s358, 1
      %s362 = scalar_select %p361, %s358, 1
      %s363 = smul.addr %s360, 8
      %s364 = sadd.s32 %s362, %s363
      %s365 = smul.addr %s364, 4
      %s366 = scalar_lea.vmem %s1, %s365
      %p367 = pneg %p89
      %p368 = pneg %p86
      %s369 = smul.u32 2, %s26
      %p370 = scmp.lt.s32.totalorder %s24, 1
      %s371 = scalar_select %p370, %s24, 1
      %p372 = scmp.lt.s32.totalorder %s369, 1
      %s373 = scalar_select %p372, %s369, 1
      %s374 = smul.addr %s371, 8
      %s375 = sadd.s32 %s373, %s374
      %s376 = smul.addr %s375, 4
      %s377 = scalar_lea.vmem %s2, %s376
      %p378 = pneg %p117
      %p379 = pneg %p114
      %s380 = smul.u32 2, %s26
      %p381 = scmp.lt.s32.totalorder %s24, 1
      %s382 = scalar_select %p381, %s24, 1
      %p383 = scmp.lt.s32.totalorder %s380, 1
      %s384 = scalar_select %p383, %s380, 1
      %s385 = smul.addr %s382, 8
      %s386 = sadd.s32 %s384, %s385
      %s387 = smul.addr %s386, 4
      %s388 = scalar_lea.vmem %s3, %s387
      %p389 = pneg %p145
      %p390 = pneg %p142
      %p391 = pneg %p166
      %p392 = pneg %p163
      %p393 = pneg %p187
      %p394 = pneg %p184
      %p395 = pneg %p208
      %p396 = pneg %p205
      %p397 = pneg %p229
      %p398 = pneg %p226
      %p399 = pneg %p257
      %p400 = pneg %p254
      %s401 = smul.u32 2, %s25
      %p402 = scmp.lt.s32.totalorder %s24, 1
      %s403 = scalar_select %p402, %s24, 1
      %p404 = scmp.lt.s32.totalorder %s401, 1
      %s405 = scalar_select %p404, %s401, 1
      %s406 = smul.addr %s403, 2
      %s407 = sadd.s32 %s405, %s406
      %s408 = smul.addr %s407, 4
      %s409 = scalar_lea.vmem %s8, %s408
      %s410 = smul.u32 2, %s25
      %p411 = scmp.lt.s32.totalorder %s24, 1
      %s412 = scalar_select %p411, %s24, 1
      %p413 = scmp.lt.s32.totalorder %s410, 1
      %s414 = scalar_select %p413, %s410, 1
      %s415 = smul.addr %s412, 2
      %s416 = sadd.s32 %s414, %s415
      %s417 = smul.addr %s416, 4
      %s418 = scalar_lea.vmem %s0, %s417
      %s419 = smul.u32 2, %s25
      %s420 = smul.u32 2, %s25
      %p421 = scmp.lt.s32.totalorder %s24, 1
      %s422 = scalar_select %p421, %s24, 1
      %p423 = scmp.lt.s32.totalorder %s420, 1
      %s424 = scalar_select %p423, %s420, 1
      %s425 = smul.addr %s422, 8
      %s426 = sadd.s32 %s424, %s425
      %s427 = smul.addr %s426, 4
      %s428 = scalar_lea.vmem %s1, %s427
      %s429 = smul.u32 2, %s25
      %s430 = smul.u32 2, %s26
      %p431 = scmp.lt.s32.totalorder %s24, 1
      %s432 = scalar_select %p431, %s24, 1
      %p433 = scmp.lt.s32.totalorder %s430, 1
      %s434 = scalar_select %p433, %s430, 1
      %s435 = smul.addr %s432, 8
      %s436 = sadd.s32 %s434, %s435
      %s437 = smul.addr %s436, 4
      %s438 = scalar_lea.vmem %s2, %s437
      %s439 = smul.u32 2, %s26
      %s440 = smul.u32 2, %s26
      %p441 = scmp.lt.s32.totalorder %s24, 1
      %s442 = scalar_select %p441, %s24, 1
      %p443 = scmp.lt.s32.totalorder %s440, 1
      %s444 = scalar_select %p443, %s440, 1
      %s445 = smul.addr %s442, 8
      %s446 = sadd.s32 %s444, %s445
      %s447 = smul.addr %s446, 4
      %s448 = scalar_lea.vmem %s3, %s447
      %s449 = smul.u32 2, %s26
      %s450 = smul.u32 2, %s25
      %p451 = scmp.lt.s32.totalorder %s24, 1
      %s452 = scalar_select %p451, %s24, 1
      %p453 = scmp.lt.s32.totalorder %s450, 1
      %s454 = scalar_select %p453, %s450, 1
      %s455 = smul.addr %s452, 2
      %s456 = sadd.s32 %s454, %s455
      %s457 = smul.addr %s456, 4
      %s458 = scalar_lea.vmem %s8, %s457
      %s459 = smul.u32 2, %s25
      %p461 = scmp.eq.s32.totalorder %s26, 0
      // Predicated region
      $region53: #{transformer_forward.20} parent=51 // pred_check
        %p462 = pneg %p461
      $region54: #{transformer_forward.20} parent=51 // pred_check_branch
        %464 = sbr.rel (%p462) target = $region56
      $region55: #{transformer_forward.20} parent=51 // pred_region
        %vm465 = vcmask 7168
        %466 = vst.msk [vmem:[#allocation2] sm:$0xff] %vm465, -inf
        %467 = vst.msk [vmem:[#allocation2 + $0x8] sm:$0xff] %vm465, -inf
        %468 = vst.msk [vmem:[#allocation2 + $0x10] sm:$0xff] %vm465, -inf
        %469 = vst.msk [vmem:[#allocation2 + $0x18] sm:$0xff] %vm465, -inf
        %470 = vst.msk [vmem:[#allocation2 + $0x20] sm:$0xff] %vm465, -inf
        %471 = vst.msk [vmem:[#allocation2 + $0x28] sm:$0xff] %vm465, -inf
        %472 = vst.msk [vmem:[#allocation2 + $0x30] sm:$0xff] %vm465, -inf
        %473 = vst.msk [vmem:[#allocation2 + $0x38] sm:$0xff] %vm465, -inf
        %474 = vst.msk [vmem:[#allocation3] sm:$0xff] %vm465, 0.0
        %475 = vst.msk [vmem:[#allocation3 + $0x8] sm:$0xff] %vm465, 0.0
        %476 = vst.msk [vmem:[#allocation3 + $0x10] sm:$0xff] %vm465, 0.0
        %477 = vst.msk [vmem:[#allocation3 + $0x18] sm:$0xff] %vm465, 0.0
        %478 = vst.msk [vmem:[#allocation3 + $0x20] sm:$0xff] %vm465, 0.0
        %479 = vst.msk [vmem:[#allocation3 + $0x28] sm:$0xff] %vm465, 0.0
        %480 = vst.msk [vmem:[#allocation3 + $0x30] sm:$0xff] %vm465, 0.0
        %481 = vst.msk [vmem:[#allocation3 + $0x38] sm:$0xff] %vm465, 0.0
        %vm482 = vcmask 261120
        %483 = vst.msk [vmem:[#allocation4] sm:$0xff] %vm482, 0.0
        %484 = vst.msk [vmem:[#allocation4 + $0x8] sm:$0xff] %vm482, 0.0
        %485 = vst.msk [vmem:[#allocation4 + $0x10] sm:$0xff] %vm482, 0.0
        %486 = vst.msk [vmem:[#allocation4 + $0x18] sm:$0xff] %vm482, 0.0
        %487 = vst.msk [vmem:[#allocation4 + $0x20] sm:$0xff] %vm482, 0.0
        %488 = vst.msk [vmem:[#allocation4 + $0x28] sm:$0xff] %vm482, 0.0
        %489 = vst.msk [vmem:[#allocation4 + $0x30] sm:$0xff] %vm482, 0.0
        %490 = vst.msk [vmem:[#allocation4 + $0x38] sm:$0xff] %vm482, 0.0
      $region56: #{transformer_forward.20} parent=51 // pred_fallthru
        _
      %v491 = vld [vmem:[%s428] sm:$0xf]
      %v492 = vld [vmem:[%s428 + $0x4] sm:$0xf]
      %v493 = vld [vmem:[%s428 + $0x8] sm:$0xf]
      %v494 = vld [vmem:[%s428 + $0xc] sm:$0xf]
      %v495 = vld [vmem:[%s428 + $0x10] sm:$0xf]
      %v496 = vld [vmem:[%s428 + $0x14] sm:$0xf]
      %v497 = vld [vmem:[%s428 + $0x18] sm:$0xf]
      %v498 = vld [vmem:[%s428 + $0x1c] sm:$0xf]
      %v499 = vld [vmem:[%s438] sm:$0xf]
      %v500 = vld [vmem:[%s438 + $0x4] sm:$0xf]
      %v501 = vld [vmem:[%s438 + $0x8] sm:$0xf]
      %v502 = vld [vmem:[%s438 + $0xc] sm:$0xf]
      %v503 = vld [vmem:[%s438 + $0x10] sm:$0xf]
      %v504 = vld [vmem:[%s438 + $0x14] sm:$0xf]
      %v505 = vld [vmem:[%s438 + $0x18] sm:$0xf]
      %v506 = vld [vmem:[%s438 + $0x1c] sm:$0xf]
      %v507 = vld [vmem:[%s448] sm:$0xf]
      %v508 = vld [vmem:[%s448 + $0x4] sm:$0xf]
      %v509 = vld [vmem:[%s448 + $0x8] sm:$0xf]
      %v510 = vld [vmem:[%s448 + $0xc] sm:$0xf]
      %v511 = vld [vmem:[%s448 + $0x10] sm:$0xf]
      %v512 = vld [vmem:[%s448 + $0x14] sm:$0xf]
      %v513 = vld [vmem:[%s448 + $0x18] sm:$0xf]
      %v514 = vld [vmem:[%s448 + $0x1c] sm:$0xf]
      %v517 = vunpack.c.l.b16 %v491
      %v518 = vunpack.c.l.b16 %v492
      %v519 = vpack.c.b16 %v518, %v517
      %v522 = vunpack.c.l.b16 %v499
      %v523 = vunpack.c.l.b16 %v500
      %v524 = vpack.c.b16 %v523, %v522
      %vm525 = vcmask 261120
      %v527 = vsel %vm525, %v519, 0
      %v530 = vsel %vm525, %v524, 0
      %532 = vmatprep.subr.bf16.mxu0 0
      %533 = vmatpush1.bf16.xpose.msra.mxu0 %v530
      %534 = vmatprep.subr.bf16.mxu0 0
      %535 = vmatpush1.bf16.xpose.msra.mxu0 0
      %536 = vmatprep.subr.bf16.mxu0 0
      %537 = vmatpush1.bf16.xpose.msra.mxu0 0
      %538 = vmatprep.subr.bf16.mxu0 0
      %539 = vmatpush1.bf16.xpose.msra.mxu0 0
      %540 = vmatprep.subr.bf16.mxu0 0
      %541 = vmatpush1.bf16.xpose.msra.mxu0 0
      %542 = vmatprep.subr.bf16.mxu0 0
      %543 = vmatpush1.bf16.xpose.msra.mxu0 0
      %544 = vmatprep.subr.bf16.mxu0 0
      %545 = vmatpush1.bf16.xpose.msra.mxu0 0
      %546 = vmatprep.subr.bf16.mxu0 0
      %547 = vmatpush1.bf16.xpose.msra.mxu0 0
      %548 = vmatprep.subr.bf16.mxu0 0
      %549 = vmatpush1.bf16.xpose.msra.mxu0 0
      %550 = vmatprep.subr.bf16.mxu0 0
      %551 = vmatpush1.bf16.xpose.msra.mxu0 0
      %552 = vmatprep.subr.bf16.mxu0 0
      %553 = vmatpush1.bf16.xpose.msra.mxu0 0
      %554 = vmatprep.subr.bf16.mxu0 0
      %555 = vmatpush1.bf16.xpose.msra.mxu0 0
      %556 = vmatprep.subr.bf16.mxu0 0
      %557 = vmatpush1.bf16.xpose.msra.mxu0 0
      %558 = vmatprep.subr.bf16.mxu0 0
      %559 = vmatpush1.bf16.xpose.msra.mxu0 0
      %560 = vmatprep.subr.bf16.mxu0 0
      %561 = vmatpush1.bf16.xpose.msra.mxu0 0
      %562 = vmatprep.subr.bf16.mxu0 0
      %563 = vmatpush1.bf16.xpose.msra.mxu0 0
      %564 = vmatprep.mubr.bf16.mxu0 0
      %565 = vmatmul.mubr.bf16.gmra.mrb[0].mxu0 %v527
      %v566 = vpop.f32.mrb[0].mxu0
      %v567 = vadd.f32 0.0, %v566
      %v568 = vpop.f32.mrb[0].mxu0
      %v569 = vpop.f32.mrb[0].mxu0
      %v570 = vadd.f32 0.0, %v569
      %v571 = vpop.f32.mrb[0].mxu0
      %572 = vdwg.mxu0
      %v575 = vunpack.c.l.b16 %v493
      %v576 = vunpack.c.l.b16 %v494
      %v577 = vpack.c.b16 %v576, %v575
      %v580 = vunpack.c.l.b16 %v501
      %v581 = vunpack.c.l.b16 %v502
      %v582 = vpack.c.b16 %v581, %v580
      %v584 = vsel %vm525, %v577, 0
      %v587 = vsel %vm525, %v582, 0
      %589 = vmatprep.subr.bf16.mxu0 0
      %590 = vmatpush1.bf16.xpose.msra.mxu0 %v587
      %591 = vmatprep.subr.bf16.mxu0 0
      %592 = vmatpush1.bf16.xpose.msra.mxu0 0
      %593 = vmatprep.subr.bf16.mxu0 0
      %594 = vmatpush1.bf16.xpose.msra.mxu0 0
      %595 = vmatprep.subr.bf16.mxu0 0
      %596 = vmatpush1.bf16.xpose.msra.mxu0 0
      %597 = vmatprep.subr.bf16.mxu0 0
      %598 = vmatpush1.bf16.xpose.msra.mxu0 0
      %599 = vmatprep.subr.bf16.mxu0 0
      %600 = vmatpush1.bf16.xpose.msra.mxu0 0
      %601 = vmatprep.subr.bf16.mxu0 0
      %602 = vmatpush1.bf16.xpose.msra.mxu0 0
      %603 = vmatprep.subr.bf16.mxu0 0
      %604 = vmatpush1.bf16.xpose.msra.mxu0 0
      %605 = vmatprep.subr.bf16.mxu0 0
      %606 = vmatpush1.bf16.xpose.msra.mxu0 0
      %607 = vmatprep.subr.bf16.mxu0 0
      %608 = vmatpush1.bf16.xpose.msra.mxu0 0
      %609 = vmatprep.subr.bf16.mxu0 0
      %610 = vmatpush1.bf16.xpose.msra.mxu0 0
      %611 = vmatprep.subr.bf16.mxu0 0
      %612 = vmatpush1.bf16.xpose.msra.mxu0 0
      %613 = vmatprep.subr.bf16.mxu0 0
      %614 = vmatpush1.bf16.xpose.msra.mxu0 0
      %615 = vmatprep.subr.bf16.mxu0 0
      %616 = vmatpush1.bf16.xpose.msra.mxu0 0
      %617 = vmatprep.subr.bf16.mxu0 0
      %618 = vmatpush1.bf16.xpose.msra.mxu0 0
      %619 = vmatprep.subr.bf16.mxu0 0
      %620 = vmatpush1.bf16.xpose.msra.mxu0 0
      %621 = vmatprep.mubr.bf16.mxu0 0
      %622 = vmatmul.mubr.bf16.gmra.mrb[0].mxu0 %v584
      %v623 = vpop.f32.mrb[0].mxu0
      %v624 = vadd.f32 0.0, %v623
      %v625 = vpop.f32.mrb[0].mxu0
      %v626 = vpop.f32.mrb[0].mxu0
      %v627 = vadd.f32 0.0, %v626
      %v628 = vpop.f32.mrb[0].mxu0
      %629 = vdwg.mxu0
      %v632 = vunpack.c.l.b16 %v495
      %v633 = vunpack.c.l.b16 %v496
      %v634 = vpack.c.b16 %v633, %v632
      %v637 = vunpack.c.l.b16 %v503
      %v638 = vunpack.c.l.b16 %v504
      %v639 = vpack.c.b16 %v638, %v637
      %v641 = vsel %vm525, %v634, 0
      %v644 = vsel %vm525, %v639, 0
      %646 = vmatprep.subr.bf16.mxu0 0
      %647 = vmatpush1.bf16.xpose.msra.mxu0 %v644
      %648 = vmatprep.subr.bf16.mxu0 0
      %649 = vmatpush1.bf16.xpose.msra.mxu0 0
      %650 = vmatprep.subr.bf16.mxu0 0
      %651 = vmatpush1.bf16.xpose.msra.mxu0 0
      %652 = vmatprep.subr.bf16.mxu0 0
      %653 = vmatpush1.bf16.xpose.msra.mxu0 0
      %654 = vmatprep.subr.bf16.mxu0 0
      %655 = vmatpush1.bf16.xpose.msra.mxu0 0
      %656 = vmatprep.subr.bf16.mxu0 0
      %657 = vmatpush1.bf16.xpose.msra.mxu0 0
      %658 = vmatprep.subr.bf16.mxu0 0
      %659 = vmatpush1.bf16.xpose.msra.mxu0 0
      %660 = vmatprep.subr.bf16.mxu0 0
      %661 = vmatpush1.bf16.xpose.msra.mxu0 0
      %662 = vmatprep.subr.bf16.mxu0 0
      %663 = vmatpush1.bf16.xpose.msra.mxu0 0
      %664 = vmatprep.subr.bf16.mxu0 0
      %665 = vmatpush1.bf16.xpose.msra.mxu0 0
      %666 = vmatprep.subr.bf16.mxu0 0
      %667 = vmatpush1.bf16.xpose.msra.mxu0 0
      %668 = vmatprep.subr.bf16.mxu0 0
      %669 = vmatpush1.bf16.xpose.msra.mxu0 0
      %670 = vmatprep.subr.bf16.mxu0 0
      %671 = vmatpush1.bf16.xpose.msra.mxu0 0
      %672 = vmatprep.subr.bf16.mxu0 0
      %673 = vmatpush1.bf16.xpose.msra.mxu0 0
      %674 = vmatprep.subr.bf16.mxu0 0
      %675 = vmatpush1.bf16.xpose.msra.mxu0 0
      %676 = vmatprep.subr.bf16.mxu0 0
      %677 = vmatpush1.bf16.xpose.msra.mxu0 0
      %678 = vmatprep.mubr.bf16.mxu0 0
      %679 = vmatmul.mubr.bf16.gmra.mrb[0].mxu0 %v641
      %v680 = vpop.f32.mrb[0].mxu0
      %v681 = vadd.f32 0.0, %v680
      %v682 = vpop.f32.mrb[0].mxu0
      %v683 = vpop.f32.mrb[0].mxu0
      %v684 = vadd.f32 0.0, %v683
      %v685 = vpop.f32.mrb[0].mxu0
      %686 = vdwg.mxu0
      %v689 = vunpack.c.l.b16 %v497
      %v690 = vunpack.c.l.b16 %v498
      %v691 = vpack.c.b16 %v690, %v689
      %v694 = vunpack.c.l.b16 %v505
      %v695 = vunpack.c.l.b16 %v506
      %v696 = vpack.c.b16 %v695, %v694
      %v698 = vsel %vm525, %v691, 0
      %v701 = vsel %vm525, %v696, 0
      %703 = vmatprep.subr.bf16.mxu0 0
      %704 = vmatpush1.bf16.xpose.msra.mxu0 %v701
      %705 = vmatprep.subr.bf16.mxu0 0
      %706 = vmatpush1.bf16.xpose.msra.mxu0 0
      %707 = vmatprep.subr.bf16.mxu0 0
      %708 = vmatpush1.bf16.xpose.msra.mxu0 0
      %709 = vmatprep.subr.bf16.mxu0 0
      %710 = vmatpush1.bf16.xpose.msra.mxu0 0
      %711 = vmatprep.subr.bf16.mxu0 0
      %712 = vmatpush1.bf16.xpose.msra.mxu0 0
      %713 = vmatprep.subr.bf16.mxu0 0
      %714 = vmatpush1.bf16.xpose.msra.mxu0 0
      %715 = vmatprep.subr.bf16.mxu0 0
      %716 = vmatpush1.bf16.xpose.msra.mxu0 0
      %717 = vmatprep.subr.bf16.mxu0 0
      %718 = vmatpush1.bf16.xpose.msra.mxu0 0
      %719 = vmatprep.subr.bf16.mxu0 0
      %720 = vmatpush1.bf16.xpose.msra.mxu0 0
      %721 = vmatprep.subr.bf16.mxu0 0
      %722 = vmatpush1.bf16.xpose.msra.mxu0 0
      %723 = vmatprep.subr.bf16.mxu0 0
      %724 = vmatpush1.bf16.xpose.msra.mxu0 0
      %725 = vmatprep.subr.bf16.mxu0 0
      %726 = vmatpush1.bf16.xpose.msra.mxu0 0
      %727 = vmatprep.subr.bf16.mxu0 0
      %728 = vmatpush1.bf16.xpose.msra.mxu0 0
      %729 = vmatprep.subr.bf16.mxu0 0
      %730 = vmatpush1.bf16.xpose.msra.mxu0 0
      %731 = vmatprep.subr.bf16.mxu0 0
      %732 = vmatpush1.bf16.xpose.msra.mxu0 0
      %733 = vmatprep.subr.bf16.mxu0 0
      %734 = vmatpush1.bf16.xpose.msra.mxu0 0
      %735 = vmatprep.mubr.bf16.mxu0 0
      %736 = vmatmul.mubr.bf16.gmra.mrb[0].mxu0 %v698
      %v737 = vpop.f32.mrb[0].mxu0
      %v738 = vadd.f32 0.0, %v737
      %v739 = vpop.f32.mrb[0].mxu0
      %v740 = vpop.f32.mrb[0].mxu0
      %v741 = vadd.f32 0.0, %v740
      %v742 = vpop.f32.mrb[0].mxu0
      %743 = vdwg.mxu0
      %v744 = vld [vmem:[#allocation2] sm:$0xff]
      %v745 = vld [vmem:[#allocation2 + $0x8] sm:$0xff]
      %v746 = vld [vmem:[#allocation2 + $0x10] sm:$0xff]
      %v747 = vld [vmem:[#allocation2 + $0x18] sm:$0xff]
      %v748 = vld [vmem:[#allocation2 + $0x20] sm:$0xff]
      %v749 = vld [vmem:[#allocation2 + $0x28] sm:$0xff]
      %v750 = vld [vmem:[#allocation2 + $0x30] sm:$0xff]
      %v751 = vld [vmem:[#allocation2 + $0x38] sm:$0xff]
      %vm752 = vcmask 130048
      %v753 = vsel %vm752, %v567, -inf
      %754 = vmax.xlane.f32.xlu0 %v753
      %v755 = vpop.xlane.xlu0 %754
      %v756 = vsel %vm752, %v570, -inf
      %757 = vmax.xlane.f32.xlu0 %v756
      %v758 = vpop.xlane.xlu0 %757
      %v759 = vsel %vm752, %v624, -inf
      %760 = vmax.xlane.f32.xlu0 %v759
      %v761 = vpop.xlane.xlu0 %760
      %v762 = vsel %vm752, %v627, -inf
      %763 = vmax.xlane.f32.xlu0 %v762
      %v764 = vpop.xlane.xlu0 %763
      %v765 = vsel %vm752, %v681, -inf
      %766 = vmax.xlane.f32.xlu0 %v765
      %v767 = vpop.xlane.xlu0 %766
      %v768 = vsel %vm752, %v684, -inf
      %769 = vmax.xlane.f32.xlu0 %v768
      %v770 = vpop.xlane.xlu0 %769
      %v771 = vsel %vm752, %v738, -inf
      %772 = vmax.xlane.f32.xlu0 %v771
      %v773 = vpop.xlane.xlu0 %772
      %v774 = vsel %vm752, %v741, -inf
      %775 = vmax.xlane.f32.xlu0 %v774
      %v776 = vpop.xlane.xlu0 %775
      %v777 = vmax.f32 %v744, %v755
      %v778 = vmax.f32 %v745, %v758
      %v779 = vmax.f32 %v746, %v761
      %v780 = vmax.f32 %v747, %v764
      %v781 = vmax.f32 %v748, %v767
      %v782 = vmax.f32 %v749, %v770
      %v783 = vmax.f32 %v750, %v773
      %v784 = vmax.f32 %v751, %v776
      %v785 = vsub.f32 %v744, %v777
      %v786 = vsub.f32 %v745, %v778
      %v787 = vsub.f32 %v746, %v779
      %v788 = vsub.f32 %v747, %v780
      %v789 = vsub.f32 %v748, %v781
      %v790 = vsub.f32 %v749, %v782
      %v791 = vsub.f32 %v750, %v783
      %v792 = vsub.f32 %v751, %v784
      %v793 = vmul.f32 %v785, 1.442695
      %v794 = vpow.pop %v793
      %v795 = vmul.f32 %v786, 1.442695
      %v796 = vpow.pop %v795
      %v797 = vmul.f32 %v787, 1.442695
      %v798 = vpow.pop %v797
      %v799 = vmul.f32 %v788, 1.442695
      %v800 = vpow.pop %v799
      %v801 = vmul.f32 %v789, 1.442695
      %v802 = vpow.pop %v801
      %v803 = vmul.f32 %v790, 1.442695
      %v804 = vpow.pop %v803
      %v805 = vmul.f32 %v791, 1.442695
      %v806 = vpow.pop %v805
      %v807 = vmul.f32 %v792, 1.442695
      %v808 = vpow.pop %v807
      %810 = vset.pattern.permute.xlu0 0
      %811 = vperm.xlu0 %810, %v777
      %v812 = vpop.permute.xlu0 %811
      %815 = vset.pattern.permute.xlu0 0
      %816 = vperm.xlu0 %815, %v778
      %v817 = vpop.permute.xlu0 %816
      %820 = vset.pattern.permute.xlu0 0
      %821 = vperm.xlu0 %820, %v779
      %v822 = vpop.permute.xlu0 %821
      %825 = vset.pattern.permute.xlu0 0
      %826 = vperm.xlu0 %825, %v780
      %v827 = vpop.permute.xlu0 %826
      %830 = vset.pattern.permute.xlu0 0
      %831 = vperm.xlu0 %830, %v781
      %v832 = vpop.permute.xlu0 %831
      %835 = vset.pattern.permute.xlu0 0
      %836 = vperm.xlu0 %835, %v782
      %v837 = vpop.permute.xlu0 %836
      %840 = vset.pattern.permute.xlu0 0
      %841 = vperm.xlu0 %840, %v783
      %v842 = vpop.permute.xlu0 %841
      %845 = vset.pattern.permute.xlu0 0
      %846 = vperm.xlu0 %845, %v784
      %v847 = vpop.permute.xlu0 %846
      %v849 = vsub.f32 %v567, %v812
      %v850 = vsub.f32 %v570, %v817
      %v851 = vsub.f32 %v624, %v822
      %v852 = vsub.f32 %v627, %v827
      %v853 = vsub.f32 %v681, %v832
      %v854 = vsub.f32 %v684, %v837
      %v855 = vsub.f32 %v738, %v842
      %v856 = vsub.f32 %v741, %v847
      %v857 = vmul.f32 %v849, 1.442695
      %v858 = vpow.pop %v857
      %v859 = vmul.f32 %v850, 1.442695
      %v860 = vpow.pop %v859
      %v861 = vmul.f32 %v851, 1.442695
      %v862 = vpow.pop %v861
      %v863 = vmul.f32 %v852, 1.442695
      %v864 = vpow.pop %v863
      %v865 = vmul.f32 %v853, 1.442695
      %v866 = vpow.pop %v865
      %v867 = vmul.f32 %v854, 1.442695
      %v868 = vpow.pop %v867
      %v869 = vmul.f32 %v855, 1.442695
      %v870 = vpow.pop %v869
      %v871 = vmul.f32 %v856, 1.442695
      %v872 = vpow.pop %v871
      %v873 = vld [vmem:[#allocation3] sm:$0xff]
      %v874 = vld [vmem:[#allocation3 + $0x8] sm:$0xff]
      %v875 = vld [vmem:[#allocation3 + $0x10] sm:$0xff]
      %v876 = vld [vmem:[#allocation3 + $0x18] sm:$0xff]
      %v877 = vld [vmem:[#allocation3 + $0x20] sm:$0xff]
      %v878 = vld [vmem:[#allocation3 + $0x28] sm:$0xff]
      %v879 = vld [vmem:[#allocation3 + $0x30] sm:$0xff]
      %v880 = vld [vmem:[#allocation3 + $0x38] sm:$0xff]
      %v881 = vmul.f32 %v794, %v873
      %v882 = vmul.f32 %v796, %v874
      %v883 = vmul.f32 %v798, %v875
      %v884 = vmul.f32 %v800, %v876
      %v885 = vmul.f32 %v802, %v877
      %v886 = vmul.f32 %v804, %v878
      %v887 = vmul.f32 %v806, %v879
      %v888 = vmul.f32 %v808, %v880
      %v889 = vsel %vm752, %v858, 0.0
      %890 = vadd.xlane.f32.xlu0 %v889
      %v891 = vpop.xlane.xlu0 %890
      %v892 = vsel %vm752, %v860, 0.0
      %893 = vadd.xlane.f32.xlu0 %v892
      %v894 = vpop.xlane.xlu0 %893
      %v895 = vsel %vm752, %v862, 0.0
      %896 = vadd.xlane.f32.xlu0 %v895
      %v897 = vpop.xlane.xlu0 %896
      %v898 = vsel %vm752, %v864, 0.0
      %899 = vadd.xlane.f32.xlu0 %v898
      %v900 = vpop.xlane.xlu0 %899
      %v901 = vsel %vm752, %v866, 0.0
      %902 = vadd.xlane.f32.xlu0 %v901
      %v903 = vpop.xlane.xlu0 %902
      %v904 = vsel %vm752, %v868, 0.0
      %905 = vadd.xlane.f32.xlu0 %v904
      %v906 = vpop.xlane.xlu0 %905
      %v907 = vsel %vm752, %v870, 0.0
      %908 = vadd.xlane.f32.xlu0 %v907
      %v909 = vpop.xlane.xlu0 %908
      %v910 = vsel %vm752, %v872, 0.0
      %911 = vadd.xlane.f32.xlu0 %v910
      %v912 = vpop.xlane.xlu0 %911
      %v913 = vadd.f32 %v881, %v891
      %v914 = vadd.f32 %v882, %v894
      %v915 = vadd.f32 %v883, %v897
      %v916 = vadd.f32 %v884, %v900
      %v917 = vadd.f32 %v885, %v903
      %v918 = vadd.f32 %v886, %v906
      %v919 = vadd.f32 %v887, %v909
      %v920 = vadd.f32 %v888, %v912
      %vm921 = vcmask 7168
      %922 = vst.msk [vmem:[#allocation3] sm:$0xff] %vm921, %v913
      %923 = vst.msk [vmem:[#allocation3 + $0x8] sm:$0xff] %vm921, %v914
      %924 = vst.msk [vmem:[#allocation3 + $0x10] sm:$0xff] %vm921, %v915
      %925 = vst.msk [vmem:[#allocation3 + $0x18] sm:$0xff] %vm921, %v916
      %926 = vst.msk [vmem:[#allocation3 + $0x20] sm:$0xff] %vm921, %v917
      %927 = vst.msk [vmem:[#allocation3 + $0x28] sm:$0xff] %vm921, %v918
      %928 = vst.msk [vmem:[#allocation3 + $0x30] sm:$0xff] %vm921, %v919
      %929 = vst.msk [vmem:[#allocation3 + $0x38] sm:$0xff] %vm921, %v920
      %v930 = vld [vmem:[#allocation4] sm:$0xff]
      %v931 = vld [vmem:[#allocation4 + $0x8] sm:$0xff]
      %v932 = vld [vmem:[#allocation4 + $0x10] sm:$0xff]
      %v933 = vld [vmem:[#allocation4 + $0x18] sm:$0xff]
      %v934 = vld [vmem:[#allocation4 + $0x20] sm:$0xff]
      %v935 = vld [vmem:[#allocation4 + $0x28] sm:$0xff]
      %v936 = vld [vmem:[#allocation4 + $0x30] sm:$0xff]
      %v937 = vld [vmem:[#allocation4 + $0x38] sm:$0xff]
      %939 = vset.pattern.permute.xlu0 0
      %940 = vperm.xlu0 %939, %v794
      %v941 = vpop.permute.xlu0 %940
      %944 = vset.pattern.permute.xlu0 0
      %945 = vperm.xlu0 %944, %v796
      %v946 = vpop.permute.xlu0 %945
      %949 = vset.pattern.permute.xlu0 0
      %950 = vperm.xlu0 %949, %v798
      %v951 = vpop.permute.xlu0 %950
      %954 = vset.pattern.permute.xlu0 0
      %955 = vperm.xlu0 %954, %v800
      %v956 = vpop.permute.xlu0 %955
      %959 = vset.pattern.permute.xlu0 0
      %960 = vperm.xlu0 %959, %v802
      %v961 = vpop.permute.xlu0 %960
      %964 = vset.pattern.permute.xlu0 0
      %965 = vperm.xlu0 %964, %v804
      %v966 = vpop.permute.xlu0 %965
      %969 = vset.pattern.permute.xlu0 0
      %970 = vperm.xlu0 %969, %v806
      %v971 = vpop.permute.xlu0 %970
      %974 = vset.pattern.permute.xlu0 0
      %975 = vperm.xlu0 %974, %v808
      %v976 = vpop.permute.xlu0 %975
      %v978 = vmul.f32 %v941, %v930
      %v979 = vmul.f32 %v946, %v931
      %v980 = vmul.f32 %v951, %v932
      %v981 = vmul.f32 %v956, %v933
      %v982 = vmul.f32 %v961, %v934
      %v983 = vmul.f32 %v966, %v935
      %v984 = vmul.f32 %v971, %v936
      %v985 = vmul.f32 %v976, %v937
      %v986 = vpack.c.bf16 %v860, %v858
      %v987 = vpack.c.bf16 %v864, %v862
      %v988 = vpack.c.bf16 %v868, %v866
      %v989 = vpack.c.bf16 %v872, %v870
      %v992 = vunpack.c.l.b16 %v507
      %v993 = vunpack.c.l.b16 %v508
      %v994 = vpack.c.b16 %v993, %v992
      %v997 = vsel %vm752, %v986, 0
      %999 = vmatprep.subr.bf16.mxu0 0
      %1000 = vmatpush1.bf16.msra.mxu0 %v994
      %1001 = vmatprep.subr.bf16.mxu0 0
      %1002 = vmatpush1.bf16.msra.mxu0 0
      %1003 = vmatprep.subr.bf16.mxu0 0
      %1004 = vmatpush1.bf16.msra.mxu0 0
      %1005 = vmatprep.subr.bf16.mxu0 0
      %1006 = vmatpush1.bf16.msra.mxu0 0
      %1007 = vmatprep.subr.bf16.mxu0 0
      %1008 = vmatpush1.bf16.msra.mxu0 0
      %1009 = vmatprep.subr.bf16.mxu0 0
      %1010 = vmatpush1.bf16.msra.mxu0 0
      %1011 = vmatprep.subr.bf16.mxu0 0
      %1012 = vmatpush1.bf16.msra.mxu0 0
      %1013 = vmatprep.subr.bf16.mxu0 0
      %1014 = vmatpush1.bf16.msra.mxu0 0
      %1015 = vmatprep.subr.bf16.mxu0 0
      %1016 = vmatpush1.bf16.msra.mxu0 0
      %1017 = vmatprep.subr.bf16.mxu0 0
      %1018 = vmatpush1.bf16.msra.mxu0 0
      %1019 = vmatprep.subr.bf16.mxu0 0
      %1020 = vmatpush1.bf16.msra.mxu0 0
      %1021 = vmatprep.subr.bf16.mxu0 0
      %1022 = vmatpush1.bf16.msra.mxu0 0
      %1023 = vmatprep.subr.bf16.mxu0 0
      %1024 = vmatpush1.bf16.msra.mxu0 0
      %1025 = vmatprep.subr.bf16.mxu0 0
      %1026 = vmatpush1.bf16.msra.mxu0 0
      %1027 = vmatprep.subr.bf16.mxu0 0
      %1028 = vmatpush1.bf16.msra.mxu0 0
      %1029 = vmatprep.subr.bf16.mxu0 0
      %1030 = vmatpush1.bf16.msra.mxu0 0
      %1031 = vmatprep.mubr.bf16.mxu0 0
      %1032 = vmatmul.mubr.bf16.gmra.mrb[0].mxu0 %v997
      %v1033 = vpop.f32.mrb[0].mxu0
      %v1034 = vadd.f32 0.0, %v1033
      %v1035 = vpop.f32.mrb[0].mxu0
      %v1036 = vpop.f32.mrb[0].mxu0
      %v1037 = vadd.f32 0.0, %v1036
      %v1038 = vpop.f32.mrb[0].mxu0
      %1039 = vdwg.mxu0
      %v1042 = vunpack.c.l.b16 %v509
      %v1043 = vunpack.c.l.b16 %v510
      %v1044 = vpack.c.b16 %v1043, %v1042
      %v1047 = vsel %vm752, %v987, 0
      %1049 = vmatprep.subr.bf16.mxu0 0
      %1050 = vmatpush1.bf16.msra.mxu0 %v1044
      %1051 = vmatprep.subr.bf16.mxu0 0
      %1052 = vmatpush1.bf16.msra.mxu0 0
      %1053 = vmatprep.subr.bf16.mxu0 0
      %1054 = vmatpush1.bf16.msra.mxu0 0
      %1055 = vmatprep.subr.bf16.mxu0 0
      %1056 = vmatpush1.bf16.msra.mxu0 0
      %1057 = vmatprep.subr.bf16.mxu0 0
      %1058 = vmatpush1.bf16.msra.mxu0 0
      %1059 = vmatprep.subr.bf16.mxu0 0
      %1060 = vmatpush1.bf16.msra.mxu0 0
      %1061 = vmatprep.subr.bf16.mxu0 0
      %1062 = vmatpush1.bf16.msra.mxu0 0
      %1063 = vmatprep.subr.bf16.mxu0 0
      %1064 = vmatpush1.bf16.msra.mxu0 0
      %1065 = vmatprep.subr.bf16.mxu0 0
      %1066 = vmatpush1.bf16.msra.mxu0 0
      %1067 = vmatprep.subr.bf16.mxu0 0
      %1068 = vmatpush1.bf16.msra.mxu0 0
      %1069 = vmatprep.subr.bf16.mxu0 0
      %1070 = vmatpush1.bf16.msra.mxu0 0
      %1071 = vmatprep.subr.bf16.mxu0 0
      %1072 = vmatpush1.bf16.msra.mxu0 0
      %1073 = vmatprep.subr.bf16.mxu0 0
      %1074 = vmatpush1.bf16.msra.mxu0 0
      %1075 = vmatprep.subr.bf16.mxu0 0
      %1076 = vmatpush1.bf16.msra.mxu0 0
      %1077 = vmatprep.subr.bf16.mxu0 0
      %1078 = vmatpush1.bf16.msra.mxu0 0
      %1079 = vmatprep.subr.bf16.mxu0 0
      %1080 = vmatpush1.bf16.msra.mxu0 0
      %1081 = vmatprep.mubr.bf16.mxu0 0
      %1082 = vmatmul.mubr.bf16.gmra.mrb[0].mxu0 %v1047
      %v1083 = vpop.f32.mrb[0].mxu0
      %v1084 = vadd.f32 0.0, %v1083
      %v1085 = vpop.f32.mrb[0].mxu0
      %v1086 = vpop.f32.mrb[0].mxu0
      %v1087 = vadd.f32 0.0, %v1086
      %v1088 = vpop.f32.mrb[0].mxu0
      %1089 = vdwg.mxu0
      %v1092 = vunpack.c.l.b16 %v511
      %v1093 = vunpack.c.l.b16 %v512
      %v1094 = vpack.c.b16 %v1093, %v1092
      %v1097 = vsel %vm752, %v988, 0
      %1099 = vmatprep.subr.bf16.mxu0 0
      %1100 = vmatpush1.bf16.msra.mxu0 %v1094
      %1101 = vmatprep.subr.bf16.mxu0 0
      %1102 = vmatpush1.bf16.msra.mxu0 0
      %1103 = vmatprep.subr.bf16.mxu0 0
      %1104 = vmatpush1.bf16.msra.mxu0 0
      %1105 = vmatprep.subr.bf16.mxu0 0
      %1106 = vmatpush1.bf16.msra.mxu0 0
      %1107 = vmatprep.subr.bf16.mxu0 0
      %1108 = vmatpush1.bf16.msra.mxu0 0
      %1109 = vmatprep.subr.bf16.mxu0 0
      %1110 = vmatpush1.bf16.msra.mxu0 0
      %1111 = vmatprep.subr.bf16.mxu0 0
      %1112 = vmatpush1.bf16.msra.mxu0 0
      %1113 = vmatprep.subr.bf16.mxu0 0
      %1114 = vmatpush1.bf16.msra.mxu0 0
      %1115 = vmatprep.subr.bf16.mxu0 0
      %1116 = vmatpush1.bf16.msra.mxu0 0
      %1117 = vmatprep.subr.bf16.mxu0 0
      %1118 = vmatpush1.bf16.msra.mxu0 0
      %1119 = vmatprep.subr.bf16.mxu0 0
      %1120 = vmatpush1.bf16.msra.mxu0 0
      %1121 = vmatprep.subr.bf16.mxu0 0
      %1122 = vmatpush1.bf16.msra.mxu0 0
      %1123 = vmatprep.subr.bf16.mxu0 0
      %1124 = vmatpush1.bf16.msra.mxu0 0
      %1125 = vmatprep.subr.bf16.mxu0 0
      %1126 = vmatpush1.bf16.msra.mxu0 0
      %1127 = vmatprep.subr.bf16.mxu0 0
      %1128 = vmatpush1.bf16.msra.mxu0 0
      %1129 = vmatprep.subr.bf16.mxu0 0
      %1130 = vmatpush1.bf16.msra.mxu0 0
      %1131 = vmatprep.mubr.bf16.mxu0 0
      %1132 = vmatmul.mubr.bf16.gmra.mrb[0].mxu0 %v1097
      %v1133 = vpop.f32.mrb[0].mxu0
      %v1134 = vadd.f32 0.0, %v1133
      %v1135 = vpop.f32.mrb[0].mxu0
      %v1136 = vpop.f32.mrb[0].mxu0
      %v1137 = vadd.f32 0.0, %v1136
      %v1138 = vpop.f32.mrb[0].mxu0
      %1139 = vdwg.mxu0
      %v1142 = vunpack.c.l.b16 %v513
      %v1143 = vunpack.c.l.b16 %v514
      %v1144 = vpack.c.b16 %v1143, %v1142
      %v1147 = vsel %vm752, %v989, 0
      %1149 = vmatprep.subr.bf16.mxu0 0
      %1150 = vmatpush1.bf16.msra.mxu0 %v1144
      %1151 = vmatprep.subr.bf16.mxu0 0
      %1152 = vmatpush1.bf16.msra.mxu0 0
      %1153 = vmatprep.subr.bf16.mxu0 0
      %1154 = vmatpush1.bf16.msra.mxu0 0
      %1155 = vmatprep.subr.bf16.mxu0 0
      %1156 = vmatpush1.bf16.msra.mxu0 0
      %1157 = vmatprep.subr.bf16.mxu0 0
      %1158 = vmatpush1.bf16.msra.mxu0 0
      %1159 = vmatprep.subr.bf16.mxu0 0
      %1160 = vmatpush1.bf16.msra.mxu0 0
      %1161 = vmatprep.subr.bf16.mxu0 0
      %1162 = vmatpush1.bf16.msra.mxu0 0
      %1163 = vmatprep.subr.bf16.mxu0 0
      %1164 = vmatpush1.bf16.msra.mxu0 0
      %1165 = vmatprep.subr.bf16.mxu0 0
      %1166 = vmatpush1.bf16.msra.mxu0 0
      %1167 = vmatprep.subr.bf16.mxu0 0
      %1168 = vmatpush1.bf16.msra.mxu0 0
      %1169 = vmatprep.subr.bf16.mxu0 0
      %1170 = vmatpush1.bf16.msra.mxu0 0
      %1171 = vmatprep.subr.bf16.mxu0 0
      %1172 = vmatpush1.bf16.msra.mxu0 0
      %1173 = vmatprep.subr.bf16.mxu0 0
      %1174 = vmatpush1.bf16.msra.mxu0 0
      %1175 = vmatprep.subr.bf16.mxu0 0
      %1176 = vmatpush1.bf16.msra.mxu0 0
      %1177 = vmatprep.subr.bf16.mxu0 0
      %1178 = vmatpush1.bf16.msra.mxu0 0
      %1179 = vmatprep.subr.bf16.mxu0 0
      %1180 = vmatpush1.bf16.msra.mxu0 0
      %1181 = vmatprep.mubr.bf16.mxu0 0
      %1182 = vmatmul.mubr.bf16.gmra.mrb[0].mxu0 %v1147
      %v1183 = vpop.f32.mrb[0].mxu0
      %v1184 = vadd.f32 0.0, %v1183
      %v1185 = vpop.f32.mrb[0].mxu0
      %v1186 = vpop.f32.mrb[0].mxu0
      %v1187 = vadd.f32 0.0, %v1186
      %v1188 = vpop.f32.mrb[0].mxu0
      %1189 = vdwg.mxu0
      %v1190 = vadd.f32 %v978, %v1034
      %v1191 = vadd.f32 %v979, %v1037
      %v1192 = vadd.f32 %v980, %v1084
      %v1193 = vadd.f32 %v981, %v1087
      %v1194 = vadd.f32 %v982, %v1134
      %v1195 = vadd.f32 %v983, %v1137
      %v1196 = vadd.f32 %v984, %v1184
      %v1197 = vadd.f32 %v985, %v1187
      %1198 = vst.msk [vmem:[#allocation4] sm:$0xff] %vm525, %v1190
      %1199 = vst.msk [vmem:[#allocation4 + $0x8] sm:$0xff] %vm525, %v1191
      %1200 = vst.msk [vmem:[#allocation4 + $0x10] sm:$0xff] %vm525, %v1192
      %1201 = vst.msk [vmem:[#allocation4 + $0x18] sm:$0xff] %vm525, %v1193
      %1202 = vst.msk [vmem:[#allocation4 + $0x20] sm:$0xff] %vm525, %v1194
      %1203 = vst.msk [vmem:[#allocation4 + $0x28] sm:$0xff] %vm525, %v1195
      %1204 = vst.msk [vmem:[#allocation4 + $0x30] sm:$0xff] %vm525, %v1196
      %1205 = vst.msk [vmem:[#allocation4 + $0x38] sm:$0xff] %vm525, %v1197
      %1206 = vst.msk [vmem:[#allocation2] sm:$0xff] %vm921, %v777
      %1207 = vst.msk [vmem:[#allocation2 + $0x8] sm:$0xff] %vm921, %v778
      %1208 = vst.msk [vmem:[#allocation2 + $0x10] sm:$0xff] %vm921, %v779
      %1209 = vst.msk [vmem:[#allocation2 + $0x18] sm:$0xff] %vm921, %v780
      %1210 = vst.msk [vmem:[#allocation2 + $0x20] sm:$0xff] %vm921, %v781
      %1211 = vst.msk [vmem:[#allocation2 + $0x28] sm:$0xff] %vm921, %v782
      %1212 = vst.msk [vmem:[#allocation2 + $0x30] sm:$0xff] %vm921, %v783
      %1213 = vst.msk [vmem:[#allocation2 + $0x38] sm:$0xff] %vm921, %v784
      // Predicated region
      $region57: #{transformer_forward.20} parent=51 // pred_check
        %p1214 = pneg %p461
      $region58: #{transformer_forward.20} parent=51 // pred_check_branch
        %1216 = sbr.rel (%p1214) target = $region60
      $region59: #{transformer_forward.20} parent=51 // pred_region
        %v1217 = vld [vmem:[#allocation4] sm:$0xff]
        %v1218 = vld [vmem:[#allocation4 + $0x8] sm:$0xff]
        %v1219 = vld [vmem:[#allocation4 + $0x10] sm:$0xff]
        %v1220 = vld [vmem:[#allocation4 + $0x18] sm:$0xff]
        %v1221 = vld [vmem:[#allocation4 + $0x20] sm:$0xff]
        %v1222 = vld [vmem:[#allocation4 + $0x28] sm:$0xff]
        %v1223 = vld [vmem:[#allocation4 + $0x30] sm:$0xff]
        %v1224 = vld [vmem:[#allocation4 + $0x38] sm:$0xff]
        %v1225 = vld [vmem:[#allocation3] sm:$0xff]
        %v1226 = vld [vmem:[#allocation3 + $0x8] sm:$0xff]
        %v1227 = vld [vmem:[#allocation3 + $0x10] sm:$0xff]
        %v1228 = vld [vmem:[#allocation3 + $0x18] sm:$0xff]
        %v1229 = vld [vmem:[#allocation3 + $0x20] sm:$0xff]
        %v1230 = vld [vmem:[#allocation3 + $0x28] sm:$0xff]
        %v1231 = vld [vmem:[#allocation3 + $0x30] sm:$0xff]
        %v1232 = vld [vmem:[#allocation3 + $0x38] sm:$0xff]
        %1234 = vset.pattern.permute.xlu0 0
        %1235 = vperm.xlu0 %1234, %v1225
        %v1236 = vpop.permute.xlu0 %1235
        %1239 = vset.pattern.permute.xlu0 0
        %1240 = vperm.xlu0 %1239, %v1226
        %v1241 = vpop.permute.xlu0 %1240
        %1244 = vset.pattern.permute.xlu0 0
        %1245 = vperm.xlu0 %1244, %v1227
        %v1246 = vpop.permute.xlu0 %1245
        %1249 = vset.pattern.permute.xlu0 0
        %1250 = vperm.xlu0 %1249, %v1228
        %v1251 = vpop.permute.xlu0 %1250
        %1254 = vset.pattern.permute.xlu0 0
        %1255 = vperm.xlu0 %1254, %v1229
        %v1256 = vpop.permute.xlu0 %1255
        %1259 = vset.pattern.permute.xlu0 0
        %1260 = vperm.xlu0 %1259, %v1230
        %v1261 = vpop.permute.xlu0 %1260
        %1264 = vset.pattern.permute.xlu0 0
        %1265 = vperm.xlu0 %1264, %v1231
        %v1266 = vpop.permute.xlu0 %1265
        %1269 = vset.pattern.permute.xlu0 0
        %1270 = vperm.xlu0 %1269, %v1232
        %v1271 = vpop.permute.xlu0 %1270
        %v1273 = vrcp.pop %v1236
        %v1274 = vmul.f32 %v1217, %v1273
        %v1275 = vrcp.pop %v1241
        %v1276 = vmul.f32 %v1218, %v1275
        %v1277 = vrcp.pop %v1246
        %v1278 = vmul.f32 %v1219, %v1277
        %v1279 = vrcp.pop %v1251
        %v1280 = vmul.f32 %v1220, %v1279
        %v1281 = vrcp.pop %v1256
        %v1282 = vmul.f32 %v1221, %v1281
        %v1283 = vrcp.pop %v1261
        %v1284 = vmul.f32 %v1222, %v1283
        %v1285 = vrcp.pop %v1266
        %v1286 = vmul.f32 %v1223, %v1285
        %v1287 = vrcp.pop %v1271
        %v1288 = vmul.f32 %v1224, %v1287
        %v1289 = vcombine.low %v1274, %v1282
        %v1290 = vcombine.high %v1274, %v1282
        %v1292 = vunpack.c.l.s4 1983009808
        %v1293 = vunpack.c.0.s8 %v1292
        %v1294 = vlaneseq
        %v1295 = vshrl.u32 %v1294, 7
        %v1296 = vsub.s32 %v1293, %v1295
        %v1297 = vrot.slane %v1289, %v1296
        %v1299 = vunpack.c.l.s4 1983009808
        %v1300 = vunpack.c.0.s8 %v1299
        %v1301 = vlaneseq
        %v1302 = vshrl.u32 %v1301, 7
        %v1303 = vsub.s32 %v1300, %v1302
        %v1304 = vrot.slane %v1290, %v1303
        %v1305 = vcombine.low %v1278, %v1286
        %v1306 = vcombine.high %v1278, %v1286
        %v1308 = vunpack.c.l.s4 1983009808
        %v1309 = vunpack.c.0.s8 %v1308
        %v1310 = vlaneseq
        %v1311 = vshrl.u32 %v1310, 7
        %v1312 = vsub.s32 %v1309, %v1311
        %v1313 = vrot.slane %v1305, %v1312
        %v1315 = vunpack.c.l.s4 1983009808
        %v1316 = vunpack.c.0.s8 %v1315
        %v1317 = vlaneseq
        %v1318 = vshrl.u32 %v1317, 7
        %v1319 = vsub.s32 %v1316, %v1318
        %v1320 = vrot.slane %v1306, %v1319
        %v1321 = vcombine.low %v1297, %v1313
        %v1322 = vcombine.high %v1297, %v1313
        %v1324 = vunpack.c.l.s4 1934713408
        %v1325 = vunpack.c.0.s8 %v1324
        %v1326 = vlaneseq
        %v1327 = vshrl.u32 %v1326, 7
        %v1328 = vsub.s32 %v1325, %v1327
        %v1329 = vrot.slane %v1321, %v1328
        %v1331 = vunpack.c.l.s4 1934713408
        %v1332 = vunpack.c.0.s8 %v1331
        %v1333 = vlaneseq
        %v1334 = vshrl.u32 %v1333, 7
        %v1335 = vsub.s32 %v1332, %v1334
        %v1336 = vrot.slane %v1322, %v1335
        %v1337 = vcombine.low %v1304, %v1320
        %v1338 = vcombine.high %v1304, %v1320
        %v1340 = vunpack.c.l.s4 1934713408
        %v1341 = vunpack.c.0.s8 %v1340
        %v1342 = vlaneseq
        %v1343 = vshrl.u32 %v1342, 7
        %v1344 = vsub.s32 %v1341, %v1343
        %v1345 = vrot.slane %v1337, %v1344
        %v1347 = vunpack.c.l.s4 1934713408
        %v1348 = vunpack.c.0.s8 %v1347
        %v1349 = vlaneseq
        %v1350 = vshrl.u32 %v1349, 7
        %v1351 = vsub.s32 %v1348, %v1350
        %v1352 = vrot.slane %v1338, %v1351
        %v1353 = vcombine.high %v1329, 0.0
        %v1354 = vcombine.high %v1336, 0.0
        %v1355 = vcombine.high %v1345, 0.0
        %v1356 = vcombine.high %v1352, 0.0
        %v1357 = vcombine.low %v1276, %v1284
        %v1358 = vcombine.high %v1276, %v1284
        %v1360 = vunpack.c.l.s4 1983009808
        %v1361 = vunpack.c.0.s8 %v1360
        %v1362 = vlaneseq
        %v1363 = vshrl.u32 %v1362, 7
        %v1364 = vsub.s32 %v1361, %v1363
        %v1365 = vrot.slane %v1357, %v1364
        %v1367 = vunpack.c.l.s4 1983009808
        %v1368 = vunpack.c.0.s8 %v1367
        %v1369 = vlaneseq
        %v1370 = vshrl.u32 %v1369, 7
        %v1371 = vsub.s32 %v1368, %v1370
        %v1372 = vrot.slane %v1358, %v1371
        %v1373 = vcombine.low %v1280, %v1288
        %v1374 = vcombine.high %v1280, %v1288
        %v1376 = vunpack.c.l.s4 1983009808
        %v1377 = vunpack.c.0.s8 %v1376
        %v1378 = vlaneseq
        %v1379 = vshrl.u32 %v1378, 7
        %v1380 = vsub.s32 %v1377, %v1379
        %v1381 = vrot.slane %v1373, %v1380
        %v1383 = vunpack.c.l.s4 1983009808
        %v1384 = vunpack.c.0.s8 %v1383
        %v1385 = vlaneseq
        %v1386 = vshrl.u32 %v1385, 7
        %v1387 = vsub.s32 %v1384, %v1386
        %v1388 = vrot.slane %v1374, %v1387
        %v1389 = vcombine.low %v1365, %v1381
        %v1390 = vcombine.high %v1365, %v1381
        %v1392 = vunpack.c.l.s4 1934713408
        %v1393 = vunpack.c.0.s8 %v1392
        %v1394 = vlaneseq
        %v1395 = vshrl.u32 %v1394, 7
        %v1396 = vsub.s32 %v1393, %v1395
        %v1397 = vrot.slane %v1389, %v1396
        %v1399 = vunpack.c.l.s4 1934713408
        %v1400 = vunpack.c.0.s8 %v1399
        %v1401 = vlaneseq
        %v1402 = vshrl.u32 %v1401, 7
        %v1403 = vsub.s32 %v1400, %v1402
        %v1404 = vrot.slane %v1390, %v1403
        %v1405 = vcombine.low %v1372, %v1388
        %v1406 = vcombine.high %v1372, %v1388
        %v1408 = vunpack.c.l.s4 1934713408
        %v1409 = vunpack.c.0.s8 %v1408
        %v1410 = vlaneseq
        %v1411 = vshrl.u32 %v1410, 7
        %v1412 = vsub.s32 %v1409, %v1411
        %v1413 = vrot.slane %v1405, %v1412
        %v1415 = vunpack.c.l.s4 1934713408
        %v1416 = vunpack.c.0.s8 %v1415
        %v1417 = vlaneseq
        %v1418 = vshrl.u32 %v1417, 7
        %v1419 = vsub.s32 %v1416, %v1418
        %v1420 = vrot.slane %v1406, %v1419
        %v1421 = vcombine.high %v1397, 0.0
        %v1422 = vcombine.high %v1404, 0.0
        %v1423 = vcombine.high %v1413, 0.0
        %v1424 = vcombine.high %v1420, 0.0
        %v1425 = vcombine.low %v1329, %v1336
        %v1427 = vunpack.c.l.s4 1983009808
        %v1428 = vunpack.c.0.s8 %v1427
        %v1429 = vlaneseq
        %v1430 = vshrl.u32 %v1429, 7
        %v1431 = vsub.s32 %v1428, %v1430
        %v1432 = vrot.slane %v1425, %v1431
        %v1433 = vcombine.low %v1353, %v1354
        %v1435 = vunpack.c.l.s4 1983009808
        %v1436 = vunpack.c.0.s8 %v1435
        %v1437 = vlaneseq
        %v1438 = vshrl.u32 %v1437, 7
        %v1439 = vsub.s32 %v1436, %v1438
        %v1440 = vrot.slane %v1433, %v1439
        %v1441 = vcombine.low %v1345, %v1352
        %v1443 = vunpack.c.l.s4 1983009808
        %v1444 = vunpack.c.0.s8 %v1443
        %v1445 = vlaneseq
        %v1446 = vshrl.u32 %v1445, 7
        %v1447 = vsub.s32 %v1444, %v1446
        %v1448 = vrot.slane %v1441, %v1447
        %v1449 = vcombine.low %v1355, %v1356
        %v1451 = vunpack.c.l.s4 1983009808
        %v1452 = vunpack.c.0.s8 %v1451
        %v1453 = vlaneseq
        %v1454 = vshrl.u32 %v1453, 7
        %v1455 = vsub.s32 %v1452, %v1454
        %v1456 = vrot.slane %v1449, %v1455
        %v1457 = vcombine.low %v1432, %v1440
        %v1458 = vcombine.high %v1432, %v1440
        %v1460 = vunpack.c.l.s4 1934713408
        %v1461 = vunpack.c.0.s8 %v1460
        %v1462 = vlaneseq
        %v1463 = vshrl.u32 %v1462, 7
        %v1464 = vsub.s32 %v1461, %v1463
        %v1465 = vrot.slane %v1457, %v1464
        %v1467 = vunpack.c.l.s4 1934713408
        %v1468 = vunpack.c.0.s8 %v1467
        %v1469 = vlaneseq
        %v1470 = vshrl.u32 %v1469, 7
        %v1471 = vsub.s32 %v1468, %v1470
        %v1472 = vrot.slane %v1458, %v1471
        %v1473 = vcombine.low %v1448, %v1456
        %v1474 = vcombine.high %v1448, %v1456
        %v1476 = vunpack.c.l.s4 1934713408
        %v1477 = vunpack.c.0.s8 %v1476
        %v1478 = vlaneseq
        %v1479 = vshrl.u32 %v1478, 7
        %v1480 = vsub.s32 %v1477, %v1479
        %v1481 = vrot.slane %v1473, %v1480
        %v1483 = vunpack.c.l.s4 1934713408
        %v1484 = vunpack.c.0.s8 %v1483
        %v1485 = vlaneseq
        %v1486 = vshrl.u32 %v1485, 7
        %v1487 = vsub.s32 %v1484, %v1486
        %v1488 = vrot.slane %v1474, %v1487
        %v1489 = vcombine.low %v1465, %v1481
        %v1490 = vcombine.high %v1465, %v1481
        %v1491 = vcombine.low %v1472, %v1488
        %v1492 = vcombine.high %v1472, %v1488
        %v1493 = vcombine.low %v1397, %v1404
        %v1495 = vunpack.c.l.s4 1983009808
        %v1496 = vunpack.c.0.s8 %v1495
        %v1497 = vlaneseq
        %v1498 = vshrl.u32 %v1497, 7
        %v1499 = vsub.s32 %v1496, %v1498
        %v1500 = vrot.slane %v1493, %v1499
        %v1501 = vcombine.low %v1421, %v1422
        %v1503 = vunpack.c.l.s4 1983009808
        %v1504 = vunpack.c.0.s8 %v1503
        %v1505 = vlaneseq
        %v1506 = vshrl.u32 %v1505, 7
        %v1507 = vsub.s32 %v1504, %v1506
        %v1508 = vrot.slane %v1501, %v1507
        %v1509 = vcombine.low %v1413, %v1420
        %v1511 = vunpack.c.l.s4 1983009808
        %v1512 = vunpack.c.0.s8 %v1511
        %v1513 = vlaneseq
        %v1514 = vshrl.u32 %v1513, 7
        %v1515 = vsub.s32 %v1512, %v1514
        %v1516 = vrot.slane %v1509, %v1515
        %v1517 = vcombine.low %v1423, %v1424
        %v1519 = vunpack.c.l.s4 1983009808
        %v1520 = vunpack.c.0.s8 %v1519
        %v1521 = vlaneseq
        %v1522 = vshrl.u32 %v1521, 7
        %v1523 = vsub.s32 %v1520, %v1522
        %v1524 = vrot.slane %v1517, %v1523
        %v1525 = vcombine.low %v1500, %v1508
        %v1526 = vcombine.high %v1500, %v1508
        %v1528 = vunpack.c.l.s4 1934713408
        %v1529 = vunpack.c.0.s8 %v1528
        %v1530 = vlaneseq
        %v1531 = vshrl.u32 %v1530, 7
        %v1532 = vsub.s32 %v1529, %v1531
        %v1533 = vrot.slane %v1525, %v1532
        %v1535 = vunpack.c.l.s4 1934713408
        %v1536 = vunpack.c.0.s8 %v1535
        %v1537 = vlaneseq
        %v1538 = vshrl.u32 %v1537, 7
        %v1539 = vsub.s32 %v1536, %v1538
        %v1540 = vrot.slane %v1526, %v1539
        %v1541 = vcombine.low %v1516, %v1524
        %v1542 = vcombine.high %v1516, %v1524
        %v1544 = vunpack.c.l.s4 1934713408
        %v1545 = vunpack.c.0.s8 %v1544
        %v1546 = vlaneseq
        %v1547 = vshrl.u32 %v1546, 7
        %v1548 = vsub.s32 %v1545, %v1547
        %v1549 = vrot.slane %v1541, %v1548
        %v1551 = vunpack.c.l.s4 1934713408
        %v1552 = vunpack.c.0.s8 %v1551
        %v1553 = vlaneseq
        %v1554 = vshrl.u32 %v1553, 7
        %v1555 = vsub.s32 %v1552, %v1554
        %v1556 = vrot.slane %v1542, %v1555
        %v1557 = vcombine.low %v1533, %v1549
        %v1558 = vcombine.high %v1533, %v1549
        %v1559 = vcombine.low %v1540, %v1556
        %v1560 = vcombine.high %v1540, %v1556
        %1563 = vrot.lane.b32.xlu0 %v1490, 32
        %v1564 = vpop.permute.xlu0 %1563
        %1565 = vrot.lane.b32.xlu0 %v1558, 32
        %v1566 = vpop.permute.xlu0 %1565
        %1571 = vrot.lane.b32.xlu0 %v1491, 64
        %v1572 = vpop.permute.xlu0 %1571
        %1573 = vrot.lane.b32.xlu0 %v1559, 64
        %v1574 = vpop.permute.xlu0 %1573
        %1579 = vrot.lane.b32.xlu0 %v1492, 96
        %v1580 = vpop.permute.xlu0 %1579
        %1581 = vrot.lane.b32.xlu0 %v1560, 96
        %v1582 = vpop.permute.xlu0 %1581
        %v1585 = vsel %vm525, %v1489, %v1564
        %v1586 = vsel %vm525, %v1557, %v1566
        %vm1587 = vcmask 523264
        %v1588 = vsel %vm1587, %v1585, %v1572
        %v1589 = vsel %vm1587, %v1586, %v1574
        %vm1590 = vcmask 785408
        %v1591 = vsel %vm1590, %v1588, %v1580
        %v1592 = vsel %vm1590, %v1589, %v1582
        %v1593 = vpack.c.bf16 %v1592, %v1591
        %v1594 = vld [vmem:[%s4] sm:$0xf]
        %v1595 = vld [vmem:[%s4 + $0x4] sm:$0xf]
        %v1596 = vld [vmem:[%s4 + $0x8] sm:$0xf]
        %v1597 = vld [vmem:[%s4 + $0xc] sm:$0xf]
        %v1598 = vld [vmem:[%s4 + $0x10] sm:$0xf]
        %v1599 = vld [vmem:[%s4 + $0x14] sm:$0xf]
        %v1600 = vld [vmem:[%s4 + $0x18] sm:$0xf]
        %v1601 = vld [vmem:[%s4 + $0x1c] sm:$0xf]
        %v1602 = vld [vmem:[%s4 + $0x20] sm:$0xf]
        %v1603 = vld [vmem:[%s4 + $0x24] sm:$0xf]
        %v1604 = vld [vmem:[%s4 + $0x28] sm:$0xf]
        %v1605 = vld [vmem:[%s4 + $0x2c] sm:$0xf]
        %v1606 = vld [vmem:[%s4 + $0x30] sm:$0xf]
        %v1607 = vld [vmem:[%s4 + $0x34] sm:$0xf]
        %v1608 = vld [vmem:[%s4 + $0x38] sm:$0xf]
        %v1609 = vld [vmem:[%s4 + $0x3c] sm:$0xf]
        %v1610 = vld [vmem:[%s5] sm:$0x1]
        %v1612 = vlaneseq
        %v1613 = vshrl.u32 %v1612, 7
        %v1614 = vsub.s32 0, %v1613
        %v1615 = vrot.slane %v1610, %v1614
        %v1633 = vunpack.c.l.b16 %v1594
        %v1634 = vunpack.c.l.b16 %v1595
        %v1635 = vunpack.c.l.b16 %v1596
        %v1636 = vunpack.c.l.b16 %v1597
        %v1637 = vunpack.c.l.b16 %v1598
        %v1638 = vunpack.c.l.b16 %v1599
        %v1639 = vunpack.c.l.b16 %v1600
        %v1640 = vunpack.c.l.b16 %v1601
        %v1641 = vunpack.c.l.b16 %v1602
        %v1642 = vunpack.c.l.b16 %v1603
        %v1643 = vunpack.c.l.b16 %v1604
        %v1644 = vunpack.c.l.b16 %v1605
        %v1645 = vunpack.c.l.b16 %v1606
        %v1646 = vunpack.c.l.b16 %v1607
        %v1647 = vunpack.c.l.b16 %v1608
        %v1648 = vunpack.c.l.b16 %v1609
        %v1649 = vpack.c.b16 %v1634, %v1633
        %v1650 = vpack.c.b16 %v1636, %v1635
        %v1651 = vpack.c.b16 %v1638, %v1637
        %v1652 = vpack.c.b16 %v1640, %v1639
        %v1653 = vpack.c.b16 %v1642, %v1641
        %v1654 = vpack.c.b16 %v1644, %v1643
        %v1655 = vpack.c.b16 %v1646, %v1645
        %v1656 = vpack.c.b16 %v1648, %v1647
        %1665 = vmatprep.subr.bf16.mxu0 0
        %1666 = vmatpush1.bf16.msra.mxu0 %v1649
        %1667 = vmatprep.subr.bf16.mxu0 0
        %1668 = vmatpush1.bf16.msra.mxu0 %v1650
        %1669 = vmatprep.subr.bf16.mxu0 0
        %1670 = vmatpush1.bf16.msra.mxu0 %v1651
        %1671 = vmatprep.subr.bf16.mxu0 0
        %1672 = vmatpush1.bf16.msra.mxu0 %v1652
        %1673 = vmatprep.subr.bf16.mxu0 0
        %1674 = vmatpush1.bf16.msra.mxu0 %v1653
        %1675 = vmatprep.subr.bf16.mxu0 0
        %1676 = vmatpush1.bf16.msra.mxu0 %v1654
        %1677 = vmatprep.subr.bf16.mxu0 0
        %1678 = vmatpush1.bf16.msra.mxu0 %v1655
        %1679 = vmatprep.subr.bf16.mxu0 0
        %1680 = vmatpush1.bf16.msra.mxu0 %v1656
        %1681 = vmatprep.subr.bf16.mxu0 0
        %1682 = vmatpush1.bf16.msra.mxu0 0
        %1683 = vmatprep.subr.bf16.mxu0 0
        %1684 = vmatpush1.bf16.msra.mxu0 0
        %1685 = vmatprep.subr.bf16.mxu0 0
        %1686 = vmatpush1.bf16.msra.mxu0 0
        %1687 = vmatprep.subr.bf16.mxu0 0
        %1688 = vmatpush1.bf16.msra.mxu0 0
        %1689 = vmatprep.subr.bf16.mxu0 0
        %1690 = vmatpush1.bf16.msra.mxu0 0
        %1691 = vmatprep.subr.bf16.mxu0 0
        %1692 = vmatpush1.bf16.msra.mxu0 0
        %1693 = vmatprep.subr.bf16.mxu0 0
        %1694 = vmatpush1.bf16.msra.mxu0 0
        %1695 = vmatprep.subr.bf16.mxu0 0
        %1696 = vmatpush1.bf16.msra.mxu0 0
        %1697 = vmatprep.mubr.bf16.mxu0 0
        %1698 = vmatmul.mubr.bf16.gmra.mrb[0].mxu0 %v1593
        %v1699 = vpop.f32.mrb[0].mxu0
        %v1700 = vadd.f32 %v1615, %v1699
        %v1701 = vpop.f32.mrb[0].mxu0
        %v1702 = vpop.f32.mrb[0].mxu0
        %v1703 = vadd.f32 %v1615, %v1702
        %v1704 = vpop.f32.mrb[0].mxu0
        %1705 = vdwg.mxu0
        %v1706 = vld [vmem:[%s418] sm:$0xf]
        %v1707 = vld [vmem:[%s418 + $0x4] sm:$0xf]
        %v1708 = vunpack.c.l.bf16 %v1706
        %v1709 = vunpack.c.l.bf16 %v1707
        %v1710 = vadd.f32 %v1700, %v1708
        %v1711 = vadd.f32 %v1703, %v1709
        %1712 = vadd.xlane.f32.xlu0 %v1710
        %v1713 = vpop.xlane.xlu0 %1712
        %1714 = vadd.xlane.f32.xlu0 %v1711
        %v1715 = vpop.xlane.xlu0 %1714
        %v1716 = vrcp.pop 128.0
        %v1717 = vmul.f32 %v1713, %v1716
        %v1718 = vmul.f32 %v1715, %v1716
        %v1719 = vsub.f32 %v1710, %v1717
        %v1720 = vsub.f32 %v1711, %v1718
        %v1721 = vmul.f32 %v1719, %v1719
        %v1722 = vmul.f32 %v1720, %v1720
        %1723 = vadd.xlane.f32.xlu0 %v1721
        %v1724 = vpop.xlane.xlu0 %1723
        %1725 = vadd.xlane.f32.xlu0 %v1722
        %v1726 = vpop.xlane.xlu0 %1725
        %v1727 = vmul.f32 %v1724, %v1716
        %v1728 = vmul.f32 %v1726, %v1716
        %v1729 = vadd.f32 %v1727, 1e-05
        %v1730 = vadd.f32 %v1728, 1e-05
        %v1731 = vrsqrt.pop %v1729
        %v1732 = vrsqrt.pop %v1730
        %v1733 = vmul.f32 %v1719, %v1731
        %v1734 = vmul.f32 %v1720, %v1732
        %v1735 = vld [vmem:[%s6] sm:$0x1]
        %v1737 = vlaneseq
        %v1738 = vshrl.u32 %v1737, 7
        %v1739 = vsub.s32 0, %v1738
        %v1740 = vrot.slane %v1735, %v1739
        %v1742 = vmul.f32 %v1733, %v1740
        %v1743 = vmul.f32 %v1734, %v1740
        %v1744 = vld [vmem:[%s7] sm:$0x1]
        %v1746 = vlaneseq
        %v1747 = vshrl.u32 %v1746, 7
        %v1748 = vsub.s32 0, %v1747
        %v1749 = vrot.slane %v1744, %v1748
        %v1751 = vadd.f32 %v1742, %v1749
        %v1752 = vadd.f32 %v1743, %v1749
        %v1753 = vpack.c.bf16 %v1752, %v1751
        %v1755 = vunpack.c.l.b16 %v1753
        %v1756 = vunpack.c.h.b16 %v1753
        %v1757 = vpack.c.b16 %v1755, %v1755
        %v1758 = vpack.c.b16 %v1756, %v1756
        %1761 = vst [vmem:[%s458] sm:$0xf] %v1757
        %1762 = vst [vmem:[%s458 + $0x4] sm:$0xf] %v1758
      $region60: #{transformer_forward.20} parent=51 // pred_fallthru
        _
      %s1763 = smul.u32 2, %s25
      %p1764 = scmp.lt.s32.totalorder %s24, 1
      %s1765 = scalar_select %p1764, %s24, 1
      %p1766 = scmp.lt.s32.totalorder %s1763, 1
      %s1767 = scalar_select %p1766, %s1763, 1
      %s1768 = smul.addr %s1765, 2
      %s1769 = sadd.s32 %s1767, %s1768
      %s1770 = smul.addr %s1769, 4
      %s1771 = scalar_lea.vmem %s8, %s1770
      // Predicated region
      $region61: #{transformer_forward.20} parent=51 // pred_check
        %p1772 = pneg %p254
      $region62: #{transformer_forward.20} parent=51 // pred_check_branch
        %1774 = sbr.rel (%p1772) target = $region64
      $region63: #{transformer_forward.20} parent=51 // pred_region
        %s1775 = smul.u32 2, %s25
      $region64: #{transformer_forward.20} parent=51 // pred_fallthru
        _
    $region52: #{transformer_forward.20} parent=5 // pred_fallthru
      _
    %p1776 = scmp.le.s32.totalorder 2, %s14
    // Predicated region
    $region65: #{transformer_forward.20} parent=5 // pred_check
      %p1777 = pneg %p1776
    $region66: #{transformer_forward.20} parent=5 // pred_check_branch
      %1779 = sbr.rel (%p1777) target = $region68
    $region67: #{transformer_forward.20} parent=5 // pred_region
      %s1780 = ssub.s32 %s14, 2
      // Predicated region
      $region69: #{transformer_forward.20} parent=67 // pred_check
        %p1781 = pneg %p260
      $region70: #{transformer_forward.20} parent=67 // pred_check_branch
        %1783 = sbr.rel (%p1781) target = $region72
      $region71: #{transformer_forward.20} parent=67 // pred_region
        %s1784 = smul.u32 2, %s28
        %p1785 = scmp.lt.s32.totalorder %s27, 1
        %s1786 = scalar_select %p1785, %s27, 1
        %p1787 = scmp.lt.s32.totalorder %s1784, 1
        %s1788 = scalar_select %p1787, %s1784, 1
        %s1789 = smul.addr %s1786, 2
        %s1790 = sadd.s32 %s1788, %s1789
        %s1791 = smul.addr %s1790, 4
        %s1792 = scalar_lea.vmem %s8, %s1791
      $region72: #{transformer_forward.20} parent=67 // pred_fallthru
        _
    $region68: #{transformer_forward.20} parent=5 // pred_fallthru
      _
  $region6: #{transformer_forward.20} parent=0 // loop_footer
    %s18 = sadd.s32 1, %s14
  $region7: #{transformer_forward.20} parent=0 // loop_footer_branch
    %13 = sbr.rel target = $region3
  $region8: #{transformer_forward.20} parent=0 // loop_exit
    _

// kernel: transformer_forward.26
$region0: #{transformer_forward.26}
  #allocation0 [shape = 'u32[]', space=smem, size = 0x4, offset = 0x4, fixed_abs, tag = 'smem constant byte address 0x4 - core index']
  #allocation1 [shape = 'u32[144,128]{1,0:T(1,128)}', space=vmem, size = 0x12000, scoped, tag = 'internal scratch']
  #allocation2 [shape = 'f32[4,16,1]{2,1,0:T(8,128)}', space=vmem, size = 0x8000, scoped, tag = 'scratch operand']
  #allocation3 [shape = 'f32[4,16,1]{2,1,0:T(8,128)}', space=vmem, size = 0x8000, scoped, tag = 'scratch operand']
  #allocation4 [shape = 'f32[4,16,32]{2,1,0:T(8,128)}', space=vmem, size = 0x8000, scoped, tag = 'scratch operand']
  %s0 = inlined_call_operand.vmem [shape: bf16[2,16,128], index: 0, kind: input, shape index: {}]
  %s1 = inlined_call_operand.vmem [shape: bf16[2,4,16,32], index: 1, kind: input, shape index: {}]
  %s2 = inlined_call_operand.vmem [shape: bf16[2,4,16,32], index: 2, kind: input, shape index: {}]
  %s3 = inlined_call_operand.vmem [shape: bf16[2,4,16,32], index: 3, kind: input, shape index: {}]
  %s4 = inlined_call_operand.vmem [shape: bf16[128,128], index: 4, kind: input, shape index: {}]
  %s5 = inlined_call_operand.vmem [shape: f32[1,128], index: 5, kind: input, shape index: {}]
  %s6 = inlined_call_operand.vmem [shape: f32[1,128], index: 6, kind: input, shape index: {}]
  %s7 = inlined_call_operand.vmem [shape: f32[1,128], index: 7, kind: input, shape index: {}]
  %s8 = inlined_call_operand.vmem [shape: bf16[2,16,128], index: 8, kind: output, shape index: {}]
  %s9 = sld [smem:[#allocation0]]
  $region73: #{transformer_forward.26} parent=0
    _
  %s11 = ssub.s32 1, %s9
  %s12 = scalar_select 0, %s11, %s9
  loop: start=0, step=1, limit=4
  $region2: #{transformer_forward.26} parent=0 // loop_pre_header
    _
  $region3: #{transformer_forward.26} parent=0 // loop_header
    %s14 = sphi 0, %s18
    %p15 = scmp.ge.s32.totalorder %s14, 4
    %s21 = sphi 0, %s40
    %s22 = sphi 0, %s36
    %s23 = sphi 0, %s32
    %s24 = sphi 0, %s21
    %s25 = sphi 0, %s22
    %s26 = sphi 0, %s23
    %s27 = sphi 0, %s24
    %s28 = sphi 0, %s25
    %s29 = sphi 0, %s26
    %s45 = sphi 0, %s47
    %s48 = sphi 0, %s45
    %s49 = sphi 0, %s48
    %s65 = sphi 0, %s49
    %s73 = sphi 0, %s75
    %s76 = sphi 0, %s73
    %s77 = sphi 0, %s76
    %s93 = sphi 0, %s77
    %s101 = sphi 0, %s103
    %s104 = sphi 0, %s101
    %s105 = sphi 0, %s104
    %s121 = sphi 0, %s105
    %s129 = sphi 0, %s131
    %s132 = sphi 0, %s129
    %s133 = sphi 0, %s132
    %s149 = sphi 0, %s133
    %s153 = sphi 0, %s153
    %s155 = sphi 0, %s153
    %s156 = sphi 0, %s155
    %s170 = sphi 0, %s156
    %s174 = sphi 0, %s174
    %s176 = sphi 0, %s174
    %s177 = sphi 0, %s176
    %s191 = sphi 0, %s177
    %s195 = sphi 0, %s195
    %s197 = sphi 0, %s195
    %s198 = sphi 0, %s197
    %s212 = sphi 0, %s198
    %s216 = sphi 0, %s216
    %s218 = sphi 0, %s216
    %s219 = sphi 0, %s218
    %s233 = sphi 0, %s219
    %s241 = sphi 0, %s243
    %s244 = sphi 0, %s241
    %s245 = sphi 0, %s244
    %s261 = sphi 0, %s245
  $region4: #{transformer_forward.26} parent=0 // loop_header_branch
    %17 = sbr.rel (%p15) target = $region8
  $region5: #{transformer_forward.26} parent=0 // loop_body
    %s19 = ssub.s32 %s14, 1
    %s20 = ssub.s32 %s14, 2
    %s30 = sadd.s32 1, %s23
    %p31 = scmp.ge.s32.totalorder %s30, 1
    %s32 = scalar_select %p31, 0, %s30
    %s33 = sadd.s32 1, %s22
    %s34 = scalar_select %p31, %s33, %s22
    %p35 = scmp.ge.s32.totalorder %s34, 1
    %s36 = scalar_select %p35, 0, %s34
    %s37 = sadd.s32 1, %s21
    %s38 = scalar_select %p35, %s37, %s21
    %p39 = scmp.ge.s32.totalorder %s38, 2
    %s40 = scalar_select %p39, 0, %s38
    %s41 = ssub.s32 %s21, %s40
    %s42 = ssub.s32 %s22, %s36
    %s43 = sor.u32 %s41, %s42
    %p44 = scmp.eq.s32.totalorder %s43, 0
    %s46 = sadd.s32 %s45, 1
    %s47 = scalar_select %p44, %s45, %s46
    %p50 = pneg %p44
    %p51 = scmp.eq.s32.totalorder %s14, 1
    %p52 = por %p50, %p51
    %p53 = scmp.ne.s32.totalorder %s45, %s48
    %p54 = scmp.eq.s32.totalorder %s14, 0
    %p55 = por %p53, %p54
    %p56 = scmp.ne.s32.totalorder %s45, %s48
    %p57 = scmp.eq.s32.totalorder %s19, 1
    %p58 = por %p56, %p57
    %p59 = scmp.ne.s32.totalorder %s48, %s49
    %p60 = scmp.eq.s32.totalorder %s19, 0
    %p61 = por %p59, %p60
    %p62 = scmp.ne.s32.totalorder %s48, %s49
    %p63 = scmp.eq.s32.totalorder %s20, 1
    %p64 = por %p62, %p63
    %p66 = scmp.ne.s32.totalorder %s49, %s65
    %p67 = scmp.eq.s32.totalorder %s20, 0
    %p68 = por %p66, %p67
    %s69 = ssub.s32 %s21, %s40
    %s70 = ssub.s32 %s22, %s36
    %s71 = sor.u32 %s69, %s70
    %p72 = scmp.eq.s32.totalorder %s71, 0
    %s74 = sadd.s32 %s73, 1
    %s75 = scalar_select %p72, %s73, %s74
    %p78 = pneg %p72
    %p79 = scmp.eq.s32.totalorder %s14, 1
    %p80 = por %p78, %p79
    %p81 = scmp.ne.s32.totalorder %s73, %s76
    %p82 = scmp.eq.s32.totalorder %s14, 0
    %p83 = por %p81, %p82
    %p84 = scmp.ne.s32.totalorder %s73, %s76
    %p85 = scmp.eq.s32.totalorder %s19, 1
    %p86 = por %p84, %p85
    %p87 = scmp.ne.s32.totalorder %s76, %s77
    %p88 = scmp.eq.s32.totalorder %s19, 0
    %p89 = por %p87, %p88
    %p90 = scmp.ne.s32.totalorder %s76, %s77
    %p91 = scmp.eq.s32.totalorder %s20, 1
    %p92 = por %p90, %p91
    %p94 = scmp.ne.s32.totalorder %s77, %s93
    %p95 = scmp.eq.s32.totalorder %s20, 0
    %p96 = por %p94, %p95
    %s97 = ssub.s32 %s21, %s40
    %s98 = ssub.s32 %s23, %s32
    %s99 = sor.u32 %s97, %s98
    %p100 = scmp.eq.s32.totalorder %s99, 0
    %s102 = sadd.s32 %s101, 1
    %s103 = scalar_select %p100, %s101, %s102
    %p106 = pneg %p100
    %p107 = scmp.eq.s32.totalorder %s14, 1
    %p108 = por %p106, %p107
    %p109 = scmp.ne.s32.totalorder %s101, %s104
    %p110 = scmp.eq.s32.totalorder %s14, 0
    %p111 = por %p109, %p110
    %p112 = scmp.ne.s32.totalorder %s101, %s104
    %p113 = scmp.eq.s32.totalorder %s19, 1
    %p114 = por %p112, %p113
    %p115 = scmp.ne.s32.totalorder %s104, %s105
    %p116 = scmp.eq.s32.totalorder %s19, 0
    %p117 = por %p115, %p116
    %p118 = scmp.ne.s32.totalorder %s104, %s105
    %p119 = scmp.eq.s32.totalorder %s20, 1
    %p120 = por %p118, %p119
    %p122 = scmp.ne.s32.totalorder %s105, %s121
    %p123 = scmp.eq.s32.totalorder %s20, 0
    %p124 = por %p122, %p123
    %s125 = ssub.s32 %s21, %s40
    %s126 = ssub.s32 %s23, %s32
    %s127 = sor.u32 %s125, %s126
    %p128 = scmp.eq.s32.totalorder %s127, 0
    %s130 = sadd.s32 %s129, 1
    %s131 = scalar_select %p128, %s129, %s130
    %p134 = pneg %p128
    %p135 = scmp.eq.s32.totalorder %s14, 1
    %p136 = por %p134, %p135
    %p137 = scmp.ne.s32.totalorder %s129, %s132
    %p138 = scmp.eq.s32.totalorder %s14, 0
    %p139 = por %p137, %p138
    %p140 = scmp.ne.s32.totalorder %s129, %s132
    %p141 = scmp.eq.s32.totalorder %s19, 1
    %p142 = por %p140, %p141
    %p143 = scmp.ne.s32.totalorder %s132, %s133
    %p144 = scmp.eq.s32.totalorder %s19, 0
    %p145 = por %p143, %p144
    %p146 = scmp.ne.s32.totalorder %s132, %s133
    %p147 = scmp.eq.s32.totalorder %s20, 1
    %p148 = por %p146, %p147
    %p150 = scmp.ne.s32.totalorder %s133, %s149
    %p151 = scmp.eq.s32.totalorder %s20, 0
    %p152 = por %p150, %p151
    %s154 = sadd.s32 %s153, 1
    %p157 = scmp.eq.s32.totalorder %s14, 1
    %p158 = scmp.ne.s32.totalorder %s153, %s155
    %p159 = scmp.eq.s32.totalorder %s14, 0
    %p160 = por %p158, %p159
    %p161 = scmp.ne.s32.totalorder %s153, %s155
    %p162 = scmp.eq.s32.totalorder %s19, 1
    %p163 = por %p161, %p162
    %p164 = scmp.ne.s32.totalorder %s155, %s156
    %p165 = scmp.eq.s32.totalorder %s19, 0
    %p166 = por %p164, %p165
    %p167 = scmp.ne.s32.totalorder %s155, %s156
    %p168 = scmp.eq.s32.totalorder %s20, 1
    %p169 = por %p167, %p168
    %p171 = scmp.ne.s32.totalorder %s156, %s170
    %p172 = scmp.eq.s32.totalorder %s20, 0
    %p173 = por %p171, %p172
    %s175 = sadd.s32 %s174, 1
    %p178 = scmp.eq.s32.totalorder %s14, 1
    %p179 = scmp.ne.s32.totalorder %s174, %s176
    %p180 = scmp.eq.s32.totalorder %s14, 0
    %p181 = por %p179, %p180
    %p182 = scmp.ne.s32.totalorder %s174, %s176
    %p183 = scmp.eq.s32.totalorder %s19, 1
    %p184 = por %p182, %p183
    %p185 = scmp.ne.s32.totalorder %s176, %s177
    %p186 = scmp.eq.s32.totalorder %s19, 0
    %p187 = por %p185, %p186
    %p188 = scmp.ne.s32.totalorder %s176, %s177
    %p189 = scmp.eq.s32.totalorder %s20, 1
    %p190 = por %p188, %p189
    %p192 = scmp.ne.s32.totalorder %s177, %s191
    %p193 = scmp.eq.s32.totalorder %s20, 0
    %p194 = por %p192, %p193
    %s196 = sadd.s32 %s195, 1
    %p199 = scmp.eq.s32.totalorder %s14, 1
    %p200 = scmp.ne.s32.totalorder %s195, %s197
    %p201 = scmp.eq.s32.totalorder %s14, 0
    %p202 = por %p200, %p201
    %p203 = scmp.ne.s32.totalorder %s195, %s197
    %p204 = scmp.eq.s32.totalorder %s19, 1
    %p205 = por %p203, %p204
    %p206 = scmp.ne.s32.totalorder %s197, %s198
    %p207 = scmp.eq.s32.totalorder %s19, 0
    %p208 = por %p206, %p207
    %p209 = scmp.ne.s32.totalorder %s197, %s198
    %p210 = scmp.eq.s32.totalorder %s20, 1
    %p211 = por %p209, %p210
    %p213 = scmp.ne.s32.totalorder %s198, %s212
    %p214 = scmp.eq.s32.totalorder %s20, 0
    %p215 = por %p213, %p214
    %s217 = sadd.s32 %s216, 1
    %p220 = scmp.eq.s32.totalorder %s14, 1
    %p221 = scmp.ne.s32.totalorder %s216, %s218
    %p222 = scmp.eq.s32.totalorder %s14, 0
    %p223 = por %p221, %p222
    %p224 = scmp.ne.s32.totalorder %s216, %s218
    %p225 = scmp.eq.s32.totalorder %s19, 1
    %p226 = por %p224, %p225
    %p227 = scmp.ne.s32.totalorder %s218, %s219
    %p228 = scmp.eq.s32.totalorder %s19, 0
    %p229 = por %p227, %p228
    %p230 = scmp.ne.s32.totalorder %s218, %s219
    %p231 = scmp.eq.s32.totalorder %s20, 1
    %p232 = por %p230, %p231
    %p234 = scmp.ne.s32.totalorder %s219, %s233
    %p235 = scmp.eq.s32.totalorder %s20, 0
    %p236 = por %p234, %p235
    %s237 = ssub.s32 %s21, %s40
    %s238 = ssub.s32 %s22, %s36
    %s239 = sor.u32 %s237, %s238
    %p240 = scmp.eq.s32.totalorder %s239, 0
    %s242 = sadd.s32 %s241, 1
    %s243 = scalar_select %p240, %s241, %s242
    %p246 = pneg %p240
    %p247 = scmp.eq.s32.totalorder %s14, 1
    %p248 = por %p246, %p247
    %p249 = scmp.ne.s32.totalorder %s241, %s244
    %p250 = scmp.eq.s32.totalorder %s14, 0
    %p251 = por %p249, %p250
    %p252 = scmp.ne.s32.totalorder %s241, %s244
    %p253 = scmp.eq.s32.totalorder %s19, 1
    %p254 = por %p252, %p253
    %p255 = scmp.ne.s32.totalorder %s244, %s245
    %p256 = scmp.eq.s32.totalorder %s19, 0
    %p257 = por %p255, %p256
    %p258 = scmp.ne.s32.totalorder %s244, %s245
    %p259 = scmp.eq.s32.totalorder %s20, 1
    %p260 = por %p258, %p259
    %p262 = scmp.ne.s32.totalorder %s245, %s261
    %p263 = scmp.eq.s32.totalorder %s20, 0
    %p264 = por %p262, %p263
    %p265 = scmp.le.s32.totalorder 1, %s14
    %p266 = scmp.lt.s32.totalorder %s14, 3
    %p267 = pnand %p265, %p266
    %p268 = pneg %p267
    // Predicated region
    $region9: #{transformer_forward.26} parent=5 // pred_check
      _
    $region10: #{transformer_forward.26} parent=5 // pred_check_branch
      %270 = sbr.rel (%p267) target = $region12
    $region11: #{transformer_forward.26} parent=5 // pred_region
      %s271 = ssub.s32 %s14, 1
      // Predicated region
      $region13: #{transformer_forward.26} parent=11 // pred_check
        %p272 = pneg %p166
      $region14: #{transformer_forward.26} parent=11 // pred_check_branch
        %274 = sbr.rel (%p272) target = $region16
      $region15: #{transformer_forward.26} parent=11 // pred_region
        _
      $region16: #{transformer_forward.26} parent=11 // pred_fallthru
        _
      // Predicated region
      $region17: #{transformer_forward.26} parent=11 // pred_check
        %p275 = pneg %p187
      $region18: #{transformer_forward.26} parent=11 // pred_check_branch
        %277 = sbr.rel (%p275) target = $region20
      $region19: #{transformer_forward.26} parent=11 // pred_region
        _
      $region20: #{transformer_forward.26} parent=11 // pred_fallthru
        _
      // Predicated region
      $region21: #{transformer_forward.26} parent=11 // pred_check
        %p278 = pneg %p208
      $region22: #{transformer_forward.26} parent=11 // pred_check_branch
        %280 = sbr.rel (%p278) target = $region24
      $region23: #{transformer_forward.26} parent=11 // pred_region
        _
      $region24: #{transformer_forward.26} parent=11 // pred_fallthru
        _
      // Predicated region
      $region25: #{transformer_forward.26} parent=11 // pred_check
        %p281 = pneg %p229
      $region26: #{transformer_forward.26} parent=11 // pred_check_branch
        %283 = sbr.rel (%p281) target = $region28
      $region27: #{transformer_forward.26} parent=11 // pred_region
        _
      $region28: #{transformer_forward.26} parent=11 // pred_fallthru
        _
    $region12: #{transformer_forward.26} parent=5 // pred_fallthru
      _
    %p284 = scmp.lt.s32.totalorder %s14, 2
    // Predicated region
    $region29: #{transformer_forward.26} parent=5 // pred_check
      %p285 = pneg %p284
    $region30: #{transformer_forward.26} parent=5 // pred_check_branch
      %287 = sbr.rel (%p285) target = $region32
    $region31: #{transformer_forward.26} parent=5 // pred_region
      // Predicated region
      $region33: #{transformer_forward.26} parent=31 // pred_check
        %p288 = pneg %p55
      $region34: #{transformer_forward.26} parent=31 // pred_check_branch
        %290 = sbr.rel (%p288) target = $region36
      $region35: #{transformer_forward.26} parent=31 // pred_region
        %s291 = smul.u32 2, %s22
        %p292 = scmp.lt.s32.totalorder %s21, 1
        %s293 = scalar_select %p292, %s21, 1
        %p294 = scmp.lt.s32.totalorder %s291, 1
        %s295 = scalar_select %p294, %s291, 1
        %s296 = smul.addr %s293, 2
        %s297 = sadd.s32 %s295, %s296
        %s298 = smul.addr %s297, 4
        %s299 = scalar_lea.vmem %s0, %s298
        %s300 = smul.u32 2, %s22
      $region36: #{transformer_forward.26} parent=31 // pred_fallthru
        _
      // Predicated region
      $region37: #{transformer_forward.26} parent=31 // pred_check
        %p301 = pneg %p83
      $region38: #{transformer_forward.26} parent=31 // pred_check_branch
        %303 = sbr.rel (%p301) target = $region40
      $region39: #{transformer_forward.26} parent=31 // pred_region
        %s304 = smul.u32 2, %s22
        %p305 = scmp.lt.s32.totalorder %s21, 1
        %s306 = scalar_select %p305, %s21, 1
        %p307 = scmp.lt.s32.totalorder %s304, 1
        %s308 = scalar_select %p307, %s304, 1
        %s309 = smul.addr %s306, 8
        %s310 = sadd.s32 %s308, %s309
        %s311 = smul.addr %s310, 4
        %s312 = scalar_lea.vmem %s1, %s311
        %s313 = smul.u32 2, %s22
      $region40: #{transformer_forward.26} parent=31 // pred_fallthru
        _
      // Predicated region
      $region41: #{transformer_forward.26} parent=31 // pred_check
        %p314 = pneg %p111
      $region42: #{transformer_forward.26} parent=31 // pred_check_branch
        %316 = sbr.rel (%p314) target = $region44
      $region43: #{transformer_forward.26} parent=31 // pred_region
        %s317 = smul.u32 2, %s23
        %p318 = scmp.lt.s32.totalorder %s21, 1
        %s319 = scalar_select %p318, %s21, 1
        %p320 = scmp.lt.s32.totalorder %s317, 1
        %s321 = scalar_select %p320, %s317, 1
        %s322 = smul.addr %s319, 8
        %s323 = sadd.s32 %s321, %s322
        %s324 = smul.addr %s323, 4
        %s325 = scalar_lea.vmem %s2, %s324
        %s326 = smul.u32 2, %s23
      $region44: #{transformer_forward.26} parent=31 // pred_fallthru
        _
      // Predicated region
      $region45: #{transformer_forward.26} parent=31 // pred_check
        %p327 = pneg %p139
      $region46: #{transformer_forward.26} parent=31 // pred_check_branch
        %329 = sbr.rel (%p327) target = $region48
      $region47: #{transformer_forward.26} parent=31 // pred_region
        %s330 = smul.u32 2, %s23
        %p331 = scmp.lt.s32.totalorder %s21, 1
        %s332 = scalar_select %p331, %s21, 1
        %p333 = scmp.lt.s32.totalorder %s330, 1
        %s334 = scalar_select %p333, %s330, 1
        %s335 = smul.addr %s332, 8
        %s336 = sadd.s32 %s334, %s335
        %s337 = smul.addr %s336, 4
        %s338 = scalar_lea.vmem %s3, %s337
        %s339 = smul.u32 2, %s23
      $region48: #{transformer_forward.26} parent=31 // pred_fallthru
        _
    $region32: #{transformer_forward.26} parent=5 // pred_fallthru
      _
    %p340 = scmp.le.s32.totalorder 1, %s14
    %p341 = scmp.lt.s32.totalorder %s14, 3
    %p342 = pnand %p340, %p341
    %p343 = pneg %p342
    // Predicated region
    $region49: #{transformer_forward.26} parent=5 // pred_check
      _
    $region50: #{transformer_forward.26} parent=5 // pred_check_branch
      %345 = sbr.rel (%p342) target = $region52
    $region51: #{transformer_forward.26} parent=5 // pred_region
      %s346 = ssub.s32 %s14, 1
      %s347 = smul.u32 2, %s25
      %p348 = scmp.lt.s32.totalorder %s24, 1
      %s349 = scalar_select %p348, %s24, 1
      %p350 = scmp.lt.s32.totalorder %s347, 1
      %s351 = scalar_select %p350, %s347, 1
      %s352 = smul.addr %s349, 2
      %s353 = sadd.s32 %s351, %s352
      %s354 = smul.addr %s353, 4
      %s355 = scalar_lea.vmem %s0, %s354
      %p356 = pneg %p61
      %p357 = pneg %p58
      %s358 = smul.u32 2, %s25
      %p359 = scmp.lt.s32.totalorder %s24, 1
      %s360 = scalar_select %p359, %s24, 1
      %p361 = scmp.lt.s32.totalorder %s358, 1
      %s362 = scalar_select %p361, %s358, 1
      %s363 = smul.addr %s360, 8
      %s364 = sadd.s32 %s362, %s363
      %s365 = smul.addr %s364, 4
      %s366 = scalar_lea.vmem %s1, %s365
      %p367 = pneg %p89
      %p368 = pneg %p86
      %s369 = smul.u32 2, %s26
      %p370 = scmp.lt.s32.totalorder %s24, 1
      %s371 = scalar_select %p370, %s24, 1
      %p372 = scmp.lt.s32.totalorder %s369, 1
      %s373 = scalar_select %p372, %s369, 1
      %s374 = smul.addr %s371, 8
      %s375 = sadd.s32 %s373, %s374
      %s376 = smul.addr %s375, 4
      %s377 = scalar_lea.vmem %s2, %s376
      %p378 = pneg %p117
      %p379 = pneg %p114
      %s380 = smul.u32 2, %s26
      %p381 = scmp.lt.s32.totalorder %s24, 1
      %s382 = scalar_select %p381, %s24, 1
      %p383 = scmp.lt.s32.totalorder %s380, 1
      %s384 = scalar_select %p383, %s380, 1
      %s385 = smul.addr %s382, 8
      %s386 = sadd.s32 %s384, %s385
      %s387 = smul.addr %s386, 4
      %s388 = scalar_lea.vmem %s3, %s387
      %p389 = pneg %p145
      %p390 = pneg %p142
      %p391 = pneg %p166
      %p392 = pneg %p163
      %p393 = pneg %p187
      %p394 = pneg %p184
      %p395 = pneg %p208
      %p396 = pneg %p205
      %p397 = pneg %p229
      %p398 = pneg %p226
      %p399 = pneg %p257
      %p400 = pneg %p254
      %s401 = smul.u32 2, %s25
      %p402 = scmp.lt.s32.totalorder %s24, 1
      %s403 = scalar_select %p402, %s24, 1
      %p404 = scmp.lt.s32.totalorder %s401, 1
      %s405 = scalar_select %p404, %s401, 1
      %s406 = smul.addr %s403, 2
      %s407 = sadd.s32 %s405, %s406
      %s408 = smul.addr %s407, 4
      %s409 = scalar_lea.vmem %s8, %s408
      %s410 = smul.u32 2, %s25
      %p411 = scmp.lt.s32.totalorder %s24, 1
      %s412 = scalar_select %p411, %s24, 1
      %p413 = scmp.lt.s32.totalorder %s410, 1
      %s414 = scalar_select %p413, %s410, 1
      %s415 = smul.addr %s412, 2
      %s416 = sadd.s32 %s414, %s415
      %s417 = smul.addr %s416, 4
      %s418 = scalar_lea.vmem %s0, %s417
      %s419 = smul.u32 2, %s25
      %s420 = smul.u32 2, %s25
      %p421 = scmp.lt.s32.totalorder %s24, 1
      %s422 = scalar_select %p421, %s24, 1
      %p423 = scmp.lt.s32.totalorder %s420, 1
      %s424 = scalar_select %p423, %s420, 1
      %s425 = smul.addr %s422, 8
      %s426 = sadd.s32 %s424, %s425
      %s427 = smul.addr %s426, 4
      %s428 = scalar_lea.vmem %s1, %s427
      %s429 = smul.u32 2, %s25
      %s430 = smul.u32 2, %s26
      %p431 = scmp.lt.s32.totalorder %s24, 1
      %s432 = scalar_select %p431, %s24, 1
      %p433 = scmp.lt.s32.totalorder %s430, 1
      %s434 = scalar_select %p433, %s430, 1
      %s435 = smul.addr %s432, 8
      %s436 = sadd.s32 %s434, %s435
      %s437 = smul.addr %s436, 4
      %s438 = scalar_lea.vmem %s2, %s437
      %s439 = smul.u32 2, %s26
      %s440 = smul.u32 2, %s26
      %p441 = scmp.lt.s32.totalorder %s24, 1
      %s442 = scalar_select %p441, %s24, 1
      %p443 = scmp.lt.s32.totalorder %s440, 1
      %s444 = scalar_select %p443, %s440, 1
      %s445 = smul.addr %s442, 8
      %s446 = sadd.s32 %s444, %s445
      %s447 = smul.addr %s446, 4
      %s448 = scalar_lea.vmem %s3, %s447
      %s449 = smul.u32 2, %s26
      %s450 = smul.u32 2, %s25
      %p451 = scmp.lt.s32.totalorder %s24, 1
      %s452 = scalar_select %p451, %s24, 1
      %p453 = scmp.lt.s32.totalorder %s450, 1
      %s454 = scalar_select %p453, %s450, 1
      %s455 = smul.addr %s452, 2
      %s456 = sadd.s32 %s454, %s455
      %s457 = smul.addr %s456, 4
      %s458 = scalar_lea.vmem %s8, %s457
      %s459 = smul.u32 2, %s25
      %p461 = scmp.eq.s32.totalorder %s26, 0
      // Predicated region
      $region53: #{transformer_forward.26} parent=51 // pred_check
        %p462 = pneg %p461
      $region54: #{transformer_forward.26} parent=51 // pred_check_branch
        %464 = sbr.rel (%p462) target = $region56
      $region55: #{transformer_forward.26} parent=51 // pred_region
        %vm465 = vcmask 7168
        %466 = vst.msk [vmem:[#allocation2] sm:$0xff] %vm465, -inf
        %467 = vst.msk [vmem:[#allocation2 + $0x8] sm:$0xff] %vm465, -inf
        %468 = vst.msk [vmem:[#allocation2 + $0x10] sm:$0xff] %vm465, -inf
        %469 = vst.msk [vmem:[#allocation2 + $0x18] sm:$0xff] %vm465, -inf
        %470 = vst.msk [vmem:[#allocation2 + $0x20] sm:$0xff] %vm465, -inf
        %471 = vst.msk [vmem:[#allocation2 + $0x28] sm:$0xff] %vm465, -inf
        %472 = vst.msk [vmem:[#allocation2 + $0x30] sm:$0xff] %vm465, -inf
        %473 = vst.msk [vmem:[#allocation2 + $0x38] sm:$0xff] %vm465, -inf
        %474 = vst.msk [vmem:[#allocation3] sm:$0xff] %vm465, 0.0
        %475 = vst.msk [vmem:[#allocation3 + $0x8] sm:$0xff] %vm465, 0.0
        %476 = vst.msk [vmem:[#allocation3 + $0x10] sm:$0xff] %vm465, 0.0
        %477 = vst.msk [vmem:[#allocation3 + $0x18] sm:$0xff] %vm465, 0.0
        %478 = vst.msk [vmem:[#allocation3 + $0x20] sm:$0xff] %vm465, 0.0
        %479 = vst.msk [vmem:[#allocation3 + $0x28] sm:$0xff] %vm465, 0.0
        %480 = vst.msk [vmem:[#allocation3 + $0x30] sm:$0xff] %vm465, 0.0
        %481 = vst.msk [vmem:[#allocation3 + $0x38] sm:$0xff] %vm465, 0.0
        %vm482 = vcmask 261120
        %483 = vst.msk [vmem:[#allocation4] sm:$0xff] %vm482, 0.0
        %484 = vst.msk [vmem:[#allocation4 + $0x8] sm:$0xff] %vm482, 0.0
        %485 = vst.msk [vmem:[#allocation4 + $0x10] sm:$0xff] %vm482, 0.0
        %486 = vst.msk [vmem:[#allocation4 + $0x18] sm:$0xff] %vm482, 0.0
        %487 = vst.msk [vmem:[#allocation4 + $0x20] sm:$0xff] %vm482, 0.0
        %488 = vst.msk [vmem:[#allocation4 + $0x28] sm:$0xff] %vm482, 0.0
        %489 = vst.msk [vmem:[#allocation4 + $0x30] sm:$0xff] %vm482, 0.0
        %490 = vst.msk [vmem:[#allocation4 + $0x38] sm:$0xff] %vm482, 0.0
      $region56: #{transformer_forward.26} parent=51 // pred_fallthru
        _
      %v491 = vld [vmem:[%s428] sm:$0xf]
      %v492 = vld [vmem:[%s428 + $0x4] sm:$0xf]
      %v493 = vld [vmem:[%s428 + $0x8] sm:$0xf]
      %v494 = vld [vmem:[%s428 + $0xc] sm:$0xf]
      %v495 = vld [vmem:[%s428 + $0x10] sm:$0xf]
      %v496 = vld [vmem:[%s428 + $0x14] sm:$0xf]
      %v497 = vld [vmem:[%s428 + $0x18] sm:$0xf]
      %v498 = vld [vmem:[%s428 + $0x1c] sm:$0xf]
      %v499 = vld [vmem:[%s438] sm:$0xf]
      %v500 = vld [vmem:[%s438 + $0x4] sm:$0xf]
      %v501 = vld [vmem:[%s438 + $0x8] sm:$0xf]
      %v502 = vld [vmem:[%s438 + $0xc] sm:$0xf]
      %v503 = vld [vmem:[%s438 + $0x10] sm:$0xf]
      %v504 = vld [vmem:[%s438 + $0x14] sm:$0xf]
      %v505 = vld [vmem:[%s438 + $0x18] sm:$0xf]
      %v506 = vld [vmem:[%s438 + $0x1c] sm:$0xf]
      %v507 = vld [vmem:[%s448] sm:$0xf]
      %v508 = vld [vmem:[%s448 + $0x4] sm:$0xf]
      %v509 = vld [vmem:[%s448 + $0x8] sm:$0xf]
      %v510 = vld [vmem:[%s448 + $0xc] sm:$0xf]
      %v511 = vld [vmem:[%s448 + $0x10] sm:$0xf]
      %v512 = vld [vmem:[%s448 + $0x14] sm:$0xf]
      %v513 = vld [vmem:[%s448 + $0x18] sm:$0xf]
      %v514 = vld [vmem:[%s448 + $0x1c] sm:$0xf]
      %v517 = vunpack.c.l.b16 %v491
      %v518 = vunpack.c.l.b16 %v492
      %v519 = vpack.c.b16 %v518, %v517
      %v522 = vunpack.c.l.b16 %v499
      %v523 = vunpack.c.l.b16 %v500
      %v524 = vpack.c.b16 %v523, %v522
      %vm525 = vcmask 261120
      %v527 = vsel %vm525, %v519, 0
      %v530 = vsel %vm525, %v524, 0
      %532 = vmatprep.subr.bf16.mxu0 0
      %533 = vmatpush1.bf16.xpose.msra.mxu0 %v530
      %534 = vmatprep.subr.bf16.mxu0 0
      %535 = vmatpush1.bf16.xpose.msra.mxu0 0
      %536 = vmatprep.subr.bf16.mxu0 0
      %537 = vmatpush1.bf16.xpose.msra.mxu0 0
      %538 = vmatprep.subr.bf16.mxu0 0
      %539 = vmatpush1.bf16.xpose.msra.mxu0 0
      %540 = vmatprep.subr.bf16.mxu0 0
      %541 = vmatpush1.bf16.xpose.msra.mxu0 0
      %542 = vmatprep.subr.bf16.mxu0 0
      %543 = vmatpush1.bf16.xpose.msra.mxu0 0
      %544 = vmatprep.subr.bf16.mxu0 0
      %545 = vmatpush1.bf16.xpose.msra.mxu0 0
      %546 = vmatprep.subr.bf16.mxu0 0
      %547 = vmatpush1.bf16.xpose.msra.mxu0 0
      %548 = vmatprep.subr.bf16.mxu0 0
      %549 = vmatpush1.bf16.xpose.msra.mxu0 0
      %550 = vmatprep.subr.bf16.mxu0 0
      %551 = vmatpush1.bf16.xpose.msra.mxu0 0
      %552 = vmatprep.subr.bf16.mxu0 0
      %553 = vmatpush1.bf16.xpose.msra.mxu0 0
      %554 = vmatprep.subr.bf16.mxu0 0
      %555 = vmatpush1.bf16.xpose.msra.mxu0 0
      %556 = vmatprep.subr.bf16.mxu0 0
      %557 = vmatpush1.bf16.xpose.msra.mxu0 0
      %558 = vmatprep.subr.bf16.mxu0 0
      %559 = vmatpush1.bf16.xpose.msra.mxu0 0
      %560 = vmatprep.subr.bf16.mxu0 0
      %561 = vmatpush1.bf16.xpose.msra.mxu0 0
      %562 = vmatprep.subr.bf16.mxu0 0
      %563 = vmatpush1.bf16.xpose.msra.mxu0 0
      %564 = vmatprep.mubr.bf16.mxu0 0
      %565 = vmatmul.mubr.bf16.gmra.mrb[0].mxu0 %v527
      %v566 = vpop.f32.mrb[0].mxu0
      %v567 = vadd.f32 0.0, %v566
      %v568 = vpop.f32.mrb[0].mxu0
      %v569 = vpop.f32.mrb[0].mxu0
      %v570 = vadd.f32 0.0, %v569
      %v571 = vpop.f32.mrb[0].mxu0
      %572 = vdwg.mxu0
      %v575 = vunpack.c.l.b16 %v493
      %v576 = vunpack.c.l.b16 %v494
      %v577 = vpack.c.b16 %v576, %v575
      %v580 = vunpack.c.l.b16 %v501
      %v581 = vunpack.c.l.b16 %v502
      %v582 = vpack.c.b16 %v581, %v580
      %v584 = vsel %vm525, %v577, 0
      %v587 = vsel %vm525, %v582, 0
      %589 = vmatprep.subr.bf16.mxu0 0
      %590 = vmatpush1.bf16.xpose.msra.mxu0 %v587
      %591 = vmatprep.subr.bf16.mxu0 0
      %592 = vmatpush1.bf16.xpose.msra.mxu0 0
      %593 = vmatprep.subr.bf16.mxu0 0
      %594 = vmatpush1.bf16.xpose.msra.mxu0 0
      %595 = vmatprep.subr.bf16.mxu0 0
      %596 = vmatpush1.bf16.xpose.msra.mxu0 0
      %597 = vmatprep.subr.bf16.mxu0 0
      %598 = vmatpush1.bf16.xpose.msra.mxu0 0
      %599 = vmatprep.subr.bf16.mxu0 0
      %600 = vmatpush1.bf16.xpose.msra.mxu0 0
      %601 = vmatprep.subr.bf16.mxu0 0
      %602 = vmatpush1.bf16.xpose.msra.mxu0 0
      %603 = vmatprep.subr.bf16.mxu0 0
      %604 = vmatpush1.bf16.xpose.msra.mxu0 0
      %605 = vmatprep.subr.bf16.mxu0 0
      %606 = vmatpush1.bf16.xpose.msra.mxu0 0
      %607 = vmatprep.subr.bf16.mxu0 0
      %608 = vmatpush1.bf16.xpose.msra.mxu0 0
      %609 = vmatprep.subr.bf16.mxu0 0
      %610 = vmatpush1.bf16.xpose.msra.mxu0 0
      %611 = vmatprep.subr.bf16.mxu0 0
      %612 = vmatpush1.bf16.xpose.msra.mxu0 0
      %613 = vmatprep.subr.bf16.mxu0 0
      %614 = vmatpush1.bf16.xpose.msra.mxu0 0
      %615 = vmatprep.subr.bf16.mxu0 0
      %616 = vmatpush1.bf16.xpose.msra.mxu0 0
      %617 = vmatprep.subr.bf16.mxu0 0
      %618 = vmatpush1.bf16.xpose.msra.mxu0 0
      %619 = vmatprep.subr.bf16.mxu0 0
      %620 = vmatpush1.bf16.xpose.msra.mxu0 0
      %621 = vmatprep.mubr.bf16.mxu0 0
      %622 = vmatmul.mubr.bf16.gmra.mrb[0].mxu0 %v584
      %v623 = vpop.f32.mrb[0].mxu0
      %v624 = vadd.f32 0.0, %v623
      %v625 = vpop.f32.mrb[0].mxu0
      %v626 = vpop.f32.mrb[0].mxu0
      %v627 = vadd.f32 0.0, %v626
      %v628 = vpop.f32.mrb[0].mxu0
      %629 = vdwg.mxu0
      %v632 = vunpack.c.l.b16 %v495
      %v633 = vunpack.c.l.b16 %v496
      %v634 = vpack.c.b16 %v633, %v632
      %v637 = vunpack.c.l.b16 %v503
      %v638 = vunpack.c.l.b16 %v504
      %v639 = vpack.c.b16 %v638, %v637
      %v641 = vsel %vm525, %v634, 0
      %v644 = vsel %vm525, %v639, 0
      %646 = vmatprep.subr.bf16.mxu0 0
      %647 = vmatpush1.bf16.xpose.msra.mxu0 %v644
      %648 = vmatprep.subr.bf16.mxu0 0
      %649 = vmatpush1.bf16.xpose.msra.mxu0 0
      %650 = vmatprep.subr.bf16.mxu0 0
      %651 = vmatpush1.bf16.xpose.msra.mxu0 0
      %652 = vmatprep.subr.bf16.mxu0 0
      %653 = vmatpush1.bf16.xpose.msra.mxu0 0
      %654 = vmatprep.subr.bf16.mxu0 0
      %655 = vmatpush1.bf16.xpose.msra.mxu0 0
      %656 = vmatprep.subr.bf16.mxu0 0
      %657 = vmatpush1.bf16.xpose.msra.mxu0 0
      %658 = vmatprep.subr.bf16.mxu0 0
      %659 = vmatpush1.bf16.xpose.msra.mxu0 0
      %660 = vmatprep.subr.bf16.mxu0 0
      %661 = vmatpush1.bf16.xpose.msra.mxu0 0
      %662 = vmatprep.subr.bf16.mxu0 0
      %663 = vmatpush1.bf16.xpose.msra.mxu0 0
      %664 = vmatprep.subr.bf16.mxu0 0
      %665 = vmatpush1.bf16.xpose.msra.mxu0 0
      %666 = vmatprep.subr.bf16.mxu0 0
      %667 = vmatpush1.bf16.xpose.msra.mxu0 0
      %668 = vmatprep.subr.bf16.mxu0 0
      %669 = vmatpush1.bf16.xpose.msra.mxu0 0
      %670 = vmatprep.subr.bf16.mxu0 0
      %671 = vmatpush1.bf16.xpose.msra.mxu0 0
      %672 = vmatprep.subr.bf16.mxu0 0
      %673 = vmatpush1.bf16.xpose.msra.mxu0 0
      %674 = vmatprep.subr.bf16.mxu0 0
      %675 = vmatpush1.bf16.xpose.msra.mxu0 0
      %676 = vmatprep.subr.bf16.mxu0 0
      %677 = vmatpush1.bf16.xpose.msra.mxu0 0
      %678 = vmatprep.mubr.bf16.mxu0 0
      %679 = vmatmul.mubr.bf16.gmra.mrb[0].mxu0 %v641
      %v680 = vpop.f32.mrb[0].mxu0
      %v681 = vadd.f32 0.0, %v680
      %v682 = vpop.f32.mrb[0].mxu0
      %v683 = vpop.f32.mrb[0].mxu0
      %v684 = vadd.f32 0.0, %v683
      %v685 = vpop.f32.mrb[0].mxu0
      %686 = vdwg.mxu0
      %v689 = vunpack.c.l.b16 %v497
      %v690 = vunpack.c.l.b16 %v498
      %v691 = vpack.c.b16 %v690, %v689
      %v694 = vunpack.c.l.b16 %v505
      %v695 = vunpack.c.l.b16 %v506
      %v696 = vpack.c.b16 %v695, %v694
      %v698 = vsel %vm525, %v691, 0
      %v701 = vsel %vm525, %v696, 0
      %703 = vmatprep.subr.bf16.mxu0 0
      %704 = vmatpush1.bf16.xpose.msra.mxu0 %v701
      %705 = vmatprep.subr.bf16.mxu0 0
      %706 = vmatpush1.bf16.xpose.msra.mxu0 0
      %707 = vmatprep.subr.bf16.mxu0 0
      %708 = vmatpush1.bf16.xpose.msra.mxu0 0
      %709 = vmatprep.subr.bf16.mxu0 0
      %710 = vmatpush1.bf16.xpose.msra.mxu0 0
      %711 = vmatprep.subr.bf16.mxu0 0
      %712 = vmatpush1.bf16.xpose.msra.mxu0 0
      %713 = vmatprep.subr.bf16.mxu0 0
      %714 = vmatpush1.bf16.xpose.msra.mxu0 0
      %715 = vmatprep.subr.bf16.mxu0 0
      %716 = vmatpush1.bf16.xpose.msra.mxu0 0
      %717 = vmatprep.subr.bf16.mxu0 0
      %718 = vmatpush1.bf16.xpose.msra.mxu0 0
      %719 = vmatprep.subr.bf16.mxu0 0
      %720 = vmatpush1.bf16.xpose.msra.mxu0 0
      %721 = vmatprep.subr.bf16.mxu0 0
      %722 = vmatpush1.bf16.xpose.msra.mxu0 0
      %723 = vmatprep.subr.bf16.mxu0 0
      %724 = vmatpush1.bf16.xpose.msra.mxu0 0
      %725 = vmatprep.subr.bf16.mxu0 0
      %726 = vmatpush1.bf16.xpose.msra.mxu0 0
      %727 = vmatprep.subr.bf16.mxu0 0
      %728 = vmatpush1.bf16.xpose.msra.mxu0 0
      %729 = vmatprep.subr.bf16.mxu0 0
      %730 = vmatpush1.bf16.xpose.msra.mxu0 0
      %731 = vmatprep.subr.bf16.mxu0 0
      %732 = vmatpush1.bf16.xpose.msra.mxu0 0
      %733 = vmatprep.subr.bf16.mxu0 0
      %734 = vmatpush1.bf16.xpose.msra.mxu0 0
      %735 = vmatprep.mubr.bf16.mxu0 0
      %736 = vmatmul.mubr.bf16.gmra.mrb[0].mxu0 %v698
      %v737 = vpop.f32.mrb[0].mxu0
      %v738 = vadd.f32 0.0, %v737
      %v739 = vpop.f32.mrb[0].mxu0
      %v740 = vpop.f32.mrb[0].mxu0
      %v741 = vadd.f32 0.0, %v740
      %v742 = vpop.f32.mrb[0].mxu0
      %743 = vdwg.mxu0
      %s744 = smul.u32 %s25, 16
      %s745 = smul.u32 %s26, 16
      %v746 = vlaneseq
      %v747 = vshrl.u32 %v746, 7
      %v748 = vadd.s32 %v747, 8
      %v749 = vstv %s744
      %v750 = vadd.s32 %v747, %v749
      %v751 = vadd.s32 %v748, %v749
      %v752 = vlaneseq
      %v753 = vand.u32 %v752, 127
      %v754 = vstv %s745
      %v755 = vadd.s32 %v753, %v754
      %vm756 = vcmp.gt.s32.totalorder %v755, %v750
      %vm757 = vcmp.gt.s32.totalorder %v755, %v751
      %v758 = vsel %vm756, 1, 0
      %v759 = vsel %vm757, 1, 0
      %vm760 = vcmp.eq.s32.totalorder %v758, 1
      %vm761 = vcmp.eq.s32.totalorder %v759, 1
      %v762 = vsel %vm760, -inf, %v567
      %v763 = vsel %vm761, -inf, %v570
      %v764 = vsel %vm760, -inf, %v624
      %v765 = vsel %vm761, -inf, %v627
      %v766 = vsel %vm760, -inf, %v681
      %v767 = vsel %vm761, -inf, %v684
      %v768 = vsel %vm760, -inf, %v738
      %v769 = vsel %vm761, -inf, %v741
      %v770 = vld [vmem:[#allocation2] sm:$0xff]
      %v771 = vld [vmem:[#allocation2 + $0x8] sm:$0xff]
      %v772 = vld [vmem:[#allocation2 + $0x10] sm:$0xff]
      %v773 = vld [vmem:[#allocation2 + $0x18] sm:$0xff]
      %v774 = vld [vmem:[#allocation2 + $0x20] sm:$0xff]
      %v775 = vld [vmem:[#allocation2 + $0x28] sm:$0xff]
      %v776 = vld [vmem:[#allocation2 + $0x30] sm:$0xff]
      %v777 = vld [vmem:[#allocation2 + $0x38] sm:$0xff]
      %vm778 = vcmask 130048
      %v779 = vsel %vm778, %v762, -inf
      %780 = vmax.xlane.f32.xlu0 %v779
      %v781 = vpop.xlane.xlu0 %780
      %v782 = vsel %vm778, %v763, -inf
      %783 = vmax.xlane.f32.xlu0 %v782
      %v784 = vpop.xlane.xlu0 %783
      %v785 = vsel %vm778, %v764, -inf
      %786 = vmax.xlane.f32.xlu0 %v785
      %v787 = vpop.xlane.xlu0 %786
      %v788 = vsel %vm778, %v765, -inf
      %789 = vmax.xlane.f32.xlu0 %v788
      %v790 = vpop.xlane.xlu0 %789
      %v791 = vsel %vm778, %v766, -inf
      %792 = vmax.xlane.f32.xlu0 %v791
      %v793 = vpop.xlane.xlu0 %792
      %v794 = vsel %vm778, %v767, -inf
      %795 = vmax.xlane.f32.xlu0 %v794
      %v796 = vpop.xlane.xlu0 %795
      %v797 = vsel %vm778, %v768, -inf
      %798 = vmax.xlane.f32.xlu0 %v797
      %v799 = vpop.xlane.xlu0 %798
      %v800 = vsel %vm778, %v769, -inf
      %801 = vmax.xlane.f32.xlu0 %v800
      %v802 = vpop.xlane.xlu0 %801
      %v803 = vmax.f32 %v770, %v781
      %v804 = vmax.f32 %v771, %v784
      %v805 = vmax.f32 %v772, %v787
      %v806 = vmax.f32 %v773, %v790
      %v807 = vmax.f32 %v774, %v793
      %v808 = vmax.f32 %v775, %v796
      %v809 = vmax.f32 %v776, %v799
      %v810 = vmax.f32 %v777, %v802
      %v811 = vsub.f32 %v770, %v803
      %v812 = vsub.f32 %v771, %v804
      %v813 = vsub.f32 %v772, %v805
      %v814 = vsub.f32 %v773, %v806
      %v815 = vsub.f32 %v774, %v807
      %v816 = vsub.f32 %v775, %v808
      %v817 = vsub.f32 %v776, %v809
      %v818 = vsub.f32 %v777, %v810
      %v819 = vmul.f32 %v811, 1.442695
      %v820 = vpow.pop %v819
      %v821 = vmul.f32 %v812, 1.442695
      %v822 = vpow.pop %v821
      %v823 = vmul.f32 %v813, 1.442695
      %v824 = vpow.pop %v823
      %v825 = vmul.f32 %v814, 1.442695
      %v826 = vpow.pop %v825
      %v827 = vmul.f32 %v815, 1.442695
      %v828 = vpow.pop %v827
      %v829 = vmul.f32 %v816, 1.442695
      %v830 = vpow.pop %v829
      %v831 = vmul.f32 %v817, 1.442695
      %v832 = vpow.pop %v831
      %v833 = vmul.f32 %v818, 1.442695
      %v834 = vpow.pop %v833
      %836 = vset.pattern.permute.xlu0 0
      %837 = vperm.xlu0 %836, %v803
      %v838 = vpop.permute.xlu0 %837
      %841 = vset.pattern.permute.xlu0 0
      %842 = vperm.xlu0 %841, %v804
      %v843 = vpop.permute.xlu0 %842
      %846 = vset.pattern.permute.xlu0 0
      %847 = vperm.xlu0 %846, %v805
      %v848 = vpop.permute.xlu0 %847
      %851 = vset.pattern.permute.xlu0 0
      %852 = vperm.xlu0 %851, %v806
      %v853 = vpop.permute.xlu0 %852
      %856 = vset.pattern.permute.xlu0 0
      %857 = vperm.xlu0 %856, %v807
      %v858 = vpop.permute.xlu0 %857
      %861 = vset.pattern.permute.xlu0 0
      %862 = vperm.xlu0 %861, %v808
      %v863 = vpop.permute.xlu0 %862
      %866 = vset.pattern.permute.xlu0 0
      %867 = vperm.xlu0 %866, %v809
      %v868 = vpop.permute.xlu0 %867
      %871 = vset.pattern.permute.xlu0 0
      %872 = vperm.xlu0 %871, %v810
      %v873 = vpop.permute.xlu0 %872
      %v875 = vsub.f32 %v762, %v838
      %v876 = vsub.f32 %v763, %v843
      %v877 = vsub.f32 %v764, %v848
      %v878 = vsub.f32 %v765, %v853
      %v879 = vsub.f32 %v766, %v858
      %v880 = vsub.f32 %v767, %v863
      %v881 = vsub.f32 %v768, %v868
      %v882 = vsub.f32 %v769, %v873
      %v883 = vmul.f32 %v875, 1.442695
      %v884 = vpow.pop %v883
      %v885 = vmul.f32 %v876, 1.442695
      %v886 = vpow.pop %v885
      %v887 = vmul.f32 %v877, 1.442695
      %v888 = vpow.pop %v887
      %v889 = vmul.f32 %v878, 1.442695
      %v890 = vpow.pop %v889
      %v891 = vmul.f32 %v879, 1.442695
      %v892 = vpow.pop %v891
      %v893 = vmul.f32 %v880, 1.442695
      %v894 = vpow.pop %v893
      %v895 = vmul.f32 %v881, 1.442695
      %v896 = vpow.pop %v895
      %v897 = vmul.f32 %v882, 1.442695
      %v898 = vpow.pop %v897
      %v899 = vld [vmem:[#allocation3] sm:$0xff]
      %v900 = vld [vmem:[#allocation3 + $0x8] sm:$0xff]
      %v901 = vld [vmem:[#allocation3 + $0x10] sm:$0xff]
      %v902 = vld [vmem:[#allocation3 + $0x18] sm:$0xff]
      %v903 = vld [vmem:[#allocation3 + $0x20] sm:$0xff]
      %v904 = vld [vmem:[#allocation3 + $0x28] sm:$0xff]
      %v905 = vld [vmem:[#allocation3 + $0x30] sm:$0xff]
      %v906 = vld [vmem:[#allocation3 + $0x38] sm:$0xff]
      %v907 = vmul.f32 %v820, %v899
      %v908 = vmul.f32 %v822, %v900
      %v909 = vmul.f32 %v824, %v901
      %v910 = vmul.f32 %v826, %v902
      %v911 = vmul.f32 %v828, %v903
      %v912 = vmul.f32 %v830, %v904
      %v913 = vmul.f32 %v832, %v905
      %v914 = vmul.f32 %v834, %v906
      %v915 = vsel %vm778, %v884, 0.0
      %916 = vadd.xlane.f32.xlu0 %v915
      %v917 = vpop.xlane.xlu0 %916
      %v918 = vsel %vm778, %v886, 0.0
      %919 = vadd.xlane.f32.xlu0 %v918
      %v920 = vpop.xlane.xlu0 %919
      %v921 = vsel %vm778, %v888, 0.0
      %922 = vadd.xlane.f32.xlu0 %v921
      %v923 = vpop.xlane.xlu0 %922
      %v924 = vsel %vm778, %v890, 0.0
      %925 = vadd.xlane.f32.xlu0 %v924
      %v926 = vpop.xlane.xlu0 %925
      %v927 = vsel %vm778, %v892, 0.0
      %928 = vadd.xlane.f32.xlu0 %v927
      %v929 = vpop.xlane.xlu0 %928
      %v930 = vsel %vm778, %v894, 0.0
      %931 = vadd.xlane.f32.xlu0 %v930
      %v932 = vpop.xlane.xlu0 %931
      %v933 = vsel %vm778, %v896, 0.0
      %934 = vadd.xlane.f32.xlu0 %v933
      %v935 = vpop.xlane.xlu0 %934
      %v936 = vsel %vm778, %v898, 0.0
      %937 = vadd.xlane.f32.xlu0 %v936
      %v938 = vpop.xlane.xlu0 %937
      %v939 = vadd.f32 %v907, %v917
      %v940 = vadd.f32 %v908, %v920
      %v941 = vadd.f32 %v909, %v923
      %v942 = vadd.f32 %v910, %v926
      %v943 = vadd.f32 %v911, %v929
      %v944 = vadd.f32 %v912, %v932
      %v945 = vadd.f32 %v913, %v935
      %v946 = vadd.f32 %v914, %v938
      %vm947 = vcmask 7168
      %948 = vst.msk [vmem:[#allocation3] sm:$0xff] %vm947, %v939
      %949 = vst.msk [vmem:[#allocation3 + $0x8] sm:$0xff] %vm947, %v940
      %950 = vst.msk [vmem:[#allocation3 + $0x10] sm:$0xff] %vm947, %v941
      %951 = vst.msk [vmem:[#allocation3 + $0x18] sm:$0xff] %vm947, %v942
      %952 = vst.msk [vmem:[#allocation3 + $0x20] sm:$0xff] %vm947, %v943
      %953 = vst.msk [vmem:[#allocation3 + $0x28] sm:$0xff] %vm947, %v944
      %954 = vst.msk [vmem:[#allocation3 + $0x30] sm:$0xff] %vm947, %v945
      %955 = vst.msk [vmem:[#allocation3 + $0x38] sm:$0xff] %vm947, %v946
      %v956 = vld [vmem:[#allocation4] sm:$0xff]
      %v957 = vld [vmem:[#allocation4 + $0x8] sm:$0xff]
      %v958 = vld [vmem:[#allocation4 + $0x10] sm:$0xff]
      %v959 = vld [vmem:[#allocation4 + $0x18] sm:$0xff]
      %v960 = vld [vmem:[#allocation4 + $0x20] sm:$0xff]
      %v961 = vld [vmem:[#allocation4 + $0x28] sm:$0xff]
      %v962 = vld [vmem:[#allocation4 + $0x30] sm:$0xff]
      %v963 = vld [vmem:[#allocation4 + $0x38] sm:$0xff]
      %965 = vset.pattern.permute.xlu0 0
      %966 = vperm.xlu0 %965, %v820
      %v967 = vpop.permute.xlu0 %966
      %970 = vset.pattern.permute.xlu0 0
      %971 = vperm.xlu0 %970, %v822
      %v972 = vpop.permute.xlu0 %971
      %975 = vset.pattern.permute.xlu0 0
      %976 = vperm.xlu0 %975, %v824
      %v977 = vpop.permute.xlu0 %976
      %980 = vset.pattern.permute.xlu0 0
      %981 = vperm.xlu0 %980, %v826
      %v982 = vpop.permute.xlu0 %981
      %985 = vset.pattern.permute.xlu0 0
      %986 = vperm.xlu0 %985, %v828
      %v987 = vpop.permute.xlu0 %986
      %990 = vset.pattern.permute.xlu0 0
      %991 = vperm.xlu0 %990, %v830
      %v992 = vpop.permute.xlu0 %991
      %995 = vset.pattern.permute.xlu0 0
      %996 = vperm.xlu0 %995, %v832
      %v997 = vpop.permute.xlu0 %996
      %1000 = vset.pattern.permute.xlu0 0
      %1001 = vperm.xlu0 %1000, %v834
      %v1002 = vpop.permute.xlu0 %1001
      %v1004 = vmul.f32 %v967, %v956
      %v1005 = vmul.f32 %v972, %v957
      %v1006 = vmul.f32 %v977, %v958
      %v1007 = vmul.f32 %v982, %v959
      %v1008 = vmul.f32 %v987, %v960
      %v1009 = vmul.f32 %v992, %v961
      %v1010 = vmul.f32 %v997, %v962
      %v1011 = vmul.f32 %v1002, %v963
      %v1012 = vpack.c.bf16 %v886, %v884
      %v1013 = vpack.c.bf16 %v890, %v888
      %v1014 = vpack.c.bf16 %v894, %v892
      %v1015 = vpack.c.bf16 %v898, %v896
      %v1018 = vunpack.c.l.b16 %v507
      %v1019 = vunpack.c.l.b16 %v508
      %v1020 = vpack.c.b16 %v1019, %v1018
      %v1023 = vsel %vm778, %v1012, 0
      %1025 = vmatprep.subr.bf16.mxu0 0
      %1026 = vmatpush1.bf16.msra.mxu0 %v1020
      %1027 = vmatprep.subr.bf16.mxu0 0
      %1028 = vmatpush1.bf16.msra.mxu0 0
      %1029 = vmatprep.subr.bf16.mxu0 0
      %1030 = vmatpush1.bf16.msra.mxu0 0
      %1031 = vmatprep.subr.bf16.mxu0 0
      %1032 = vmatpush1.bf16.msra.mxu0 0
      %1033 = vmatprep.subr.bf16.mxu0 0
      %1034 = vmatpush1.bf16.msra.mxu0 0
      %1035 = vmatprep.subr.bf16.mxu0 0
      %1036 = vmatpush1.bf16.msra.mxu0 0
      %1037 = vmatprep.subr.bf16.mxu0 0
      %1038 = vmatpush1.bf16.msra.mxu0 0
      %1039 = vmatprep.subr.bf16.mxu0 0
      %1040 = vmatpush1.bf16.msra.mxu0 0
      %1041 = vmatprep.subr.bf16.mxu0 0
      %1042 = vmatpush1.bf16.msra.mxu0 0
      %1043 = vmatprep.subr.bf16.mxu0 0
      %1044 = vmatpush1.bf16.msra.mxu0 0
      %1045 = vmatprep.subr.bf16.mxu0 0
      %1046 = vmatpush1.bf16.msra.mxu0 0
      %1047 = vmatprep.subr.bf16.mxu0 0
      %1048 = vmatpush1.bf16.msra.mxu0 0
      %1049 = vmatprep.subr.bf16.mxu0 0
      %1050 = vmatpush1.bf16.msra.mxu0 0
      %1051 = vmatprep.subr.bf16.mxu0 0
      %1052 = vmatpush1.bf16.msra.mxu0 0
      %1053 = vmatprep.subr.bf16.mxu0 0
      %1054 = vmatpush1.bf16.msra.mxu0 0
      %1055 = vmatprep.subr.bf16.mxu0 0
      %1056 = vmatpush1.bf16.msra.mxu0 0
      %1057 = vmatprep.mubr.bf16.mxu0 0
      %1058 = vmatmul.mubr.bf16.gmra.mrb[0].mxu0 %v1023
      %v1059 = vpop.f32.mrb[0].mxu0
      %v1060 = vadd.f32 0.0, %v1059
      %v1061 = vpop.f32.mrb[0].mxu0
      %v1062 = vpop.f32.mrb[0].mxu0
      %v1063 = vadd.f32 0.0, %v1062
      %v1064 = vpop.f32.mrb[0].mxu0
      %1065 = vdwg.mxu0
      %v1068 = vunpack.c.l.b16 %v509
      %v1069 = vunpack.c.l.b16 %v510
      %v1070 = vpack.c.b16 %v1069, %v1068
      %v1073 = vsel %vm778, %v1013, 0
      %1075 = vmatprep.subr.bf16.mxu0 0
      %1076 = vmatpush1.bf16.msra.mxu0 %v1070
      %1077 = vmatprep.subr.bf16.mxu0 0
      %1078 = vmatpush1.bf16.msra.mxu0 0
      %1079 = vmatprep.subr.bf16.mxu0 0
      %1080 = vmatpush1.bf16.msra.mxu0 0
      %1081 = vmatprep.subr.bf16.mxu0 0
      %1082 = vmatpush1.bf16.msra.mxu0 0
      %1083 = vmatprep.subr.bf16.mxu0 0
      %1084 = vmatpush1.bf16.msra.mxu0 0
      %1085 = vmatprep.subr.bf16.mxu0 0
      %1086 = vmatpush1.bf16.msra.mxu0 0
      %1087 = vmatprep.subr.bf16.mxu0 0
      %1088 = vmatpush1.bf16.msra.mxu0 0
      %1089 = vmatprep.subr.bf16.mxu0 0
      %1090 = vmatpush1.bf16.msra.mxu0 0
      %1091 = vmatprep.subr.bf16.mxu0 0
      %1092 = vmatpush1.bf16.msra.mxu0 0
      %1093 = vmatprep.subr.bf16.mxu0 0
      %1094 = vmatpush1.bf16.msra.mxu0 0
      %1095 = vmatprep.subr.bf16.mxu0 0
      %1096 = vmatpush1.bf16.msra.mxu0 0
      %1097 = vmatprep.subr.bf16.mxu0 0
      %1098 = vmatpush1.bf16.msra.mxu0 0
      %1099 = vmatprep.subr.bf16.mxu0 0
      %1100 = vmatpush1.bf16.msra.mxu0 0
      %1101 = vmatprep.subr.bf16.mxu0 0
      %1102 = vmatpush1.bf16.msra.mxu0 0
      %1103 = vmatprep.subr.bf16.mxu0 0
      %1104 = vmatpush1.bf16.msra.mxu0 0
      %1105 = vmatprep.subr.bf16.mxu0 0
      %1106 = vmatpush1.bf16.msra.mxu0 0
      %1107 = vmatprep.mubr.bf16.mxu0 0
      %1108 = vmatmul.mubr.bf16.gmra.mrb[0].mxu0 %v1073
      %v1109 = vpop.f32.mrb[0].mxu0
      %v1110 = vadd.f32 0.0, %v1109
      %v1111 = vpop.f32.mrb[0].mxu0
      %v1112 = vpop.f32.mrb[0].mxu0
      %v1113 = vadd.f32 0.0, %v1112
      %v1114 = vpop.f32.mrb[0].mxu0
      %1115 = vdwg.mxu0
      %v1118 = vunpack.c.l.b16 %v511
      %v1119 = vunpack.c.l.b16 %v512
      %v1120 = vpack.c.b16 %v1119, %v1118
      %v1123 = vsel %vm778, %v1014, 0
      %1125 = vmatprep.subr.bf16.mxu0 0
      %1126 = vmatpush1.bf16.msra.mxu0 %v1120
      %1127 = vmatprep.subr.bf16.mxu0 0
      %1128 = vmatpush1.bf16.msra.mxu0 0
      %1129 = vmatprep.subr.bf16.mxu0 0
      %1130 = vmatpush1.bf16.msra.mxu0 0
      %1131 = vmatprep.subr.bf16.mxu0 0
      %1132 = vmatpush1.bf16.msra.mxu0 0
      %1133 = vmatprep.subr.bf16.mxu0 0
      %1134 = vmatpush1.bf16.msra.mxu0 0
      %1135 = vmatprep.subr.bf16.mxu0 0
      %1136 = vmatpush1.bf16.msra.mxu0 0
      %1137 = vmatprep.subr.bf16.mxu0 0
      %1138 = vmatpush1.bf16.msra.mxu0 0
      %1139 = vmatprep.subr.bf16.mxu0 0
      %1140 = vmatpush1.bf16.msra.mxu0 0
      %1141 = vmatprep.subr.bf16.mxu0 0
      %1142 = vmatpush1.bf16.msra.mxu0 0
      %1143 = vmatprep.subr.bf16.mxu0 0
      %1144 = vmatpush1.bf16.msra.mxu0 0
      %1145 = vmatprep.subr.bf16.mxu0 0
      %1146 = vmatpush1.bf16.msra.mxu0 0
      %1147 = vmatprep.subr.bf16.mxu0 0
      %1148 = vmatpush1.bf16.msra.mxu0 0
      %1149 = vmatprep.subr.bf16.mxu0 0
      %1150 = vmatpush1.bf16.msra.mxu0 0
      %1151 = vmatprep.subr.bf16.mxu0 0
      %1152 = vmatpush1.bf16.msra.mxu0 0
      %1153 = vmatprep.subr.bf16.mxu0 0
      %1154 = vmatpush1.bf16.msra.mxu0 0
      %1155 = vmatprep.subr.bf16.mxu0 0
      %1156 = vmatpush1.bf16.msra.mxu0 0
      %1157 = vmatprep.mubr.bf16.mxu0 0
      %1158 = vmatmul.mubr.bf16.gmra.mrb[0].mxu0 %v1123
      %v1159 = vpop.f32.mrb[0].mxu0
      %v1160 = vadd.f32 0.0, %v1159
      %v1161 = vpop.f32.mrb[0].mxu0
      %v1162 = vpop.f32.mrb[0].mxu0
      %v1163 = vadd.f32 0.0, %v1162
      %v1164 = vpop.f32.mrb[0].mxu0
      %1165 = vdwg.mxu0
      %v1168 = vunpack.c.l.b16 %v513
      %v1169 = vunpack.c.l.b16 %v514
      %v1170 = vpack.c.b16 %v1169, %v1168
      %v1173 = vsel %vm778, %v1015, 0
      %1175 = vmatprep.subr.bf16.mxu0 0
      %1176 = vmatpush1.bf16.msra.mxu0 %v1170
      %1177 = vmatprep.subr.bf16.mxu0 0
      %1178 = vmatpush1.bf16.msra.mxu0 0
      %1179 = vmatprep.subr.bf16.mxu0 0
      %1180 = vmatpush1.bf16.msra.mxu0 0
      %1181 = vmatprep.subr.bf16.mxu0 0
      %1182 = vmatpush1.bf16.msra.mxu0 0
      %1183 = vmatprep.subr.bf16.mxu0 0
      %1184 = vmatpush1.bf16.msra.mxu0 0
      %1185 = vmatprep.subr.bf16.mxu0 0
      %1186 = vmatpush1.bf16.msra.mxu0 0
      %1187 = vmatprep.subr.bf16.mxu0 0
      %1188 = vmatpush1.bf16.msra.mxu0 0
      %1189 = vmatprep.subr.bf16.mxu0 0
      %1190 = vmatpush1.bf16.msra.mxu0 0
      %1191 = vmatprep.subr.bf16.mxu0 0
      %1192 = vmatpush1.bf16.msra.mxu0 0
      %1193 = vmatprep.subr.bf16.mxu0 0
      %1194 = vmatpush1.bf16.msra.mxu0 0
      %1195 = vmatprep.subr.bf16.mxu0 0
      %1196 = vmatpush1.bf16.msra.mxu0 0
      %1197 = vmatprep.subr.bf16.mxu0 0
      %1198 = vmatpush1.bf16.msra.mxu0 0
      %1199 = vmatprep.subr.bf16.mxu0 0
      %1200 = vmatpush1.bf16.msra.mxu0 0
      %1201 = vmatprep.subr.bf16.mxu0 0
      %1202 = vmatpush1.bf16.msra.mxu0 0
      %1203 = vmatprep.subr.bf16.mxu0 0
      %1204 = vmatpush1.bf16.msra.mxu0 0
      %1205 = vmatprep.subr.bf16.mxu0 0
      %1206 = vmatpush1.bf16.msra.mxu0 0
      %1207 = vmatprep.mubr.bf16.mxu0 0
      %1208 = vmatmul.mubr.bf16.gmra.mrb[0].mxu0 %v1173
      %v1209 = vpop.f32.mrb[0].mxu0
      %v1210 = vadd.f32 0.0, %v1209
      %v1211 = vpop.f32.mrb[0].mxu0
      %v1212 = vpop.f32.mrb[0].mxu0
      %v1213 = vadd.f32 0.0, %v1212
      %v1214 = vpop.f32.mrb[0].mxu0
      %1215 = vdwg.mxu0
      %v1216 = vadd.f32 %v1004, %v1060
      %v1217 = vadd.f32 %v1005, %v1063
      %v1218 = vadd.f32 %v1006, %v1110
      %v1219 = vadd.f32 %v1007, %v1113
      %v1220 = vadd.f32 %v1008, %v1160
      %v1221 = vadd.f32 %v1009, %v1163
      %v1222 = vadd.f32 %v1010, %v1210
      %v1223 = vadd.f32 %v1011, %v1213
      %1224 = vst.msk [vmem:[#allocation4] sm:$0xff] %vm525, %v1216
      %1225 = vst.msk [vmem:[#allocation4 + $0x8] sm:$0xff] %vm525, %v1217
      %1226 = vst.msk [vmem:[#allocation4 + $0x10] sm:$0xff] %vm525, %v1218
      %1227 = vst.msk [vmem:[#allocation4 + $0x18] sm:$0xff] %vm525, %v1219
      %1228 = vst.msk [vmem:[#allocation4 + $0x20] sm:$0xff] %vm525, %v1220
      %1229 = vst.msk [vmem:[#allocation4 + $0x28] sm:$0xff] %vm525, %v1221
      %1230 = vst.msk [vmem:[#allocation4 + $0x30] sm:$0xff] %vm525, %v1222
      %1231 = vst.msk [vmem:[#allocation4 + $0x38] sm:$0xff] %vm525, %v1223
      %1232 = vst.msk [vmem:[#allocation2] sm:$0xff] %vm947, %v803
      %1233 = vst.msk [vmem:[#allocation2 + $0x8] sm:$0xff] %vm947, %v804
      %1234 = vst.msk [vmem:[#allocation2 + $0x10] sm:$0xff] %vm947, %v805
      %1235 = vst.msk [vmem:[#allocation2 + $0x18] sm:$0xff] %vm947, %v806
      %1236 = vst.msk [vmem:[#allocation2 + $0x20] sm:$0xff] %vm947, %v807
      %1237 = vst.msk [vmem:[#allocation2 + $0x28] sm:$0xff] %vm947, %v808
      %1238 = vst.msk [vmem:[#allocation2 + $0x30] sm:$0xff] %vm947, %v809
      %1239 = vst.msk [vmem:[#allocation2 + $0x38] sm:$0xff] %vm947, %v810
      // Predicated region
      $region57: #{transformer_forward.26} parent=51 // pred_check
        %p1240 = pneg %p461
      $region58: #{transformer_forward.26} parent=51 // pred_check_branch
        %1242 = sbr.rel (%p1240) target = $region60
      $region59: #{transformer_forward.26} parent=51 // pred_region
        %v1243 = vld [vmem:[#allocation4] sm:$0xff]
        %v1244 = vld [vmem:[#allocation4 + $0x8] sm:$0xff]
        %v1245 = vld [vmem:[#allocation4 + $0x10] sm:$0xff]
        %v1246 = vld [vmem:[#allocation4 + $0x18] sm:$0xff]
        %v1247 = vld [vmem:[#allocation4 + $0x20] sm:$0xff]
        %v1248 = vld [vmem:[#allocation4 + $0x28] sm:$0xff]
        %v1249 = vld [vmem:[#allocation4 + $0x30] sm:$0xff]
        %v1250 = vld [vmem:[#allocation4 + $0x38] sm:$0xff]
        %v1251 = vld [vmem:[#allocation3] sm:$0xff]
        %v1252 = vld [vmem:[#allocation3 + $0x8] sm:$0xff]
        %v1253 = vld [vmem:[#allocation3 + $0x10] sm:$0xff]
        %v1254 = vld [vmem:[#allocation3 + $0x18] sm:$0xff]
        %v1255 = vld [vmem:[#allocation3 + $0x20] sm:$0xff]
        %v1256 = vld [vmem:[#allocation3 + $0x28] sm:$0xff]
        %v1257 = vld [vmem:[#allocation3 + $0x30] sm:$0xff]
        %v1258 = vld [vmem:[#allocation3 + $0x38] sm:$0xff]
        %1260 = vset.pattern.permute.xlu0 0
        %1261 = vperm.xlu0 %1260, %v1251
        %v1262 = vpop.permute.xlu0 %1261
        %1265 = vset.pattern.permute.xlu0 0
        %1266 = vperm.xlu0 %1265, %v1252
        %v1267 = vpop.permute.xlu0 %1266
        %1270 = vset.pattern.permute.xlu0 0
        %1271 = vperm.xlu0 %1270, %v1253
        %v1272 = vpop.permute.xlu0 %1271
        %1275 = vset.pattern.permute.xlu0 0
        %1276 = vperm.xlu0 %1275, %v1254
        %v1277 = vpop.permute.xlu0 %1276
        %1280 = vset.pattern.permute.xlu0 0
        %1281 = vperm.xlu0 %1280, %v1255
        %v1282 = vpop.permute.xlu0 %1281
        %1285 = vset.pattern.permute.xlu0 0
        %1286 = vperm.xlu0 %1285, %v1256
        %v1287 = vpop.permute.xlu0 %1286
        %1290 = vset.pattern.permute.xlu0 0
        %1291 = vperm.xlu0 %1290, %v1257
        %v1292 = vpop.permute.xlu0 %1291
        %1295 = vset.pattern.permute.xlu0 0
        %1296 = vperm.xlu0 %1295, %v1258
        %v1297 = vpop.permute.xlu0 %1296
        %v1299 = vrcp.pop %v1262
        %v1300 = vmul.f32 %v1243, %v1299
        %v1301 = vrcp.pop %v1267
        %v1302 = vmul.f32 %v1244, %v1301
        %v1303 = vrcp.pop %v1272
        %v1304 = vmul.f32 %v1245, %v1303
        %v1305 = vrcp.pop %v1277
        %v1306 = vmul.f32 %v1246, %v1305
        %v1307 = vrcp.pop %v1282
        %v1308 = vmul.f32 %v1247, %v1307
        %v1309 = vrcp.pop %v1287
        %v1310 = vmul.f32 %v1248, %v1309
        %v1311 = vrcp.pop %v1292
        %v1312 = vmul.f32 %v1249, %v1311
        %v1313 = vrcp.pop %v1297
        %v1314 = vmul.f32 %v1250, %v1313
        %v1315 = vcombine.low %v1300, %v1308
        %v1316 = vcombine.high %v1300, %v1308
        %v1318 = vunpack.c.l.s4 1983009808
        %v1319 = vunpack.c.0.s8 %v1318
        %v1320 = vlaneseq
        %v1321 = vshrl.u32 %v1320, 7
        %v1322 = vsub.s32 %v1319, %v1321
        %v1323 = vrot.slane %v1315, %v1322
        %v1325 = vunpack.c.l.s4 1983009808
        %v1326 = vunpack.c.0.s8 %v1325
        %v1327 = vlaneseq
        %v1328 = vshrl.u32 %v1327, 7
        %v1329 = vsub.s32 %v1326, %v1328
        %v1330 = vrot.slane %v1316, %v1329
        %v1331 = vcombine.low %v1304, %v1312
        %v1332 = vcombine.high %v1304, %v1312
        %v1334 = vunpack.c.l.s4 1983009808
        %v1335 = vunpack.c.0.s8 %v1334
        %v1336 = vlaneseq
        %v1337 = vshrl.u32 %v1336, 7
        %v1338 = vsub.s32 %v1335, %v1337
        %v1339 = vrot.slane %v1331, %v1338
        %v1341 = vunpack.c.l.s4 1983009808
        %v1342 = vunpack.c.0.s8 %v1341
        %v1343 = vlaneseq
        %v1344 = vshrl.u32 %v1343, 7
        %v1345 = vsub.s32 %v1342, %v1344
        %v1346 = vrot.slane %v1332, %v1345
        %v1347 = vcombine.low %v1323, %v1339
        %v1348 = vcombine.high %v1323, %v1339
        %v1350 = vunpack.c.l.s4 1934713408
        %v1351 = vunpack.c.0.s8 %v1350
        %v1352 = vlaneseq
        %v1353 = vshrl.u32 %v1352, 7
        %v1354 = vsub.s32 %v1351, %v1353
        %v1355 = vrot.slane %v1347, %v1354
        %v1357 = vunpack.c.l.s4 1934713408
        %v1358 = vunpack.c.0.s8 %v1357
        %v1359 = vlaneseq
        %v1360 = vshrl.u32 %v1359, 7
        %v1361 = vsub.s32 %v1358, %v1360
        %v1362 = vrot.slane %v1348, %v1361
        %v1363 = vcombine.low %v1330, %v1346
        %v1364 = vcombine.high %v1330, %v1346
        %v1366 = vunpack.c.l.s4 1934713408
        %v1367 = vunpack.c.0.s8 %v1366
        %v1368 = vlaneseq
        %v1369 = vshrl.u32 %v1368, 7
        %v1370 = vsub.s32 %v1367, %v1369
        %v1371 = vrot.slane %v1363, %v1370
        %v1373 = vunpack.c.l.s4 1934713408
        %v1374 = vunpack.c.0.s8 %v1373
        %v1375 = vlaneseq
        %v1376 = vshrl.u32 %v1375, 7
        %v1377 = vsub.s32 %v1374, %v1376
        %v1378 = vrot.slane %v1364, %v1377
        %v1379 = vcombine.high %v1355, 0.0
        %v1380 = vcombine.high %v1362, 0.0
        %v1381 = vcombine.high %v1371, 0.0
        %v1382 = vcombine.high %v1378, 0.0
        %v1383 = vcombine.low %v1302, %v1310
        %v1384 = vcombine.high %v1302, %v1310
        %v1386 = vunpack.c.l.s4 1983009808
        %v1387 = vunpack.c.0.s8 %v1386
        %v1388 = vlaneseq
        %v1389 = vshrl.u32 %v1388, 7
        %v1390 = vsub.s32 %v1387, %v1389
        %v1391 = vrot.slane %v1383, %v1390
        %v1393 = vunpack.c.l.s4 1983009808
        %v1394 = vunpack.c.0.s8 %v1393
        %v1395 = vlaneseq
        %v1396 = vshrl.u32 %v1395, 7
        %v1397 = vsub.s32 %v1394, %v1396
        %v1398 = vrot.slane %v1384, %v1397
        %v1399 = vcombine.low %v1306, %v1314
        %v1400 = vcombine.high %v1306, %v1314
        %v1402 = vunpack.c.l.s4 1983009808
        %v1403 = vunpack.c.0.s8 %v1402
        %v1404 = vlaneseq
        %v1405 = vshrl.u32 %v1404, 7
        %v1406 = vsub.s32 %v1403, %v1405
        %v1407 = vrot.slane %v1399, %v1406
        %v1409 = vunpack.c.l.s4 1983009808
        %v1410 = vunpack.c.0.s8 %v1409
        %v1411 = vlaneseq
        %v1412 = vshrl.u32 %v1411, 7
        %v1413 = vsub.s32 %v1410, %v1412
        %v1414 = vrot.slane %v1400, %v1413
        %v1415 = vcombine.low %v1391, %v1407
        %v1416 = vcombine.high %v1391, %v1407
        %v1418 = vunpack.c.l.s4 1934713408
        %v1419 = vunpack.c.0.s8 %v1418
        %v1420 = vlaneseq
        %v1421 = vshrl.u32 %v1420, 7
        %v1422 = vsub.s32 %v1419, %v1421
        %v1423 = vrot.slane %v1415, %v1422
        %v1425 = vunpack.c.l.s4 1934713408
        %v1426 = vunpack.c.0.s8 %v1425
        %v1427 = vlaneseq
        %v1428 = vshrl.u32 %v1427, 7
        %v1429 = vsub.s32 %v1426, %v1428
        %v1430 = vrot.slane %v1416, %v1429
        %v1431 = vcombine.low %v1398, %v1414
        %v1432 = vcombine.high %v1398, %v1414
        %v1434 = vunpack.c.l.s4 1934713408
        %v1435 = vunpack.c.0.s8 %v1434
        %v1436 = vlaneseq
        %v1437 = vshrl.u32 %v1436, 7
        %v1438 = vsub.s32 %v1435, %v1437
        %v1439 = vrot.slane %v1431, %v1438
        %v1441 = vunpack.c.l.s4 1934713408
        %v1442 = vunpack.c.0.s8 %v1441
        %v1443 = vlaneseq
        %v1444 = vshrl.u32 %v1443, 7
        %v1445 = vsub.s32 %v1442, %v1444
        %v1446 = vrot.slane %v1432, %v1445
        %v1447 = vcombine.high %v1423, 0.0
        %v1448 = vcombine.high %v1430, 0.0
        %v1449 = vcombine.high %v1439, 0.0
        %v1450 = vcombine.high %v1446, 0.0
        %v1451 = vcombine.low %v1355, %v1362
        %v1453 = vunpack.c.l.s4 1983009808
        %v1454 = vunpack.c.0.s8 %v1453
        %v1455 = vlaneseq
        %v1456 = vshrl.u32 %v1455, 7
        %v1457 = vsub.s32 %v1454, %v1456
        %v1458 = vrot.slane %v1451, %v1457
        %v1459 = vcombine.low %v1379, %v1380
        %v1461 = vunpack.c.l.s4 1983009808
        %v1462 = vunpack.c.0.s8 %v1461
        %v1463 = vlaneseq
        %v1464 = vshrl.u32 %v1463, 7
        %v1465 = vsub.s32 %v1462, %v1464
        %v1466 = vrot.slane %v1459, %v1465
        %v1467 = vcombine.low %v1371, %v1378
        %v1469 = vunpack.c.l.s4 1983009808
        %v1470 = vunpack.c.0.s8 %v1469
        %v1471 = vlaneseq
        %v1472 = vshrl.u32 %v1471, 7
        %v1473 = vsub.s32 %v1470, %v1472
        %v1474 = vrot.slane %v1467, %v1473
        %v1475 = vcombine.low %v1381, %v1382
        %v1477 = vunpack.c.l.s4 1983009808
        %v1478 = vunpack.c.0.s8 %v1477
        %v1479 = vlaneseq
        %v1480 = vshrl.u32 %v1479, 7
        %v1481 = vsub.s32 %v1478, %v1480
        %v1482 = vrot.slane %v1475, %v1481
        %v1483 = vcombine.low %v1458, %v1466
        %v1484 = vcombine.high %v1458, %v1466
        %v1486 = vunpack.c.l.s4 1934713408
        %v1487 = vunpack.c.0.s8 %v1486
        %v1488 = vlaneseq
        %v1489 = vshrl.u32 %v1488, 7
        %v1490 = vsub.s32 %v1487, %v1489
        %v1491 = vrot.slane %v1483, %v1490
        %v1493 = vunpack.c.l.s4 1934713408
        %v1494 = vunpack.c.0.s8 %v1493
        %v1495 = vlaneseq
        %v1496 = vshrl.u32 %v1495, 7
        %v1497 = vsub.s32 %v1494, %v1496
        %v1498 = vrot.slane %v1484, %v1497
        %v1499 = vcombine.low %v1474, %v1482
        %v1500 = vcombine.high %v1474, %v1482
        %v1502 = vunpack.c.l.s4 1934713408
        %v1503 = vunpack.c.0.s8 %v1502
        %v1504 = vlaneseq
        %v1505 = vshrl.u32 %v1504, 7
        %v1506 = vsub.s32 %v1503, %v1505
        %v1507 = vrot.slane %v1499, %v1506
        %v1509 = vunpack.c.l.s4 1934713408
        %v1510 = vunpack.c.0.s8 %v1509
        %v1511 = vlaneseq
        %v1512 = vshrl.u32 %v1511, 7
        %v1513 = vsub.s32 %v1510, %v1512
        %v1514 = vrot.slane %v1500, %v1513
        %v1515 = vcombine.low %v1491, %v1507
        %v1516 = vcombine.high %v1491, %v1507
        %v1517 = vcombine.low %v1498, %v1514
        %v1518 = vcombine.high %v1498, %v1514
        %v1519 = vcombine.low %v1423, %v1430
        %v1521 = vunpack.c.l.s4 1983009808
        %v1522 = vunpack.c.0.s8 %v1521
        %v1523 = vlaneseq
        %v1524 = vshrl.u32 %v1523, 7
        %v1525 = vsub.s32 %v1522, %v1524
        %v1526 = vrot.slane %v1519, %v1525
        %v1527 = vcombine.low %v1447, %v1448
        %v1529 = vunpack.c.l.s4 1983009808
        %v1530 = vunpack.c.0.s8 %v1529
        %v1531 = vlaneseq
        %v1532 = vshrl.u32 %v1531, 7
        %v1533 = vsub.s32 %v1530, %v1532
        %v1534 = vrot.slane %v1527, %v1533
        %v1535 = vcombine.low %v1439, %v1446
        %v1537 = vunpack.c.l.s4 1983009808
        %v1538 = vunpack.c.0.s8 %v1537
        %v1539 = vlaneseq
        %v1540 = vshrl.u32 %v1539, 7
        %v1541 = vsub.s32 %v1538, %v1540
        %v1542 = vrot.slane %v1535, %v1541
        %v1543 = vcombine.low %v1449, %v1450
        %v1545 = vunpack.c.l.s4 1983009808
        %v1546 = vunpack.c.0.s8 %v1545
        %v1547 = vlaneseq
        %v1548 = vshrl.u32 %v1547, 7
        %v1549 = vsub.s32 %v1546, %v1548
        %v1550 = vrot.slane %v1543, %v1549
        %v1551 = vcombine.low %v1526, %v1534
        %v1552 = vcombine.high %v1526, %v1534
        %v1554 = vunpack.c.l.s4 1934713408
        %v1555 = vunpack.c.0.s8 %v1554
        %v1556 = vlaneseq
        %v1557 = vshrl.u32 %v1556, 7
        %v1558 = vsub.s32 %v1555, %v1557
        %v1559 = vrot.slane %v1551, %v1558
        %v1561 = vunpack.c.l.s4 1934713408
        %v1562 = vunpack.c.0.s8 %v1561
        %v1563 = vlaneseq
        %v1564 = vshrl.u32 %v1563, 7
        %v1565 = vsub.s32 %v1562, %v1564
        %v1566 = vrot.slane %v1552, %v1565
        %v1567 = vcombine.low %v1542, %v1550
        %v1568 = vcombine.high %v1542, %v1550
        %v1570 = vunpack.c.l.s4 1934713408
        %v1571 = vunpack.c.0.s8 %v1570
        %v1572 = vlaneseq
        %v1573 = vshrl.u32 %v1572, 7
        %v1574 = vsub.s32 %v1571, %v1573
        %v1575 = vrot.slane %v1567, %v1574
        %v1577 = vunpack.c.l.s4 1934713408
        %v1578 = vunpack.c.0.s8 %v1577
        %v1579 = vlaneseq
        %v1580 = vshrl.u32 %v1579, 7
        %v1581 = vsub.s32 %v1578, %v1580
        %v1582 = vrot.slane %v1568, %v1581
        %v1583 = vcombine.low %v1559, %v1575
        %v1584 = vcombine.high %v1559, %v1575
        %v1585 = vcombine.low %v1566, %v1582
        %v1586 = vcombine.high %v1566, %v1582
        %1589 = vrot.lane.b32.xlu0 %v1516, 32
        %v1590 = vpop.permute.xlu0 %1589
        %1591 = vrot.lane.b32.xlu0 %v1584, 32
        %v1592 = vpop.permute.xlu0 %1591
        %1597 = vrot.lane.b32.xlu0 %v1517, 64
        %v1598 = vpop.permute.xlu0 %1597
        %1599 = vrot.lane.b32.xlu0 %v1585, 64
        %v1600 = vpop.permute.xlu0 %1599
        %1605 = vrot.lane.b32.xlu0 %v1518, 96
        %v1606 = vpop.permute.xlu0 %1605
        %1607 = vrot.lane.b32.xlu0 %v1586, 96
        %v1608 = vpop.permute.xlu0 %1607
        %v1611 = vsel %vm525, %v1515, %v1590
        %v1612 = vsel %vm525, %v1583, %v1592
        %vm1613 = vcmask 523264
        %v1614 = vsel %vm1613, %v1611, %v1598
        %v1615 = vsel %vm1613, %v1612, %v1600
        %vm1616 = vcmask 785408
        %v1617 = vsel %vm1616, %v1614, %v1606
        %v1618 = vsel %vm1616, %v1615, %v1608
        %v1619 = vpack.c.bf16 %v1618, %v1617
        %v1620 = vld [vmem:[%s4] sm:$0xf]
        %v1621 = vld [vmem:[%s4 + $0x4] sm:$0xf]
        %v1622 = vld [vmem:[%s4 + $0x8] sm:$0xf]
        %v1623 = vld [vmem:[%s4 + $0xc] sm:$0xf]
        %v1624 = vld [vmem:[%s4 + $0x10] sm:$0xf]
        %v1625 = vld [vmem:[%s4 + $0x14] sm:$0xf]
        %v1626 = vld [vmem:[%s4 + $0x18] sm:$0xf]
        %v1627 = vld [vmem:[%s4 + $0x1c] sm:$0xf]
        %v1628 = vld [vmem:[%s4 + $0x20] sm:$0xf]
        %v1629 = vld [vmem:[%s4 + $0x24] sm:$0xf]
        %v1630 = vld [vmem:[%s4 + $0x28] sm:$0xf]
        %v1631 = vld [vmem:[%s4 + $0x2c] sm:$0xf]
        %v1632 = vld [vmem:[%s4 + $0x30] sm:$0xf]
        %v1633 = vld [vmem:[%s4 + $0x34] sm:$0xf]
        %v1634 = vld [vmem:[%s4 + $0x38] sm:$0xf]
        %v1635 = vld [vmem:[%s4 + $0x3c] sm:$0xf]
        %v1636 = vld [vmem:[%s5] sm:$0x1]
        %v1638 = vlaneseq
        %v1639 = vshrl.u32 %v1638, 7
        %v1640 = vsub.s32 0, %v1639
        %v1641 = vrot.slane %v1636, %v1640
        %v1659 = vunpack.c.l.b16 %v1620
        %v1660 = vunpack.c.l.b16 %v1621
        %v1661 = vunpack.c.l.b16 %v1622
        %v1662 = vunpack.c.l.b16 %v1623
        %v1663 = vunpack.c.l.b16 %v1624
        %v1664 = vunpack.c.l.b16 %v1625
        %v1665 = vunpack.c.l.b16 %v1626
        %v1666 = vunpack.c.l.b16 %v1627
        %v1667 = vunpack.c.l.b16 %v1628
        %v1668 = vunpack.c.l.b16 %v1629
        %v1669 = vunpack.c.l.b16 %v1630
        %v1670 = vunpack.c.l.b16 %v1631
        %v1671 = vunpack.c.l.b16 %v1632
        %v1672 = vunpack.c.l.b16 %v1633
        %v1673 = vunpack.c.l.b16 %v1634
        %v1674 = vunpack.c.l.b16 %v1635
        %v1675 = vpack.c.b16 %v1660, %v1659
        %v1676 = vpack.c.b16 %v1662, %v1661
        %v1677 = vpack.c.b16 %v1664, %v1663
        %v1678 = vpack.c.b16 %v1666, %v1665
        %v1679 = vpack.c.b16 %v1668, %v1667
        %v1680 = vpack.c.b16 %v1670, %v1669
        %v1681 = vpack.c.b16 %v1672, %v1671
        %v1682 = vpack.c.b16 %v1674, %v1673
        %1691 = vmatprep.subr.bf16.mxu0 0
        %1692 = vmatpush1.bf16.msra.mxu0 %v1675
        %1693 = vmatprep.subr.bf16.mxu0 0
        %1694 = vmatpush1.bf16.msra.mxu0 %v1676
        %1695 = vmatprep.subr.bf16.mxu0 0
        %1696 = vmatpush1.bf16.msra.mxu0 %v1677
        %1697 = vmatprep.subr.bf16.mxu0 0
        %1698 = vmatpush1.bf16.msra.mxu0 %v1678
        %1699 = vmatprep.subr.bf16.mxu0 0
        %1700 = vmatpush1.bf16.msra.mxu0 %v1679
        %1701 = vmatprep.subr.bf16.mxu0 0
        %1702 = vmatpush1.bf16.msra.mxu0 %v1680
        %1703 = vmatprep.subr.bf16.mxu0 0
        %1704 = vmatpush1.bf16.msra.mxu0 %v1681
        %1705 = vmatprep.subr.bf16.mxu0 0
        %1706 = vmatpush1.bf16.msra.mxu0 %v1682
        %1707 = vmatprep.subr.bf16.mxu0 0
        %1708 = vmatpush1.bf16.msra.mxu0 0
        %1709 = vmatprep.subr.bf16.mxu0 0
        %1710 = vmatpush1.bf16.msra.mxu0 0
        %1711 = vmatprep.subr.bf16.mxu0 0
        %1712 = vmatpush1.bf16.msra.mxu0 0
        %1713 = vmatprep.subr.bf16.mxu0 0
        %1714 = vmatpush1.bf16.msra.mxu0 0
        %1715 = vmatprep.subr.bf16.mxu0 0
        %1716 = vmatpush1.bf16.msra.mxu0 0
        %1717 = vmatprep.subr.bf16.mxu0 0
        %1718 = vmatpush1.bf16.msra.mxu0 0
        %1719 = vmatprep.subr.bf16.mxu0 0
        %1720 = vmatpush1.bf16.msra.mxu0 0
        %1721 = vmatprep.subr.bf16.mxu0 0
        %1722 = vmatpush1.bf16.msra.mxu0 0
        %1723 = vmatprep.mubr.bf16.mxu0 0
        %1724 = vmatmul.mubr.bf16.gmra.mrb[0].mxu0 %v1619
        %v1725 = vpop.f32.mrb[0].mxu0
        %v1726 = vadd.f32 %v1641, %v1725
        %v1727 = vpop.f32.mrb[0].mxu0
        %v1728 = vpop.f32.mrb[0].mxu0
        %v1729 = vadd.f32 %v1641, %v1728
        %v1730 = vpop.f32.mrb[0].mxu0
        %1731 = vdwg.mxu0
        %v1732 = vld [vmem:[%s418] sm:$0xf]
        %v1733 = vld [vmem:[%s418 + $0x4] sm:$0xf]
        %v1734 = vunpack.c.l.bf16 %v1732
        %v1735 = vunpack.c.l.bf16 %v1733
        %v1736 = vadd.f32 %v1726, %v1734
        %v1737 = vadd.f32 %v1729, %v1735
        %1738 = vadd.xlane.f32.xlu0 %v1736
        %v1739 = vpop.xlane.xlu0 %1738
        %1740 = vadd.xlane.f32.xlu0 %v1737
        %v1741 = vpop.xlane.xlu0 %1740
        %v1742 = vrcp.pop 128.0
        %v1743 = vmul.f32 %v1739, %v1742
        %v1744 = vmul.f32 %v1741, %v1742
        %v1745 = vsub.f32 %v1736, %v1743
        %v1746 = vsub.f32 %v1737, %v1744
        %v1747 = vmul.f32 %v1745, %v1745
        %v1748 = vmul.f32 %v1746, %v1746
        %1749 = vadd.xlane.f32.xlu0 %v1747
        %v1750 = vpop.xlane.xlu0 %1749
        %1751 = vadd.xlane.f32.xlu0 %v1748
        %v1752 = vpop.xlane.xlu0 %1751
        %v1753 = vmul.f32 %v1750, %v1742
        %v1754 = vmul.f32 %v1752, %v1742
        %v1755 = vadd.f32 %v1753, 1e-05
        %v1756 = vadd.f32 %v1754, 1e-05
        %v1757 = vrsqrt.pop %v1755
        %v1758 = vrsqrt.pop %v1756
        %v1759 = vmul.f32 %v1745, %v1757
        %v1760 = vmul.f32 %v1746, %v1758
        %v1761 = vld [vmem:[%s6] sm:$0x1]
        %v1763 = vlaneseq
        %v1764 = vshrl.u32 %v1763, 7
        %v1765 = vsub.s32 0, %v1764
        %v1766 = vrot.slane %v1761, %v1765
        %v1768 = vmul.f32 %v1759, %v1766
        %v1769 = vmul.f32 %v1760, %v1766
        %v1770 = vld [vmem:[%s7] sm:$0x1]
        %v1772 = vlaneseq
        %v1773 = vshrl.u32 %v1772, 7
        %v1774 = vsub.s32 0, %v1773
        %v1775 = vrot.slane %v1770, %v1774
        %v1777 = vadd.f32 %v1768, %v1775
        %v1778 = vadd.f32 %v1769, %v1775
        %v1779 = vpack.c.bf16 %v1778, %v1777
        %v1781 = vunpack.c.l.b16 %v1779
        %v1782 = vunpack.c.h.b16 %v1779
        %v1783 = vpack.c.b16 %v1781, %v1781
        %v1784 = vpack.c.b16 %v1782, %v1782
        %1787 = vst [vmem:[%s458] sm:$0xf] %v1783
        %1788 = vst [vmem:[%s458 + $0x4] sm:$0xf] %v1784
      $region60: #{transformer_forward.26} parent=51 // pred_fallthru
        _
      %s1789 = smul.u32 2, %s25
      %p1790 = scmp.lt.s32.totalorder %s24, 1
      %s1791 = scalar_select %p1790, %s24, 1
      %p1792 = scmp.lt.s32.totalorder %s1789, 1
      %s1793 = scalar_select %p1792, %s1789, 1
      %s1794 = smul.addr %s1791, 2
      %s1795 = sadd.s32 %s1793, %s1794
      %s1796 = smul.addr %s1795, 4
      %s1797 = scalar_lea.vmem %s8, %s1796
      // Predicated region
      $region61: #{transformer_forward.26} parent=51 // pred_check
        %p1798 = pneg %p254
      $region62: #{transformer_forward.26} parent=51 // pred_check_branch
        %1800 = sbr.rel (%p1798) target = $region64
      $region63: #{transformer_forward.26} parent=51 // pred_region
        %s1801 = smul.u32 2, %s25
      $region64: #{transformer_forward.26} parent=51 // pred_fallthru
        _
    $region52: #{transformer_forward.26} parent=5 // pred_fallthru
      _
    %p1802 = scmp.le.s32.totalorder 2, %s14
    // Predicated region
    $region65: #{transformer_forward.26} parent=5 // pred_check
      %p1803 = pneg %p1802
    $region66: #{transformer_forward.26} parent=5 // pred_check_branch
      %1805 = sbr.rel (%p1803) target = $region68
    $region67: #{transformer_forward.26} parent=5 // pred_region
      %s1806 = ssub.s32 %s14, 2
      // Predicated region
      $region69: #{transformer_forward.26} parent=67 // pred_check
        %p1807 = pneg %p260
      $region70: #{transformer_forward.26} parent=67 // pred_check_branch
        %1809 = sbr.rel (%p1807) target = $region72
      $region71: #{transformer_forward.26} parent=67 // pred_region
        %s1810 = smul.u32 2, %s28
        %p1811 = scmp.lt.s32.totalorder %s27, 1
        %s1812 = scalar_select %p1811, %s27, 1
        %p1813 = scmp.lt.s32.totalorder %s1810, 1
        %s1814 = scalar_select %p1813, %s1810, 1
        %s1815 = smul.addr %s1812, 2
        %s1816 = sadd.s32 %s1814, %s1815
        %s1817 = smul.addr %s1816, 4
        %s1818 = scalar_lea.vmem %s8, %s1817
      $region72: #{transformer_forward.26} parent=67 // pred_fallthru
        _
    $region68: #{transformer_forward.26} parent=5 // pred_fallthru
      _
  $region6: #{transformer_forward.26} parent=0 // loop_footer
    %s18 = sadd.s32 1, %s14
  $region7: #{transformer_forward.26} parent=0 // loop_footer_branch
    %13 = sbr.rel target = $region3
  $region8: #{transformer_forward.26} parent=0 // loop_exit
    _

// kernel: transformer_forward.28
$region0: #{transformer_forward.28}
  #allocation0 [shape = 'u32[]', space=smem, size = 0x4, offset = 0x4, fixed_abs, tag = 'smem constant byte address 0x4 - core index']
  #allocation1 [shape = 'u32[144,128]{1,0:T(1,128)}', space=vmem, size = 0x12000, scoped, tag = 'internal scratch']
  %s0 = inlined_call_operand.vmem [shape: bf16[2,16,128], index: 0, kind: input, shape index: {}]
  %s1 = inlined_call_operand.vmem [shape: bf16[128,128], index: 1, kind: input, shape index: {}]
  %s2 = inlined_call_operand.vmem [shape: bf16[128,128], index: 2, kind: input, shape index: {}]
  %s3 = inlined_call_operand.vmem [shape: bf16[2,4,16,32], index: 3, kind: output, shape index: {0}]
  %s4 = inlined_call_operand.vmem [shape: bf16[2,4,16,32], index: 4, kind: output, shape index: {1}]
  %5 = xla_tuple %s3, %s4
  %s6 = sld [smem:[#allocation0]]
  $region53: #{transformer_forward.28} parent=0
    _
  %s8 = ssub.s32 1, %s6
  %s9 = scalar_select 0, %s8, %s6
  loop: start=0, step=1, limit=4
  $region2: #{transformer_forward.28} parent=0 // loop_pre_header
    _
  $region3: #{transformer_forward.28} parent=0 // loop_header
    %s11 = sphi 0, %s15
    %p12 = scmp.ge.s32.totalorder %s11, 4
    %s18 = sphi 0, %s30
    %s19 = sphi 0, %s26
    %s20 = sphi 0, %s18
    %s21 = sphi 0, %s19
    %s22 = sphi 0, %s20
    %s23 = sphi 0, %s21
    %s35 = sphi 0, %s37
    %s38 = sphi 0, %s35
    %s39 = sphi 0, %s38
    %s55 = sphi 0, %s39
    %s59 = sphi 0, %s59
    %s61 = sphi 0, %s59
    %s62 = sphi 0, %s61
    %s76 = sphi 0, %s62
    %s80 = sphi 0, %s80
    %s82 = sphi 0, %s80
    %s83 = sphi 0, %s82
    %s97 = sphi 0, %s83
    %s105 = sphi 0, %s107
    %s108 = sphi 0, %s105
    %s109 = sphi 0, %s108
    %s125 = sphi 0, %s109
    %s133 = sphi 0, %s135
    %s136 = sphi 0, %s133
    %s137 = sphi 0, %s136
    %s153 = sphi 0, %s137
  $region4: #{transformer_forward.28} parent=0 // loop_header_branch
    %14 = sbr.rel (%p12) target = $region8
  $region5: #{transformer_forward.28} parent=0 // loop_body
    %s16 = ssub.s32 %s11, 1
    %s17 = ssub.s32 %s11, 2
    %s24 = sadd.s32 1, %s19
    %p25 = scmp.ge.s32.totalorder %s24, 1
    %s26 = scalar_select %p25, 0, %s24
    %s27 = sadd.s32 1, %s18
    %s28 = scalar_select %p25, %s27, %s18
    %p29 = scmp.ge.s32.totalorder %s28, 2
    %s30 = scalar_select %p29, 0, %s28
    %s31 = ssub.s32 %s18, %s30
    %s32 = ssub.s32 %s19, %s26
    %s33 = sor.u32 %s31, %s32
    %p34 = scmp.eq.s32.totalorder %s33, 0
    %s36 = sadd.s32 %s35, 1
    %s37 = scalar_select %p34, %s35, %s36
    %p40 = pneg %p34
    %p41 = scmp.eq.s32.totalorder %s11, 1
    %p42 = por %p40, %p41
    %p43 = scmp.ne.s32.totalorder %s35, %s38
    %p44 = scmp.eq.s32.totalorder %s11, 0
    %p45 = por %p43, %p44
    %p46 = scmp.ne.s32.totalorder %s35, %s38
    %p47 = scmp.eq.s32.totalorder %s16, 1
    %p48 = por %p46, %p47
    %p49 = scmp.ne.s32.totalorder %s38, %s39
    %p50 = scmp.eq.s32.totalorder %s16, 0
    %p51 = por %p49, %p50
    %p52 = scmp.ne.s32.totalorder %s38, %s39
    %p53 = scmp.eq.s32.totalorder %s17, 1
    %p54 = por %p52, %p53
    %p56 = scmp.ne.s32.totalorder %s39, %s55
    %p57 = scmp.eq.s32.totalorder %s17, 0
    %p58 = por %p56, %p57
    %s60 = sadd.s32 %s59, 1
    %p63 = scmp.eq.s32.totalorder %s11, 1
    %p64 = scmp.ne.s32.totalorder %s59, %s61
    %p65 = scmp.eq.s32.totalorder %s11, 0
    %p66 = por %p64, %p65
    %p67 = scmp.ne.s32.totalorder %s59, %s61
    %p68 = scmp.eq.s32.totalorder %s16, 1
    %p69 = por %p67, %p68
    %p70 = scmp.ne.s32.totalorder %s61, %s62
    %p71 = scmp.eq.s32.totalorder %s16, 0
    %p72 = por %p70, %p71
    %p73 = scmp.ne.s32.totalorder %s61, %s62
    %p74 = scmp.eq.s32.totalorder %s17, 1
    %p75 = por %p73, %p74
    %p77 = scmp.ne.s32.totalorder %s62, %s76
    %p78 = scmp.eq.s32.totalorder %s17, 0
    %p79 = por %p77, %p78
    %s81 = sadd.s32 %s80, 1
    %p84 = scmp.eq.s32.totalorder %s11, 1
    %p85 = scmp.ne.s32.totalorder %s80, %s82
    %p86 = scmp.eq.s32.totalorder %s11, 0
    %p87 = por %p85, %p86
    %p88 = scmp.ne.s32.totalorder %s80, %s82
    %p89 = scmp.eq.s32.totalorder %s16, 1
    %p90 = por %p88, %p89
    %p91 = scmp.ne.s32.totalorder %s82, %s83
    %p92 = scmp.eq.s32.totalorder %s16, 0
    %p93 = por %p91, %p92
    %p94 = scmp.ne.s32.totalorder %s82, %s83
    %p95 = scmp.eq.s32.totalorder %s17, 1
    %p96 = por %p94, %p95
    %p98 = scmp.ne.s32.totalorder %s83, %s97
    %p99 = scmp.eq.s32.totalorder %s17, 0
    %p100 = por %p98, %p99
    %s101 = ssub.s32 %s18, %s30
    %s102 = ssub.s32 %s19, %s26
    %s103 = sor.u32 %s101, %s102
    %p104 = scmp.eq.s32.totalorder %s103, 0
    %s106 = sadd.s32 %s105, 1
    %s107 = scalar_select %p104, %s105, %s106
    %p110 = pneg %p104
    %p111 = scmp.eq.s32.totalorder %s11, 1
    %p112 = por %p110, %p111
    %p113 = scmp.ne.s32.totalorder %s105, %s108
    %p114 = scmp.eq.s32.totalorder %s11, 0
    %p115 = por %p113, %p114
    %p116 = scmp.ne.s32.totalorder %s105, %s108
    %p117 = scmp.eq.s32.totalorder %s16, 1
    %p118 = por %p116, %p117
    %p119 = scmp.ne.s32.totalorder %s108, %s109
    %p120 = scmp.eq.s32.totalorder %s16, 0
    %p121 = por %p119, %p120
    %p122 = scmp.ne.s32.totalorder %s108, %s109
    %p123 = scmp.eq.s32.totalorder %s17, 1
    %p124 = por %p122, %p123
    %p126 = scmp.ne.s32.totalorder %s109, %s125
    %p127 = scmp.eq.s32.totalorder %s17, 0
    %p128 = por %p126, %p127
    %s129 = ssub.s32 %s18, %s30
    %s130 = ssub.s32 %s19, %s26
    %s131 = sor.u32 %s129, %s130
    %p132 = scmp.eq.s32.totalorder %s131, 0
    %s134 = sadd.s32 %s133, 1
    %s135 = scalar_select %p132, %s133, %s134
    %p138 = pneg %p132
    %p139 = scmp.eq.s32.totalorder %s11, 1
    %p140 = por %p138, %p139
    %p141 = scmp.ne.s32.totalorder %s133, %s136
    %p142 = scmp.eq.s32.totalorder %s11, 0
    %p143 = por %p141, %p142
    %p144 = scmp.ne.s32.totalorder %s133, %s136
    %p145 = scmp.eq.s32.totalorder %s16, 1
    %p146 = por %p144, %p145
    %p147 = scmp.ne.s32.totalorder %s136, %s137
    %p148 = scmp.eq.s32.totalorder %s16, 0
    %p149 = por %p147, %p148
    %p150 = scmp.ne.s32.totalorder %s136, %s137
    %p151 = scmp.eq.s32.totalorder %s17, 1
    %p152 = por %p150, %p151
    %p154 = scmp.ne.s32.totalorder %s137, %s153
    %p155 = scmp.eq.s32.totalorder %s17, 0
    %p156 = por %p154, %p155
    %p157 = scmp.le.s32.totalorder 1, %s11
    %p158 = scmp.lt.s32.totalorder %s11, 3
    %p159 = pnand %p157, %p158
    %p160 = pneg %p159
    // Predicated region
    $region9: #{transformer_forward.28} parent=5 // pred_check
      _
    $region10: #{transformer_forward.28} parent=5 // pred_check_branch
      %162 = sbr.rel (%p159) target = $region12
    $region11: #{transformer_forward.28} parent=5 // pred_region
      %s163 = ssub.s32 %s11, 1
      // Predicated region
      $region13: #{transformer_forward.28} parent=11 // pred_check
        %p164 = pneg %p72
      $region14: #{transformer_forward.28} parent=11 // pred_check_branch
        %166 = sbr.rel (%p164) target = $region16
      $region15: #{transformer_forward.28} parent=11 // pred_region
        _
      $region16: #{transformer_forward.28} parent=11 // pred_fallthru
        _
      // Predicated region
      $region17: #{transformer_forward.28} parent=11 // pred_check
        %p167 = pneg %p93
      $region18: #{transformer_forward.28} parent=11 // pred_check_branch
        %169 = sbr.rel (%p167) target = $region20
      $region19: #{transformer_forward.28} parent=11 // pred_region
        _
      $region20: #{transformer_forward.28} parent=11 // pred_fallthru
        _
    $region12: #{transformer_forward.28} parent=5 // pred_fallthru
      _
    %p170 = scmp.lt.s32.totalorder %s11, 2
    // Predicated region
    $region21: #{transformer_forward.28} parent=5 // pred_check
      %p171 = pneg %p170
    $region22: #{transformer_forward.28} parent=5 // pred_check_branch
      %173 = sbr.rel (%p171) target = $region24
    $region23: #{transformer_forward.28} parent=5 // pred_region
      // Predicated region
      $region25: #{transformer_forward.28} parent=23 // pred_check
        %p174 = pneg %p45
      $region26: #{transformer_forward.28} parent=23 // pred_check_branch
        %176 = sbr.rel (%p174) target = $region28
      $region27: #{transformer_forward.28} parent=23 // pred_region
        %s177 = smul.u32 2, %s19
        %p178 = scmp.lt.s32.totalorder %s18, 1
        %s179 = scalar_select %p178, %s18, 1
        %p180 = scmp.lt.s32.totalorder %s177, 1
        %s181 = scalar_select %p180, %s177, 1
        %s182 = smul.addr %s179, 2
        %s183 = sadd.s32 %s181, %s182
        %s184 = smul.addr %s183, 4
        %s185 = scalar_lea.vmem %s0, %s184
        %s186 = smul.u32 2, %s19
      $region28: #{transformer_forward.28} parent=23 // pred_fallthru
        _
    $region24: #{transformer_forward.28} parent=5 // pred_fallthru
      _
    %p187 = scmp.le.s32.totalorder 1, %s11
    %p188 = scmp.lt.s32.totalorder %s11, 3
    %p189 = pnand %p187, %p188
    %p190 = pneg %p189
    // Predicated region
    $region29: #{transformer_forward.28} parent=5 // pred_check
      _
    $region30: #{transformer_forward.28} parent=5 // pred_check_branch
      %192 = sbr.rel (%p189) target = $region32
    $region31: #{transformer_forward.28} parent=5 // pred_region
      %s193 = ssub.s32 %s11, 1
      %s194 = smul.u32 2, %s21
      %p195 = scmp.lt.s32.totalorder %s20, 1
      %s196 = scalar_select %p195, %s20, 1
      %p197 = scmp.lt.s32.totalorder %s194, 1
      %s198 = scalar_select %p197, %s194, 1
      %s199 = smul.addr %s196, 2
      %s200 = sadd.s32 %s198, %s199
      %s201 = smul.addr %s200, 4
      %s202 = scalar_lea.vmem %s0, %s201
      %p203 = pneg %p51
      %p204 = pneg %p48
      %p205 = pneg %p72
      %p206 = pneg %p69
      %p207 = pneg %p93
      %p208 = pneg %p90
      %p209 = pneg %p121
      %p210 = pneg %p118
      %s211 = smul.u32 2, %s21
      %p212 = scmp.lt.s32.totalorder %s20, 1
      %s213 = scalar_select %p212, %s20, 1
      %p214 = scmp.lt.s32.totalorder %s211, 1
      %s215 = scalar_select %p214, %s211, 1
      %s216 = smul.addr %s213, 8
      %s217 = sadd.s32 %s215, %s216
      %s218 = smul.addr %s217, 4
      %s219 = scalar_lea.vmem %s3, %s218
      %p220 = pneg %p149
      %p221 = pneg %p146
      %s222 = smul.u32 2, %s21
      %p223 = scmp.lt.s32.totalorder %s20, 1
      %s224 = scalar_select %p223, %s20, 1
      %p225 = scmp.lt.s32.totalorder %s222, 1
      %s226 = scalar_select %p225, %s222, 1
      %s227 = smul.addr %s224, 8
      %s228 = sadd.s32 %s226, %s227
      %s229 = smul.addr %s228, 4
      %s230 = scalar_lea.vmem %s4, %s229
      %s231 = smul.u32 2, %s21
      %p232 = scmp.lt.s32.totalorder %s20, 1
      %s233 = scalar_select %p232, %s20, 1
      %p234 = scmp.lt.s32.totalorder %s231, 1
      %s235 = scalar_select %p234, %s231, 1
      %s236 = smul.addr %s233, 2
      %s237 = sadd.s32 %s235, %s236
      %s238 = smul.addr %s237, 4
      %s239 = scalar_lea.vmem %s0, %s238
      %s240 = smul.u32 2, %s21
      %s241 = smul.u32 2, %s21
      %p242 = scmp.lt.s32.totalorder %s20, 1
      %s243 = scalar_select %p242, %s20, 1
      %p244 = scmp.lt.s32.totalorder %s241, 1
      %s245 = scalar_select %p244, %s241, 1
      %s246 = smul.addr %s243, 8
      %s247 = sadd.s32 %s245, %s246
      %s248 = smul.addr %s247, 4
      %s249 = scalar_lea.vmem %s3, %s248
      %s250 = smul.u32 2, %s21
      %s251 = smul.u32 2, %s21
      %p252 = scmp.lt.s32.totalorder %s20, 1
      %s253 = scalar_select %p252, %s20, 1
      %p254 = scmp.lt.s32.totalorder %s251, 1
      %s255 = scalar_select %p254, %s251, 1
      %s256 = smul.addr %s253, 8
      %s257 = sadd.s32 %s255, %s256
      %s258 = smul.addr %s257, 4
      %s259 = scalar_lea.vmem %s4, %s258
      %s260 = smul.u32 2, %s21
      %v262 = vld [vmem:[%s239] sm:$0xf]
      %v263 = vld [vmem:[%s239 + $0x4] sm:$0xf]
      %v264 = vld [vmem:[%s1] sm:$0xf]
      %v265 = vld [vmem:[%s1 + $0x4] sm:$0xf]
      %v266 = vld [vmem:[%s1 + $0x8] sm:$0xf]
      %v267 = vld [vmem:[%s1 + $0xc] sm:$0xf]
      %v268 = vld [vmem:[%s1 + $0x10] sm:$0xf]
      %v269 = vld [vmem:[%s1 + $0x14] sm:$0xf]
      %v270 = vld [vmem:[%s1 + $0x18] sm:$0xf]
      %v271 = vld [vmem:[%s1 + $0x1c] sm:$0xf]
      %v272 = vld [vmem:[%s1 + $0x20] sm:$0xf]
      %v273 = vld [vmem:[%s1 + $0x24] sm:$0xf]
      %v274 = vld [vmem:[%s1 + $0x28] sm:$0xf]
      %v275 = vld [vmem:[%s1 + $0x2c] sm:$0xf]
      %v276 = vld [vmem:[%s1 + $0x30] sm:$0xf]
      %v277 = vld [vmem:[%s1 + $0x34] sm:$0xf]
      %v278 = vld [vmem:[%s1 + $0x38] sm:$0xf]
      %v279 = vld [vmem:[%s1 + $0x3c] sm:$0xf]
      %v282 = vunpack.c.l.b16 %v262
      %v283 = vunpack.c.l.b16 %v263
      %v284 = vpack.c.b16 %v283, %v282
      %v302 = vunpack.c.l.b16 %v264
      %v303 = vunpack.c.l.b16 %v265
      %v304 = vunpack.c.l.b16 %v266
      %v305 = vunpack.c.l.b16 %v267
      %v306 = vunpack.c.l.b16 %v268
      %v307 = vunpack.c.l.b16 %v269
      %v308 = vunpack.c.l.b16 %v270
      %v309 = vunpack.c.l.b16 %v271
      %v310 = vunpack.c.l.b16 %v272
      %v311 = vunpack.c.l.b16 %v273
      %v312 = vunpack.c.l.b16 %v274
      %v313 = vunpack.c.l.b16 %v275
      %v314 = vunpack.c.l.b16 %v276
      %v315 = vunpack.c.l.b16 %v277
      %v316 = vunpack.c.l.b16 %v278
      %v317 = vunpack.c.l.b16 %v279
      %v318 = vpack.c.b16 %v303, %v302
      %v319 = vpack.c.b16 %v305, %v304
      %v320 = vpack.c.b16 %v307, %v306
      %v321 = vpack.c.b16 %v309, %v308
      %v322 = vpack.c.b16 %v311, %v310
      %v323 = vpack.c.b16 %v313, %v312
      %v324 = vpack.c.b16 %v315, %v314
      %v325 = vpack.c.b16 %v317, %v316
      %334 = vmatprep.subr.bf16.mxu0 0
      %335 = vmatpush1.bf16.msra.mxu0 %v318
      %336 = vmatprep.subr.bf16.mxu0 0
      %337 = vmatpush1.bf16.msra.mxu0 %v319
      %338 = vmatprep.subr.bf16.mxu0 0
      %339 = vmatpush1.bf16.msra.mxu0 %v320
      %340 = vmatprep.subr.bf16.mxu0 0
      %341 = vmatpush1.bf16.msra.mxu0 %v321
      %342 = vmatprep.subr.bf16.mxu0 0
      %343 = vmatpush1.bf16.msra.mxu0 %v322
      %344 = vmatprep.subr.bf16.mxu0 0
      %345 = vmatpush1.bf16.msra.mxu0 %v323
      %346 = vmatprep.subr.bf16.mxu0 0
      %347 = vmatpush1.bf16.msra.mxu0 %v324
      %348 = vmatprep.subr.bf16.mxu0 0
      %349 = vmatpush1.bf16.msra.mxu0 %v325
      %350 = vmatprep.subr.bf16.mxu0 0
      %351 = vmatpush1.bf16.msra.mxu0 0
      %352 = vmatprep.subr.bf16.mxu0 0
      %353 = vmatpush1.bf16.msra.mxu0 0
      %354 = vmatprep.subr.bf16.mxu0 0
      %355 = vmatpush1.bf16.msra.mxu0 0
      %356 = vmatprep.subr.bf16.mxu0 0
      %357 = vmatpush1.bf16.msra.mxu0 0
      %358 = vmatprep.subr.bf16.mxu0 0
      %359 = vmatpush1.bf16.msra.mxu0 0
      %360 = vmatprep.subr.bf16.mxu0 0
      %361 = vmatpush1.bf16.msra.mxu0 0
      %362 = vmatprep.subr.bf16.mxu0 0
      %363 = vmatpush1.bf16.msra.mxu0 0
      %364 = vmatprep.subr.bf16.mxu0 0
      %365 = vmatpush1.bf16.msra.mxu0 0
      %366 = vmatprep.mubr.bf16.mxu0 0
      %367 = vmatmul.mubr.bf16.gmra.mrb[0].mxu0 %v284
      %v368 = vpop.f32.mrb[0].mxu0
      %v369 = vadd.f32 0.0, %v368
      %v370 = vpop.f32.mrb[0].mxu0
      %v371 = vpop.f32.mrb[0].mxu0
      %v372 = vadd.f32 0.0, %v371
      %v373 = vpop.f32.mrb[0].mxu0
      %374 = vdwg.mxu0
      %377 = vrot.lane.b32.xlu0 %v369, 96
      %v378 = vpop.permute.xlu0 %377
      %379 = vrot.lane.b32.xlu0 %v372, 96
      %v380 = vpop.permute.xlu0 %379
      %383 = vrot.lane.b32.xlu0 %v369, 64
      %v384 = vpop.permute.xlu0 %383
      %385 = vrot.lane.b32.xlu0 %v372, 64
      %v386 = vpop.permute.xlu0 %385
      %389 = vrot.lane.b32.xlu0 %v369, 32
      %v390 = vpop.permute.xlu0 %389
      %391 = vrot.lane.b32.xlu0 %v372, 32
      %v392 = vpop.permute.xlu0 %391
      %v395 = vcombine.low %v369, %v384
      %v396 = vcombine.high %v369, %v384
      %v398 = vunpack.c.l.s4 1983009808
      %v399 = vunpack.c.0.s8 %v398
      %v400 = vlaneseq
      %v401 = vshrl.u32 %v400, 7
      %v402 = vsub.s32 %v399, %v401
      %v403 = vrot.slane %v395, %v402
      %v405 = vunpack.c.l.s4 1983009808
      %v406 = vunpack.c.0.s8 %v405
      %v407 = vlaneseq
      %v408 = vshrl.u32 %v407, 7
      %v409 = vsub.s32 %v406, %v408
      %v410 = vrot.slane %v396, %v409
      %v411 = vcombine.low %v378, %v390
      %v412 = vcombine.high %v378, %v390
      %v414 = vunpack.c.l.s4 1983009808
      %v415 = vunpack.c.0.s8 %v414
      %v416 = vlaneseq
      %v417 = vshrl.u32 %v416, 7
      %v418 = vsub.s32 %v415, %v417
      %v419 = vrot.slane %v411, %v418
      %v421 = vunpack.c.l.s4 1983009808
      %v422 = vunpack.c.0.s8 %v421
      %v423 = vlaneseq
      %v424 = vshrl.u32 %v423, 7
      %v425 = vsub.s32 %v422, %v424
      %v426 = vrot.slane %v412, %v425
      %v427 = vcombine.low %v403, %v419
      %v428 = vcombine.high %v403, %v419
      %v430 = vunpack.c.l.s4 1934713408
      %v431 = vunpack.c.0.s8 %v430
      %v432 = vlaneseq
      %v433 = vshrl.u32 %v432, 7
      %v434 = vsub.s32 %v431, %v433
      %v435 = vrot.slane %v427, %v434
      %v437 = vunpack.c.l.s4 1934713408
      %v438 = vunpack.c.0.s8 %v437
      %v439 = vlaneseq
      %v440 = vshrl.u32 %v439, 7
      %v441 = vsub.s32 %v438, %v440
      %v442 = vrot.slane %v428, %v441
      %v443 = vcombine.low %v410, %v426
      %v444 = vcombine.high %v410, %v426
      %v446 = vunpack.c.l.s4 1934713408
      %v447 = vunpack.c.0.s8 %v446
      %v448 = vlaneseq
      %v449 = vshrl.u32 %v448, 7
      %v450 = vsub.s32 %v447, %v449
      %v451 = vrot.slane %v443, %v450
      %v453 = vunpack.c.l.s4 1934713408
      %v454 = vunpack.c.0.s8 %v453
      %v455 = vlaneseq
      %v456 = vshrl.u32 %v455, 7
      %v457 = vsub.s32 %v454, %v456
      %v458 = vrot.slane %v444, %v457
      %v459 = vcombine.high %v435, 0.0
      %v460 = vcombine.high %v442, 0.0
      %v461 = vcombine.high %v451, 0.0
      %v462 = vcombine.high %v458, 0.0
      %v463 = vcombine.low %v372, %v386
      %v464 = vcombine.high %v372, %v386
      %v466 = vunpack.c.l.s4 1983009808
      %v467 = vunpack.c.0.s8 %v466
      %v468 = vlaneseq
      %v469 = vshrl.u32 %v468, 7
      %v470 = vsub.s32 %v467, %v469
      %v471 = vrot.slane %v463, %v470
      %v473 = vunpack.c.l.s4 1983009808
      %v474 = vunpack.c.0.s8 %v473
      %v475 = vlaneseq
      %v476 = vshrl.u32 %v475, 7
      %v477 = vsub.s32 %v474, %v476
      %v478 = vrot.slane %v464, %v477
      %v479 = vcombine.low %v380, %v392
      %v480 = vcombine.high %v380, %v392
      %v482 = vunpack.c.l.s4 1983009808
      %v483 = vunpack.c.0.s8 %v482
      %v484 = vlaneseq
      %v485 = vshrl.u32 %v484, 7
      %v486 = vsub.s32 %v483, %v485
      %v487 = vrot.slane %v479, %v486
      %v489 = vunpack.c.l.s4 1983009808
      %v490 = vunpack.c.0.s8 %v489
      %v491 = vlaneseq
      %v492 = vshrl.u32 %v491, 7
      %v493 = vsub.s32 %v490, %v492
      %v494 = vrot.slane %v480, %v493
      %v495 = vcombine.low %v471, %v487
      %v496 = vcombine.high %v471, %v487
      %v498 = vunpack.c.l.s4 1934713408
      %v499 = vunpack.c.0.s8 %v498
      %v500 = vlaneseq
      %v501 = vshrl.u32 %v500, 7
      %v502 = vsub.s32 %v499, %v501
      %v503 = vrot.slane %v495, %v502
      %v505 = vunpack.c.l.s4 1934713408
      %v506 = vunpack.c.0.s8 %v505
      %v507 = vlaneseq
      %v508 = vshrl.u32 %v507, 7
      %v509 = vsub.s32 %v506, %v508
      %v510 = vrot.slane %v496, %v509
      %v511 = vcombine.low %v478, %v494
      %v512 = vcombine.high %v478, %v494
      %v514 = vunpack.c.l.s4 1934713408
      %v515 = vunpack.c.0.s8 %v514
      %v516 = vlaneseq
      %v517 = vshrl.u32 %v516, 7
      %v518 = vsub.s32 %v515, %v517
      %v519 = vrot.slane %v511, %v518
      %v521 = vunpack.c.l.s4 1934713408
      %v522 = vunpack.c.0.s8 %v521
      %v523 = vlaneseq
      %v524 = vshrl.u32 %v523, 7
      %v525 = vsub.s32 %v522, %v524
      %v526 = vrot.slane %v512, %v525
      %v527 = vcombine.high %v503, 0.0
      %v528 = vcombine.high %v510, 0.0
      %v529 = vcombine.high %v519, 0.0
      %v530 = vcombine.high %v526, 0.0
      %v531 = vcombine.low %v435, %v442
      %v533 = vunpack.c.l.s4 1983009808
      %v534 = vunpack.c.0.s8 %v533
      %v535 = vlaneseq
      %v536 = vshrl.u32 %v535, 7
      %v537 = vsub.s32 %v534, %v536
      %v538 = vrot.slane %v531, %v537
      %v539 = vcombine.low %v459, %v460
      %v541 = vunpack.c.l.s4 1983009808
      %v542 = vunpack.c.0.s8 %v541
      %v543 = vlaneseq
      %v544 = vshrl.u32 %v543, 7
      %v545 = vsub.s32 %v542, %v544
      %v546 = vrot.slane %v539, %v545
      %v547 = vcombine.low %v451, %v458
      %v549 = vunpack.c.l.s4 1983009808
      %v550 = vunpack.c.0.s8 %v549
      %v551 = vlaneseq
      %v552 = vshrl.u32 %v551, 7
      %v553 = vsub.s32 %v550, %v552
      %v554 = vrot.slane %v547, %v553
      %v555 = vcombine.low %v461, %v462
      %v557 = vunpack.c.l.s4 1983009808
      %v558 = vunpack.c.0.s8 %v557
      %v559 = vlaneseq
      %v560 = vshrl.u32 %v559, 7
      %v561 = vsub.s32 %v558, %v560
      %v562 = vrot.slane %v555, %v561
      %v563 = vcombine.low %v538, %v546
      %v564 = vcombine.high %v538, %v546
      %v566 = vunpack.c.l.s4 1934713408
      %v567 = vunpack.c.0.s8 %v566
      %v568 = vlaneseq
      %v569 = vshrl.u32 %v568, 7
      %v570 = vsub.s32 %v567, %v569
      %v571 = vrot.slane %v563, %v570
      %v573 = vunpack.c.l.s4 1934713408
      %v574 = vunpack.c.0.s8 %v573
      %v575 = vlaneseq
      %v576 = vshrl.u32 %v575, 7
      %v577 = vsub.s32 %v574, %v576
      %v578 = vrot.slane %v564, %v577
      %v579 = vcombine.low %v554, %v562
      %v580 = vcombine.high %v554, %v562
      %v582 = vunpack.c.l.s4 1934713408
      %v583 = vunpack.c.0.s8 %v582
      %v584 = vlaneseq
      %v585 = vshrl.u32 %v584, 7
      %v586 = vsub.s32 %v583, %v585
      %v587 = vrot.slane %v579, %v586
      %v589 = vunpack.c.l.s4 1934713408
      %v590 = vunpack.c.0.s8 %v589
      %v591 = vlaneseq
      %v592 = vshrl.u32 %v591, 7
      %v593 = vsub.s32 %v590, %v592
      %v594 = vrot.slane %v580, %v593
      %v595 = vcombine.low %v571, %v587
      %v596 = vcombine.high %v571, %v587
      %v597 = vcombine.low %v578, %v594
      %v598 = vcombine.high %v578, %v594
      %v599 = vcombine.low %v503, %v510
      %v601 = vunpack.c.l.s4 1983009808
      %v602 = vunpack.c.0.s8 %v601
      %v603 = vlaneseq
      %v604 = vshrl.u32 %v603, 7
      %v605 = vsub.s32 %v602, %v604
      %v606 = vrot.slane %v599, %v605
      %v607 = vcombine.low %v527, %v528
      %v609 = vunpack.c.l.s4 1983009808
      %v610 = vunpack.c.0.s8 %v609
      %v611 = vlaneseq
      %v612 = vshrl.u32 %v611, 7
      %v613 = vsub.s32 %v610, %v612
      %v614 = vrot.slane %v607, %v613
      %v615 = vcombine.low %v519, %v526
      %v617 = vunpack.c.l.s4 1983009808
      %v618 = vunpack.c.0.s8 %v617
      %v619 = vlaneseq
      %v620 = vshrl.u32 %v619, 7
      %v621 = vsub.s32 %v618, %v620
      %v622 = vrot.slane %v615, %v621
      %v623 = vcombine.low %v529, %v530
      %v625 = vunpack.c.l.s4 1983009808
      %v626 = vunpack.c.0.s8 %v625
      %v627 = vlaneseq
      %v628 = vshrl.u32 %v627, 7
      %v629 = vsub.s32 %v626, %v628
      %v630 = vrot.slane %v623, %v629
      %v631 = vcombine.low %v606, %v614
      %v632 = vcombine.high %v606, %v614
      %v634 = vunpack.c.l.s4 1934713408
      %v635 = vunpack.c.0.s8 %v634
      %v636 = vlaneseq
      %v637 = vshrl.u32 %v636, 7
      %v638 = vsub.s32 %v635, %v637
      %v639 = vrot.slane %v631, %v638
      %v641 = vunpack.c.l.s4 1934713408
      %v642 = vunpack.c.0.s8 %v641
      %v643 = vlaneseq
      %v644 = vshrl.u32 %v643, 7
      %v645 = vsub.s32 %v642, %v644
      %v646 = vrot.slane %v632, %v645
      %v647 = vcombine.low %v622, %v630
      %v648 = vcombine.high %v622, %v630
      %v650 = vunpack.c.l.s4 1934713408
      %v651 = vunpack.c.0.s8 %v650
      %v652 = vlaneseq
      %v653 = vshrl.u32 %v652, 7
      %v654 = vsub.s32 %v651, %v653
      %v655 = vrot.slane %v647, %v654
      %v657 = vunpack.c.l.s4 1934713408
      %v658 = vunpack.c.0.s8 %v657
      %v659 = vlaneseq
      %v660 = vshrl.u32 %v659, 7
      %v661 = vsub.s32 %v658, %v660
      %v662 = vrot.slane %v648, %v661
      %v663 = vcombine.low %v639, %v655
      %v664 = vcombine.high %v639, %v655
      %v665 = vcombine.low %v646, %v662
      %v666 = vcombine.high %v646, %v662
      %v667 = vpack.c.bf16 %v663, %v595
      %v668 = vpack.c.bf16 %v664, %v596
      %v669 = vpack.c.bf16 %v665, %v597
      %v670 = vpack.c.bf16 %v666, %v598
      %v675 = vunpack.c.l.b16 %v667
      %v676 = vunpack.c.h.b16 %v667
      %v677 = vunpack.c.l.b16 %v668
      %v678 = vunpack.c.h.b16 %v668
      %v679 = vunpack.c.l.b16 %v669
      %v680 = vunpack.c.h.b16 %v669
      %v681 = vunpack.c.l.b16 %v670
      %v682 = vunpack.c.h.b16 %v670
      %v683 = vpack.c.b16 %v675, %v675
      %v684 = vpack.c.b16 %v676, %v676
      %v685 = vpack.c.b16 %v677, %v677
      %v686 = vpack.c.b16 %v678, %v678
      %v687 = vpack.c.b16 %v679, %v679
      %v688 = vpack.c.b16 %v680, %v680
      %v689 = vpack.c.b16 %v681, %v681
      %v690 = vpack.c.b16 %v682, %v682
      %vm699 = vcmask 257024
      %700 = vst.msk [vmem:[%s249] sm:$0xf] %vm699, %v683
      %701 = vst.msk [vmem:[%s249 + $0x4] sm:$0xf] %vm699, %v684
      %702 = vst.msk [vmem:[%s249 + $0x8] sm:$0xf] %vm699, %v685
      %703 = vst.msk [vmem:[%s249 + $0xc] sm:$0xf] %vm699, %v686
      %704 = vst.msk [vmem:[%s249 + $0x10] sm:$0xf] %vm699, %v687
      %705 = vst.msk [vmem:[%s249 + $0x14] sm:$0xf] %vm699, %v688
      %706 = vst.msk [vmem:[%s249 + $0x18] sm:$0xf] %vm699, %v689
      %707 = vst.msk [vmem:[%s249 + $0x1c] sm:$0xf] %vm699, %v690
      %v708 = vld [vmem:[%s2] sm:$0xf]
      %v709 = vld [vmem:[%s2 + $0x4] sm:$0xf]
      %v710 = vld [vmem:[%s2 + $0x8] sm:$0xf]
      %v711 = vld [vmem:[%s2 + $0xc] sm:$0xf]
      %v712 = vld [vmem:[%s2 + $0x10] sm:$0xf]
      %v713 = vld [vmem:[%s2 + $0x14] sm:$0xf]
      %v714 = vld [vmem:[%s2 + $0x18] sm:$0xf]
      %v715 = vld [vmem:[%s2 + $0x1c] sm:$0xf]
      %v716 = vld [vmem:[%s2 + $0x20] sm:$0xf]
      %v717 = vld [vmem:[%s2 + $0x24] sm:$0xf]
      %v718 = vld [vmem:[%s2 + $0x28] sm:$0xf]
      %v719 = vld [vmem:[%s2 + $0x2c] sm:$0xf]
      %v720 = vld [vmem:[%s2 + $0x30] sm:$0xf]
      %v721 = vld [vmem:[%s2 + $0x34] sm:$0xf]
      %v722 = vld [vmem:[%s2 + $0x38] sm:$0xf]
      %v723 = vld [vmem:[%s2 + $0x3c] sm:$0xf]
      %v740 = vunpack.c.l.b16 %v708
      %v741 = vunpack.c.l.b16 %v709
      %v742 = vunpack.c.l.b16 %v710
      %v743 = vunpack.c.l.b16 %v711
      %v744 = vunpack.c.l.b16 %v712
      %v745 = vunpack.c.l.b16 %v713
      %v746 = vunpack.c.l.b16 %v714
      %v747 = vunpack.c.l.b16 %v715
      %v748 = vunpack.c.l.b16 %v716
      %v749 = vunpack.c.l.b16 %v717
      %v750 = vunpack.c.l.b16 %v718
      %v751 = vunpack.c.l.b16 %v719
      %v752 = vunpack.c.l.b16 %v720
      %v753 = vunpack.c.l.b16 %v721
      %v754 = vunpack.c.l.b16 %v722
      %v755 = vunpack.c.l.b16 %v723
      %v756 = vpack.c.b16 %v741, %v740
      %v757 = vpack.c.b16 %v743, %v742
      %v758 = vpack.c.b16 %v745, %v744
      %v759 = vpack.c.b16 %v747, %v746
      %v760 = vpack.c.b16 %v749, %v748
      %v761 = vpack.c.b16 %v751, %v750
      %v762 = vpack.c.b16 %v753, %v752
      %v763 = vpack.c.b16 %v755, %v754
      %772 = vmatprep.subr.bf16.mxu0 0
      %773 = vmatpush1.bf16.msra.mxu0 %v756
      %774 = vmatprep.subr.bf16.mxu0 0
      %775 = vmatpush1.bf16.msra.mxu0 %v757
      %776 = vmatprep.subr.bf16.mxu0 0
      %777 = vmatpush1.bf16.msra.mxu0 %v758
      %778 = vmatprep.subr.bf16.mxu0 0
      %779 = vmatpush1.bf16.msra.mxu0 %v759
      %780 = vmatprep.subr.bf16.mxu0 0
      %781 = vmatpush1.bf16.msra.mxu0 %v760
      %782 = vmatprep.subr.bf16.mxu0 0
      %783 = vmatpush1.bf16.msra.mxu0 %v761
      %784 = vmatprep.subr.bf16.mxu0 0
      %785 = vmatpush1.bf16.msra.mxu0 %v762
      %786 = vmatprep.subr.bf16.mxu0 0
      %787 = vmatpush1.bf16.msra.mxu0 %v763
      %788 = vmatprep.subr.bf16.mxu0 0
      %789 = vmatpush1.bf16.msra.mxu0 0
      %790 = vmatprep.subr.bf16.mxu0 0
      %791 = vmatpush1.bf16.msra.mxu0 0
      %792 = vmatprep.subr.bf16.mxu0 0
      %793 = vmatpush1.bf16.msra.mxu0 0
      %794 = vmatprep.subr.bf16.mxu0 0
      %795 = vmatpush1.bf16.msra.mxu0 0
      %796 = vmatprep.subr.bf16.mxu0 0
      %797 = vmatpush1.bf16.msra.mxu0 0
      %798 = vmatprep.subr.bf16.mxu0 0
      %799 = vmatpush1.bf16.msra.mxu0 0
      %800 = vmatprep.subr.bf16.mxu0 0
      %801 = vmatpush1.bf16.msra.mxu0 0
      %802 = vmatprep.subr.bf16.mxu0 0
      %803 = vmatpush1.bf16.msra.mxu0 0
      %804 = vmatprep.mubr.bf16.mxu0 0
      %805 = vmatmul.mubr.bf16.gmra.mrb[0].mxu0 %v284
      %v806 = vpop.f32.mrb[0].mxu0
      %v807 = vadd.f32 0.0, %v806
      %v808 = vpop.f32.mrb[0].mxu0
      %v809 = vpop.f32.mrb[0].mxu0
      %v810 = vadd.f32 0.0, %v809
      %v811 = vpop.f32.mrb[0].mxu0
      %812 = vdwg.mxu0
      %815 = vrot.lane.b32.xlu0 %v807, 96
      %v816 = vpop.permute.xlu0 %815
      %817 = vrot.lane.b32.xlu0 %v810, 96
      %v818 = vpop.permute.xlu0 %817
      %821 = vrot.lane.b32.xlu0 %v807, 64
      %v822 = vpop.permute.xlu0 %821
      %823 = vrot.lane.b32.xlu0 %v810, 64
      %v824 = vpop.permute.xlu0 %823
      %827 = vrot.lane.b32.xlu0 %v807, 32
      %v828 = vpop.permute.xlu0 %827
      %829 = vrot.lane.b32.xlu0 %v810, 32
      %v830 = vpop.permute.xlu0 %829
      %v833 = vcombine.low %v807, %v822
      %v834 = vcombine.high %v807, %v822
      %v836 = vunpack.c.l.s4 1983009808
      %v837 = vunpack.c.0.s8 %v836
      %v838 = vlaneseq
      %v839 = vshrl.u32 %v838, 7
      %v840 = vsub.s32 %v837, %v839
      %v841 = vrot.slane %v833, %v840
      %v843 = vunpack.c.l.s4 1983009808
      %v844 = vunpack.c.0.s8 %v843
      %v845 = vlaneseq
      %v846 = vshrl.u32 %v845, 7
      %v847 = vsub.s32 %v844, %v846
      %v848 = vrot.slane %v834, %v847
      %v849 = vcombine.low %v816, %v828
      %v850 = vcombine.high %v816, %v828
      %v852 = vunpack.c.l.s4 1983009808
      %v853 = vunpack.c.0.s8 %v852
      %v854 = vlaneseq
      %v855 = vshrl.u32 %v854, 7
      %v856 = vsub.s32 %v853, %v855
      %v857 = vrot.slane %v849, %v856
      %v859 = vunpack.c.l.s4 1983009808
      %v860 = vunpack.c.0.s8 %v859
      %v861 = vlaneseq
      %v862 = vshrl.u32 %v861, 7
      %v863 = vsub.s32 %v860, %v862
      %v864 = vrot.slane %v850, %v863
      %v865 = vcombine.low %v841, %v857
      %v866 = vcombine.high %v841, %v857
      %v868 = vunpack.c.l.s4 1934713408
      %v869 = vunpack.c.0.s8 %v868
      %v870 = vlaneseq
      %v871 = vshrl.u32 %v870, 7
      %v872 = vsub.s32 %v869, %v871
      %v873 = vrot.slane %v865, %v872
      %v875 = vunpack.c.l.s4 1934713408
      %v876 = vunpack.c.0.s8 %v875
      %v877 = vlaneseq
      %v878 = vshrl.u32 %v877, 7
      %v879 = vsub.s32 %v876, %v878
      %v880 = vrot.slane %v866, %v879
      %v881 = vcombine.low %v848, %v864
      %v882 = vcombine.high %v848, %v864
      %v884 = vunpack.c.l.s4 1934713408
      %v885 = vunpack.c.0.s8 %v884
      %v886 = vlaneseq
      %v887 = vshrl.u32 %v886, 7
      %v888 = vsub.s32 %v885, %v887
      %v889 = vrot.slane %v881, %v888
      %v891 = vunpack.c.l.s4 1934713408
      %v892 = vunpack.c.0.s8 %v891
      %v893 = vlaneseq
      %v894 = vshrl.u32 %v893, 7
      %v895 = vsub.s32 %v892, %v894
      %v896 = vrot.slane %v882, %v895
      %v897 = vcombine.high %v873, 0.0
      %v898 = vcombine.high %v880, 0.0
      %v899 = vcombine.high %v889, 0.0
      %v900 = vcombine.high %v896, 0.0
      %v901 = vcombine.low %v810, %v824
      %v902 = vcombine.high %v810, %v824
      %v904 = vunpack.c.l.s4 1983009808
      %v905 = vunpack.c.0.s8 %v904
      %v906 = vlaneseq
      %v907 = vshrl.u32 %v906, 7
      %v908 = vsub.s32 %v905, %v907
      %v909 = vrot.slane %v901, %v908
      %v911 = vunpack.c.l.s4 1983009808
      %v912 = vunpack.c.0.s8 %v911
      %v913 = vlaneseq
      %v914 = vshrl.u32 %v913, 7
      %v915 = vsub.s32 %v912, %v914
      %v916 = vrot.slane %v902, %v915
      %v917 = vcombine.low %v818, %v830
      %v918 = vcombine.high %v818, %v830
      %v920 = vunpack.c.l.s4 1983009808
      %v921 = vunpack.c.0.s8 %v920
      %v922 = vlaneseq
      %v923 = vshrl.u32 %v922, 7
      %v924 = vsub.s32 %v921, %v923
      %v925 = vrot.slane %v917, %v924
      %v927 = vunpack.c.l.s4 1983009808
      %v928 = vunpack.c.0.s8 %v927
      %v929 = vlaneseq
      %v930 = vshrl.u32 %v929, 7
      %v931 = vsub.s32 %v928, %v930
      %v932 = vrot.slane %v918, %v931
      %v933 = vcombine.low %v909, %v925
      %v934 = vcombine.high %v909, %v925
      %v936 = vunpack.c.l.s4 1934713408
      %v937 = vunpack.c.0.s8 %v936
      %v938 = vlaneseq
      %v939 = vshrl.u32 %v938, 7
      %v940 = vsub.s32 %v937, %v939
      %v941 = vrot.slane %v933, %v940
      %v943 = vunpack.c.l.s4 1934713408
      %v944 = vunpack.c.0.s8 %v943
      %v945 = vlaneseq
      %v946 = vshrl.u32 %v945, 7
      %v947 = vsub.s32 %v944, %v946
      %v948 = vrot.slane %v934, %v947
      %v949 = vcombine.low %v916, %v932
      %v950 = vcombine.high %v916, %v932
      %v952 = vunpack.c.l.s4 1934713408
      %v953 = vunpack.c.0.s8 %v952
      %v954 = vlaneseq
      %v955 = vshrl.u32 %v954, 7
      %v956 = vsub.s32 %v953, %v955
      %v957 = vrot.slane %v949, %v956
      %v959 = vunpack.c.l.s4 1934713408
      %v960 = vunpack.c.0.s8 %v959
      %v961 = vlaneseq
      %v962 = vshrl.u32 %v961, 7
      %v963 = vsub.s32 %v960, %v962
      %v964 = vrot.slane %v950, %v963
      %v965 = vcombine.high %v941, 0.0
      %v966 = vcombine.high %v948, 0.0
      %v967 = vcombine.high %v957, 0.0
      %v968 = vcombine.high %v964, 0.0
      %v969 = vcombine.low %v873, %v880
      %v971 = vunpack.c.l.s4 1983009808
      %v972 = vunpack.c.0.s8 %v971
      %v973 = vlaneseq
      %v974 = vshrl.u32 %v973, 7
      %v975 = vsub.s32 %v972, %v974
      %v976 = vrot.slane %v969, %v975
      %v977 = vcombine.low %v897, %v898
      %v979 = vunpack.c.l.s4 1983009808
      %v980 = vunpack.c.0.s8 %v979
      %v981 = vlaneseq
      %v982 = vshrl.u32 %v981, 7
      %v983 = vsub.s32 %v980, %v982
      %v984 = vrot.slane %v977, %v983
      %v985 = vcombine.low %v889, %v896
      %v987 = vunpack.c.l.s4 1983009808
      %v988 = vunpack.c.0.s8 %v987
      %v989 = vlaneseq
      %v990 = vshrl.u32 %v989, 7
      %v991 = vsub.s32 %v988, %v990
      %v992 = vrot.slane %v985, %v991
      %v993 = vcombine.low %v899, %v900
      %v995 = vunpack.c.l.s4 1983009808
      %v996 = vunpack.c.0.s8 %v995
      %v997 = vlaneseq
      %v998 = vshrl.u32 %v997, 7
      %v999 = vsub.s32 %v996, %v998
      %v1000 = vrot.slane %v993, %v999
      %v1001 = vcombine.low %v976, %v984
      %v1002 = vcombine.high %v976, %v984
      %v1004 = vunpack.c.l.s4 1934713408
      %v1005 = vunpack.c.0.s8 %v1004
      %v1006 = vlaneseq
      %v1007 = vshrl.u32 %v1006, 7
      %v1008 = vsub.s32 %v1005, %v1007
      %v1009 = vrot.slane %v1001, %v1008
      %v1011 = vunpack.c.l.s4 1934713408
      %v1012 = vunpack.c.0.s8 %v1011
      %v1013 = vlaneseq
      %v1014 = vshrl.u32 %v1013, 7
      %v1015 = vsub.s32 %v1012, %v1014
      %v1016 = vrot.slane %v1002, %v1015
      %v1017 = vcombine.low %v992, %v1000
      %v1018 = vcombine.high %v992, %v1000
      %v1020 = vunpack.c.l.s4 1934713408
      %v1021 = vunpack.c.0.s8 %v1020
      %v1022 = vlaneseq
      %v1023 = vshrl.u32 %v1022, 7
      %v1024 = vsub.s32 %v1021, %v1023
      %v1025 = vrot.slane %v1017, %v1024
      %v1027 = vunpack.c.l.s4 1934713408
      %v1028 = vunpack.c.0.s8 %v1027
      %v1029 = vlaneseq
      %v1030 = vshrl.u32 %v1029, 7
      %v1031 = vsub.s32 %v1028, %v1030
      %v1032 = vrot.slane %v1018, %v1031
      %v1033 = vcombine.low %v1009, %v1025
      %v1034 = vcombine.high %v1009, %v1025
      %v1035 = vcombine.low %v1016, %v1032
      %v1036 = vcombine.high %v1016, %v1032
      %v1037 = vcombine.low %v941, %v948
      %v1039 = vunpack.c.l.s4 1983009808
      %v1040 = vunpack.c.0.s8 %v1039
      %v1041 = vlaneseq
      %v1042 = vshrl.u32 %v1041, 7
      %v1043 = vsub.s32 %v1040, %v1042
      %v1044 = vrot.slane %v1037, %v1043
      %v1045 = vcombine.low %v965, %v966
      %v1047 = vunpack.c.l.s4 1983009808
      %v1048 = vunpack.c.0.s8 %v1047
      %v1049 = vlaneseq
      %v1050 = vshrl.u32 %v1049, 7
      %v1051 = vsub.s32 %v1048, %v1050
      %v1052 = vrot.slane %v1045, %v1051
      %v1053 = vcombine.low %v957, %v964
      %v1055 = vunpack.c.l.s4 1983009808
      %v1056 = vunpack.c.0.s8 %v1055
      %v1057 = vlaneseq
      %v1058 = vshrl.u32 %v1057, 7
      %v1059 = vsub.s32 %v1056, %v1058
      %v1060 = vrot.slane %v1053, %v1059
      %v1061 = vcombine.low %v967, %v968
      %v1063 = vunpack.c.l.s4 1983009808
      %v1064 = vunpack.c.0.s8 %v1063
      %v1065 = vlaneseq
      %v1066 = vshrl.u32 %v1065, 7
      %v1067 = vsub.s32 %v1064, %v1066
      %v1068 = vrot.slane %v1061, %v1067
      %v1069 = vcombine.low %v1044, %v1052
      %v1070 = vcombine.high %v1044, %v1052
      %v1072 = vunpack.c.l.s4 1934713408
      %v1073 = vunpack.c.0.s8 %v1072
      %v1074 = vlaneseq
      %v1075 = vshrl.u32 %v1074, 7
      %v1076 = vsub.s32 %v1073, %v1075
      %v1077 = vrot.slane %v1069, %v1076
      %v1079 = vunpack.c.l.s4 1934713408
      %v1080 = vunpack.c.0.s8 %v1079
      %v1081 = vlaneseq
      %v1082 = vshrl.u32 %v1081, 7
      %v1083 = vsub.s32 %v1080, %v1082
      %v1084 = vrot.slane %v1070, %v1083
      %v1085 = vcombine.low %v1060, %v1068
      %v1086 = vcombine.high %v1060, %v1068
      %v1088 = vunpack.c.l.s4 1934713408
      %v1089 = vunpack.c.0.s8 %v1088
      %v1090 = vlaneseq
      %v1091 = vshrl.u32 %v1090, 7
      %v1092 = vsub.s32 %v1089, %v1091
      %v1093 = vrot.slane %v1085, %v1092
      %v1095 = vunpack.c.l.s4 1934713408
      %v1096 = vunpack.c.0.s8 %v1095
      %v1097 = vlaneseq
      %v1098 = vshrl.u32 %v1097, 7
      %v1099 = vsub.s32 %v1096, %v1098
      %v1100 = vrot.slane %v1086, %v1099
      %v1101 = vcombine.low %v1077, %v1093
      %v1102 = vcombine.high %v1077, %v1093
      %v1103 = vcombine.low %v1084, %v1100
      %v1104 = vcombine.high %v1084, %v1100
      %v1105 = vpack.c.bf16 %v1101, %v1033
      %v1106 = vpack.c.bf16 %v1102, %v1034
      %v1107 = vpack.c.bf16 %v1103, %v1035
      %v1108 = vpack.c.bf16 %v1104, %v1036
      %v1113 = vunpack.c.l.b16 %v1105
      %v1114 = vunpack.c.h.b16 %v1105
      %v1115 = vunpack.c.l.b16 %v1106
      %v1116 = vunpack.c.h.b16 %v1106
      %v1117 = vunpack.c.l.b16 %v1107
      %v1118 = vunpack.c.h.b16 %v1107
      %v1119 = vunpack.c.l.b16 %v1108
      %v1120 = vunpack.c.h.b16 %v1108
      %v1121 = vpack.c.b16 %v1113, %v1113
      %v1122 = vpack.c.b16 %v1114, %v1114
      %v1123 = vpack.c.b16 %v1115, %v1115
      %v1124 = vpack.c.b16 %v1116, %v1116
      %v1125 = vpack.c.b16 %v1117, %v1117
      %v1126 = vpack.c.b16 %v1118, %v1118
      %v1127 = vpack.c.b16 %v1119, %v1119
      %v1128 = vpack.c.b16 %v1120, %v1120
      %1137 = vst.msk [vmem:[%s259] sm:$0xf] %vm699, %v1121
      %1138 = vst.msk [vmem:[%s259 + $0x4] sm:$0xf] %vm699, %v1122
      %1139 = vst.msk [vmem:[%s259 + $0x8] sm:$0xf] %vm699, %v1123
      %1140 = vst.msk [vmem:[%s259 + $0xc] sm:$0xf] %vm699, %v1124
      %1141 = vst.msk [vmem:[%s259 + $0x10] sm:$0xf] %vm699, %v1125
      %1142 = vst.msk [vmem:[%s259 + $0x14] sm:$0xf] %vm699, %v1126
      %1143 = vst.msk [vmem:[%s259 + $0x18] sm:$0xf] %vm699, %v1127
      %1144 = vst.msk [vmem:[%s259 + $0x1c] sm:$0xf] %vm699, %v1128
      %s1145 = smul.u32 2, %s21
      %p1146 = scmp.lt.s32.totalorder %s20, 1
      %s1147 = scalar_select %p1146, %s20, 1
      %p1148 = scmp.lt.s32.totalorder %s1145, 1
      %s1149 = scalar_select %p1148, %s1145, 1
      %s1150 = smul.addr %s1147, 8
      %s1151 = sadd.s32 %s1149, %s1150
      %s1152 = smul.addr %s1151, 4
      %s1153 = scalar_lea.vmem %s3, %s1152
      %s1154 = smul.u32 2, %s21
      %p1155 = scmp.lt.s32.totalorder %s20, 1
      %s1156 = scalar_select %p1155, %s20, 1
      %p1157 = scmp.lt.s32.totalorder %s1154, 1
      %s1158 = scalar_select %p1157, %s1154, 1
      %s1159 = smul.addr %s1156, 8
      %s1160 = sadd.s32 %s1158, %s1159
      %s1161 = smul.addr %s1160, 4
      %s1162 = scalar_lea.vmem %s4, %s1161
      // Predicated region
      $region33: #{transformer_forward.28} parent=31 // pred_check
        %p1163 = pneg %p118
      $region34: #{transformer_forward.28} parent=31 // pred_check_branch
        %1165 = sbr.rel (%p1163) target = $region36
      $region35: #{transformer_forward.28} parent=31 // pred_region
        %s1166 = smul.u32 2, %s21
      $region36: #{transformer_forward.28} parent=31 // pred_fallthru
        _
      // Predicated region
      $region37: #{transformer_forward.28} parent=31 // pred_check
        %p1167 = pneg %p146
      $region38: #{transformer_forward.28} parent=31 // pred_check_branch
        %1169 = sbr.rel (%p1167) target = $region40
      $region39: #{transformer_forward.28} parent=31 // pred_region
        %s1170 = smul.u32 2, %s21
      $region40: #{transformer_forward.28} parent=31 // pred_fallthru
        _
    $region32: #{transformer_forward.28} parent=5 // pred_fallthru
      _
    %p1171 = scmp.le.s32.totalorder 2, %s11
    // Predicated region
    $region41: #{transformer_forward.28} parent=5 // pred_check
      %p1172 = pneg %p1171
    $region42: #{transformer_forward.28} parent=5 // pred_check_branch
      %1174 = sbr.rel (%p1172) target = $region44
    $region43: #{transformer_forward.28} parent=5 // pred_region
      %s1175 = ssub.s32 %s11, 2
      // Predicated region
      $region45: #{transformer_forward.28} parent=43 // pred_check
        %p1176 = pneg %p124
      $region46: #{transformer_forward.28} parent=43 // pred_check_branch
        %1178 = sbr.rel (%p1176) target = $region48
      $region47: #{transformer_forward.28} parent=43 // pred_region
        %s1179 = smul.u32 2, %s23
        %p1180 = scmp.lt.s32.totalorder %s22, 1
        %s1181 = scalar_select %p1180, %s22, 1
        %p1182 = scmp.lt.s32.totalorder %s1179, 1
        %s1183 = scalar_select %p1182, %s1179, 1
        %s1184 = smul.addr %s1181, 8
        %s1185 = sadd.s32 %s1183, %s1184
        %s1186 = smul.addr %s1185, 4
        %s1187 = scalar_lea.vmem %s3, %s1186
      $region48: #{transformer_forward.28} parent=43 // pred_fallthru
        _
      // Predicated region
      $region49: #{transformer_forward.28} parent=43 // pred_check
        %p1188 = pneg %p152
      $region50: #{transformer_forward.28} parent=43 // pred_check_branch
        %1190 = sbr.rel (%p1188) target = $region52
      $region51: #{transformer_forward.28} parent=43 // pred_region
        %s1191 = smul.u32 2, %s23
        %p1192 = scmp.lt.s32.totalorder %s22, 1
        %s1193 = scalar_select %p1192, %s22, 1
        %p1194 = scmp.lt.s32.totalorder %s1191, 1
        %s1195 = scalar_select %p1194, %s1191, 1
        %s1196 = smul.addr %s1193, 8
        %s1197 = sadd.s32 %s1195, %s1196
        %s1198 = smul.addr %s1197, 4
        %s1199 = scalar_lea.vmem %s4, %s1198
      $region52: #{transformer_forward.28} parent=43 // pred_fallthru
        _
    $region44: #{transformer_forward.28} parent=5 // pred_fallthru
      _
  $region6: #{transformer_forward.28} parent=0 // loop_footer
    %s15 = sadd.s32 1, %s11
  $region7: #{transformer_forward.28} parent=0 // loop_footer_branch
    %10 = sbr.rel target = $region3
  $region8: #{transformer_forward.28} parent=0 // loop_exit
    _

// kernel: transformer_forward.21
$region0: #{transformer_forward.21}
  #allocation0 [shape = 'u32[]', space=smem, size = 0x4, offset = 0x4, fixed_abs, tag = 'smem constant byte address 0x4 - core index']
  #allocation1 [shape = 'u32[144,128]{1,0:T(1,128)}', space=vmem, size = 0x12000, scoped, tag = 'internal scratch']
  %s0 = inlined_call_operand.vmem [shape: bf16[32,128], index: 0, kind: input, shape index: {}]
  %s1 = inlined_call_operand.vmem [shape: bf16[128,256], index: 1, kind: input, shape index: {}]
  %s2 = inlined_call_operand.vmem [shape: f32[1,256], index: 2, kind: input, shape index: {}]
  %s3 = inlined_call_operand.vmem [shape: bf16[256,128], index: 3, kind: input, shape index: {}]
  %s4 = inlined_call_operand.vmem [shape: f32[1,128], index: 4, kind: input, shape index: {}]
  %s5 = inlined_call_operand.vmem [shape: f32[1,128], index: 5, kind: input, shape index: {}]
  %s6 = inlined_call_operand.vmem [shape: f32[1,128], index: 6, kind: input, shape index: {}]
  %s7 = inlined_call_operand.vmem [shape: bf16[32,128], index: 7, kind: output, shape index: {}]
  %s8 = sld [smem:[#allocation0]]
  $region38: #{transformer_forward.21} parent=0
    _
  %s10 = ssub.s32 1, %s8
  %s11 = scalar_select 0, %s10, %s8
  // Predicated region
  $region2: #{transformer_forward.21} parent=0 // pred_check
    _
  $region3: #{transformer_forward.21} parent=0 // pred_check_branch
    %13 = sbr.rel (0) target = $region5
  $region4: #{transformer_forward.21} parent=0 // pred_region
    _
  $region5: #{transformer_forward.21} parent=0 // pred_fallthru
    _
  // Predicated region
  $region6: #{transformer_forward.21} parent=0 // pred_check
    _
  $region7: #{transformer_forward.21} parent=0 // pred_check_branch
    %15 = sbr.rel (0) target = $region9
  $region8: #{transformer_forward.21} parent=0 // pred_region
    _
  $region9: #{transformer_forward.21} parent=0 // pred_fallthru
    _
  // Predicated region
  $region10: #{transformer_forward.21} parent=0 // pred_check
    _
  $region11: #{transformer_forward.21} parent=0 // pred_check_branch
    %17 = sbr.rel (0) target = $region13
  $region12: #{transformer_forward.21} parent=0 // pred_region
    _
  $region13: #{transformer_forward.21} parent=0 // pred_fallthru
    _
  // Predicated region
  $region14: #{transformer_forward.21} parent=0 // pred_check
    _
  $region15: #{transformer_forward.21} parent=0 // pred_check_branch
    %19 = sbr.rel (0) target = $region17
  $region16: #{transformer_forward.21} parent=0 // pred_region
    _
  $region17: #{transformer_forward.21} parent=0 // pred_fallthru
    _
  // Predicated region
  $region18: #{transformer_forward.21} parent=0 // pred_check
    _
  $region19: #{transformer_forward.21} parent=0 // pred_check_branch
    %21 = sbr.rel (0) target = $region21
  $region20: #{transformer_forward.21} parent=0 // pred_region
    _
  $region21: #{transformer_forward.21} parent=0 // pred_fallthru
    _
  // Predicated region
  $region22: #{transformer_forward.21} parent=0 // pred_check
    _
  $region23: #{transformer_forward.21} parent=0 // pred_check_branch
    %23 = sbr.rel (0) target = $region25
  $region24: #{transformer_forward.21} parent=0 // pred_region
    _
  $region25: #{transformer_forward.21} parent=0 // pred_fallthru
    _
  // Predicated region
  $region26: #{transformer_forward.21} parent=0 // pred_check
    _
  $region27: #{transformer_forward.21} parent=0 // pred_check_branch
    %25 = sbr.rel (0) target = $region29
  $region28: #{transformer_forward.21} parent=0 // pred_region
    _
  $region29: #{transformer_forward.21} parent=0 // pred_fallthru
    _
  %v27 = vld [vmem:[%s0] sm:$0xf]
  %v28 = vld [vmem:[%s0 + $0x4] sm:$0xf]
  %v29 = vld [vmem:[%s0 + $0x8] sm:$0xf]
  %v30 = vld [vmem:[%s0 + $0xc] sm:$0xf]
  %v31 = vld [vmem:[%s1] sm:$0xff]
  %v32 = vld [vmem:[%s1 + $0x8] sm:$0xff]
  %v33 = vld [vmem:[%s1 + $0x10] sm:$0xff]
  %v34 = vld [vmem:[%s1 + $0x18] sm:$0xff]
  %v35 = vld [vmem:[%s1 + $0x20] sm:$0xff]
  %v36 = vld [vmem:[%s1 + $0x28] sm:$0xff]
  %v37 = vld [vmem:[%s1 + $0x30] sm:$0xff]
  %v38 = vld [vmem:[%s1 + $0x38] sm:$0xff]
  %v39 = vld [vmem:[%s1 + $0x40] sm:$0xff]
  %v40 = vld [vmem:[%s1 + $0x48] sm:$0xff]
  %v41 = vld [vmem:[%s1 + $0x50] sm:$0xff]
  %v42 = vld [vmem:[%s1 + $0x58] sm:$0xff]
  %v43 = vld [vmem:[%s1 + $0x60] sm:$0xff]
  %v44 = vld [vmem:[%s1 + $0x68] sm:$0xff]
  %v45 = vld [vmem:[%s1 + $0x70] sm:$0xff]
  %v46 = vld [vmem:[%s1 + $0x78] sm:$0xff]
  %v47 = vld [vmem:[%s2] sm:$0x3]
  %v49 = vlaneseq
  %v50 = vshrl.u32 %v49, 7
  %v51 = vsub.s32 0, %v50
  %v52 = vrot.slane %v47, %v51
  %v53 = vlaneseq
  %v54 = vshrl.u32 %v53, 7
  %v55 = vsub.s32 1, %v54
  %v56 = vrot.slane %v47, %v55
  %v63 = vunpack.c.l.b16 %v27
  %v64 = vunpack.c.l.b16 %v28
  %v65 = vunpack.c.l.b16 %v29
  %v66 = vunpack.c.l.b16 %v30
  %v67 = vpack.c.b16 %v64, %v63
  %v68 = vpack.c.b16 %v66, %v65
  %v87 = vunpack.c.l.b16 %v31
  %v88 = vunpack.c.h.b16 %v31
  %v89 = vunpack.c.l.b16 %v32
  %v90 = vunpack.c.h.b16 %v32
  %v91 = vunpack.c.l.b16 %v33
  %v92 = vunpack.c.h.b16 %v33
  %v93 = vunpack.c.l.b16 %v34
  %v94 = vunpack.c.h.b16 %v34
  %v95 = vunpack.c.l.b16 %v35
  %v96 = vunpack.c.h.b16 %v35
  %v97 = vunpack.c.l.b16 %v36
  %v98 = vunpack.c.h.b16 %v36
  %v99 = vunpack.c.l.b16 %v37
  %v100 = vunpack.c.h.b16 %v37
  %v101 = vunpack.c.l.b16 %v38
  %v102 = vunpack.c.h.b16 %v38
  %v103 = vunpack.c.l.b16 %v39
  %v104 = vunpack.c.h.b16 %v39
  %v105 = vunpack.c.l.b16 %v40
  %v106 = vunpack.c.h.b16 %v40
  %v107 = vunpack.c.l.b16 %v41
  %v108 = vunpack.c.h.b16 %v41
  %v109 = vunpack.c.l.b16 %v42
  %v110 = vunpack.c.h.b16 %v42
  %v111 = vunpack.c.l.b16 %v43
  %v112 = vunpack.c.h.b16 %v43
  %v113 = vunpack.c.l.b16 %v44
  %v114 = vunpack.c.h.b16 %v44
  %v115 = vunpack.c.l.b16 %v45
  %v116 = vunpack.c.h.b16 %v45
  %v117 = vunpack.c.l.b16 %v46
  %v118 = vunpack.c.h.b16 %v46
  %v119 = vpack.c.b16 %v89, %v87
  %v120 = vpack.c.b16 %v90, %v88
  %v121 = vpack.c.b16 %v93, %v91
  %v122 = vpack.c.b16 %v94, %v92
  %v123 = vpack.c.b16 %v97, %v95
  %v124 = vpack.c.b16 %v98, %v96
  %v125 = vpack.c.b16 %v101, %v99
  %v126 = vpack.c.b16 %v102, %v100
  %v127 = vpack.c.b16 %v105, %v103
  %v128 = vpack.c.b16 %v106, %v104
  %v129 = vpack.c.b16 %v109, %v107
  %v130 = vpack.c.b16 %v110, %v108
  %v131 = vpack.c.b16 %v113, %v111
  %v132 = vpack.c.b16 %v114, %v112
  %v133 = vpack.c.b16 %v117, %v115
  %v134 = vpack.c.b16 %v118, %v116
  %151 = vmatprep.subr.bf16.mxu0 %v120
  %152 = vmatpush1.bf16.msra.mxu0 %v119
  %153 = vmatprep.subr.bf16.mxu0 %v122
  %154 = vmatpush1.bf16.msra.mxu0 %v121
  %155 = vmatprep.subr.bf16.mxu0 %v124
  %156 = vmatpush1.bf16.msra.mxu0 %v123
  %157 = vmatprep.subr.bf16.mxu0 %v126
  %158 = vmatpush1.bf16.msra.mxu0 %v125
  %159 = vmatprep.subr.bf16.mxu0 %v128
  %160 = vmatpush1.bf16.msra.mxu0 %v127
  %161 = vmatprep.subr.bf16.mxu0 %v130
  %162 = vmatpush1.bf16.msra.mxu0 %v129
  %163 = vmatprep.subr.bf16.mxu0 %v132
  %164 = vmatpush1.bf16.msra.mxu0 %v131
  %165 = vmatprep.subr.bf16.mxu0 %v134
  %166 = vmatpush1.bf16.msra.mxu0 %v133
  %167 = vmatprep.subr.bf16.mxu0 0
  %168 = vmatpush1.bf16.msra.mxu0 0
  %169 = vmatprep.subr.bf16.mxu0 0
  %170 = vmatpush1.bf16.msra.mxu0 0
  %171 = vmatprep.subr.bf16.mxu0 0
  %172 = vmatpush1.bf16.msra.mxu0 0
  %173 = vmatprep.subr.bf16.mxu0 0
  %174 = vmatpush1.bf16.msra.mxu0 0
  %175 = vmatprep.subr.bf16.mxu0 0
  %176 = vmatpush1.bf16.msra.mxu0 0
  %177 = vmatprep.subr.bf16.mxu0 0
  %178 = vmatpush1.bf16.msra.mxu0 0
  %179 = vmatprep.subr.bf16.mxu0 0
  %180 = vmatpush1.bf16.msra.mxu0 0
  %181 = vmatprep.subr.bf16.mxu0 0
  %182 = vmatpush1.bf16.msra.mxu0 0
  %183 = vmatprep.mubr.bf16.mxu0 0
  %184 = vmatmul.mubr.bf16.gmra.mrb[0].mxu0 %v67
  %v185 = vpop.f32.mrb[0].mxu0
  %v186 = vadd.f32 %v52, %v185
  %v187 = vpop.f32.mrb[0].mxu0
  %v188 = vadd.f32 %v56, %v187
  %v189 = vpop.f32.mrb[0].mxu0
  %v190 = vadd.f32 %v52, %v189
  %v191 = vpop.f32.mrb[0].mxu0
  %v192 = vadd.f32 %v56, %v191
  %193 = vmatprep.mubr.bf16.mxu0 0
  %194 = vmatmul.mubr.bf16.gmra.mrb[0].mxu0 %v68
  %v195 = vpop.f32.mrb[0].mxu0
  %v196 = vadd.f32 %v52, %v195
  %v197 = vpop.f32.mrb[0].mxu0
  %v198 = vadd.f32 %v56, %v197
  %v199 = vpop.f32.mrb[0].mxu0
  %v200 = vadd.f32 %v52, %v199
  %v201 = vpop.f32.mrb[0].mxu0
  %v202 = vadd.f32 %v56, %v201
  %203 = vdwg.mxu0
  %v204 = vmax.f32 %v186, 0.0
  %v205 = vmax.f32 %v188, 0.0
  %v206 = vmax.f32 %v190, 0.0
  %v207 = vmax.f32 %v192, 0.0
  %v208 = vmax.f32 %v196, 0.0
  %v209 = vmax.f32 %v198, 0.0
  %v210 = vmax.f32 %v200, 0.0
  %v211 = vmax.f32 %v202, 0.0
  %v212 = vpack.c.bf16 %v206, %v204
  %v213 = vpack.c.bf16 %v207, %v205
  %v214 = vpack.c.bf16 %v210, %v208
  %v215 = vpack.c.bf16 %v211, %v209
  %v216 = vld [vmem:[%s3] sm:$0xf]
  %v217 = vld [vmem:[%s3 + $0x4] sm:$0xf]
  %v218 = vld [vmem:[%s3 + $0x8] sm:$0xf]
  %v219 = vld [vmem:[%s3 + $0xc] sm:$0xf]
  %v220 = vld [vmem:[%s3 + $0x10] sm:$0xf]
  %v221 = vld [vmem:[%s3 + $0x14] sm:$0xf]
  %v222 = vld [vmem:[%s3 + $0x18] sm:$0xf]
  %v223 = vld [vmem:[%s3 + $0x1c] sm:$0xf]
  %v224 = vld [vmem:[%s3 + $0x20] sm:$0xf]
  %v225 = vld [vmem:[%s3 + $0x24] sm:$0xf]
  %v226 = vld [vmem:[%s3 + $0x28] sm:$0xf]
  %v227 = vld [vmem:[%s3 + $0x2c] sm:$0xf]
  %v228 = vld [vmem:[%s3 + $0x30] sm:$0xf]
  %v229 = vld [vmem:[%s3 + $0x34] sm:$0xf]
  %v230 = vld [vmem:[%s3 + $0x38] sm:$0xf]
  %v231 = vld [vmem:[%s3 + $0x3c] sm:$0xf]
  %v232 = vld [vmem:[%s3 + $0x40] sm:$0xf]
  %v233 = vld [vmem:[%s3 + $0x44] sm:$0xf]
  %v234 = vld [vmem:[%s3 + $0x48] sm:$0xf]
  %v235 = vld [vmem:[%s3 + $0x4c] sm:$0xf]
  %v236 = vld [vmem:[%s3 + $0x50] sm:$0xf]
  %v237 = vld [vmem:[%s3 + $0x54] sm:$0xf]
  %v238 = vld [vmem:[%s3 + $0x58] sm:$0xf]
  %v239 = vld [vmem:[%s3 + $0x5c] sm:$0xf]
  %v240 = vld [vmem:[%s3 + $0x60] sm:$0xf]
  %v241 = vld [vmem:[%s3 + $0x64] sm:$0xf]
  %v242 = vld [vmem:[%s3 + $0x68] sm:$0xf]
  %v243 = vld [vmem:[%s3 + $0x6c] sm:$0xf]
  %v244 = vld [vmem:[%s3 + $0x70] sm:$0xf]
  %v245 = vld [vmem:[%s3 + $0x74] sm:$0xf]
  %v246 = vld [vmem:[%s3 + $0x78] sm:$0xf]
  %v247 = vld [vmem:[%s3 + $0x7c] sm:$0xf]
  %v248 = vld [vmem:[%s4] sm:$0x1]
  %v250 = vlaneseq
  %v251 = vshrl.u32 %v250, 7
  %v252 = vsub.s32 0, %v251
  %v253 = vrot.slane %v248, %v252
  %v287 = vunpack.c.l.b16 %v216
  %v288 = vunpack.c.l.b16 %v217
  %v289 = vunpack.c.l.b16 %v218
  %v290 = vunpack.c.l.b16 %v219
  %v291 = vunpack.c.l.b16 %v220
  %v292 = vunpack.c.l.b16 %v221
  %v293 = vunpack.c.l.b16 %v222
  %v294 = vunpack.c.l.b16 %v223
  %v295 = vunpack.c.l.b16 %v224
  %v296 = vunpack.c.l.b16 %v225
  %v297 = vunpack.c.l.b16 %v226
  %v298 = vunpack.c.l.b16 %v227
  %v299 = vunpack.c.l.b16 %v228
  %v300 = vunpack.c.l.b16 %v229
  %v301 = vunpack.c.l.b16 %v230
  %v302 = vunpack.c.l.b16 %v231
  %v303 = vunpack.c.l.b16 %v232
  %v304 = vunpack.c.l.b16 %v233
  %v305 = vunpack.c.l.b16 %v234
  %v306 = vunpack.c.l.b16 %v235
  %v307 = vunpack.c.l.b16 %v236
  %v308 = vunpack.c.l.b16 %v237
  %v309 = vunpack.c.l.b16 %v238
  %v310 = vunpack.c.l.b16 %v239
  %v311 = vunpack.c.l.b16 %v240
  %v312 = vunpack.c.l.b16 %v241
  %v313 = vunpack.c.l.b16 %v242
  %v314 = vunpack.c.l.b16 %v243
  %v315 = vunpack.c.l.b16 %v244
  %v316 = vunpack.c.l.b16 %v245
  %v317 = vunpack.c.l.b16 %v246
  %v318 = vunpack.c.l.b16 %v247
  %v319 = vpack.c.b16 %v288, %v287
  %v320 = vpack.c.b16 %v290, %v289
  %v321 = vpack.c.b16 %v292, %v291
  %v322 = vpack.c.b16 %v294, %v293
  %v323 = vpack.c.b16 %v296, %v295
  %v324 = vpack.c.b16 %v298, %v297
  %v325 = vpack.c.b16 %v300, %v299
  %v326 = vpack.c.b16 %v302, %v301
  %v327 = vpack.c.b16 %v304, %v303
  %v328 = vpack.c.b16 %v306, %v305
  %v329 = vpack.c.b16 %v308, %v307
  %v330 = vpack.c.b16 %v310, %v309
  %v331 = vpack.c.b16 %v312, %v311
  %v332 = vpack.c.b16 %v314, %v313
  %v333 = vpack.c.b16 %v316, %v315
  %v334 = vpack.c.b16 %v318, %v317
  %351 = vmatprep.subr.bf16.mxu0 0
  %352 = vmatpush1.bf16.msra.mxu0 %v319
  %353 = vmatprep.subr.bf16.mxu0 0
  %354 = vmatpush1.bf16.msra.mxu0 %v320
  %355 = vmatprep.subr.bf16.mxu0 0
  %356 = vmatpush1.bf16.msra.mxu0 %v321
  %357 = vmatprep.subr.bf16.mxu0 0
  %358 = vmatpush1.bf16.msra.mxu0 %v322
  %359 = vmatprep.subr.bf16.mxu0 0
  %360 = vmatpush1.bf16.msra.mxu0 %v323
  %361 = vmatprep.subr.bf16.mxu0 0
  %362 = vmatpush1.bf16.msra.mxu0 %v324
  %363 = vmatprep.subr.bf16.mxu0 0
  %364 = vmatpush1.bf16.msra.mxu0 %v325
  %365 = vmatprep.subr.bf16.mxu0 0
  %366 = vmatpush1.bf16.msra.mxu0 %v326
  %367 = vmatprep.subr.bf16.mxu0 0
  %368 = vmatpush1.bf16.msra.mxu0 %v327
  %369 = vmatprep.subr.bf16.mxu0 0
  %370 = vmatpush1.bf16.msra.mxu0 %v328
  %371 = vmatprep.subr.bf16.mxu0 0
  %372 = vmatpush1.bf16.msra.mxu0 %v329
  %373 = vmatprep.subr.bf16.mxu0 0
  %374 = vmatpush1.bf16.msra.mxu0 %v330
  %375 = vmatprep.subr.bf16.mxu0 0
  %376 = vmatpush1.bf16.msra.mxu0 %v331
  %377 = vmatprep.subr.bf16.mxu0 0
  %378 = vmatpush1.bf16.msra.mxu0 %v332
  %379 = vmatprep.subr.bf16.mxu0 0
  %380 = vmatpush1.bf16.msra.mxu0 %v333
  %381 = vmatprep.subr.bf16.mxu0 0
  %382 = vmatpush1.bf16.msra.mxu0 %v334
  %383 = vmatprep.mubr.bf16.mxu0 %v213
  %384 = vmatmul.mubr.bf16.gmra.mrb[0].mxu0 %v212
  %v385 = vpop.f32.mrb[0].mxu0
  %v386 = vadd.f32 %v253, %v385
  %v387 = vpop.f32.mrb[0].mxu0
  %v388 = vpop.f32.mrb[0].mxu0
  %v389 = vadd.f32 %v253, %v388
  %v390 = vpop.f32.mrb[0].mxu0
  %391 = vmatprep.mubr.bf16.mxu0 %v215
  %392 = vmatmul.mubr.bf16.gmra.mrb[0].mxu0 %v214
  %v393 = vpop.f32.mrb[0].mxu0
  %v394 = vadd.f32 %v253, %v393
  %v395 = vpop.f32.mrb[0].mxu0
  %v396 = vpop.f32.mrb[0].mxu0
  %v397 = vadd.f32 %v253, %v396
  %v398 = vpop.f32.mrb[0].mxu0
  %399 = vdwg.mxu0
  %v400 = vunpack.c.l.bf16 %v27
  %v401 = vunpack.c.l.bf16 %v28
  %v402 = vunpack.c.l.bf16 %v29
  %v403 = vunpack.c.l.bf16 %v30
  %v404 = vadd.f32 %v386, %v400
  %v405 = vadd.f32 %v389, %v401
  %v406 = vadd.f32 %v394, %v402
  %v407 = vadd.f32 %v397, %v403
  %408 = vadd.xlane.f32.xlu0 %v404
  %v409 = vpop.xlane.xlu0 %408
  %410 = vadd.xlane.f32.xlu0 %v405
  %v411 = vpop.xlane.xlu0 %410
  %412 = vadd.xlane.f32.xlu0 %v406
  %v413 = vpop.xlane.xlu0 %412
  %414 = vadd.xlane.f32.xlu0 %v407
  %v415 = vpop.xlane.xlu0 %414
  %v416 = vrcp.pop 128.0
  %v417 = vmul.f32 %v409, %v416
  %v418 = vmul.f32 %v411, %v416
  %v419 = vmul.f32 %v413, %v416
  %v420 = vmul.f32 %v415, %v416
  %v421 = vsub.f32 %v404, %v417
  %v422 = vsub.f32 %v405, %v418
  %v423 = vsub.f32 %v406, %v419
  %v424 = vsub.f32 %v407, %v420
  %v425 = vmul.f32 %v421, %v421
  %v426 = vmul.f32 %v422, %v422
  %v427 = vmul.f32 %v423, %v423
  %v428 = vmul.f32 %v424, %v424
  %429 = vadd.xlane.f32.xlu0 %v425
  %v430 = vpop.xlane.xlu0 %429
  %431 = vadd.xlane.f32.xlu0 %v426
  %v432 = vpop.xlane.xlu0 %431
  %433 = vadd.xlane.f32.xlu0 %v427
  %v434 = vpop.xlane.xlu0 %433
  %435 = vadd.xlane.f32.xlu0 %v428
  %v436 = vpop.xlane.xlu0 %435
  %v437 = vmul.f32 %v430, %v416
  %v438 = vmul.f32 %v432, %v416
  %v439 = vmul.f32 %v434, %v416
  %v440 = vmul.f32 %v436, %v416
  %v441 = vadd.f32 %v437, 1e-05
  %v442 = vadd.f32 %v438, 1e-05
  %v443 = vadd.f32 %v439, 1e-05
  %v444 = vadd.f32 %v440, 1e-05
  %v445 = vrsqrt.pop %v441
  %v446 = vrsqrt.pop %v442
  %v447 = vrsqrt.pop %v443
  %v448 = vrsqrt.pop %v444
  %v449 = vmul.f32 %v421, %v445
  %v450 = vmul.f32 %v422, %v446
  %v451 = vmul.f32 %v423, %v447
  %v452 = vmul.f32 %v424, %v448
  %v453 = vld [vmem:[%s5] sm:$0x1]
  %v455 = vlaneseq
  %v456 = vshrl.u32 %v455, 7
  %v457 = vsub.s32 0, %v456
  %v458 = vrot.slane %v453, %v457
  %v460 = vmul.f32 %v449, %v458
  %v461 = vmul.f32 %v450, %v458
  %v462 = vmul.f32 %v451, %v458
  %v463 = vmul.f32 %v452, %v458
  %v464 = vld [vmem:[%s6] sm:$0x1]
  %v466 = vlaneseq
  %v467 = vshrl.u32 %v466, 7
  %v468 = vsub.s32 0, %v467
  %v469 = vrot.slane %v464, %v468
  %v471 = vadd.f32 %v460, %v469
  %v472 = vadd.f32 %v461, %v469
  %v473 = vadd.f32 %v462, %v469
  %v474 = vadd.f32 %v463, %v469
  %v475 = vpack.c.bf16 %v472, %v471
  %v476 = vpack.c.bf16 %v474, %v473
  %v479 = vunpack.c.l.b16 %v475
  %v480 = vunpack.c.h.b16 %v475
  %v481 = vunpack.c.l.b16 %v476
  %v482 = vunpack.c.h.b16 %v476
  %v483 = vpack.c.b16 %v479, %v479
  %v484 = vpack.c.b16 %v480, %v480
  %v485 = vpack.c.b16 %v481, %v481
  %v486 = vpack.c.b16 %v482, %v482
  %491 = vst [vmem:[%s7] sm:$0xf] %v483
  %492 = vst [vmem:[%s7 + $0x4] sm:$0xf] %v484
  %493 = vst [vmem:[%s7 + $0x8] sm:$0xf] %v485
  %494 = vst [vmem:[%s7 + $0xc] sm:$0xf] %v486
  // Predicated region
  $region30: #{transformer_forward.21} parent=0 // pred_check
    _
  $region31: #{transformer_forward.21} parent=0 // pred_check_branch
    %496 = sbr.rel (0) target = $region33
  $region32: #{transformer_forward.21} parent=0 // pred_region
    _
  $region33: #{transformer_forward.21} parent=0 // pred_fallthru
    _
  // Predicated region
  $region34: #{transformer_forward.21} parent=0 // pred_check
    _
  $region35: #{transformer_forward.21} parent=0 // pred_check_branch
    %498 = sbr.rel (0) target = $region37
  $region36: #{transformer_forward.21} parent=0 // pred_region
    _
  $region37: #{transformer_forward.21} parent=0 // pred_fallthru
    _

// kernel: transformer_forward.37
$region0: #{transformer_forward.37}
  #allocation0 [shape = 'u32[]', space=smem, size = 0x4, offset = 0x4, fixed_abs, tag = 'smem constant byte address 0x4 - core index']
  #allocation1 [shape = 'u32[144,128]{1,0:T(1,128)}', space=vmem, size = 0x12000, scoped, tag = 'internal scratch']
  %s0 = inlined_call_operand.vmem [shape: bf16[32,128], index: 0, kind: input, shape index: {}]
  %s1 = inlined_call_operand.vmem [shape: bf16[128,256], index: 1, kind: input, shape index: {}]
  %s2 = inlined_call_operand.vmem [shape: f32[1,256], index: 2, kind: input, shape index: {}]
  %s3 = inlined_call_operand.hbm [shape: f32[32,256], index: 3, kind: output, shape index: {}]
  %s4 = sld [smem:[#allocation0]]
  $region22: #{transformer_forward.37} parent=0
    _
  %s6 = ssub.s32 1, %s4
  %s7 = scalar_select 0, %s6, %s4
  $region1: #{transformer_forward.37} parent=0
    #allocation2 [shape = 'u8[32768]{0}', space=vmem, size = 0x8000, scoped, tag = 'output window, operand 0, single buffered']
    #allocation3 [shape = 's32[1]{0}', space=sflag, size = 0x4, scoped, tag = 'scoped memory for transformer_forward.37']
    %8 = vsyncpa [#allocation3], 0
    // Predicated region
    $region2: #{transformer_forward.37} parent=1 // pred_check
      _
    $region3: #{transformer_forward.37} parent=1 // pred_check_branch
      %10 = sbr.rel (0) target = $region5
    $region4: #{transformer_forward.37} parent=1 // pred_region
      _
    $region5: #{transformer_forward.37} parent=1 // pred_fallthru
      _
    // Predicated region
    $region6: #{transformer_forward.37} parent=1 // pred_check
      _
    $region7: #{transformer_forward.37} parent=1 // pred_check_branch
      %12 = sbr.rel (0) target = $region9
    $region8: #{transformer_forward.37} parent=1 // pred_region
      _
    $region9: #{transformer_forward.37} parent=1 // pred_fallthru
      _
    // Predicated region
    $region10: #{transformer_forward.37} parent=1 // pred_check
      _
    $region11: #{transformer_forward.37} parent=1 // pred_check_branch
      %14 = sbr.rel (0) target = $region13
    $region12: #{transformer_forward.37} parent=1 // pred_region
      _
    $region13: #{transformer_forward.37} parent=1 // pred_fallthru
      _
    %v16 = vld [vmem:[%s0] sm:$0xf]
    %v17 = vld [vmem:[%s0 + $0x4] sm:$0xf]
    %v18 = vld [vmem:[%s0 + $0x8] sm:$0xf]
    %v19 = vld [vmem:[%s0 + $0xc] sm:$0xf]
    %v20 = vld [vmem:[%s1] sm:$0xff]
    %v21 = vld [vmem:[%s1 + $0x8] sm:$0xff]
    %v22 = vld [vmem:[%s1 + $0x10] sm:$0xff]
    %v23 = vld [vmem:[%s1 + $0x18] sm:$0xff]
    %v24 = vld [vmem:[%s1 + $0x20] sm:$0xff]
    %v25 = vld [vmem:[%s1 + $0x28] sm:$0xff]
    %v26 = vld [vmem:[%s1 + $0x30] sm:$0xff]
    %v27 = vld [vmem:[%s1 + $0x38] sm:$0xff]
    %v28 = vld [vmem:[%s1 + $0x40] sm:$0xff]
    %v29 = vld [vmem:[%s1 + $0x48] sm:$0xff]
    %v30 = vld [vmem:[%s1 + $0x50] sm:$0xff]
    %v31 = vld [vmem:[%s1 + $0x58] sm:$0xff]
    %v32 = vld [vmem:[%s1 + $0x60] sm:$0xff]
    %v33 = vld [vmem:[%s1 + $0x68] sm:$0xff]
    %v34 = vld [vmem:[%s1 + $0x70] sm:$0xff]
    %v35 = vld [vmem:[%s1 + $0x78] sm:$0xff]
    %v36 = vld [vmem:[%s2] sm:$0x3]
    %v38 = vlaneseq
    %v39 = vshrl.u32 %v38, 7
    %v40 = vsub.s32 0, %v39
    %v41 = vrot.slane %v36, %v40
    %v42 = vlaneseq
    %v43 = vshrl.u32 %v42, 7
    %v44 = vsub.s32 1, %v43
    %v45 = vrot.slane %v36, %v44
    %v52 = vunpack.c.l.b16 %v16
    %v53 = vunpack.c.l.b16 %v17
    %v54 = vunpack.c.l.b16 %v18
    %v55 = vunpack.c.l.b16 %v19
    %v56 = vpack.c.b16 %v53, %v52
    %v57 = vpack.c.b16 %v55, %v54
    %v76 = vunpack.c.l.b16 %v20
    %v77 = vunpack.c.h.b16 %v20
    %v78 = vunpack.c.l.b16 %v21
    %v79 = vunpack.c.h.b16 %v21
    %v80 = vunpack.c.l.b16 %v22
    %v81 = vunpack.c.h.b16 %v22
    %v82 = vunpack.c.l.b16 %v23
    %v83 = vunpack.c.h.b16 %v23
    %v84 = vunpack.c.l.b16 %v24
    %v85 = vunpack.c.h.b16 %v24
    %v86 = vunpack.c.l.b16 %v25
    %v87 = vunpack.c.h.b16 %v25
    %v88 = vunpack.c.l.b16 %v26
    %v89 = vunpack.c.h.b16 %v26
    %v90 = vunpack.c.l.b16 %v27
    %v91 = vunpack.c.h.b16 %v27
    %v92 = vunpack.c.l.b16 %v28
    %v93 = vunpack.c.h.b16 %v28
    %v94 = vunpack.c.l.b16 %v29
    %v95 = vunpack.c.h.b16 %v29
    %v96 = vunpack.c.l.b16 %v30
    %v97 = vunpack.c.h.b16 %v30
    %v98 = vunpack.c.l.b16 %v31
    %v99 = vunpack.c.h.b16 %v31
    %v100 = vunpack.c.l.b16 %v32
    %v101 = vunpack.c.h.b16 %v32
    %v102 = vunpack.c.l.b16 %v33
    %v103 = vunpack.c.h.b16 %v33
    %v104 = vunpack.c.l.b16 %v34
    %v105 = vunpack.c.h.b16 %v34
    %v106 = vunpack.c.l.b16 %v35
    %v107 = vunpack.c.h.b16 %v35
    %v108 = vpack.c.b16 %v78, %v76
    %v109 = vpack.c.b16 %v79, %v77
    %v110 = vpack.c.b16 %v82, %v80
    %v111 = vpack.c.b16 %v83, %v81
    %v112 = vpack.c.b16 %v86, %v84
    %v113 = vpack.c.b16 %v87, %v85
    %v114 = vpack.c.b16 %v90, %v88
    %v115 = vpack.c.b16 %v91, %v89
    %v116 = vpack.c.b16 %v94, %v92
    %v117 = vpack.c.b16 %v95, %v93
    %v118 = vpack.c.b16 %v98, %v96
    %v119 = vpack.c.b16 %v99, %v97
    %v120 = vpack.c.b16 %v102, %v100
    %v121 = vpack.c.b16 %v103, %v101
    %v122 = vpack.c.b16 %v106, %v104
    %v123 = vpack.c.b16 %v107, %v105
    %140 = vmatprep.subr.bf16.mxu0 %v109
    %141 = vmatpush1.bf16.msra.mxu0 %v108
    %142 = vmatprep.subr.bf16.mxu0 %v111
    %143 = vmatpush1.bf16.msra.mxu0 %v110
    %144 = vmatprep.subr.bf16.mxu0 %v113
    %145 = vmatpush1.bf16.msra.mxu0 %v112
    %146 = vmatprep.subr.bf16.mxu0 %v115
    %147 = vmatpush1.bf16.msra.mxu0 %v114
    %148 = vmatprep.subr.bf16.mxu0 %v117
    %149 = vmatpush1.bf16.msra.mxu0 %v116
    %150 = vmatprep.subr.bf16.mxu0 %v119
    %151 = vmatpush1.bf16.msra.mxu0 %v118
    %152 = vmatprep.subr.bf16.mxu0 %v121
    %153 = vmatpush1.bf16.msra.mxu0 %v120
    %154 = vmatprep.subr.bf16.mxu0 %v123
    %155 = vmatpush1.bf16.msra.mxu0 %v122
    %156 = vmatprep.subr.bf16.mxu0 0
    %157 = vmatpush1.bf16.msra.mxu0 0
    %158 = vmatprep.subr.bf16.mxu0 0
    %159 = vmatpush1.bf16.msra.mxu0 0
    %160 = vmatprep.subr.bf16.mxu0 0
    %161 = vmatpush1.bf16.msra.mxu0 0
    %162 = vmatprep.subr.bf16.mxu0 0
    %163 = vmatpush1.bf16.msra.mxu0 0
    %164 = vmatprep.subr.bf16.mxu0 0
    %165 = vmatpush1.bf16.msra.mxu0 0
    %166 = vmatprep.subr.bf16.mxu0 0
    %167 = vmatpush1.bf16.msra.mxu0 0
    %168 = vmatprep.subr.bf16.mxu0 0
    %169 = vmatpush1.bf16.msra.mxu0 0
    %170 = vmatprep.subr.bf16.mxu0 0
    %171 = vmatpush1.bf16.msra.mxu0 0
    %172 = vmatprep.mubr.bf16.mxu0 0
    %173 = vmatmul.mubr.bf16.gmra.mrb[0].mxu0 %v56
    %v174 = vpop.f32.mrb[0].mxu0
    %v175 = vadd.f32 %v41, %v174
    %v176 = vpop.f32.mrb[0].mxu0
    %v177 = vadd.f32 %v45, %v176
    %v178 = vpop.f32.mrb[0].mxu0
    %v179 = vadd.f32 %v41, %v178
    %v180 = vpop.f32.mrb[0].mxu0
    %v181 = vadd.f32 %v45, %v180
    %182 = vmatprep.mubr.bf16.mxu0 0
    %183 = vmatmul.mubr.bf16.gmra.mrb[0].mxu0 %v57
    %v184 = vpop.f32.mrb[0].mxu0
    %v185 = vadd.f32 %v41, %v184
    %v186 = vpop.f32.mrb[0].mxu0
    %v187 = vadd.f32 %v45, %v186
    %v188 = vpop.f32.mrb[0].mxu0
    %v189 = vadd.f32 %v41, %v188
    %v190 = vpop.f32.mrb[0].mxu0
    %v191 = vadd.f32 %v45, %v190
    %192 = vdwg.mxu0
    %193 = vst [vmem:[#allocation2] sm:$0xff] %v175
    %194 = vst [vmem:[#allocation2 + $0x8] sm:$0xff] %v177
    %195 = vst [vmem:[#allocation2 + $0x10] sm:$0xff] %v179
    %196 = vst [vmem:[#allocation2 + $0x18] sm:$0xff] %v181
    %197 = vst [vmem:[#allocation2 + $0x20] sm:$0xff] %v185
    %198 = vst [vmem:[#allocation2 + $0x28] sm:$0xff] %v187
    %199 = vst [vmem:[#allocation2 + $0x30] sm:$0xff] %v189
    %200 = vst [vmem:[#allocation2 + $0x38] sm:$0xff] %v191
    // Predicated region
    $region14: #{transformer_forward.37} parent=1 // pred_check
      _
    $region15: #{transformer_forward.37} parent=1 // pred_check_branch
      %202 = sbr.rel (0) target = $region17
    $region16: #{transformer_forward.37} parent=1 // pred_region
      %s204 = ssub.s32 1024, 1024
      %205 = vsyncadd [#allocation3], %s204
      %s206 = sshll.u32 [#allocation2], 4
      %s207 = int_to_ptr.vmem [resolvable:$true] %s206
      %212 = dma.vmem_to_hbm [thread:$0]  %s207, 1024, %s3, [#allocation3], 256, 256, 16
    $region17: #{transformer_forward.37} parent=1 // pred_fallthru
      _
    // Predicated region
    $region18: #{transformer_forward.37} parent=1 // pred_check
      _
    $region19: #{transformer_forward.37} parent=1 // pred_check_branch
      %214 = sbr.rel (0) target = $region21
    $region20: #{transformer_forward.37} parent=1 // pred_region
      %215 = dma.done [#allocation3], 1024
    $region21: #{transformer_forward.37} parent=1 // pred_fallthru
      _
    %216 = vsyncpa [#allocation3], 1

</llo_original>
